<compile_context>
chip_gen: v5e
topology: v5e:2x2
jax: 0.10.0
libtpu: 0.0.40
codegen_flags: <defaults>
</compile_context>

<pallas_src>
import jax
import jax.numpy as jnp
from jax.experimental import pallas as pl
from jax.experimental.pallas import tpu as pltpu

# ----------------------------- model dimensions (small) -----------------------------
B = 2              # batch
V = 5              # num_views (fixed by fc1 = Linear(fc_in_features * 5, 1024))
C = 3              # image channels
H = W = 16         # spatial
HW = H * W
F = 32             # fc_in_features (ResNet50 uses 2048; scaled down for the stub backbone)
HIDDEN = 1024      # fc1 output
NUM_CLASSES = 100
NCP = 128          # num_classes padded to a full lane tile (sliced back in the wrapper)
BHW = B * HW       # pixels per view across the batch (512, lane-aligned)
N = V * BHW        # total pixel-lane axis (2560)


# ----------------------------- fused Pallas kernel -----------------------------------
def mvcnn_fused_kernel(x_ref, wct_ref, bc_ref, pool_ref, w1v_ref, b1t_ref,
                       w2t_ref, b2t_ref, o_ref):
    """Whole MVCNN forward in one invocation (column / transposed orientation, all f32).

    x_ref   : (C, N)         all view-images; channels on sublanes, pixels lane-dense;
                             lane index = (view*B + batch)*HW + pixel
    wct_ref : (F, C)         pointwise-conv weight, transposed
    bc_ref  : (F, 1)         conv bias (column)
    pool_ref: (BHW, B)       global-average-pool matrix: pool[b*HW + p, b] = 1/HW
    w1v_ref : (V, HIDDEN, F) fc1 weight, split per view and transposed
    b1t_ref : (HIDDEN, 1)    fc1 bias (column)
    w2t_ref : (NCP, HIDDEN)  fc2 weight, transposed, zero-padded to 128 classes
    b2t_ref : (NCP, 1)       fc2 bias (column, zero-padded)
    o_ref   : (NCP, B)       logits (transposed; wrapper transposes/slices back)
    """
    # ---- backbone stub: pointwise conv -> ReLU (all views / pixels at once) ----------
    h = jnp.dot(wct_ref[...], x_ref[...], preferred_element_type=jnp.float32)    # (F, N)
    h = jnp.maximum(h + bc_ref[...], 0.0)

    # ---- fused global-average-pool + fc1, accumulated per view (static unroll of 5) --
    # pooled_v[f, b] = mean_p h[f, (v*B+b)*HW + p]   (MXU matmul against pool matrix)
    # h1          += w1_v.T @ pooled_v               (fc1 contribution of view v)
    h1 = jnp.zeros((HIDDEN, B), jnp.float32)
    for vi in range(V):
        h_v = h[:, vi * BHW:(vi + 1) * BHW]                                       # (F, BHW)
        pooled_v = jnp.dot(h_v, pool_ref[...], preferred_element_type=jnp.float32)  # (F, B)
        h1 = h1 + jnp.dot(w1v_ref[vi], pooled_v,
                          preferred_element_type=jnp.float32)                     # (HIDDEN, B)

    # ---- classifier head: bias -> dropout (eval: identity) -> relu -> fc2 ------------
    h1 = jnp.maximum(h1 + b1t_ref[...], 0.0)                                      # (HIDDEN, B)
    o_ref[...] = jnp.dot(w2t_ref[...], h1,
                         preferred_element_type=jnp.float32) + b2t_ref[...]       # (NCP, B)


# ----------------------------- wrapper ------------------------------------------------
def mvcnn_forward(inputs, params):
    """inputs: (B, V, C, H, W) float32 (NCHW per view, matching the PyTorch module)."""
    b, v, c, hh, ww = inputs.shape
    assert (b, v, c, hh * ww) == (B, V, C, HW), "shape constants mismatch"
    hw = hh * ww
    nvhw = v * b * hw

    # Lane-dense input layout: channels on sublanes, (view, batch, pixel) on lanes.
    # Tiny (30 KB) XLA-side transform; the Pallas DMA then moves dense 128-lane rows.
    x_cs = jnp.transpose(inputs.reshape(b, v, c, hw), (2, 1, 0, 3)).reshape(c, nvhw)

    # Weight layout plumbing (done by XLA outside the kernel; all small, once per call).
    wct = params["w_conv"].T                                        # (F, C)
    bc = params["b_conv"].reshape(F, 1)                             # (F, 1)
    pool = jnp.repeat(jnp.eye(B, dtype=jnp.float32), HW, axis=0) / HW   # (BHW, B)
    # w1: (V*F, HIDDEN) -> per-view transposed stack (V, HIDDEN, F)
    w1v = jnp.transpose(params["w1"].reshape(V, F, HIDDEN), (0, 2, 1))
    b1t = params["b1"].reshape(HIDDEN, 1)                           # (HIDDEN, 1)
    w2t = jnp.pad(params["w2"].T, ((0, NCP - NUM_CLASSES), (0, 0)))  # (NCP, HIDDEN)
    b2t = jnp.pad(params["b2"].reshape(NUM_CLASSES, 1), ((0, NCP - NUM_CLASSES), (0, 0)))

    flops = 2 * (F * c * nvhw + V * (F * BHW * b + HIDDEN * F * b) + NCP * HIDDEN * b)
    bytes_accessed = 4 * (x_cs.size + wct.size + bc.size + pool.size + w1v.size
                          + b1t.size + w2t.size + b2t.size + NCP * b)

    out_t = pl.pallas_call(
        mvcnn_fused_kernel,
        out_shape=jax.ShapeDtypeStruct((NCP, b), jnp.float32),
        grid_spec=pltpu.PrefetchScalarGridSpec(
            num_scalar_prefetch=0,
            grid=(1,),                      # single step: whole working set (<2 MB) fits VMEM
            in_specs=[
                pl.BlockSpec((c, nvhw), lambda i: (0, 0)),
                pl.BlockSpec((F, c), lambda i: (0, 0)),
                pl.BlockSpec((F, 1), lambda i: (0, 0)),
                pl.BlockSpec((BHW, b), lambda i: (0, 0)),
                pl.BlockSpec((V, HIDDEN, F), lambda i: (0, 0, 0)),
                pl.BlockSpec((HIDDEN, 1), lambda i: (0, 0)),
                pl.BlockSpec((NCP, HIDDEN), lambda i: (0, 0)),
                pl.BlockSpec((NCP, 1), lambda i: (0, 0)),
            ],
            out_specs=pl.BlockSpec((NCP, b), lambda i: (0, 0)),
        ),
        compiler_params=pltpu.CompilerParams(dimension_semantics=("arbitrary",)),
        cost_estimate=pl.CostEstimate(flops=flops, transcendentals=0,
                                      bytes_accessed=bytes_accessed),
    )(x_cs, wct, bc, pool, w1v, b1t, w2t, b2t)

    # (NCP, B) -> (B, NUM_CLASSES): transposing/slicing a 1 KB array in XLA is free.
    return out_t[:NUM_CLASSES, :].T


# ----------------------------- pure-JAX reference (f32) ------------------------------
def mvcnn_reference(inputs, params):
    """Reference of the same (stubbed-backbone) forward pass, all f32."""
    b, v, c, hh, ww = inputs.shape
    x = inputs.reshape(b * v, c, hh * ww)                                        # (NV, C, HW)
    pre = jnp.einsum("ncs,cf->nsf", x, params["w_conv"]) + params["b_conv"]      # (NV, HW, F)
    feats = jnp.mean(jnp.maximum(pre, 0.0), axis=1).reshape(b, v * F)            # (B, V*F)
    h1 = jnp.maximum(feats @ params["w1"] + params["b1"], 0.0)
    return h1 @ params["w2"] + params["b2"]


# ----------------------------- main ---------------------------------------------------
if __name__ == "__main__":
    key = jax.random.PRNGKey(0)
    k_in, k_wc, k_bc, k_w1, k_b1, k_w2, k_b2 = jax.random.split(key, 7)

    inputs = jax.random.normal(k_in, (B, V, C, H, W), dtype=jnp.float32)

    params = {
        "w_conv": jax.random.normal(k_wc, (C, F), jnp.float32) * (1.0 / jnp.sqrt(C)),
        "b_conv": jax.random.normal(k_bc, (1, F), jnp.float32) * 0.01,
        "w1": jax.random.normal(k_w1, (V * F, HIDDEN), jnp.float32) * (1.0 / jnp.sqrt(V * F)),
        "b1": jax.random.normal(k_b1, (1, HIDDEN), jnp.float32) * 0.01,
        "w2": jax.random.normal(k_w2, (HIDDEN, NUM_CLASSES), jnp.float32) * (1.0 / jnp.sqrt(HIDDEN)),
        "b2": jax.random.normal(k_b2, (1, NUM_CLASSES), jnp.float32) * 0.01,
    }

    fwd = jax.jit(mvcnn_forward)
    logits = jax.block_until_ready(fwd(inputs, params))
    assert logits.shape == (B, NUM_CLASSES), logits.shape

    ref = jax.block_until_ready(mvcnn_reference(inputs, params))
    max_err = float(jnp.max(jnp.abs(logits - ref)))
    # All-f32 kernel vs. pure-f32 reference; tolerance covers MXU f32 multi-pass rounding.
    assert jnp.allclose(logits, ref, rtol=2e-2, atol=2e-2), max_err

    print("KERNEL_OK")
</pallas_src>

<mosaic_0001>
module attributes {stable_mosaic.version = 11 : i64} {
  func.func @mvcnn_fused_kernel(%arg0: i32, %arg1: memref<3x2560xf32, #tpu.memory_space<vmem>>, %arg2: memref<32x3xf32, #tpu.memory_space<vmem>>, %arg3: memref<32x1xf32, #tpu.memory_space<vmem>>, %arg4: memref<512x2xf32, #tpu.memory_space<vmem>>, %arg5: memref<5x1024x32xf32, #tpu.memory_space<vmem>>, %arg6: memref<1024x1xf32, #tpu.memory_space<vmem>>, %arg7: memref<128x1024xf32, #tpu.memory_space<vmem>>, %arg8: memref<128x1xf32, #tpu.memory_space<vmem>>, %arg9: memref<128x2xf32, #tpu.memory_space<vmem>>) attributes {dimension_semantics = [#tpu.dimension_semantics<arbitrary>], iteration_bounds = array<i64: 1>, scalar_prefetch = 0 : i64, scratch_operands = 0 : i64, tpu.core_type = #tpu.core_type<tc>, window_params = [{pipeline_mode = #tpu.pipeline_mode<synchronous>, transform_indices = @transform_0, window_bounds = array<i64: 3, 2560>}, {pipeline_mode = #tpu.pipeline_mode<synchronous>, transform_indices = @transform_1, window_bounds = array<i64: 32, 3>}, {pipeline_mode = #tpu.pipeline_mode<synchronous>, transform_indices = @transform_2, window_bounds = array<i64: 32, 1>}, {pipeline_mode = #tpu.pipeline_mode<synchronous>, transform_indices = @transform_3, window_bounds = array<i64: 512, 2>}, {pipeline_mode = #tpu.pipeline_mode<synchronous>, transform_indices = @transform_4, window_bounds = array<i64: 5, 1024, 32>}, {pipeline_mode = #tpu.pipeline_mode<synchronous>, transform_indices = @transform_5, window_bounds = array<i64: 1024, 1>}, {pipeline_mode = #tpu.pipeline_mode<synchronous>, transform_indices = @transform_6, window_bounds = array<i64: 128, 1024>}, {pipeline_mode = #tpu.pipeline_mode<synchronous>, transform_indices = @transform_7, window_bounds = array<i64: 128, 1>}, {pipeline_mode = #tpu.pipeline_mode<synchronous>, transform_indices = @transform_8, window_bounds = array<i64: 128, 2>}]} {
    %c0 = arith.constant 0 : index
    %c0_0 = arith.constant 0 : index
    %0 = vector.load %arg2[%c0, %c0_0] : memref<32x3xf32, #tpu.memory_space<vmem>>, vector<32x3xf32>
    %c0_1 = arith.constant 0 : index
    %c0_2 = arith.constant 0 : index
    %1 = vector.load %arg1[%c0_1, %c0_2] : memref<3x2560xf32, #tpu.memory_space<vmem>>, vector<3x2560xf32>
    %cst = arith.constant dense<0.000000e+00> : vector<32x2560xf32>
    %2 = tpu.matmul %0, %1, %cst {dimension_numbers = #tpu.dot_dimension_numbers<[1], [0], [0], [1], [0, 0, 1, 1], [], []>} : vector<32x3xf32>, vector<3x2560xf32>, vector<32x2560xf32> -> vector<32x2560xf32>
    %c0_3 = arith.constant 0 : index
    %c0_4 = arith.constant 0 : index
    %3 = vector.load %arg3[%c0_3, %c0_4] : memref<32x1xf32, #tpu.memory_space<vmem>>, vector<32x1xf32>
    %4 = vector.broadcast %3 : vector<32x1xf32> to vector<32x2560xf32>
    %5 = arith.addf %2, %4 : vector<32x2560xf32>
    %cst_5 = arith.constant 0.000000e+00 : f32
    %6 = vector.broadcast %cst_5 : f32 to vector<32x2560xf32>
    %7 = arith.maximumf %5, %6 : vector<32x2560xf32>
    %cst_6 = arith.constant 0.000000e+00 : f32
    %8 = vector.broadcast %cst_6 : f32 to vector<1024x2xf32>
    %9 = vector.extract_strided_slice %7 {offsets = [0, 0], sizes = [32, 512], strides = [1, 1]} : vector<32x2560xf32> to vector<32x512xf32>
    %c0_7 = arith.constant 0 : index
    %c0_8 = arith.constant 0 : index
    %10 = vector.load %arg4[%c0_7, %c0_8] : memref<512x2xf32, #tpu.memory_space<vmem>>, vector<512x2xf32>
    %cst_9 = arith.constant dense<0.000000e+00> : vector<32x2xf32>
    %11 = tpu.matmul %9, %10, %cst_9 {dimension_numbers = #tpu.dot_dimension_numbers<[1], [0], [0], [1], [0, 0, 1, 1], [], []>} : vector<32x512xf32>, vector<512x2xf32>, vector<32x2xf32> -> vector<32x2xf32>
    %c0_10 = arith.constant 0 : index
    %c0_11 = arith.constant 0 : index
    %c0_12 = arith.constant 0 : index
    %12 = vector.load %arg5[%c0_10, %c0_11, %c0_12] : memref<5x1024x32xf32, #tpu.memory_space<vmem>>, vector<1x1024x32xf32>
    %13 = vector.shape_cast %12 : vector<1x1024x32xf32> to vector<1024x32xf32>
    %cst_13 = arith.constant dense<0.000000e+00> : vector<1024x2xf32>
    %14 = tpu.matmul %13, %11, %cst_13 {dimension_numbers = #tpu.dot_dimension_numbers<[1], [0], [0], [1], [0, 0, 1, 1], [], []>} : vector<1024x32xf32>, vector<32x2xf32>, vector<1024x2xf32> -> vector<1024x2xf32>
    %15 = arith.addf %8, %14 : vector<1024x2xf32>
    %16 = vector.extract_strided_slice %7 {offsets = [0, 512], sizes = [32, 512], strides = [1, 1]} : vector<32x2560xf32> to vector<32x512xf32>
    %c0_14 = arith.constant 0 : index
    %c0_15 = arith.constant 0 : index
    %17 = vector.load %arg4[%c0_14, %c0_15] : memref<512x2xf32, #tpu.memory_space<vmem>>, vector<512x2xf32>
    %cst_16 = arith.constant dense<0.000000e+00> : vector<32x2xf32>
    %18 = tpu.matmul %16, %17, %cst_16 {dimension_numbers = #tpu.dot_dimension_numbers<[1], [0], [0], [1], [0, 0, 1, 1], [], []>} : vector<32x512xf32>, vector<512x2xf32>, vector<32x2xf32> -> vector<32x2xf32>
    %c1 = arith.constant 1 : index
    %c0_17 = arith.constant 0 : index
    %c0_18 = arith.constant 0 : index
    %19 = vector.load %arg5[%c1, %c0_17, %c0_18] : memref<5x1024x32xf32, #tpu.memory_space<vmem>>, vector<1x1024x32xf32>
    %20 = vector.shape_cast %19 : vector<1x1024x32xf32> to vector<1024x32xf32>
    %cst_19 = arith.constant dense<0.000000e+00> : vector<1024x2xf32>
    %21 = tpu.matmul %20, %18, %cst_19 {dimension_numbers = #tpu.dot_dimension_numbers<[1], [0], [0], [1], [0, 0, 1, 1], [], []>} : vector<1024x32xf32>, vector<32x2xf32>, vector<1024x2xf32> -> vector<1024x2xf32>
    %22 = arith.addf %15, %21 : vector<1024x2xf32>
    %23 = vector.extract_strided_slice %7 {offsets = [0, 1024], sizes = [32, 512], strides = [1, 1]} : vector<32x2560xf32> to vector<32x512xf32>
    %c0_20 = arith.constant 0 : index
    %c0_21 = arith.constant 0 : index
    %24 = vector.load %arg4[%c0_20, %c0_21] : memref<512x2xf32, #tpu.memory_space<vmem>>, vector<512x2xf32>
    %cst_22 = arith.constant dense<0.000000e+00> : vector<32x2xf32>
    %25 = tpu.matmul %23, %24, %cst_22 {dimension_numbers = #tpu.dot_dimension_numbers<[1], [0], [0], [1], [0, 0, 1, 1], [], []>} : vector<32x512xf32>, vector<512x2xf32>, vector<32x2xf32> -> vector<32x2xf32>
    %c2 = arith.constant 2 : index
    %c0_23 = arith.constant 0 : index
    %c0_24 = arith.constant 0 : index
    %26 = vector.load %arg5[%c2, %c0_23, %c0_24] : memref<5x1024x32xf32, #tpu.memory_space<vmem>>, vector<1x1024x32xf32>
    %27 = vector.shape_cast %26 : vector<1x1024x32xf32> to vector<1024x32xf32>
    %cst_25 = arith.constant dense<0.000000e+00> : vector<1024x2xf32>
    %28 = tpu.matmul %27, %25, %cst_25 {dimension_numbers = #tpu.dot_dimension_numbers<[1], [0], [0], [1], [0, 0, 1, 1], [], []>} : vector<1024x32xf32>, vector<32x2xf32>, vector<1024x2xf32> -> vector<1024x2xf32>
    %29 = arith.addf %22, %28 : vector<1024x2xf32>
    %30 = vector.extract_strided_slice %7 {offsets = [0, 1536], sizes = [32, 512], strides = [1, 1]} : vector<32x2560xf32> to vector<32x512xf32>
    %c0_26 = arith.constant 0 : index
    %c0_27 = arith.constant 0 : index
    %31 = vector.load %arg4[%c0_26, %c0_27] : memref<512x2xf32, #tpu.memory_space<vmem>>, vector<512x2xf32>
    %cst_28 = arith.constant dense<0.000000e+00> : vector<32x2xf32>
    %32 = tpu.matmul %30, %31, %cst_28 {dimension_numbers = #tpu.dot_dimension_numbers<[1], [0], [0], [1], [0, 0, 1, 1], [], []>} : vector<32x512xf32>, vector<512x2xf32>, vector<32x2xf32> -> vector<32x2xf32>
    %c3 = arith.constant 3 : index
    %c0_29 = arith.constant 0 : index
    %c0_30 = arith.constant 0 : index
    %33 = vector.load %arg5[%c3, %c0_29, %c0_30] : memref<5x1024x32xf32, #tpu.memory_space<vmem>>, vector<1x1024x32xf32>
    %34 = vector.shape_cast %33 : vector<1x1024x32xf32> to vector<1024x32xf32>
    %cst_31 = arith.constant dense<0.000000e+00> : vector<1024x2xf32>
    %35 = tpu.matmul %34, %32, %cst_31 {dimension_numbers = #tpu.dot_dimension_numbers<[1], [0], [0], [1], [0, 0, 1, 1], [], []>} : vector<1024x32xf32>, vector<32x2xf32>, vector<1024x2xf32> -> vector<1024x2xf32>
    %36 = arith.addf %29, %35 : vector<1024x2xf32>
    %37 = vector.extract_strided_slice %7 {offsets = [0, 2048], sizes = [32, 512], strides = [1, 1]} : vector<32x2560xf32> to vector<32x512xf32>
    %c0_32 = arith.constant 0 : index
    %c0_33 = arith.constant 0 : index
    %38 = vector.load %arg4[%c0_32, %c0_33] : memref<512x2xf32, #tpu.memory_space<vmem>>, vector<512x2xf32>
    %cst_34 = arith.constant dense<0.000000e+00> : vector<32x2xf32>
    %39 = tpu.matmul %37, %38, %cst_34 {dimension_numbers = #tpu.dot_dimension_numbers<[1], [0], [0], [1], [0, 0, 1, 1], [], []>} : vector<32x512xf32>, vector<512x2xf32>, vector<32x2xf32> -> vector<32x2xf32>
    %c4 = arith.constant 4 : index
    %c0_35 = arith.constant 0 : index
    %c0_36 = arith.constant 0 : index
    %40 = vector.load %arg5[%c4, %c0_35, %c0_36] : memref<5x1024x32xf32, #tpu.memory_space<vmem>>, vector<1x1024x32xf32>
    %41 = vector.shape_cast %40 : vector<1x1024x32xf32> to vector<1024x32xf32>
    %cst_37 = arith.constant dense<0.000000e+00> : vector<1024x2xf32>
    %42 = tpu.matmul %41, %39, %cst_37 {dimension_numbers = #tpu.dot_dimension_numbers<[1], [0], [0], [1], [0, 0, 1, 1], [], []>} : vector<1024x32xf32>, vector<32x2xf32>, vector<1024x2xf32> -> vector<1024x2xf32>
    %43 = arith.addf %36, %42 : vector<1024x2xf32>
    %c0_38 = arith.constant 0 : index
    %c0_39 = arith.constant 0 : index
    %44 = vector.load %arg6[%c0_38, %c0_39] : memref<1024x1xf32, #tpu.memory_space<vmem>>, vector<1024x1xf32>
    %45 = vector.broadcast %44 : vector<1024x1xf32> to vector<1024x2xf32>
    %46 = arith.addf %43, %45 : vector<1024x2xf32>
    %cst_40 = arith.constant 0.000000e+00 : f32
    %47 = vector.broadcast %cst_40 : f32 to vector<1024x2xf32>
    %48 = arith.maximumf %46, %47 : vector<1024x2xf32>
    %c0_41 = arith.constant 0 : index
    %c0_42 = arith.constant 0 : index
    %49 = vector.load %arg7[%c0_41, %c0_42] : memref<128x1024xf32, #tpu.memory_space<vmem>>, vector<128x1024xf32>
    %cst_43 = arith.constant dense<0.000000e+00> : vector<128x2xf32>
    %50 = tpu.matmul %49, %48, %cst_43 {dimension_numbers = #tpu.dot_dimension_numbers<[1], [0], [0], [1], [0, 0, 1, 1], [], []>} : vector<128x1024xf32>, vector<1024x2xf32>, vector<128x2xf32> -> vector<128x2xf32>
    %c0_44 = arith.constant 0 : index
    %c0_45 = arith.constant 0 : index
    %51 = vector.load %arg8[%c0_44, %c0_45] : memref<128x1xf32, #tpu.memory_space<vmem>>, vector<128x1xf32>
    %52 = vector.broadcast %51 : vector<128x1xf32> to vector<128x2xf32>
    %53 = arith.addf %50, %52 : vector<128x2xf32>
    %c0_46 = arith.constant 0 : index
    %c0_47 = arith.constant 0 : index
    %54 = vector.load %arg9[%c0_46, %c0_47] : memref<128x2xf32, #tpu.memory_space<vmem>>, vector<128x2xf32>
    tpu.vector_store %arg9[%c0_46, %c0_47], %53 {strides = array<i32>} : memref<128x2xf32, #tpu.memory_space<vmem>>, vector<128x2xf32>,
    return
  }
  func.func @transform_0(%arg0: i32) -> (i32, i32) {
    %c0_i32 = arith.constant 0 : i32
    %c0_i32_0 = arith.constant 0 : i32
    %c0_i32_1 = arith.constant 0 : i32
    return %c0_i32, %c0_i32_0 : i32, i32
  }
  func.func @transform_1(%arg0: i32) -> (i32, i32) {
    %c0_i32 = arith.constant 0 : i32
    %c0_i32_0 = arith.constant 0 : i32
    %c0_i32_1 = arith.constant 0 : i32
    return %c0_i32, %c0_i32_0 : i32, i32
  }
  func.func @transform_2(%arg0: i32) -> (i32, i32) {
    %c0_i32 = arith.constant 0 : i32
    %c0_i32_0 = arith.constant 0 : i32
    %c0_i32_1 = arith.constant 0 : i32
    return %c0_i32, %c0_i32_0 : i32, i32
  }
  func.func @transform_3(%arg0: i32) -> (i32, i32) {
    %c0_i32 = arith.constant 0 : i32
    %c0_i32_0 = arith.constant 0 : i32
    %c0_i32_1 = arith.constant 0 : i32
    return %c0_i32, %c0_i32_0 : i32, i32
  }
  func.func @transform_4(%arg0: i32) -> (i32, i32, i32) {
    %c0_i32 = arith.constant 0 : i32
    %c0_i32_0 = arith.constant 0 : i32
    %c0_i32_1 = arith.constant 0 : i32
    %c0_i32_2 = arith.constant 0 : i32
    return %c0_i32, %c0_i32_0, %c0_i32_1 : i32, i32, i32
  }
  func.func @transform_5(%arg0: i32) -> (i32, i32) {
    %c0_i32 = arith.constant 0 : i32
    %c0_i32_0 = arith.constant 0 : i32
    %c0_i32_1 = arith.constant 0 : i32
    return %c0_i32, %c0_i32_0 : i32, i32
  }
  func.func @transform_6(%arg0: i32) -> (i32, i32) {
    %c0_i32 = arith.constant 0 : i32
    %c0_i32_0 = arith.constant 0 : i32
    %c0_i32_1 = arith.constant 0 : i32
    return %c0_i32, %c0_i32_0 : i32, i32
  }
  func.func @transform_7(%arg0: i32) -> (i32, i32) {
    %c0_i32 = arith.constant 0 : i32
    %c0_i32_0 = arith.constant 0 : i32
    %c0_i32_1 = arith.constant 0 : i32
    return %c0_i32, %c0_i32_0 : i32, i32
  }
  func.func @transform_8(%arg0: i32) -> (i32, i32) {
    %c0_i32 = arith.constant 0 : i32
    %c0_i32_0 = arith.constant 0 : i32
    %c0_i32_1 = arith.constant 0 : i32
    return %c0_i32, %c0_i32_0 : i32, i32
  }
}

</mosaic_0001>

<llo_original>
// kernel: mvcnn_forward.1
$region0: #{mvcnn_forward.1}
  #allocation0 [shape = 'u32[]', space=smem, size = 0x4, offset = 0x4, fixed_abs, tag = 'smem constant byte address 0x4 - core index']
  #allocation1 [shape = 'u32[72,128]{1,0:T(1,128)}', space=vmem, size = 0x9000, scoped, tag = 'internal scratch']
  %s0 = inlined_call_operand.vmem [shape: f32[3,2560], index: 0, kind: input, shape index: {}]
  %s1 = inlined_call_operand.vmem [shape: f32[32,3], index: 1, kind: input, shape index: {}]
  %s2 = inlined_call_operand.vmem [shape: f32[32,1], index: 2, kind: input, shape index: {}]
  %s3 = inlined_call_operand.vmem [shape: f32[512,2], index: 3, kind: input, shape index: {}]
  %s4 = inlined_call_operand.vmem [shape: f32[5,1024,32], index: 4, kind: input, shape index: {}]
  %s5 = inlined_call_operand.vmem [shape: f32[1024,1], index: 5, kind: input, shape index: {}]
  %s6 = inlined_call_operand.vmem [shape: f32[128,1024], index: 6, kind: input, shape index: {}]
  %s7 = inlined_call_operand.vmem [shape: f32[128,1], index: 7, kind: input, shape index: {}]
  %s8 = inlined_call_operand.vmem [shape: f32[128,2], index: 8, kind: output, shape index: {}]
  %s9 = sld [smem:[#allocation0]]
  $region42: #{mvcnn_forward.1} parent=0
    _
  %s11 = ssub.s32 1, %s9
  %s12 = scalar_select 0, %s11, %s9
  // Predicated region
  $region2: #{mvcnn_forward.1} parent=0 // pred_check
    _
  $region3: #{mvcnn_forward.1} parent=0 // pred_check_branch
    %14 = sbr.rel (0) target = $region5
  $region4: #{mvcnn_forward.1} parent=0 // pred_region
    _
  $region5: #{mvcnn_forward.1} parent=0 // pred_fallthru
    _
  // Predicated region
  $region6: #{mvcnn_forward.1} parent=0 // pred_check
    _
  $region7: #{mvcnn_forward.1} parent=0 // pred_check_branch
    %16 = sbr.rel (0) target = $region9
  $region8: #{mvcnn_forward.1} parent=0 // pred_region
    _
  $region9: #{mvcnn_forward.1} parent=0 // pred_fallthru
    _
  // Predicated region
  $region10: #{mvcnn_forward.1} parent=0 // pred_check
    _
  $region11: #{mvcnn_forward.1} parent=0 // pred_check_branch
    %18 = sbr.rel (0) target = $region13
  $region12: #{mvcnn_forward.1} parent=0 // pred_region
    _
  $region13: #{mvcnn_forward.1} parent=0 // pred_fallthru
    _
  // Predicated region
  $region14: #{mvcnn_forward.1} parent=0 // pred_check
    _
  $region15: #{mvcnn_forward.1} parent=0 // pred_check_branch
    %20 = sbr.rel (0) target = $region17
  $region16: #{mvcnn_forward.1} parent=0 // pred_region
    _
  $region17: #{mvcnn_forward.1} parent=0 // pred_fallthru
    _
  // Predicated region
  $region18: #{mvcnn_forward.1} parent=0 // pred_check
    _
  $region19: #{mvcnn_forward.1} parent=0 // pred_check_branch
    %22 = sbr.rel (0) target = $region21
  $region20: #{mvcnn_forward.1} parent=0 // pred_region
    _
  $region21: #{mvcnn_forward.1} parent=0 // pred_fallthru
    _
  // Predicated region
  $region22: #{mvcnn_forward.1} parent=0 // pred_check
    _
  $region23: #{mvcnn_forward.1} parent=0 // pred_check_branch
    %24 = sbr.rel (0) target = $region25
  $region24: #{mvcnn_forward.1} parent=0 // pred_region
    _
  $region25: #{mvcnn_forward.1} parent=0 // pred_fallthru
    _
  // Predicated region
  $region26: #{mvcnn_forward.1} parent=0 // pred_check
    _
  $region27: #{mvcnn_forward.1} parent=0 // pred_check_branch
    %26 = sbr.rel (0) target = $region29
  $region28: #{mvcnn_forward.1} parent=0 // pred_region
    _
  $region29: #{mvcnn_forward.1} parent=0 // pred_fallthru
    _
  // Predicated region
  $region30: #{mvcnn_forward.1} parent=0 // pred_check
    _
  $region31: #{mvcnn_forward.1} parent=0 // pred_check_branch
    %28 = sbr.rel (0) target = $region33
  $region32: #{mvcnn_forward.1} parent=0 // pred_region
    _
  $region33: #{mvcnn_forward.1} parent=0 // pred_fallthru
    _
  %v29 = vld [vmem:[%s1] sm:$0xff]
  %v30 = vld [vmem:[%s1 + $0x8] sm:$0xff]
  %v31 = vld [vmem:[%s1 + $0x10] sm:$0xff]
  %v32 = vld [vmem:[%s1 + $0x18] sm:$0xff]
  %v33 = vld [vmem:[%s0] sm:$0x77]
  %v34 = vld [vmem:[%s0 + $0x8] sm:$0x77]
  %v35 = vld [vmem:[%s0 + $0x10] sm:$0x77]
  %v36 = vld [vmem:[%s0 + $0x18] sm:$0x77]
  %v37 = vld [vmem:[%s0 + $0x20] sm:$0x77]
  %v38 = vld [vmem:[%s0 + $0x28] sm:$0x77]
  %v39 = vld [vmem:[%s0 + $0x30] sm:$0x77]
  %v40 = vld [vmem:[%s0 + $0x38] sm:$0x77]
  %v41 = vld [vmem:[%s0 + $0x40] sm:$0x77]
  %v42 = vld [vmem:[%s0 + $0x48] sm:$0x77]
  %v43 = vld [vmem:[%s2] sm:$0xff]
  %v44 = vld [vmem:[%s2 + $0x8] sm:$0xff]
  %v45 = vld [vmem:[%s2 + $0x10] sm:$0xff]
  %v46 = vld [vmem:[%s2 + $0x18] sm:$0xff]
  %48 = vset.pattern.permute.xlu0 0
  %49 = vperm.xlu0 %48, %v43
  %v50 = vpop.permute.xlu0 %49
  %53 = vset.pattern.permute.xlu0 0
  %54 = vperm.xlu0 %53, %v44
  %v55 = vpop.permute.xlu0 %54
  %58 = vset.pattern.permute.xlu0 0
  %59 = vperm.xlu0 %58, %v45
  %v60 = vpop.permute.xlu0 %59
  %63 = vset.pattern.permute.xlu0 0
  %64 = vperm.xlu0 %63, %v46
  %v65 = vpop.permute.xlu0 %64
  %77 = vst [vmem:[#allocation1] ss:$2 sm:$0xff] %v33
  %s78 = scalar_lea.vmem [#allocation1], 16
  %79 = vst [vmem:[%s78] ss:$2 sm:$0xff] %v34
  %s80 = scalar_lea.vmem [#allocation1], 32
  %81 = vst [vmem:[%s80] ss:$2 sm:$0xff] %v35
  %s82 = scalar_lea.vmem [#allocation1], 48
  %83 = vst [vmem:[%s82] ss:$2 sm:$0xff] %v36
  %v84 = vld.sshfl [vmem:[#allocation1] sm:$0xff pattern:$0x75316420]
  %v85 = vld.sshfl [vmem:[#allocation1 + $0x8] sm:$0xff pattern:$0x75316420]
  %v86 = vld.sshfl [vmem:[#allocation1 + $0x10] sm:$0xff pattern:$0x75316420]
  %v87 = vld.sshfl [vmem:[#allocation1 + $0x18] sm:$0xff pattern:$0x75316420]
  %v88 = vld.sshfl [vmem:[#allocation1 + $0x20] sm:$0xff pattern:$0x75316420]
  %v89 = vld.sshfl [vmem:[#allocation1 + $0x28] sm:$0xff pattern:$0x75316420]
  %v90 = vld.sshfl [vmem:[#allocation1 + $0x30] sm:$0xff pattern:$0x75316420]
  %v91 = vld.sshfl [vmem:[#allocation1 + $0x38] sm:$0xff pattern:$0x75316420]
  %92 = vst [vmem:[#allocation1] ss:$2 sm:$0xff] %v37
  %93 = vst [vmem:[%s78] ss:$2 sm:$0xff] %v38
  %94 = vst [vmem:[%s80] ss:$2 sm:$0xff] %v39
  %95 = vst [vmem:[%s82] ss:$2 sm:$0xff] %v40
  %v96 = vld.sshfl [vmem:[#allocation1] sm:$0xff pattern:$0x75316420]
  %v97 = vld.sshfl [vmem:[#allocation1 + $0x8] sm:$0xff pattern:$0x75316420]
  %v98 = vld.sshfl [vmem:[#allocation1 + $0x10] sm:$0xff pattern:$0x75316420]
  %v99 = vld.sshfl [vmem:[#allocation1 + $0x18] sm:$0xff pattern:$0x75316420]
  %v100 = vld.sshfl [vmem:[#allocation1 + $0x20] sm:$0xff pattern:$0x75316420]
  %v101 = vld.sshfl [vmem:[#allocation1 + $0x28] sm:$0xff pattern:$0x75316420]
  %v102 = vld.sshfl [vmem:[#allocation1 + $0x30] sm:$0xff pattern:$0x75316420]
  %v103 = vld.sshfl [vmem:[#allocation1 + $0x38] sm:$0xff pattern:$0x75316420]
  %104 = vst [vmem:[#allocation1] ss:$2 sm:$0xff] %v41
  %105 = vst [vmem:[%s78] ss:$2 sm:$0xff] %v42
  %v106 = vld.sshfl [vmem:[#allocation1] sm:$0xff pattern:$0x75316420]
  %v107 = vld.sshfl [vmem:[#allocation1 + $0x8] sm:$0xff pattern:$0x75316420]
  %v108 = vld.sshfl [vmem:[#allocation1 + $0x10] sm:$0xff pattern:$0x75316420]
  %v109 = vld.sshfl [vmem:[#allocation1 + $0x18] sm:$0xff pattern:$0x75316420]
  %vm110 = vcmask 23552
  %v112 = vsel %vm110, %v29, 0
  %v115 = vsel %vm110, %v30, 0
  %v118 = vsel %vm110, %v31, 0
  %v121 = vsel %vm110, %v32, 0
  %vm123 = vcmask 1042432
  %v124 = vsel %vm123, %v84, 0
  %v126 = vsel %vm123, %v85, 0
  %v128 = vsel %vm123, %v86, 0
  %v130 = vsel %vm123, %v87, 0
  %v132 = vsel %vm123, %v88, 0
  %v134 = vsel %vm123, %v89, 0
  %v136 = vsel %vm123, %v90, 0
  %v138 = vsel %vm123, %v91, 0
  %v140 = vsel %vm123, %v96, 0
  %v142 = vsel %vm123, %v97, 0
  %v144 = vsel %vm123, %v98, 0
  %v146 = vsel %vm123, %v99, 0
  %v148 = vsel %vm123, %v100, 0
  %v150 = vsel %vm123, %v101, 0
  %v152 = vsel %vm123, %v102, 0
  %v154 = vsel %vm123, %v103, 0
  %v156 = vsel %vm123, %v106, 0
  %v158 = vsel %vm123, %v107, 0
  %v160 = vsel %vm123, %v108, 0
  %v162 = vsel %vm123, %v109, 0
  %164 = vmatpush.msra.mxu0 0.0
  %165 = vmatpush.msra.mxu0 0.0
  %166 = vmatpush.msra.mxu0 0.0
  %167 = vmatpush.msra.mxu0 0.0
  %168 = vmatpush.msra.mxu0 0.0
  %169 = vmatpush.msra.mxu0 0.0
  %170 = vmatpush.msra.mxu0 0.0
  %171 = vmatpush.msra.mxu0 0.0
  %172 = vmatpush.msra.mxu0 0.0
  %173 = vmatpush.msra.mxu0 0.0
  %174 = vmatpush.msra.mxu0 0.0
  %175 = vmatpush.msra.mxu0 0.0
  %176 = vmatpush.msra.mxu0 0.0
  %177 = vmatpush.msra.mxu0 0.0
  %178 = vmatpush.msra.mxu0 0.0
  %179 = vmatpush.msra.mxu0 %v124
  %180 = vmatmul.f32.gmra.mxu0 %v112
  %v181 = vpop.f32.mrf.mxu0
  %v182 = vadd.f32 %v50, %v181
  %183 = vmatmul.f32.gmra.mxu0 %v115
  %v184 = vpop.f32.mrf.mxu0
  %v185 = vadd.f32 %v55, %v184
  %186 = vmatmul.f32.gmra.mxu0 %v118
  %v187 = vpop.f32.mrf.mxu0
  %v188 = vadd.f32 %v60, %v187
  %189 = vmatmul.f32.gmra.mxu0 %v121
  %v190 = vpop.f32.mrf.mxu0
  %v191 = vadd.f32 %v65, %v190
  %192 = vdwg.mxu0
  %193 = vmatpush.msra.mxu0 0.0
  %194 = vmatpush.msra.mxu0 0.0
  %195 = vmatpush.msra.mxu0 0.0
  %196 = vmatpush.msra.mxu0 0.0
  %197 = vmatpush.msra.mxu0 0.0
  %198 = vmatpush.msra.mxu0 0.0
  %199 = vmatpush.msra.mxu0 0.0
  %200 = vmatpush.msra.mxu0 0.0
  %201 = vmatpush.msra.mxu0 0.0
  %202 = vmatpush.msra.mxu0 0.0
  %203 = vmatpush.msra.mxu0 0.0
  %204 = vmatpush.msra.mxu0 0.0
  %205 = vmatpush.msra.mxu0 0.0
  %206 = vmatpush.msra.mxu0 0.0
  %207 = vmatpush.msra.mxu0 0.0
  %208 = vmatpush.msra.mxu0 %v126
  %209 = vmatmul.f32.gmra.mxu0 %v112
  %v210 = vpop.f32.mrf.mxu0
  %v211 = vadd.f32 %v50, %v210
  %212 = vmatmul.f32.gmra.mxu0 %v115
  %v213 = vpop.f32.mrf.mxu0
  %v214 = vadd.f32 %v55, %v213
  %215 = vmatmul.f32.gmra.mxu0 %v118
  %v216 = vpop.f32.mrf.mxu0
  %v217 = vadd.f32 %v60, %v216
  %218 = vmatmul.f32.gmra.mxu0 %v121
  %v219 = vpop.f32.mrf.mxu0
  %v220 = vadd.f32 %v65, %v219
  %221 = vdwg.mxu0
  %222 = vmatpush.msra.mxu0 0.0
  %223 = vmatpush.msra.mxu0 0.0
  %224 = vmatpush.msra.mxu0 0.0
  %225 = vmatpush.msra.mxu0 0.0
  %226 = vmatpush.msra.mxu0 0.0
  %227 = vmatpush.msra.mxu0 0.0
  %228 = vmatpush.msra.mxu0 0.0
  %229 = vmatpush.msra.mxu0 0.0
  %230 = vmatpush.msra.mxu0 0.0
  %231 = vmatpush.msra.mxu0 0.0
  %232 = vmatpush.msra.mxu0 0.0
  %233 = vmatpush.msra.mxu0 0.0
  %234 = vmatpush.msra.mxu0 0.0
  %235 = vmatpush.msra.mxu0 0.0
  %236 = vmatpush.msra.mxu0 0.0
  %237 = vmatpush.msra.mxu0 %v128
  %238 = vmatmul.f32.gmra.mxu0 %v112
  %v239 = vpop.f32.mrf.mxu0
  %v240 = vadd.f32 %v50, %v239
  %241 = vmatmul.f32.gmra.mxu0 %v115
  %v242 = vpop.f32.mrf.mxu0
  %v243 = vadd.f32 %v55, %v242
  %244 = vmatmul.f32.gmra.mxu0 %v118
  %v245 = vpop.f32.mrf.mxu0
  %v246 = vadd.f32 %v60, %v245
  %247 = vmatmul.f32.gmra.mxu0 %v121
  %v248 = vpop.f32.mrf.mxu0
  %v249 = vadd.f32 %v65, %v248
  %250 = vdwg.mxu0
  %251 = vmatpush.msra.mxu0 0.0
  %252 = vmatpush.msra.mxu0 0.0
  %253 = vmatpush.msra.mxu0 0.0
  %254 = vmatpush.msra.mxu0 0.0
  %255 = vmatpush.msra.mxu0 0.0
  %256 = vmatpush.msra.mxu0 0.0
  %257 = vmatpush.msra.mxu0 0.0
  %258 = vmatpush.msra.mxu0 0.0
  %259 = vmatpush.msra.mxu0 0.0
  %260 = vmatpush.msra.mxu0 0.0
  %261 = vmatpush.msra.mxu0 0.0
  %262 = vmatpush.msra.mxu0 0.0
  %263 = vmatpush.msra.mxu0 0.0
  %264 = vmatpush.msra.mxu0 0.0
  %265 = vmatpush.msra.mxu0 0.0
  %266 = vmatpush.msra.mxu0 %v130
  %267 = vmatmul.f32.gmra.mxu0 %v112
  %v268 = vpop.f32.mrf.mxu0
  %v269 = vadd.f32 %v50, %v268
  %270 = vmatmul.f32.gmra.mxu0 %v115
  %v271 = vpop.f32.mrf.mxu0
  %v272 = vadd.f32 %v55, %v271
  %273 = vmatmul.f32.gmra.mxu0 %v118
  %v274 = vpop.f32.mrf.mxu0
  %v275 = vadd.f32 %v60, %v274
  %276 = vmatmul.f32.gmra.mxu0 %v121
  %v277 = vpop.f32.mrf.mxu0
  %v278 = vadd.f32 %v65, %v277
  %279 = vdwg.mxu0
  %280 = vmatpush.msra.mxu0 0.0
  %281 = vmatpush.msra.mxu0 0.0
  %282 = vmatpush.msra.mxu0 0.0
  %283 = vmatpush.msra.mxu0 0.0
  %284 = vmatpush.msra.mxu0 0.0
  %285 = vmatpush.msra.mxu0 0.0
  %286 = vmatpush.msra.mxu0 0.0
  %287 = vmatpush.msra.mxu0 0.0
  %288 = vmatpush.msra.mxu0 0.0
  %289 = vmatpush.msra.mxu0 0.0
  %290 = vmatpush.msra.mxu0 0.0
  %291 = vmatpush.msra.mxu0 0.0
  %292 = vmatpush.msra.mxu0 0.0
  %293 = vmatpush.msra.mxu0 0.0
  %294 = vmatpush.msra.mxu0 0.0
  %295 = vmatpush.msra.mxu0 %v132
  %296 = vmatmul.f32.gmra.mxu0 %v112
  %v297 = vpop.f32.mrf.mxu0
  %v298 = vadd.f32 %v50, %v297
  %299 = vmatmul.f32.gmra.mxu0 %v115
  %v300 = vpop.f32.mrf.mxu0
  %v301 = vadd.f32 %v55, %v300
  %302 = vmatmul.f32.gmra.mxu0 %v118
  %v303 = vpop.f32.mrf.mxu0
  %v304 = vadd.f32 %v60, %v303
  %305 = vmatmul.f32.gmra.mxu0 %v121
  %v306 = vpop.f32.mrf.mxu0
  %v307 = vadd.f32 %v65, %v306
  %308 = vdwg.mxu0
  %309 = vmatpush.msra.mxu0 0.0
  %310 = vmatpush.msra.mxu0 0.0
  %311 = vmatpush.msra.mxu0 0.0
  %312 = vmatpush.msra.mxu0 0.0
  %313 = vmatpush.msra.mxu0 0.0
  %314 = vmatpush.msra.mxu0 0.0
  %315 = vmatpush.msra.mxu0 0.0
  %316 = vmatpush.msra.mxu0 0.0
  %317 = vmatpush.msra.mxu0 0.0
  %318 = vmatpush.msra.mxu0 0.0
  %319 = vmatpush.msra.mxu0 0.0
  %320 = vmatpush.msra.mxu0 0.0
  %321 = vmatpush.msra.mxu0 0.0
  %322 = vmatpush.msra.mxu0 0.0
  %323 = vmatpush.msra.mxu0 0.0
  %324 = vmatpush.msra.mxu0 %v134
  %325 = vmatmul.f32.gmra.mxu0 %v112
  %v326 = vpop.f32.mrf.mxu0
  %v327 = vadd.f32 %v50, %v326
  %328 = vmatmul.f32.gmra.mxu0 %v115
  %v329 = vpop.f32.mrf.mxu0
  %v330 = vadd.f32 %v55, %v329
  %331 = vmatmul.f32.gmra.mxu0 %v118
  %v332 = vpop.f32.mrf.mxu0
  %v333 = vadd.f32 %v60, %v332
  %334 = vmatmul.f32.gmra.mxu0 %v121
  %v335 = vpop.f32.mrf.mxu0
  %v336 = vadd.f32 %v65, %v335
  %337 = vdwg.mxu0
  %338 = vmatpush.msra.mxu0 0.0
  %339 = vmatpush.msra.mxu0 0.0
  %340 = vmatpush.msra.mxu0 0.0
  %341 = vmatpush.msra.mxu0 0.0
  %342 = vmatpush.msra.mxu0 0.0
  %343 = vmatpush.msra.mxu0 0.0
  %344 = vmatpush.msra.mxu0 0.0
  %345 = vmatpush.msra.mxu0 0.0
  %346 = vmatpush.msra.mxu0 0.0
  %347 = vmatpush.msra.mxu0 0.0
  %348 = vmatpush.msra.mxu0 0.0
  %349 = vmatpush.msra.mxu0 0.0
  %350 = vmatpush.msra.mxu0 0.0
  %351 = vmatpush.msra.mxu0 0.0
  %352 = vmatpush.msra.mxu0 0.0
  %353 = vmatpush.msra.mxu0 %v136
  %354 = vmatmul.f32.gmra.mxu0 %v112
  %v355 = vpop.f32.mrf.mxu0
  %v356 = vadd.f32 %v50, %v355
  %357 = vmatmul.f32.gmra.mxu0 %v115
  %v358 = vpop.f32.mrf.mxu0
  %v359 = vadd.f32 %v55, %v358
  %360 = vmatmul.f32.gmra.mxu0 %v118
  %v361 = vpop.f32.mrf.mxu0
  %v362 = vadd.f32 %v60, %v361
  %363 = vmatmul.f32.gmra.mxu0 %v121
  %v364 = vpop.f32.mrf.mxu0
  %v365 = vadd.f32 %v65, %v364
  %366 = vdwg.mxu0
  %367 = vmatpush.msra.mxu0 0.0
  %368 = vmatpush.msra.mxu0 0.0
  %369 = vmatpush.msra.mxu0 0.0
  %370 = vmatpush.msra.mxu0 0.0
  %371 = vmatpush.msra.mxu0 0.0
  %372 = vmatpush.msra.mxu0 0.0
  %373 = vmatpush.msra.mxu0 0.0
  %374 = vmatpush.msra.mxu0 0.0
  %375 = vmatpush.msra.mxu0 0.0
  %376 = vmatpush.msra.mxu0 0.0
  %377 = vmatpush.msra.mxu0 0.0
  %378 = vmatpush.msra.mxu0 0.0
  %379 = vmatpush.msra.mxu0 0.0
  %380 = vmatpush.msra.mxu0 0.0
  %381 = vmatpush.msra.mxu0 0.0
  %382 = vmatpush.msra.mxu0 %v138
  %383 = vmatmul.f32.gmra.mxu0 %v112
  %v384 = vpop.f32.mrf.mxu0
  %v385 = vadd.f32 %v50, %v384
  %386 = vmatmul.f32.gmra.mxu0 %v115
  %v387 = vpop.f32.mrf.mxu0
  %v388 = vadd.f32 %v55, %v387
  %389 = vmatmul.f32.gmra.mxu0 %v118
  %v390 = vpop.f32.mrf.mxu0
  %v391 = vadd.f32 %v60, %v390
  %392 = vmatmul.f32.gmra.mxu0 %v121
  %v393 = vpop.f32.mrf.mxu0
  %v394 = vadd.f32 %v65, %v393
  %395 = vdwg.mxu0
  %396 = vmatpush.msra.mxu0 0.0
  %397 = vmatpush.msra.mxu0 0.0
  %398 = vmatpush.msra.mxu0 0.0
  %399 = vmatpush.msra.mxu0 0.0
  %400 = vmatpush.msra.mxu0 0.0
  %401 = vmatpush.msra.mxu0 0.0
  %402 = vmatpush.msra.mxu0 0.0
  %403 = vmatpush.msra.mxu0 0.0
  %404 = vmatpush.msra.mxu0 0.0
  %405 = vmatpush.msra.mxu0 0.0
  %406 = vmatpush.msra.mxu0 0.0
  %407 = vmatpush.msra.mxu0 0.0
  %408 = vmatpush.msra.mxu0 0.0
  %409 = vmatpush.msra.mxu0 0.0
  %410 = vmatpush.msra.mxu0 0.0
  %411 = vmatpush.msra.mxu0 %v140
  %412 = vmatmul.f32.gmra.mxu0 %v112
  %v413 = vpop.f32.mrf.mxu0
  %v414 = vadd.f32 %v50, %v413
  %415 = vmatmul.f32.gmra.mxu0 %v115
  %v416 = vpop.f32.mrf.mxu0
  %v417 = vadd.f32 %v55, %v416
  %418 = vmatmul.f32.gmra.mxu0 %v118
  %v419 = vpop.f32.mrf.mxu0
  %v420 = vadd.f32 %v60, %v419
  %421 = vmatmul.f32.gmra.mxu0 %v121
  %v422 = vpop.f32.mrf.mxu0
  %v423 = vadd.f32 %v65, %v422
  %424 = vdwg.mxu0
  %425 = vmatpush.msra.mxu0 0.0
  %426 = vmatpush.msra.mxu0 0.0
  %427 = vmatpush.msra.mxu0 0.0
  %428 = vmatpush.msra.mxu0 0.0
  %429 = vmatpush.msra.mxu0 0.0
  %430 = vmatpush.msra.mxu0 0.0
  %431 = vmatpush.msra.mxu0 0.0
  %432 = vmatpush.msra.mxu0 0.0
  %433 = vmatpush.msra.mxu0 0.0
  %434 = vmatpush.msra.mxu0 0.0
  %435 = vmatpush.msra.mxu0 0.0
  %436 = vmatpush.msra.mxu0 0.0
  %437 = vmatpush.msra.mxu0 0.0
  %438 = vmatpush.msra.mxu0 0.0
  %439 = vmatpush.msra.mxu0 0.0
  %440 = vmatpush.msra.mxu0 %v142
  %441 = vmatmul.f32.gmra.mxu0 %v112
  %v442 = vpop.f32.mrf.mxu0
  %v443 = vadd.f32 %v50, %v442
  %444 = vmatmul.f32.gmra.mxu0 %v115
  %v445 = vpop.f32.mrf.mxu0
  %v446 = vadd.f32 %v55, %v445
  %447 = vmatmul.f32.gmra.mxu0 %v118
  %v448 = vpop.f32.mrf.mxu0
  %v449 = vadd.f32 %v60, %v448
  %450 = vmatmul.f32.gmra.mxu0 %v121
  %v451 = vpop.f32.mrf.mxu0
  %v452 = vadd.f32 %v65, %v451
  %453 = vdwg.mxu0
  %454 = vmatpush.msra.mxu0 0.0
  %455 = vmatpush.msra.mxu0 0.0
  %456 = vmatpush.msra.mxu0 0.0
  %457 = vmatpush.msra.mxu0 0.0
  %458 = vmatpush.msra.mxu0 0.0
  %459 = vmatpush.msra.mxu0 0.0
  %460 = vmatpush.msra.mxu0 0.0
  %461 = vmatpush.msra.mxu0 0.0
  %462 = vmatpush.msra.mxu0 0.0
  %463 = vmatpush.msra.mxu0 0.0
  %464 = vmatpush.msra.mxu0 0.0
  %465 = vmatpush.msra.mxu0 0.0
  %466 = vmatpush.msra.mxu0 0.0
  %467 = vmatpush.msra.mxu0 0.0
  %468 = vmatpush.msra.mxu0 0.0
  %469 = vmatpush.msra.mxu0 %v144
  %470 = vmatmul.f32.gmra.mxu0 %v112
  %v471 = vpop.f32.mrf.mxu0
  %v472 = vadd.f32 %v50, %v471
  %473 = vmatmul.f32.gmra.mxu0 %v115
  %v474 = vpop.f32.mrf.mxu0
  %v475 = vadd.f32 %v55, %v474
  %476 = vmatmul.f32.gmra.mxu0 %v118
  %v477 = vpop.f32.mrf.mxu0
  %v478 = vadd.f32 %v60, %v477
  %479 = vmatmul.f32.gmra.mxu0 %v121
  %v480 = vpop.f32.mrf.mxu0
  %v481 = vadd.f32 %v65, %v480
  %482 = vdwg.mxu0
  %483 = vmatpush.msra.mxu0 0.0
  %484 = vmatpush.msra.mxu0 0.0
  %485 = vmatpush.msra.mxu0 0.0
  %486 = vmatpush.msra.mxu0 0.0
  %487 = vmatpush.msra.mxu0 0.0
  %488 = vmatpush.msra.mxu0 0.0
  %489 = vmatpush.msra.mxu0 0.0
  %490 = vmatpush.msra.mxu0 0.0
  %491 = vmatpush.msra.mxu0 0.0
  %492 = vmatpush.msra.mxu0 0.0
  %493 = vmatpush.msra.mxu0 0.0
  %494 = vmatpush.msra.mxu0 0.0
  %495 = vmatpush.msra.mxu0 0.0
  %496 = vmatpush.msra.mxu0 0.0
  %497 = vmatpush.msra.mxu0 0.0
  %498 = vmatpush.msra.mxu0 %v146
  %499 = vmatmul.f32.gmra.mxu0 %v112
  %v500 = vpop.f32.mrf.mxu0
  %v501 = vadd.f32 %v50, %v500
  %502 = vmatmul.f32.gmra.mxu0 %v115
  %v503 = vpop.f32.mrf.mxu0
  %v504 = vadd.f32 %v55, %v503
  %505 = vmatmul.f32.gmra.mxu0 %v118
  %v506 = vpop.f32.mrf.mxu0
  %v507 = vadd.f32 %v60, %v506
  %508 = vmatmul.f32.gmra.mxu0 %v121
  %v509 = vpop.f32.mrf.mxu0
  %v510 = vadd.f32 %v65, %v509
  %511 = vdwg.mxu0
  %512 = vmatpush.msra.mxu0 0.0
  %513 = vmatpush.msra.mxu0 0.0
  %514 = vmatpush.msra.mxu0 0.0
  %515 = vmatpush.msra.mxu0 0.0
  %516 = vmatpush.msra.mxu0 0.0
  %517 = vmatpush.msra.mxu0 0.0
  %518 = vmatpush.msra.mxu0 0.0
  %519 = vmatpush.msra.mxu0 0.0
  %520 = vmatpush.msra.mxu0 0.0
  %521 = vmatpush.msra.mxu0 0.0
  %522 = vmatpush.msra.mxu0 0.0
  %523 = vmatpush.msra.mxu0 0.0
  %524 = vmatpush.msra.mxu0 0.0
  %525 = vmatpush.msra.mxu0 0.0
  %526 = vmatpush.msra.mxu0 0.0
  %527 = vmatpush.msra.mxu0 %v148
  %528 = vmatmul.f32.gmra.mxu0 %v112
  %v529 = vpop.f32.mrf.mxu0
  %v530 = vadd.f32 %v50, %v529
  %531 = vmatmul.f32.gmra.mxu0 %v115
  %v532 = vpop.f32.mrf.mxu0
  %v533 = vadd.f32 %v55, %v532
  %534 = vmatmul.f32.gmra.mxu0 %v118
  %v535 = vpop.f32.mrf.mxu0
  %v536 = vadd.f32 %v60, %v535
  %537 = vmatmul.f32.gmra.mxu0 %v121
  %v538 = vpop.f32.mrf.mxu0
  %v539 = vadd.f32 %v65, %v538
  %540 = vdwg.mxu0
  %541 = vmatpush.msra.mxu0 0.0
  %542 = vmatpush.msra.mxu0 0.0
  %543 = vmatpush.msra.mxu0 0.0
  %544 = vmatpush.msra.mxu0 0.0
  %545 = vmatpush.msra.mxu0 0.0
  %546 = vmatpush.msra.mxu0 0.0
  %547 = vmatpush.msra.mxu0 0.0
  %548 = vmatpush.msra.mxu0 0.0
  %549 = vmatpush.msra.mxu0 0.0
  %550 = vmatpush.msra.mxu0 0.0
  %551 = vmatpush.msra.mxu0 0.0
  %552 = vmatpush.msra.mxu0 0.0
  %553 = vmatpush.msra.mxu0 0.0
  %554 = vmatpush.msra.mxu0 0.0
  %555 = vmatpush.msra.mxu0 0.0
  %556 = vmatpush.msra.mxu0 %v150
  %557 = vmatmul.f32.gmra.mxu0 %v112
  %v558 = vpop.f32.mrf.mxu0
  %v559 = vadd.f32 %v50, %v558
  %560 = vmatmul.f32.gmra.mxu0 %v115
  %v561 = vpop.f32.mrf.mxu0
  %v562 = vadd.f32 %v55, %v561
  %563 = vmatmul.f32.gmra.mxu0 %v118
  %v564 = vpop.f32.mrf.mxu0
  %v565 = vadd.f32 %v60, %v564
  %566 = vmatmul.f32.gmra.mxu0 %v121
  %v567 = vpop.f32.mrf.mxu0
  %v568 = vadd.f32 %v65, %v567
  %569 = vdwg.mxu0
  %570 = vmatpush.msra.mxu0 0.0
  %571 = vmatpush.msra.mxu0 0.0
  %572 = vmatpush.msra.mxu0 0.0
  %573 = vmatpush.msra.mxu0 0.0
  %574 = vmatpush.msra.mxu0 0.0
  %575 = vmatpush.msra.mxu0 0.0
  %576 = vmatpush.msra.mxu0 0.0
  %577 = vmatpush.msra.mxu0 0.0
  %578 = vmatpush.msra.mxu0 0.0
  %579 = vmatpush.msra.mxu0 0.0
  %580 = vmatpush.msra.mxu0 0.0
  %581 = vmatpush.msra.mxu0 0.0
  %582 = vmatpush.msra.mxu0 0.0
  %583 = vmatpush.msra.mxu0 0.0
  %584 = vmatpush.msra.mxu0 0.0
  %585 = vmatpush.msra.mxu0 %v152
  %586 = vmatmul.f32.gmra.mxu0 %v112
  %v587 = vpop.f32.mrf.mxu0
  %v588 = vadd.f32 %v50, %v587
  %589 = vmatmul.f32.gmra.mxu0 %v115
  %v590 = vpop.f32.mrf.mxu0
  %v591 = vadd.f32 %v55, %v590
  %592 = vmatmul.f32.gmra.mxu0 %v118
  %v593 = vpop.f32.mrf.mxu0
  %v594 = vadd.f32 %v60, %v593
  %595 = vmatmul.f32.gmra.mxu0 %v121
  %v596 = vpop.f32.mrf.mxu0
  %v597 = vadd.f32 %v65, %v596
  %598 = vdwg.mxu0
  %599 = vmatpush.msra.mxu0 0.0
  %600 = vmatpush.msra.mxu0 0.0
  %601 = vmatpush.msra.mxu0 0.0
  %602 = vmatpush.msra.mxu0 0.0
  %603 = vmatpush.msra.mxu0 0.0
  %604 = vmatpush.msra.mxu0 0.0
  %605 = vmatpush.msra.mxu0 0.0
  %606 = vmatpush.msra.mxu0 0.0
  %607 = vmatpush.msra.mxu0 0.0
  %608 = vmatpush.msra.mxu0 0.0
  %609 = vmatpush.msra.mxu0 0.0
  %610 = vmatpush.msra.mxu0 0.0
  %611 = vmatpush.msra.mxu0 0.0
  %612 = vmatpush.msra.mxu0 0.0
  %613 = vmatpush.msra.mxu0 0.0
  %614 = vmatpush.msra.mxu0 %v154
  %615 = vmatmul.f32.gmra.mxu0 %v112
  %v616 = vpop.f32.mrf.mxu0
  %v617 = vadd.f32 %v50, %v616
  %618 = vmatmul.f32.gmra.mxu0 %v115
  %v619 = vpop.f32.mrf.mxu0
  %v620 = vadd.f32 %v55, %v619
  %621 = vmatmul.f32.gmra.mxu0 %v118
  %v622 = vpop.f32.mrf.mxu0
  %v623 = vadd.f32 %v60, %v622
  %624 = vmatmul.f32.gmra.mxu0 %v121
  %v625 = vpop.f32.mrf.mxu0
  %v626 = vadd.f32 %v65, %v625
  %627 = vdwg.mxu0
  %628 = vmatpush.msra.mxu0 0.0
  %629 = vmatpush.msra.mxu0 0.0
  %630 = vmatpush.msra.mxu0 0.0
  %631 = vmatpush.msra.mxu0 0.0
  %632 = vmatpush.msra.mxu0 0.0
  %633 = vmatpush.msra.mxu0 0.0
  %634 = vmatpush.msra.mxu0 0.0
  %635 = vmatpush.msra.mxu0 0.0
  %636 = vmatpush.msra.mxu0 0.0
  %637 = vmatpush.msra.mxu0 0.0
  %638 = vmatpush.msra.mxu0 0.0
  %639 = vmatpush.msra.mxu0 0.0
  %640 = vmatpush.msra.mxu0 0.0
  %641 = vmatpush.msra.mxu0 0.0
  %642 = vmatpush.msra.mxu0 0.0
  %643 = vmatpush.msra.mxu0 %v156
  %644 = vmatmul.f32.gmra.mxu0 %v112
  %v645 = vpop.f32.mrf.mxu0
  %v646 = vadd.f32 %v50, %v645
  %647 = vmatmul.f32.gmra.mxu0 %v115
  %v648 = vpop.f32.mrf.mxu0
  %v649 = vadd.f32 %v55, %v648
  %650 = vmatmul.f32.gmra.mxu0 %v118
  %v651 = vpop.f32.mrf.mxu0
  %v652 = vadd.f32 %v60, %v651
  %653 = vmatmul.f32.gmra.mxu0 %v121
  %v654 = vpop.f32.mrf.mxu0
  %v655 = vadd.f32 %v65, %v654
  %656 = vdwg.mxu0
  %657 = vmatpush.msra.mxu0 0.0
  %658 = vmatpush.msra.mxu0 0.0
  %659 = vmatpush.msra.mxu0 0.0
  %660 = vmatpush.msra.mxu0 0.0
  %661 = vmatpush.msra.mxu0 0.0
  %662 = vmatpush.msra.mxu0 0.0
  %663 = vmatpush.msra.mxu0 0.0
  %664 = vmatpush.msra.mxu0 0.0
  %665 = vmatpush.msra.mxu0 0.0
  %666 = vmatpush.msra.mxu0 0.0
  %667 = vmatpush.msra.mxu0 0.0
  %668 = vmatpush.msra.mxu0 0.0
  %669 = vmatpush.msra.mxu0 0.0
  %670 = vmatpush.msra.mxu0 0.0
  %671 = vmatpush.msra.mxu0 0.0
  %672 = vmatpush.msra.mxu0 %v158
  %673 = vmatmul.f32.gmra.mxu0 %v112
  %v674 = vpop.f32.mrf.mxu0
  %v675 = vadd.f32 %v50, %v674
  %676 = vmatmul.f32.gmra.mxu0 %v115
  %v677 = vpop.f32.mrf.mxu0
  %v678 = vadd.f32 %v55, %v677
  %679 = vmatmul.f32.gmra.mxu0 %v118
  %v680 = vpop.f32.mrf.mxu0
  %v681 = vadd.f32 %v60, %v680
  %682 = vmatmul.f32.gmra.mxu0 %v121
  %v683 = vpop.f32.mrf.mxu0
  %v684 = vadd.f32 %v65, %v683
  %685 = vdwg.mxu0
  %686 = vmatpush.msra.mxu0 0.0
  %687 = vmatpush.msra.mxu0 0.0
  %688 = vmatpush.msra.mxu0 0.0
  %689 = vmatpush.msra.mxu0 0.0
  %690 = vmatpush.msra.mxu0 0.0
  %691 = vmatpush.msra.mxu0 0.0
  %692 = vmatpush.msra.mxu0 0.0
  %693 = vmatpush.msra.mxu0 0.0
  %694 = vmatpush.msra.mxu0 0.0
  %695 = vmatpush.msra.mxu0 0.0
  %696 = vmatpush.msra.mxu0 0.0
  %697 = vmatpush.msra.mxu0 0.0
  %698 = vmatpush.msra.mxu0 0.0
  %699 = vmatpush.msra.mxu0 0.0
  %700 = vmatpush.msra.mxu0 0.0
  %701 = vmatpush.msra.mxu0 %v160
  %702 = vmatmul.f32.gmra.mxu0 %v112
  %v703 = vpop.f32.mrf.mxu0
  %v704 = vadd.f32 %v50, %v703
  %705 = vmatmul.f32.gmra.mxu0 %v115
  %v706 = vpop.f32.mrf.mxu0
  %v707 = vadd.f32 %v55, %v706
  %708 = vmatmul.f32.gmra.mxu0 %v118
  %v709 = vpop.f32.mrf.mxu0
  %v710 = vadd.f32 %v60, %v709
  %711 = vmatmul.f32.gmra.mxu0 %v121
  %v712 = vpop.f32.mrf.mxu0
  %v713 = vadd.f32 %v65, %v712
  %714 = vdwg.mxu0
  %715 = vmatpush.msra.mxu0 0.0
  %716 = vmatpush.msra.mxu0 0.0
  %717 = vmatpush.msra.mxu0 0.0
  %718 = vmatpush.msra.mxu0 0.0
  %719 = vmatpush.msra.mxu0 0.0
  %720 = vmatpush.msra.mxu0 0.0
  %721 = vmatpush.msra.mxu0 0.0
  %722 = vmatpush.msra.mxu0 0.0
  %723 = vmatpush.msra.mxu0 0.0
  %724 = vmatpush.msra.mxu0 0.0
  %725 = vmatpush.msra.mxu0 0.0
  %726 = vmatpush.msra.mxu0 0.0
  %727 = vmatpush.msra.mxu0 0.0
  %728 = vmatpush.msra.mxu0 0.0
  %729 = vmatpush.msra.mxu0 0.0
  %730 = vmatpush.msra.mxu0 %v162
  %731 = vmatmul.f32.gmra.mxu0 %v112
  %v732 = vpop.f32.mrf.mxu0
  %v733 = vadd.f32 %v50, %v732
  %734 = vmatmul.f32.gmra.mxu0 %v115
  %v735 = vpop.f32.mrf.mxu0
  %v736 = vadd.f32 %v55, %v735
  %737 = vmatmul.f32.gmra.mxu0 %v118
  %v738 = vpop.f32.mrf.mxu0
  %v739 = vadd.f32 %v60, %v738
  %740 = vmatmul.f32.gmra.mxu0 %v121
  %v741 = vpop.f32.mrf.mxu0
  %v742 = vadd.f32 %v65, %v741
  %743 = vdwg.mxu0
  %v744 = vmax.f32 %v182, 0.0
  %v745 = vmax.f32 %v211, 0.0
  %v746 = vmax.f32 %v240, 0.0
  %v747 = vmax.f32 %v269, 0.0
  %v748 = vmax.f32 %v298, 0.0
  %v749 = vmax.f32 %v327, 0.0
  %v750 = vmax.f32 %v356, 0.0
  %v751 = vmax.f32 %v385, 0.0
  %v752 = vmax.f32 %v414, 0.0
  %v753 = vmax.f32 %v443, 0.0
  %v754 = vmax.f32 %v472, 0.0
  %v755 = vmax.f32 %v501, 0.0
  %v756 = vmax.f32 %v530, 0.0
  %v757 = vmax.f32 %v559, 0.0
  %v758 = vmax.f32 %v588, 0.0
  %v759 = vmax.f32 %v617, 0.0
  %v760 = vmax.f32 %v646, 0.0
  %v761 = vmax.f32 %v675, 0.0
  %v762 = vmax.f32 %v704, 0.0
  %v763 = vmax.f32 %v733, 0.0
  %v764 = vmax.f32 %v185, 0.0
  %v765 = vmax.f32 %v214, 0.0
  %v766 = vmax.f32 %v243, 0.0
  %v767 = vmax.f32 %v272, 0.0
  %v768 = vmax.f32 %v301, 0.0
  %v769 = vmax.f32 %v330, 0.0
  %v770 = vmax.f32 %v359, 0.0
  %v771 = vmax.f32 %v388, 0.0
  %v772 = vmax.f32 %v417, 0.0
  %v773 = vmax.f32 %v446, 0.0
  %v774 = vmax.f32 %v475, 0.0
  %v775 = vmax.f32 %v504, 0.0
  %v776 = vmax.f32 %v533, 0.0
  %v777 = vmax.f32 %v562, 0.0
  %v778 = vmax.f32 %v591, 0.0
  %v779 = vmax.f32 %v620, 0.0
  %v780 = vmax.f32 %v649, 0.0
  %v781 = vmax.f32 %v678, 0.0
  %v782 = vmax.f32 %v707, 0.0
  %v783 = vmax.f32 %v736, 0.0
  %v784 = vmax.f32 %v188, 0.0
  %v785 = vmax.f32 %v217, 0.0
  %v786 = vmax.f32 %v246, 0.0
  %v787 = vmax.f32 %v275, 0.0
  %v788 = vmax.f32 %v304, 0.0
  %v789 = vmax.f32 %v333, 0.0
  %v790 = vmax.f32 %v362, 0.0
  %v791 = vmax.f32 %v391, 0.0
  %v792 = vmax.f32 %v420, 0.0
  %v793 = vmax.f32 %v449, 0.0
  %v794 = vmax.f32 %v478, 0.0
  %v795 = vmax.f32 %v507, 0.0
  %v796 = vmax.f32 %v536, 0.0
  %v797 = vmax.f32 %v565, 0.0
  %v798 = vmax.f32 %v594, 0.0
  %v799 = vmax.f32 %v623, 0.0
  %v800 = vmax.f32 %v652, 0.0
  %v801 = vmax.f32 %v681, 0.0
  %v802 = vmax.f32 %v710, 0.0
  %v803 = vmax.f32 %v739, 0.0
  %v804 = vmax.f32 %v191, 0.0
  %v805 = vmax.f32 %v220, 0.0
  %v806 = vmax.f32 %v249, 0.0
  %v807 = vmax.f32 %v278, 0.0
  %v808 = vmax.f32 %v307, 0.0
  %v809 = vmax.f32 %v336, 0.0
  %v810 = vmax.f32 %v365, 0.0
  %v811 = vmax.f32 %v394, 0.0
  %v812 = vmax.f32 %v423, 0.0
  %v813 = vmax.f32 %v452, 0.0
  %v814 = vmax.f32 %v481, 0.0
  %v815 = vmax.f32 %v510, 0.0
  %v816 = vmax.f32 %v539, 0.0
  %v817 = vmax.f32 %v568, 0.0
  %v818 = vmax.f32 %v597, 0.0
  %v819 = vmax.f32 %v626, 0.0
  %v820 = vmax.f32 %v655, 0.0
  %v821 = vmax.f32 %v684, 0.0
  %v822 = vmax.f32 %v713, 0.0
  %v823 = vmax.f32 %v742, 0.0
  %v824 = vld [vmem:[%s3] sm:$0xff]
  %v825 = vld [vmem:[%s3 + $0x8] sm:$0xff]
  %v826 = vld [vmem:[%s3 + $0x10] sm:$0xff]
  %v827 = vld [vmem:[%s3 + $0x18] sm:$0xff]
  %v828 = vld [vmem:[%s3 + $0x20] sm:$0xff]
  %v829 = vld [vmem:[%s3 + $0x28] sm:$0xff]
  %v830 = vld [vmem:[%s3 + $0x30] sm:$0xff]
  %v831 = vld [vmem:[%s3 + $0x38] sm:$0xff]
  %v832 = vld [vmem:[%s3 + $0x40] sm:$0xff]
  %v833 = vld [vmem:[%s3 + $0x48] sm:$0xff]
  %v834 = vld [vmem:[%s3 + $0x50] sm:$0xff]
  %v835 = vld [vmem:[%s3 + $0x58] sm:$0xff]
  %v836 = vld [vmem:[%s3 + $0x60] sm:$0xff]
  %v837 = vld [vmem:[%s3 + $0x68] sm:$0xff]
  %v838 = vld [vmem:[%s3 + $0x70] sm:$0xff]
  %v839 = vld [vmem:[%s3 + $0x78] sm:$0xff]
  %v840 = vld [vmem:[%s3 + $0x80] sm:$0xff]
  %v841 = vld [vmem:[%s3 + $0x88] sm:$0xff]
  %v842 = vld [vmem:[%s3 + $0x90] sm:$0xff]
  %v843 = vld [vmem:[%s3 + $0x98] sm:$0xff]
  %v844 = vld [vmem:[%s3 + $0xa0] sm:$0xff]
  %v845 = vld [vmem:[%s3 + $0xa8] sm:$0xff]
  %v846 = vld [vmem:[%s3 + $0xb0] sm:$0xff]
  %v847 = vld [vmem:[%s3 + $0xb8] sm:$0xff]
  %v848 = vld [vmem:[%s3 + $0xc0] sm:$0xff]
  %v849 = vld [vmem:[%s3 + $0xc8] sm:$0xff]
  %v850 = vld [vmem:[%s3 + $0xd0] sm:$0xff]
  %v851 = vld [vmem:[%s3 + $0xd8] sm:$0xff]
  %v852 = vld [vmem:[%s3 + $0xe0] sm:$0xff]
  %v853 = vld [vmem:[%s3 + $0xe8] sm:$0xff]
  %v854 = vld [vmem:[%s3 + $0xf0] sm:$0xff]
  %v855 = vld [vmem:[%s3 + $0xf8] sm:$0xff]
  %v856 = vld [vmem:[%s3 + $0x100] sm:$0xff]
  %v857 = vld [vmem:[%s3 + $0x108] sm:$0xff]
  %v858 = vld [vmem:[%s3 + $0x110] sm:$0xff]
  %v859 = vld [vmem:[%s3 + $0x118] sm:$0xff]
  %v860 = vld [vmem:[%s3 + $0x120] sm:$0xff]
  %v861 = vld [vmem:[%s3 + $0x128] sm:$0xff]
  %v862 = vld [vmem:[%s3 + $0x130] sm:$0xff]
  %v863 = vld [vmem:[%s3 + $0x138] sm:$0xff]
  %v864 = vld [vmem:[%s3 + $0x140] sm:$0xff]
  %v865 = vld [vmem:[%s3 + $0x148] sm:$0xff]
  %v866 = vld [vmem:[%s3 + $0x150] sm:$0xff]
  %v867 = vld [vmem:[%s3 + $0x158] sm:$0xff]
  %v868 = vld [vmem:[%s3 + $0x160] sm:$0xff]
  %v869 = vld [vmem:[%s3 + $0x168] sm:$0xff]
  %v870 = vld [vmem:[%s3 + $0x170] sm:$0xff]
  %v871 = vld [vmem:[%s3 + $0x178] sm:$0xff]
  %v872 = vld [vmem:[%s3 + $0x180] sm:$0xff]
  %v873 = vld [vmem:[%s3 + $0x188] sm:$0xff]
  %v874 = vld [vmem:[%s3 + $0x190] sm:$0xff]
  %v875 = vld [vmem:[%s3 + $0x198] sm:$0xff]
  %v876 = vld [vmem:[%s3 + $0x1a0] sm:$0xff]
  %v877 = vld [vmem:[%s3 + $0x1a8] sm:$0xff]
  %v878 = vld [vmem:[%s3 + $0x1b0] sm:$0xff]
  %v879 = vld [vmem:[%s3 + $0x1b8] sm:$0xff]
  %v880 = vld [vmem:[%s3 + $0x1c0] sm:$0xff]
  %v881 = vld [vmem:[%s3 + $0x1c8] sm:$0xff]
  %v882 = vld [vmem:[%s3 + $0x1d0] sm:$0xff]
  %v883 = vld [vmem:[%s3 + $0x1d8] sm:$0xff]
  %v884 = vld [vmem:[%s3 + $0x1e0] sm:$0xff]
  %v885 = vld [vmem:[%s3 + $0x1e8] sm:$0xff]
  %v886 = vld [vmem:[%s3 + $0x1f0] sm:$0xff]
  %v887 = vld [vmem:[%s3 + $0x1f8] sm:$0xff]
  %888 = vmatpush.msra.mxu0 %v839
  %889 = vmatpush.msra.mxu0 %v838
  %890 = vmatpush.msra.mxu0 %v837
  %891 = vmatpush.msra.mxu0 %v836
  %892 = vmatpush.msra.mxu0 %v835
  %893 = vmatpush.msra.mxu0 %v834
  %894 = vmatpush.msra.mxu0 %v833
  %895 = vmatpush.msra.mxu0 %v832
  %896 = vmatpush.msra.mxu0 %v831
  %897 = vmatpush.msra.mxu0 %v830
  %898 = vmatpush.msra.mxu0 %v829
  %899 = vmatpush.msra.mxu0 %v828
  %900 = vmatpush.msra.mxu0 %v827
  %901 = vmatpush.msra.mxu0 %v826
  %902 = vmatpush.msra.mxu0 %v825
  %903 = vmatpush.msra.mxu0 %v824
  %904 = vmatmul.f32.gmra.mxu0 %v744
  %v905 = vpop.f32.mrf.mxu0
  %v906 = vadd.f32 0.0, %v905
  %907 = vmatmul.f32.gmra.mxu0 %v764
  %v908 = vpop.f32.mrf.mxu0
  %v909 = vadd.f32 0.0, %v908
  %910 = vmatmul.f32.gmra.mxu0 %v784
  %v911 = vpop.f32.mrf.mxu0
  %v912 = vadd.f32 0.0, %v911
  %913 = vmatmul.f32.gmra.mxu0 %v804
  %v914 = vpop.f32.mrf.mxu0
  %v915 = vadd.f32 0.0, %v914
  %916 = vdwg.mxu0
  %917 = vmatpush.msra.mxu0 %v855
  %918 = vmatpush.msra.mxu0 %v854
  %919 = vmatpush.msra.mxu0 %v853
  %920 = vmatpush.msra.mxu0 %v852
  %921 = vmatpush.msra.mxu0 %v851
  %922 = vmatpush.msra.mxu0 %v850
  %923 = vmatpush.msra.mxu0 %v849
  %924 = vmatpush.msra.mxu0 %v848
  %925 = vmatpush.msra.mxu0 %v847
  %926 = vmatpush.msra.mxu0 %v846
  %927 = vmatpush.msra.mxu0 %v845
  %928 = vmatpush.msra.mxu0 %v844
  %929 = vmatpush.msra.mxu0 %v843
  %930 = vmatpush.msra.mxu0 %v842
  %931 = vmatpush.msra.mxu0 %v841
  %932 = vmatpush.msra.mxu0 %v840
  %933 = vmatmul.f32.gmra.mxu0 %v745
  %v934 = vpop.f32.mrf.mxu0
  %v935 = vadd.f32 %v906, %v934
  %936 = vmatmul.f32.gmra.mxu0 %v765
  %v937 = vpop.f32.mrf.mxu0
  %v938 = vadd.f32 %v909, %v937
  %939 = vmatmul.f32.gmra.mxu0 %v785
  %v940 = vpop.f32.mrf.mxu0
  %v941 = vadd.f32 %v912, %v940
  %942 = vmatmul.f32.gmra.mxu0 %v805
  %v943 = vpop.f32.mrf.mxu0
  %v944 = vadd.f32 %v915, %v943
  %945 = vdwg.mxu0
  %946 = vmatpush.msra.mxu0 %v871
  %947 = vmatpush.msra.mxu0 %v870
  %948 = vmatpush.msra.mxu0 %v869
  %949 = vmatpush.msra.mxu0 %v868
  %950 = vmatpush.msra.mxu0 %v867
  %951 = vmatpush.msra.mxu0 %v866
  %952 = vmatpush.msra.mxu0 %v865
  %953 = vmatpush.msra.mxu0 %v864
  %954 = vmatpush.msra.mxu0 %v863
  %955 = vmatpush.msra.mxu0 %v862
  %956 = vmatpush.msra.mxu0 %v861
  %957 = vmatpush.msra.mxu0 %v860
  %958 = vmatpush.msra.mxu0 %v859
  %959 = vmatpush.msra.mxu0 %v858
  %960 = vmatpush.msra.mxu0 %v857
  %961 = vmatpush.msra.mxu0 %v856
  %962 = vmatmul.f32.gmra.mxu0 %v746
  %v963 = vpop.f32.mrf.mxu0
  %v964 = vadd.f32 %v935, %v963
  %965 = vmatmul.f32.gmra.mxu0 %v766
  %v966 = vpop.f32.mrf.mxu0
  %v967 = vadd.f32 %v938, %v966
  %968 = vmatmul.f32.gmra.mxu0 %v786
  %v969 = vpop.f32.mrf.mxu0
  %v970 = vadd.f32 %v941, %v969
  %971 = vmatmul.f32.gmra.mxu0 %v806
  %v972 = vpop.f32.mrf.mxu0
  %v973 = vadd.f32 %v944, %v972
  %974 = vdwg.mxu0
  %975 = vmatpush.msra.mxu0 %v887
  %976 = vmatpush.msra.mxu0 %v886
  %977 = vmatpush.msra.mxu0 %v885
  %978 = vmatpush.msra.mxu0 %v884
  %979 = vmatpush.msra.mxu0 %v883
  %980 = vmatpush.msra.mxu0 %v882
  %981 = vmatpush.msra.mxu0 %v881
  %982 = vmatpush.msra.mxu0 %v880
  %983 = vmatpush.msra.mxu0 %v879
  %984 = vmatpush.msra.mxu0 %v878
  %985 = vmatpush.msra.mxu0 %v877
  %986 = vmatpush.msra.mxu0 %v876
  %987 = vmatpush.msra.mxu0 %v875
  %988 = vmatpush.msra.mxu0 %v874
  %989 = vmatpush.msra.mxu0 %v873
  %990 = vmatpush.msra.mxu0 %v872
  %991 = vmatmul.f32.gmra.mxu0 %v747
  %v992 = vpop.f32.mrf.mxu0
  %v993 = vadd.f32 %v964, %v992
  %994 = vmatmul.f32.gmra.mxu0 %v767
  %v995 = vpop.f32.mrf.mxu0
  %v996 = vadd.f32 %v967, %v995
  %997 = vmatmul.f32.gmra.mxu0 %v787
  %v998 = vpop.f32.mrf.mxu0
  %v999 = vadd.f32 %v970, %v998
  %1000 = vmatmul.f32.gmra.mxu0 %v807
  %v1001 = vpop.f32.mrf.mxu0
  %v1002 = vadd.f32 %v973, %v1001
  %1003 = vdwg.mxu0
  %v1004 = vld [vmem:[%s4] sm:$0xff]
  %v1005 = vld [vmem:[%s4 + $0x8] sm:$0xff]
  %v1006 = vld [vmem:[%s4 + $0x10] sm:$0xff]
  %v1007 = vld [vmem:[%s4 + $0x18] sm:$0xff]
  %v1008 = vld [vmem:[%s4 + $0x20] sm:$0xff]
  %v1009 = vld [vmem:[%s4 + $0x28] sm:$0xff]
  %v1010 = vld [vmem:[%s4 + $0x30] sm:$0xff]
  %v1011 = vld [vmem:[%s4 + $0x38] sm:$0xff]
  %v1012 = vld [vmem:[%s4 + $0x40] sm:$0xff]
  %v1013 = vld [vmem:[%s4 + $0x48] sm:$0xff]
  %v1014 = vld [vmem:[%s4 + $0x50] sm:$0xff]
  %v1015 = vld [vmem:[%s4 + $0x58] sm:$0xff]
  %v1016 = vld [vmem:[%s4 + $0x60] sm:$0xff]
  %v1017 = vld [vmem:[%s4 + $0x68] sm:$0xff]
  %v1018 = vld [vmem:[%s4 + $0x70] sm:$0xff]
  %v1019 = vld [vmem:[%s4 + $0x78] sm:$0xff]
  %v1020 = vld [vmem:[%s4 + $0x80] sm:$0xff]
  %v1021 = vld [vmem:[%s4 + $0x88] sm:$0xff]
  %v1022 = vld [vmem:[%s4 + $0x90] sm:$0xff]
  %v1023 = vld [vmem:[%s4 + $0x98] sm:$0xff]
  %v1024 = vld [vmem:[%s4 + $0xa0] sm:$0xff]
  %v1025 = vld [vmem:[%s4 + $0xa8] sm:$0xff]
  %v1026 = vld [vmem:[%s4 + $0xb0] sm:$0xff]
  %v1027 = vld [vmem:[%s4 + $0xb8] sm:$0xff]
  %v1028 = vld [vmem:[%s4 + $0xc0] sm:$0xff]
  %v1029 = vld [vmem:[%s4 + $0xc8] sm:$0xff]
  %v1030 = vld [vmem:[%s4 + $0xd0] sm:$0xff]
  %v1031 = vld [vmem:[%s4 + $0xd8] sm:$0xff]
  %v1032 = vld [vmem:[%s4 + $0xe0] sm:$0xff]
  %v1033 = vld [vmem:[%s4 + $0xe8] sm:$0xff]
  %v1034 = vld [vmem:[%s4 + $0xf0] sm:$0xff]
  %v1035 = vld [vmem:[%s4 + $0xf8] sm:$0xff]
  %v1036 = vld [vmem:[%s4 + $0x100] sm:$0xff]
  %v1037 = vld [vmem:[%s4 + $0x108] sm:$0xff]
  %v1038 = vld [vmem:[%s4 + $0x110] sm:$0xff]
  %v1039 = vld [vmem:[%s4 + $0x118] sm:$0xff]
  %v1040 = vld [vmem:[%s4 + $0x120] sm:$0xff]
  %v1041 = vld [vmem:[%s4 + $0x128] sm:$0xff]
  %v1042 = vld [vmem:[%s4 + $0x130] sm:$0xff]
  %v1043 = vld [vmem:[%s4 + $0x138] sm:$0xff]
  %v1044 = vld [vmem:[%s4 + $0x140] sm:$0xff]
  %v1045 = vld [vmem:[%s4 + $0x148] sm:$0xff]
  %v1046 = vld [vmem:[%s4 + $0x150] sm:$0xff]
  %v1047 = vld [vmem:[%s4 + $0x158] sm:$0xff]
  %v1048 = vld [vmem:[%s4 + $0x160] sm:$0xff]
  %v1049 = vld [vmem:[%s4 + $0x168] sm:$0xff]
  %v1050 = vld [vmem:[%s4 + $0x170] sm:$0xff]
  %v1051 = vld [vmem:[%s4 + $0x178] sm:$0xff]
  %v1052 = vld [vmem:[%s4 + $0x180] sm:$0xff]
  %v1053 = vld [vmem:[%s4 + $0x188] sm:$0xff]
  %v1054 = vld [vmem:[%s4 + $0x190] sm:$0xff]
  %v1055 = vld [vmem:[%s4 + $0x198] sm:$0xff]
  %v1056 = vld [vmem:[%s4 + $0x1a0] sm:$0xff]
  %v1057 = vld [vmem:[%s4 + $0x1a8] sm:$0xff]
  %v1058 = vld [vmem:[%s4 + $0x1b0] sm:$0xff]
  %v1059 = vld [vmem:[%s4 + $0x1b8] sm:$0xff]
  %v1060 = vld [vmem:[%s4 + $0x1c0] sm:$0xff]
  %v1061 = vld [vmem:[%s4 + $0x1c8] sm:$0xff]
  %v1062 = vld [vmem:[%s4 + $0x1d0] sm:$0xff]
  %v1063 = vld [vmem:[%s4 + $0x1d8] sm:$0xff]
  %v1064 = vld [vmem:[%s4 + $0x1e0] sm:$0xff]
  %v1065 = vld [vmem:[%s4 + $0x1e8] sm:$0xff]
  %v1066 = vld [vmem:[%s4 + $0x1f0] sm:$0xff]
  %v1067 = vld [vmem:[%s4 + $0x1f8] sm:$0xff]
  %v1068 = vld [vmem:[%s4 + $0x200] sm:$0xff]
  %v1069 = vld [vmem:[%s4 + $0x208] sm:$0xff]
  %v1070 = vld [vmem:[%s4 + $0x210] sm:$0xff]
  %v1071 = vld [vmem:[%s4 + $0x218] sm:$0xff]
  %v1072 = vld [vmem:[%s4 + $0x220] sm:$0xff]
  %v1073 = vld [vmem:[%s4 + $0x228] sm:$0xff]
  %v1074 = vld [vmem:[%s4 + $0x230] sm:$0xff]
  %v1075 = vld [vmem:[%s4 + $0x238] sm:$0xff]
  %v1076 = vld [vmem:[%s4 + $0x240] sm:$0xff]
  %v1077 = vld [vmem:[%s4 + $0x248] sm:$0xff]
  %v1078 = vld [vmem:[%s4 + $0x250] sm:$0xff]
  %v1079 = vld [vmem:[%s4 + $0x258] sm:$0xff]
  %v1080 = vld [vmem:[%s4 + $0x260] sm:$0xff]
  %v1081 = vld [vmem:[%s4 + $0x268] sm:$0xff]
  %v1082 = vld [vmem:[%s4 + $0x270] sm:$0xff]
  %v1083 = vld [vmem:[%s4 + $0x278] sm:$0xff]
  %v1084 = vld [vmem:[%s4 + $0x280] sm:$0xff]
  %v1085 = vld [vmem:[%s4 + $0x288] sm:$0xff]
  %v1086 = vld [vmem:[%s4 + $0x290] sm:$0xff]
  %v1087 = vld [vmem:[%s4 + $0x298] sm:$0xff]
  %v1088 = vld [vmem:[%s4 + $0x2a0] sm:$0xff]
  %v1089 = vld [vmem:[%s4 + $0x2a8] sm:$0xff]
  %v1090 = vld [vmem:[%s4 + $0x2b0] sm:$0xff]
  %v1091 = vld [vmem:[%s4 + $0x2b8] sm:$0xff]
  %v1092 = vld [vmem:[%s4 + $0x2c0] sm:$0xff]
  %v1093 = vld [vmem:[%s4 + $0x2c8] sm:$0xff]
  %v1094 = vld [vmem:[%s4 + $0x2d0] sm:$0xff]
  %v1095 = vld [vmem:[%s4 + $0x2d8] sm:$0xff]
  %v1096 = vld [vmem:[%s4 + $0x2e0] sm:$0xff]
  %v1097 = vld [vmem:[%s4 + $0x2e8] sm:$0xff]
  %v1098 = vld [vmem:[%s4 + $0x2f0] sm:$0xff]
  %v1099 = vld [vmem:[%s4 + $0x2f8] sm:$0xff]
  %v1100 = vld [vmem:[%s4 + $0x300] sm:$0xff]
  %v1101 = vld [vmem:[%s4 + $0x308] sm:$0xff]
  %v1102 = vld [vmem:[%s4 + $0x310] sm:$0xff]
  %v1103 = vld [vmem:[%s4 + $0x318] sm:$0xff]
  %v1104 = vld [vmem:[%s4 + $0x320] sm:$0xff]
  %v1105 = vld [vmem:[%s4 + $0x328] sm:$0xff]
  %v1106 = vld [vmem:[%s4 + $0x330] sm:$0xff]
  %v1107 = vld [vmem:[%s4 + $0x338] sm:$0xff]
  %v1108 = vld [vmem:[%s4 + $0x340] sm:$0xff]
  %v1109 = vld [vmem:[%s4 + $0x348] sm:$0xff]
  %v1110 = vld [vmem:[%s4 + $0x350] sm:$0xff]
  %v1111 = vld [vmem:[%s4 + $0x358] sm:$0xff]
  %v1112 = vld [vmem:[%s4 + $0x360] sm:$0xff]
  %v1113 = vld [vmem:[%s4 + $0x368] sm:$0xff]
  %v1114 = vld [vmem:[%s4 + $0x370] sm:$0xff]
  %v1115 = vld [vmem:[%s4 + $0x378] sm:$0xff]
  %v1116 = vld [vmem:[%s4 + $0x380] sm:$0xff]
  %v1117 = vld [vmem:[%s4 + $0x388] sm:$0xff]
  %v1118 = vld [vmem:[%s4 + $0x390] sm:$0xff]
  %v1119 = vld [vmem:[%s4 + $0x398] sm:$0xff]
  %v1120 = vld [vmem:[%s4 + $0x3a0] sm:$0xff]
  %v1121 = vld [vmem:[%s4 + $0x3a8] sm:$0xff]
  %v1122 = vld [vmem:[%s4 + $0x3b0] sm:$0xff]
  %v1123 = vld [vmem:[%s4 + $0x3b8] sm:$0xff]
  %v1124 = vld [vmem:[%s4 + $0x3c0] sm:$0xff]
  %v1125 = vld [vmem:[%s4 + $0x3c8] sm:$0xff]
  %v1126 = vld [vmem:[%s4 + $0x3d0] sm:$0xff]
  %v1127 = vld [vmem:[%s4 + $0x3d8] sm:$0xff]
  %v1128 = vld [vmem:[%s4 + $0x3e0] sm:$0xff]
  %v1129 = vld [vmem:[%s4 + $0x3e8] sm:$0xff]
  %v1130 = vld [vmem:[%s4 + $0x3f0] sm:$0xff]
  %v1131 = vld [vmem:[%s4 + $0x3f8] sm:$0xff]
  %1132 = vmatpush.msra.mxu0 %v839
  %1133 = vmatpush.msra.mxu0 %v838
  %1134 = vmatpush.msra.mxu0 %v837
  %1135 = vmatpush.msra.mxu0 %v836
  %1136 = vmatpush.msra.mxu0 %v835
  %1137 = vmatpush.msra.mxu0 %v834
  %1138 = vmatpush.msra.mxu0 %v833
  %1139 = vmatpush.msra.mxu0 %v832
  %1140 = vmatpush.msra.mxu0 %v831
  %1141 = vmatpush.msra.mxu0 %v830
  %1142 = vmatpush.msra.mxu0 %v829
  %1143 = vmatpush.msra.mxu0 %v828
  %1144 = vmatpush.msra.mxu0 %v827
  %1145 = vmatpush.msra.mxu0 %v826
  %1146 = vmatpush.msra.mxu0 %v825
  %1147 = vmatpush.msra.mxu0 %v824
  %1148 = vmatmul.f32.gmra.mxu0 %v748
  %v1149 = vpop.f32.mrf.mxu0
  %v1150 = vadd.f32 0.0, %v1149
  %1151 = vmatmul.f32.gmra.mxu0 %v768
  %v1152 = vpop.f32.mrf.mxu0
  %v1153 = vadd.f32 0.0, %v1152
  %1154 = vmatmul.f32.gmra.mxu0 %v788
  %v1155 = vpop.f32.mrf.mxu0
  %v1156 = vadd.f32 0.0, %v1155
  %1157 = vmatmul.f32.gmra.mxu0 %v808
  %v1158 = vpop.f32.mrf.mxu0
  %v1159 = vadd.f32 0.0, %v1158
  %1160 = vdwg.mxu0
  %1161 = vmatpush.msra.mxu0 %v855
  %1162 = vmatpush.msra.mxu0 %v854
  %1163 = vmatpush.msra.mxu0 %v853
  %1164 = vmatpush.msra.mxu0 %v852
  %1165 = vmatpush.msra.mxu0 %v851
  %1166 = vmatpush.msra.mxu0 %v850
  %1167 = vmatpush.msra.mxu0 %v849
  %1168 = vmatpush.msra.mxu0 %v848
  %1169 = vmatpush.msra.mxu0 %v847
  %1170 = vmatpush.msra.mxu0 %v846
  %1171 = vmatpush.msra.mxu0 %v845
  %1172 = vmatpush.msra.mxu0 %v844
  %1173 = vmatpush.msra.mxu0 %v843
  %1174 = vmatpush.msra.mxu0 %v842
  %1175 = vmatpush.msra.mxu0 %v841
  %1176 = vmatpush.msra.mxu0 %v840
  %1177 = vmatmul.f32.gmra.mxu0 %v749
  %v1178 = vpop.f32.mrf.mxu0
  %v1179 = vadd.f32 %v1150, %v1178
  %1180 = vmatmul.f32.gmra.mxu0 %v769
  %v1181 = vpop.f32.mrf.mxu0
  %v1182 = vadd.f32 %v1153, %v1181
  %1183 = vmatmul.f32.gmra.mxu0 %v789
  %v1184 = vpop.f32.mrf.mxu0
  %v1185 = vadd.f32 %v1156, %v1184
  %1186 = vmatmul.f32.gmra.mxu0 %v809
  %v1187 = vpop.f32.mrf.mxu0
  %v1188 = vadd.f32 %v1159, %v1187
  %1189 = vdwg.mxu0
  %1190 = vmatpush.msra.mxu0 %v871
  %1191 = vmatpush.msra.mxu0 %v870
  %1192 = vmatpush.msra.mxu0 %v869
  %1193 = vmatpush.msra.mxu0 %v868
  %1194 = vmatpush.msra.mxu0 %v867
  %1195 = vmatpush.msra.mxu0 %v866
  %1196 = vmatpush.msra.mxu0 %v865
  %1197 = vmatpush.msra.mxu0 %v864
  %1198 = vmatpush.msra.mxu0 %v863
  %1199 = vmatpush.msra.mxu0 %v862
  %1200 = vmatpush.msra.mxu0 %v861
  %1201 = vmatpush.msra.mxu0 %v860
  %1202 = vmatpush.msra.mxu0 %v859
  %1203 = vmatpush.msra.mxu0 %v858
  %1204 = vmatpush.msra.mxu0 %v857
  %1205 = vmatpush.msra.mxu0 %v856
  %1206 = vmatmul.f32.gmra.mxu0 %v750
  %v1207 = vpop.f32.mrf.mxu0
  %v1208 = vadd.f32 %v1179, %v1207
  %1209 = vmatmul.f32.gmra.mxu0 %v770
  %v1210 = vpop.f32.mrf.mxu0
  %v1211 = vadd.f32 %v1182, %v1210
  %1212 = vmatmul.f32.gmra.mxu0 %v790
  %v1213 = vpop.f32.mrf.mxu0
  %v1214 = vadd.f32 %v1185, %v1213
  %1215 = vmatmul.f32.gmra.mxu0 %v810
  %v1216 = vpop.f32.mrf.mxu0
  %v1217 = vadd.f32 %v1188, %v1216
  %1218 = vdwg.mxu0
  %1219 = vmatpush.msra.mxu0 %v887
  %1220 = vmatpush.msra.mxu0 %v886
  %1221 = vmatpush.msra.mxu0 %v885
  %1222 = vmatpush.msra.mxu0 %v884
  %1223 = vmatpush.msra.mxu0 %v883
  %1224 = vmatpush.msra.mxu0 %v882
  %1225 = vmatpush.msra.mxu0 %v881
  %1226 = vmatpush.msra.mxu0 %v880
  %1227 = vmatpush.msra.mxu0 %v879
  %1228 = vmatpush.msra.mxu0 %v878
  %1229 = vmatpush.msra.mxu0 %v877
  %1230 = vmatpush.msra.mxu0 %v876
  %1231 = vmatpush.msra.mxu0 %v875
  %1232 = vmatpush.msra.mxu0 %v874
  %1233 = vmatpush.msra.mxu0 %v873
  %1234 = vmatpush.msra.mxu0 %v872
  %1235 = vmatmul.f32.gmra.mxu0 %v751
  %v1236 = vpop.f32.mrf.mxu0
  %v1237 = vadd.f32 %v1208, %v1236
  %1238 = vmatmul.f32.gmra.mxu0 %v771
  %v1239 = vpop.f32.mrf.mxu0
  %v1240 = vadd.f32 %v1211, %v1239
  %1241 = vmatmul.f32.gmra.mxu0 %v791
  %v1242 = vpop.f32.mrf.mxu0
  %v1243 = vadd.f32 %v1214, %v1242
  %1244 = vmatmul.f32.gmra.mxu0 %v811
  %v1245 = vpop.f32.mrf.mxu0
  %v1246 = vadd.f32 %v1217, %v1245
  %1247 = vdwg.mxu0
  %s1248 = scalar_lea.vmem %s4, 1024
  %v1249 = vld [vmem:[%s1248] sm:$0xff]
  %v1250 = vld [vmem:[%s1248 + $0x8] sm:$0xff]
  %v1251 = vld [vmem:[%s1248 + $0x10] sm:$0xff]
  %v1252 = vld [vmem:[%s1248 + $0x18] sm:$0xff]
  %v1253 = vld [vmem:[%s1248 + $0x20] sm:$0xff]
  %v1254 = vld [vmem:[%s1248 + $0x28] sm:$0xff]
  %v1255 = vld [vmem:[%s1248 + $0x30] sm:$0xff]
  %v1256 = vld [vmem:[%s1248 + $0x38] sm:$0xff]
  %v1257 = vld [vmem:[%s1248 + $0x40] sm:$0xff]
  %v1258 = vld [vmem:[%s1248 + $0x48] sm:$0xff]
  %v1259 = vld [vmem:[%s1248 + $0x50] sm:$0xff]
  %v1260 = vld [vmem:[%s1248 + $0x58] sm:$0xff]
  %v1261 = vld [vmem:[%s1248 + $0x60] sm:$0xff]
  %v1262 = vld [vmem:[%s1248 + $0x68] sm:$0xff]
  %v1263 = vld [vmem:[%s1248 + $0x70] sm:$0xff]
  %v1264 = vld [vmem:[%s1248 + $0x78] sm:$0xff]
  %v1265 = vld [vmem:[%s1248 + $0x80] sm:$0xff]
  %v1266 = vld [vmem:[%s1248 + $0x88] sm:$0xff]
  %v1267 = vld [vmem:[%s1248 + $0x90] sm:$0xff]
  %v1268 = vld [vmem:[%s1248 + $0x98] sm:$0xff]
  %v1269 = vld [vmem:[%s1248 + $0xa0] sm:$0xff]
  %v1270 = vld [vmem:[%s1248 + $0xa8] sm:$0xff]
  %v1271 = vld [vmem:[%s1248 + $0xb0] sm:$0xff]
  %v1272 = vld [vmem:[%s1248 + $0xb8] sm:$0xff]
  %v1273 = vld [vmem:[%s1248 + $0xc0] sm:$0xff]
  %v1274 = vld [vmem:[%s1248 + $0xc8] sm:$0xff]
  %v1275 = vld [vmem:[%s1248 + $0xd0] sm:$0xff]
  %v1276 = vld [vmem:[%s1248 + $0xd8] sm:$0xff]
  %v1277 = vld [vmem:[%s1248 + $0xe0] sm:$0xff]
  %v1278 = vld [vmem:[%s1248 + $0xe8] sm:$0xff]
  %v1279 = vld [vmem:[%s1248 + $0xf0] sm:$0xff]
  %v1280 = vld [vmem:[%s1248 + $0xf8] sm:$0xff]
  %v1281 = vld [vmem:[%s1248 + $0x100] sm:$0xff]
  %v1282 = vld [vmem:[%s1248 + $0x108] sm:$0xff]
  %v1283 = vld [vmem:[%s1248 + $0x110] sm:$0xff]
  %v1284 = vld [vmem:[%s1248 + $0x118] sm:$0xff]
  %v1285 = vld [vmem:[%s1248 + $0x120] sm:$0xff]
  %v1286 = vld [vmem:[%s1248 + $0x128] sm:$0xff]
  %v1287 = vld [vmem:[%s1248 + $0x130] sm:$0xff]
  %v1288 = vld [vmem:[%s1248 + $0x138] sm:$0xff]
  %v1289 = vld [vmem:[%s1248 + $0x140] sm:$0xff]
  %v1290 = vld [vmem:[%s1248 + $0x148] sm:$0xff]
  %v1291 = vld [vmem:[%s1248 + $0x150] sm:$0xff]
  %v1292 = vld [vmem:[%s1248 + $0x158] sm:$0xff]
  %v1293 = vld [vmem:[%s1248 + $0x160] sm:$0xff]
  %v1294 = vld [vmem:[%s1248 + $0x168] sm:$0xff]
  %v1295 = vld [vmem:[%s1248 + $0x170] sm:$0xff]
  %v1296 = vld [vmem:[%s1248 + $0x178] sm:$0xff]
  %v1297 = vld [vmem:[%s1248 + $0x180] sm:$0xff]
  %v1298 = vld [vmem:[%s1248 + $0x188] sm:$0xff]
  %v1299 = vld [vmem:[%s1248 + $0x190] sm:$0xff]
  %v1300 = vld [vmem:[%s1248 + $0x198] sm:$0xff]
  %v1301 = vld [vmem:[%s1248 + $0x1a0] sm:$0xff]
  %v1302 = vld [vmem:[%s1248 + $0x1a8] sm:$0xff]
  %v1303 = vld [vmem:[%s1248 + $0x1b0] sm:$0xff]
  %v1304 = vld [vmem:[%s1248 + $0x1b8] sm:$0xff]
  %v1305 = vld [vmem:[%s1248 + $0x1c0] sm:$0xff]
  %v1306 = vld [vmem:[%s1248 + $0x1c8] sm:$0xff]
  %v1307 = vld [vmem:[%s1248 + $0x1d0] sm:$0xff]
  %v1308 = vld [vmem:[%s1248 + $0x1d8] sm:$0xff]
  %v1309 = vld [vmem:[%s1248 + $0x1e0] sm:$0xff]
  %v1310 = vld [vmem:[%s1248 + $0x1e8] sm:$0xff]
  %v1311 = vld [vmem:[%s1248 + $0x1f0] sm:$0xff]
  %v1312 = vld [vmem:[%s1248 + $0x1f8] sm:$0xff]
  %v1313 = vld [vmem:[%s1248 + $0x200] sm:$0xff]
  %v1314 = vld [vmem:[%s1248 + $0x208] sm:$0xff]
  %v1315 = vld [vmem:[%s1248 + $0x210] sm:$0xff]
  %v1316 = vld [vmem:[%s1248 + $0x218] sm:$0xff]
  %v1317 = vld [vmem:[%s1248 + $0x220] sm:$0xff]
  %v1318 = vld [vmem:[%s1248 + $0x228] sm:$0xff]
  %v1319 = vld [vmem:[%s1248 + $0x230] sm:$0xff]
  %v1320 = vld [vmem:[%s1248 + $0x238] sm:$0xff]
  %v1321 = vld [vmem:[%s1248 + $0x240] sm:$0xff]
  %v1322 = vld [vmem:[%s1248 + $0x248] sm:$0xff]
  %v1323 = vld [vmem:[%s1248 + $0x250] sm:$0xff]
  %v1324 = vld [vmem:[%s1248 + $0x258] sm:$0xff]
  %v1325 = vld [vmem:[%s1248 + $0x260] sm:$0xff]
  %v1326 = vld [vmem:[%s1248 + $0x268] sm:$0xff]
  %v1327 = vld [vmem:[%s1248 + $0x270] sm:$0xff]
  %v1328 = vld [vmem:[%s1248 + $0x278] sm:$0xff]
  %v1329 = vld [vmem:[%s1248 + $0x280] sm:$0xff]
  %v1330 = vld [vmem:[%s1248 + $0x288] sm:$0xff]
  %v1331 = vld [vmem:[%s1248 + $0x290] sm:$0xff]
  %v1332 = vld [vmem:[%s1248 + $0x298] sm:$0xff]
  %v1333 = vld [vmem:[%s1248 + $0x2a0] sm:$0xff]
  %v1334 = vld [vmem:[%s1248 + $0x2a8] sm:$0xff]
  %v1335 = vld [vmem:[%s1248 + $0x2b0] sm:$0xff]
  %v1336 = vld [vmem:[%s1248 + $0x2b8] sm:$0xff]
  %v1337 = vld [vmem:[%s1248 + $0x2c0] sm:$0xff]
  %v1338 = vld [vmem:[%s1248 + $0x2c8] sm:$0xff]
  %v1339 = vld [vmem:[%s1248 + $0x2d0] sm:$0xff]
  %v1340 = vld [vmem:[%s1248 + $0x2d8] sm:$0xff]
  %v1341 = vld [vmem:[%s1248 + $0x2e0] sm:$0xff]
  %v1342 = vld [vmem:[%s1248 + $0x2e8] sm:$0xff]
  %v1343 = vld [vmem:[%s1248 + $0x2f0] sm:$0xff]
  %v1344 = vld [vmem:[%s1248 + $0x2f8] sm:$0xff]
  %v1345 = vld [vmem:[%s1248 + $0x300] sm:$0xff]
  %v1346 = vld [vmem:[%s1248 + $0x308] sm:$0xff]
  %v1347 = vld [vmem:[%s1248 + $0x310] sm:$0xff]
  %v1348 = vld [vmem:[%s1248 + $0x318] sm:$0xff]
  %v1349 = vld [vmem:[%s1248 + $0x320] sm:$0xff]
  %v1350 = vld [vmem:[%s1248 + $0x328] sm:$0xff]
  %v1351 = vld [vmem:[%s1248 + $0x330] sm:$0xff]
  %v1352 = vld [vmem:[%s1248 + $0x338] sm:$0xff]
  %v1353 = vld [vmem:[%s1248 + $0x340] sm:$0xff]
  %v1354 = vld [vmem:[%s1248 + $0x348] sm:$0xff]
  %v1355 = vld [vmem:[%s1248 + $0x350] sm:$0xff]
  %v1356 = vld [vmem:[%s1248 + $0x358] sm:$0xff]
  %v1357 = vld [vmem:[%s1248 + $0x360] sm:$0xff]
  %v1358 = vld [vmem:[%s1248 + $0x368] sm:$0xff]
  %v1359 = vld [vmem:[%s1248 + $0x370] sm:$0xff]
  %v1360 = vld [vmem:[%s1248 + $0x378] sm:$0xff]
  %v1361 = vld [vmem:[%s1248 + $0x380] sm:$0xff]
  %v1362 = vld [vmem:[%s1248 + $0x388] sm:$0xff]
  %v1363 = vld [vmem:[%s1248 + $0x390] sm:$0xff]
  %v1364 = vld [vmem:[%s1248 + $0x398] sm:$0xff]
  %v1365 = vld [vmem:[%s1248 + $0x3a0] sm:$0xff]
  %v1366 = vld [vmem:[%s1248 + $0x3a8] sm:$0xff]
  %v1367 = vld [vmem:[%s1248 + $0x3b0] sm:$0xff]
  %v1368 = vld [vmem:[%s1248 + $0x3b8] sm:$0xff]
  %v1369 = vld [vmem:[%s1248 + $0x3c0] sm:$0xff]
  %v1370 = vld [vmem:[%s1248 + $0x3c8] sm:$0xff]
  %v1371 = vld [vmem:[%s1248 + $0x3d0] sm:$0xff]
  %v1372 = vld [vmem:[%s1248 + $0x3d8] sm:$0xff]
  %v1373 = vld [vmem:[%s1248 + $0x3e0] sm:$0xff]
  %v1374 = vld [vmem:[%s1248 + $0x3e8] sm:$0xff]
  %v1375 = vld [vmem:[%s1248 + $0x3f0] sm:$0xff]
  %v1376 = vld [vmem:[%s1248 + $0x3f8] sm:$0xff]
  %vm1377 = vcmask 261120
  %v1379 = vsel %vm1377, %v1249, 0
  %v1382 = vsel %vm1377, %v1250, 0
  %v1385 = vsel %vm1377, %v1251, 0
  %v1388 = vsel %vm1377, %v1252, 0
  %v1391 = vsel %vm1377, %v1253, 0
  %v1394 = vsel %vm1377, %v1254, 0
  %v1397 = vsel %vm1377, %v1255, 0
  %v1400 = vsel %vm1377, %v1256, 0
  %v1403 = vsel %vm1377, %v1257, 0
  %v1406 = vsel %vm1377, %v1258, 0
  %v1409 = vsel %vm1377, %v1259, 0
  %v1412 = vsel %vm1377, %v1260, 0
  %v1415 = vsel %vm1377, %v1261, 0
  %v1418 = vsel %vm1377, %v1262, 0
  %v1421 = vsel %vm1377, %v1263, 0
  %v1424 = vsel %vm1377, %v1264, 0
  %v1427 = vsel %vm1377, %v1265, 0
  %v1430 = vsel %vm1377, %v1266, 0
  %v1433 = vsel %vm1377, %v1267, 0
  %v1436 = vsel %vm1377, %v1268, 0
  %v1439 = vsel %vm1377, %v1269, 0
  %v1442 = vsel %vm1377, %v1270, 0
  %v1445 = vsel %vm1377, %v1271, 0
  %v1448 = vsel %vm1377, %v1272, 0
  %v1451 = vsel %vm1377, %v1273, 0
  %v1454 = vsel %vm1377, %v1274, 0
  %v1457 = vsel %vm1377, %v1275, 0
  %v1460 = vsel %vm1377, %v1276, 0
  %v1463 = vsel %vm1377, %v1277, 0
  %v1466 = vsel %vm1377, %v1278, 0
  %v1469 = vsel %vm1377, %v1279, 0
  %v1472 = vsel %vm1377, %v1280, 0
  %v1475 = vsel %vm1377, %v1281, 0
  %v1478 = vsel %vm1377, %v1282, 0
  %v1481 = vsel %vm1377, %v1283, 0
  %v1484 = vsel %vm1377, %v1284, 0
  %v1487 = vsel %vm1377, %v1285, 0
  %v1490 = vsel %vm1377, %v1286, 0
  %v1493 = vsel %vm1377, %v1287, 0
  %v1496 = vsel %vm1377, %v1288, 0
  %v1499 = vsel %vm1377, %v1289, 0
  %v1502 = vsel %vm1377, %v1290, 0
  %v1505 = vsel %vm1377, %v1291, 0
  %v1508 = vsel %vm1377, %v1292, 0
  %v1511 = vsel %vm1377, %v1293, 0
  %v1514 = vsel %vm1377, %v1294, 0
  %v1517 = vsel %vm1377, %v1295, 0
  %v1520 = vsel %vm1377, %v1296, 0
  %v1523 = vsel %vm1377, %v1297, 0
  %v1526 = vsel %vm1377, %v1298, 0
  %v1529 = vsel %vm1377, %v1299, 0
  %v1532 = vsel %vm1377, %v1300, 0
  %v1535 = vsel %vm1377, %v1301, 0
  %v1538 = vsel %vm1377, %v1302, 0
  %v1541 = vsel %vm1377, %v1303, 0
  %v1544 = vsel %vm1377, %v1304, 0
  %v1547 = vsel %vm1377, %v1305, 0
  %v1550 = vsel %vm1377, %v1306, 0
  %v1553 = vsel %vm1377, %v1307, 0
  %v1556 = vsel %vm1377, %v1308, 0
  %v1559 = vsel %vm1377, %v1309, 0
  %v1562 = vsel %vm1377, %v1310, 0
  %v1565 = vsel %vm1377, %v1311, 0
  %v1568 = vsel %vm1377, %v1312, 0
  %v1571 = vsel %vm1377, %v1313, 0
  %v1574 = vsel %vm1377, %v1314, 0
  %v1577 = vsel %vm1377, %v1315, 0
  %v1580 = vsel %vm1377, %v1316, 0
  %v1583 = vsel %vm1377, %v1317, 0
  %v1586 = vsel %vm1377, %v1318, 0
  %v1589 = vsel %vm1377, %v1319, 0
  %v1592 = vsel %vm1377, %v1320, 0
  %v1595 = vsel %vm1377, %v1321, 0
  %v1598 = vsel %vm1377, %v1322, 0
  %v1601 = vsel %vm1377, %v1323, 0
  %v1604 = vsel %vm1377, %v1324, 0
  %v1607 = vsel %vm1377, %v1325, 0
  %v1610 = vsel %vm1377, %v1326, 0
  %v1613 = vsel %vm1377, %v1327, 0
  %v1616 = vsel %vm1377, %v1328, 0
  %v1619 = vsel %vm1377, %v1329, 0
  %v1622 = vsel %vm1377, %v1330, 0
  %v1625 = vsel %vm1377, %v1331, 0
  %v1628 = vsel %vm1377, %v1332, 0
  %v1631 = vsel %vm1377, %v1333, 0
  %v1634 = vsel %vm1377, %v1334, 0
  %v1637 = vsel %vm1377, %v1335, 0
  %v1640 = vsel %vm1377, %v1336, 0
  %v1643 = vsel %vm1377, %v1337, 0
  %v1646 = vsel %vm1377, %v1338, 0
  %v1649 = vsel %vm1377, %v1339, 0
  %v1652 = vsel %vm1377, %v1340, 0
  %v1655 = vsel %vm1377, %v1341, 0
  %v1658 = vsel %vm1377, %v1342, 0
  %v1661 = vsel %vm1377, %v1343, 0
  %v1664 = vsel %vm1377, %v1344, 0
  %v1667 = vsel %vm1377, %v1345, 0
  %v1670 = vsel %vm1377, %v1346, 0
  %v1673 = vsel %vm1377, %v1347, 0
  %v1676 = vsel %vm1377, %v1348, 0
  %v1679 = vsel %vm1377, %v1349, 0
  %v1682 = vsel %vm1377, %v1350, 0
  %v1685 = vsel %vm1377, %v1351, 0
  %v1688 = vsel %vm1377, %v1352, 0
  %v1691 = vsel %vm1377, %v1353, 0
  %v1694 = vsel %vm1377, %v1354, 0
  %v1697 = vsel %vm1377, %v1355, 0
  %v1700 = vsel %vm1377, %v1356, 0
  %v1703 = vsel %vm1377, %v1357, 0
  %v1706 = vsel %vm1377, %v1358, 0
  %v1709 = vsel %vm1377, %v1359, 0
  %v1712 = vsel %vm1377, %v1360, 0
  %v1715 = vsel %vm1377, %v1361, 0
  %v1718 = vsel %vm1377, %v1362, 0
  %v1721 = vsel %vm1377, %v1363, 0
  %v1724 = vsel %vm1377, %v1364, 0
  %v1727 = vsel %vm1377, %v1365, 0
  %v1730 = vsel %vm1377, %v1366, 0
  %v1733 = vsel %vm1377, %v1367, 0
  %v1736 = vsel %vm1377, %v1368, 0
  %v1739 = vsel %vm1377, %v1369, 0
  %v1742 = vsel %vm1377, %v1370, 0
  %v1745 = vsel %vm1377, %v1371, 0
  %v1748 = vsel %vm1377, %v1372, 0
  %v1751 = vsel %vm1377, %v1373, 0
  %v1754 = vsel %vm1377, %v1374, 0
  %v1757 = vsel %vm1377, %v1375, 0
  %v1760 = vsel %vm1377, %v1376, 0
  %1762 = vmatpush.msra.mxu0 0.0
  %1763 = vmatpush.msra.mxu0 0.0
  %1764 = vmatpush.msra.mxu0 0.0
  %1765 = vmatpush.msra.mxu0 0.0
  %1766 = vmatpush.msra.mxu0 0.0
  %1767 = vmatpush.msra.mxu0 0.0
  %1768 = vmatpush.msra.mxu0 0.0
  %1769 = vmatpush.msra.mxu0 0.0
  %1770 = vmatpush.msra.mxu0 0.0
  %1771 = vmatpush.msra.mxu0 0.0
  %1772 = vmatpush.msra.mxu0 0.0
  %1773 = vmatpush.msra.mxu0 0.0
  %1774 = vmatpush.msra.mxu0 %v1246
  %1775 = vmatpush.msra.mxu0 %v1243
  %1776 = vmatpush.msra.mxu0 %v1240
  %1777 = vmatpush.msra.mxu0 %v1237
  %1778 = vmatmul.f32.gmra.mxu0 %v1379
  %v1779 = vpop.f32.mrf.mxu0
  %v1780 = vadd.f32 0.0, %v1779
  %1781 = vmatmul.f32.gmra.mxu0 %v1382
  %v1782 = vpop.f32.mrf.mxu0
  %v1783 = vadd.f32 0.0, %v1782
  %1784 = vmatmul.f32.gmra.mxu0 %v1385
  %v1785 = vpop.f32.mrf.mxu0
  %v1786 = vadd.f32 0.0, %v1785
  %1787 = vmatmul.f32.gmra.mxu0 %v1388
  %v1788 = vpop.f32.mrf.mxu0
  %v1789 = vadd.f32 0.0, %v1788
  %1790 = vmatmul.f32.gmra.mxu0 %v1391
  %v1791 = vpop.f32.mrf.mxu0
  %v1792 = vadd.f32 0.0, %v1791
  %1793 = vmatmul.f32.gmra.mxu0 %v1394
  %v1794 = vpop.f32.mrf.mxu0
  %v1795 = vadd.f32 0.0, %v1794
  %1796 = vmatmul.f32.gmra.mxu0 %v1397
  %v1797 = vpop.f32.mrf.mxu0
  %v1798 = vadd.f32 0.0, %v1797
  %1799 = vmatmul.f32.gmra.mxu0 %v1400
  %v1800 = vpop.f32.mrf.mxu0
  %v1801 = vadd.f32 0.0, %v1800
  %1802 = vmatmul.f32.gmra.mxu0 %v1403
  %v1803 = vpop.f32.mrf.mxu0
  %v1804 = vadd.f32 0.0, %v1803
  %1805 = vmatmul.f32.gmra.mxu0 %v1406
  %v1806 = vpop.f32.mrf.mxu0
  %v1807 = vadd.f32 0.0, %v1806
  %1808 = vmatmul.f32.gmra.mxu0 %v1409
  %v1809 = vpop.f32.mrf.mxu0
  %v1810 = vadd.f32 0.0, %v1809
  %1811 = vmatmul.f32.gmra.mxu0 %v1412
  %v1812 = vpop.f32.mrf.mxu0
  %v1813 = vadd.f32 0.0, %v1812
  %1814 = vmatmul.f32.gmra.mxu0 %v1415
  %v1815 = vpop.f32.mrf.mxu0
  %v1816 = vadd.f32 0.0, %v1815
  %1817 = vmatmul.f32.gmra.mxu0 %v1418
  %v1818 = vpop.f32.mrf.mxu0
  %v1819 = vadd.f32 0.0, %v1818
  %1820 = vmatmul.f32.gmra.mxu0 %v1421
  %v1821 = vpop.f32.mrf.mxu0
  %v1822 = vadd.f32 0.0, %v1821
  %1823 = vmatmul.f32.gmra.mxu0 %v1424
  %v1824 = vpop.f32.mrf.mxu0
  %v1825 = vadd.f32 0.0, %v1824
  %1826 = vmatmul.f32.gmra.mxu0 %v1427
  %v1827 = vpop.f32.mrf.mxu0
  %v1828 = vadd.f32 0.0, %v1827
  %1829 = vmatmul.f32.gmra.mxu0 %v1430
  %v1830 = vpop.f32.mrf.mxu0
  %v1831 = vadd.f32 0.0, %v1830
  %1832 = vmatmul.f32.gmra.mxu0 %v1433
  %v1833 = vpop.f32.mrf.mxu0
  %v1834 = vadd.f32 0.0, %v1833
  %1835 = vmatmul.f32.gmra.mxu0 %v1436
  %v1836 = vpop.f32.mrf.mxu0
  %v1837 = vadd.f32 0.0, %v1836
  %1838 = vmatmul.f32.gmra.mxu0 %v1439
  %v1839 = vpop.f32.mrf.mxu0
  %v1840 = vadd.f32 0.0, %v1839
  %1841 = vmatmul.f32.gmra.mxu0 %v1442
  %v1842 = vpop.f32.mrf.mxu0
  %v1843 = vadd.f32 0.0, %v1842
  %1844 = vmatmul.f32.gmra.mxu0 %v1445
  %v1845 = vpop.f32.mrf.mxu0
  %v1846 = vadd.f32 0.0, %v1845
  %1847 = vmatmul.f32.gmra.mxu0 %v1448
  %v1848 = vpop.f32.mrf.mxu0
  %v1849 = vadd.f32 0.0, %v1848
  %1850 = vmatmul.f32.gmra.mxu0 %v1451
  %v1851 = vpop.f32.mrf.mxu0
  %v1852 = vadd.f32 0.0, %v1851
  %1853 = vmatmul.f32.gmra.mxu0 %v1454
  %v1854 = vpop.f32.mrf.mxu0
  %v1855 = vadd.f32 0.0, %v1854
  %1856 = vmatmul.f32.gmra.mxu0 %v1457
  %v1857 = vpop.f32.mrf.mxu0
  %v1858 = vadd.f32 0.0, %v1857
  %1859 = vmatmul.f32.gmra.mxu0 %v1460
  %v1860 = vpop.f32.mrf.mxu0
  %v1861 = vadd.f32 0.0, %v1860
  %1862 = vmatmul.f32.gmra.mxu0 %v1463
  %v1863 = vpop.f32.mrf.mxu0
  %v1864 = vadd.f32 0.0, %v1863
  %1865 = vmatmul.f32.gmra.mxu0 %v1466
  %v1866 = vpop.f32.mrf.mxu0
  %v1867 = vadd.f32 0.0, %v1866
  %1868 = vmatmul.f32.gmra.mxu0 %v1469
  %v1869 = vpop.f32.mrf.mxu0
  %v1870 = vadd.f32 0.0, %v1869
  %1871 = vmatmul.f32.gmra.mxu0 %v1472
  %v1872 = vpop.f32.mrf.mxu0
  %v1873 = vadd.f32 0.0, %v1872
  %1874 = vmatmul.f32.gmra.mxu0 %v1475
  %v1875 = vpop.f32.mrf.mxu0
  %v1876 = vadd.f32 0.0, %v1875
  %1877 = vmatmul.f32.gmra.mxu0 %v1478
  %v1878 = vpop.f32.mrf.mxu0
  %v1879 = vadd.f32 0.0, %v1878
  %1880 = vmatmul.f32.gmra.mxu0 %v1481
  %v1881 = vpop.f32.mrf.mxu0
  %v1882 = vadd.f32 0.0, %v1881
  %1883 = vmatmul.f32.gmra.mxu0 %v1484
  %v1884 = vpop.f32.mrf.mxu0
  %v1885 = vadd.f32 0.0, %v1884
  %1886 = vmatmul.f32.gmra.mxu0 %v1487
  %v1887 = vpop.f32.mrf.mxu0
  %v1888 = vadd.f32 0.0, %v1887
  %1889 = vmatmul.f32.gmra.mxu0 %v1490
  %v1890 = vpop.f32.mrf.mxu0
  %v1891 = vadd.f32 0.0, %v1890
  %1892 = vmatmul.f32.gmra.mxu0 %v1493
  %v1893 = vpop.f32.mrf.mxu0
  %v1894 = vadd.f32 0.0, %v1893
  %1895 = vmatmul.f32.gmra.mxu0 %v1496
  %v1896 = vpop.f32.mrf.mxu0
  %v1897 = vadd.f32 0.0, %v1896
  %1898 = vmatmul.f32.gmra.mxu0 %v1499
  %v1899 = vpop.f32.mrf.mxu0
  %v1900 = vadd.f32 0.0, %v1899
  %1901 = vmatmul.f32.gmra.mxu0 %v1502
  %v1902 = vpop.f32.mrf.mxu0
  %v1903 = vadd.f32 0.0, %v1902
  %1904 = vmatmul.f32.gmra.mxu0 %v1505
  %v1905 = vpop.f32.mrf.mxu0
  %v1906 = vadd.f32 0.0, %v1905
  %1907 = vmatmul.f32.gmra.mxu0 %v1508
  %v1908 = vpop.f32.mrf.mxu0
  %v1909 = vadd.f32 0.0, %v1908
  %1910 = vmatmul.f32.gmra.mxu0 %v1511
  %v1911 = vpop.f32.mrf.mxu0
  %v1912 = vadd.f32 0.0, %v1911
  %1913 = vmatmul.f32.gmra.mxu0 %v1514
  %v1914 = vpop.f32.mrf.mxu0
  %v1915 = vadd.f32 0.0, %v1914
  %1916 = vmatmul.f32.gmra.mxu0 %v1517
  %v1917 = vpop.f32.mrf.mxu0
  %v1918 = vadd.f32 0.0, %v1917
  %1919 = vmatmul.f32.gmra.mxu0 %v1520
  %v1920 = vpop.f32.mrf.mxu0
  %v1921 = vadd.f32 0.0, %v1920
  %1922 = vmatmul.f32.gmra.mxu0 %v1523
  %v1923 = vpop.f32.mrf.mxu0
  %v1924 = vadd.f32 0.0, %v1923
  %1925 = vmatmul.f32.gmra.mxu0 %v1526
  %v1926 = vpop.f32.mrf.mxu0
  %v1927 = vadd.f32 0.0, %v1926
  %1928 = vmatmul.f32.gmra.mxu0 %v1529
  %v1929 = vpop.f32.mrf.mxu0
  %v1930 = vadd.f32 0.0, %v1929
  %1931 = vmatmul.f32.gmra.mxu0 %v1532
  %v1932 = vpop.f32.mrf.mxu0
  %v1933 = vadd.f32 0.0, %v1932
  %1934 = vmatmul.f32.gmra.mxu0 %v1535
  %v1935 = vpop.f32.mrf.mxu0
  %v1936 = vadd.f32 0.0, %v1935
  %1937 = vmatmul.f32.gmra.mxu0 %v1538
  %v1938 = vpop.f32.mrf.mxu0
  %v1939 = vadd.f32 0.0, %v1938
  %1940 = vmatmul.f32.gmra.mxu0 %v1541
  %v1941 = vpop.f32.mrf.mxu0
  %v1942 = vadd.f32 0.0, %v1941
  %1943 = vmatmul.f32.gmra.mxu0 %v1544
  %v1944 = vpop.f32.mrf.mxu0
  %v1945 = vadd.f32 0.0, %v1944
  %1946 = vmatmul.f32.gmra.mxu0 %v1547
  %v1947 = vpop.f32.mrf.mxu0
  %v1948 = vadd.f32 0.0, %v1947
  %1949 = vmatmul.f32.gmra.mxu0 %v1550
  %v1950 = vpop.f32.mrf.mxu0
  %v1951 = vadd.f32 0.0, %v1950
  %1952 = vmatmul.f32.gmra.mxu0 %v1553
  %v1953 = vpop.f32.mrf.mxu0
  %v1954 = vadd.f32 0.0, %v1953
  %1955 = vmatmul.f32.gmra.mxu0 %v1556
  %v1956 = vpop.f32.mrf.mxu0
  %v1957 = vadd.f32 0.0, %v1956
  %1958 = vmatmul.f32.gmra.mxu0 %v1559
  %v1959 = vpop.f32.mrf.mxu0
  %v1960 = vadd.f32 0.0, %v1959
  %1961 = vmatmul.f32.gmra.mxu0 %v1562
  %v1962 = vpop.f32.mrf.mxu0
  %v1963 = vadd.f32 0.0, %v1962
  %1964 = vmatmul.f32.gmra.mxu0 %v1565
  %v1965 = vpop.f32.mrf.mxu0
  %v1966 = vadd.f32 0.0, %v1965
  %1967 = vmatmul.f32.gmra.mxu0 %v1568
  %v1968 = vpop.f32.mrf.mxu0
  %v1969 = vadd.f32 0.0, %v1968
  %1970 = vmatmul.f32.gmra.mxu0 %v1571
  %v1971 = vpop.f32.mrf.mxu0
  %v1972 = vadd.f32 0.0, %v1971
  %1973 = vmatmul.f32.gmra.mxu0 %v1574
  %v1974 = vpop.f32.mrf.mxu0
  %v1975 = vadd.f32 0.0, %v1974
  %1976 = vmatmul.f32.gmra.mxu0 %v1577
  %v1977 = vpop.f32.mrf.mxu0
  %v1978 = vadd.f32 0.0, %v1977
  %1979 = vmatmul.f32.gmra.mxu0 %v1580
  %v1980 = vpop.f32.mrf.mxu0
  %v1981 = vadd.f32 0.0, %v1980
  %1982 = vmatmul.f32.gmra.mxu0 %v1583
  %v1983 = vpop.f32.mrf.mxu0
  %v1984 = vadd.f32 0.0, %v1983
  %1985 = vmatmul.f32.gmra.mxu0 %v1586
  %v1986 = vpop.f32.mrf.mxu0
  %v1987 = vadd.f32 0.0, %v1986
  %1988 = vmatmul.f32.gmra.mxu0 %v1589
  %v1989 = vpop.f32.mrf.mxu0
  %v1990 = vadd.f32 0.0, %v1989
  %1991 = vmatmul.f32.gmra.mxu0 %v1592
  %v1992 = vpop.f32.mrf.mxu0
  %v1993 = vadd.f32 0.0, %v1992
  %1994 = vmatmul.f32.gmra.mxu0 %v1595
  %v1995 = vpop.f32.mrf.mxu0
  %v1996 = vadd.f32 0.0, %v1995
  %1997 = vmatmul.f32.gmra.mxu0 %v1598
  %v1998 = vpop.f32.mrf.mxu0
  %v1999 = vadd.f32 0.0, %v1998
  %2000 = vmatmul.f32.gmra.mxu0 %v1601
  %v2001 = vpop.f32.mrf.mxu0
  %v2002 = vadd.f32 0.0, %v2001
  %2003 = vmatmul.f32.gmra.mxu0 %v1604
  %v2004 = vpop.f32.mrf.mxu0
  %v2005 = vadd.f32 0.0, %v2004
  %2006 = vmatmul.f32.gmra.mxu0 %v1607
  %v2007 = vpop.f32.mrf.mxu0
  %v2008 = vadd.f32 0.0, %v2007
  %2009 = vmatmul.f32.gmra.mxu0 %v1610
  %v2010 = vpop.f32.mrf.mxu0
  %v2011 = vadd.f32 0.0, %v2010
  %2012 = vmatmul.f32.gmra.mxu0 %v1613
  %v2013 = vpop.f32.mrf.mxu0
  %v2014 = vadd.f32 0.0, %v2013
  %2015 = vmatmul.f32.gmra.mxu0 %v1616
  %v2016 = vpop.f32.mrf.mxu0
  %v2017 = vadd.f32 0.0, %v2016
  %2018 = vmatmul.f32.gmra.mxu0 %v1619
  %v2019 = vpop.f32.mrf.mxu0
  %v2020 = vadd.f32 0.0, %v2019
  %2021 = vmatmul.f32.gmra.mxu0 %v1622
  %v2022 = vpop.f32.mrf.mxu0
  %v2023 = vadd.f32 0.0, %v2022
  %2024 = vmatmul.f32.gmra.mxu0 %v1625
  %v2025 = vpop.f32.mrf.mxu0
  %v2026 = vadd.f32 0.0, %v2025
  %2027 = vmatmul.f32.gmra.mxu0 %v1628
  %v2028 = vpop.f32.mrf.mxu0
  %v2029 = vadd.f32 0.0, %v2028
  %2030 = vmatmul.f32.gmra.mxu0 %v1631
  %v2031 = vpop.f32.mrf.mxu0
  %v2032 = vadd.f32 0.0, %v2031
  %2033 = vmatmul.f32.gmra.mxu0 %v1634
  %v2034 = vpop.f32.mrf.mxu0
  %v2035 = vadd.f32 0.0, %v2034
  %2036 = vmatmul.f32.gmra.mxu0 %v1637
  %v2037 = vpop.f32.mrf.mxu0
  %v2038 = vadd.f32 0.0, %v2037
  %2039 = vmatmul.f32.gmra.mxu0 %v1640
  %v2040 = vpop.f32.mrf.mxu0
  %v2041 = vadd.f32 0.0, %v2040
  %2042 = vmatmul.f32.gmra.mxu0 %v1643
  %v2043 = vpop.f32.mrf.mxu0
  %v2044 = vadd.f32 0.0, %v2043
  %2045 = vmatmul.f32.gmra.mxu0 %v1646
  %v2046 = vpop.f32.mrf.mxu0
  %v2047 = vadd.f32 0.0, %v2046
  %2048 = vmatmul.f32.gmra.mxu0 %v1649
  %v2049 = vpop.f32.mrf.mxu0
  %v2050 = vadd.f32 0.0, %v2049
  %2051 = vmatmul.f32.gmra.mxu0 %v1652
  %v2052 = vpop.f32.mrf.mxu0
  %v2053 = vadd.f32 0.0, %v2052
  %2054 = vmatmul.f32.gmra.mxu0 %v1655
  %v2055 = vpop.f32.mrf.mxu0
  %v2056 = vadd.f32 0.0, %v2055
  %2057 = vmatmul.f32.gmra.mxu0 %v1658
  %v2058 = vpop.f32.mrf.mxu0
  %v2059 = vadd.f32 0.0, %v2058
  %2060 = vmatmul.f32.gmra.mxu0 %v1661
  %v2061 = vpop.f32.mrf.mxu0
  %v2062 = vadd.f32 0.0, %v2061
  %2063 = vmatmul.f32.gmra.mxu0 %v1664
  %v2064 = vpop.f32.mrf.mxu0
  %v2065 = vadd.f32 0.0, %v2064
  %2066 = vmatmul.f32.gmra.mxu0 %v1667
  %v2067 = vpop.f32.mrf.mxu0
  %v2068 = vadd.f32 0.0, %v2067
  %2069 = vmatmul.f32.gmra.mxu0 %v1670
  %v2070 = vpop.f32.mrf.mxu0
  %v2071 = vadd.f32 0.0, %v2070
  %2072 = vmatmul.f32.gmra.mxu0 %v1673
  %v2073 = vpop.f32.mrf.mxu0
  %v2074 = vadd.f32 0.0, %v2073
  %2075 = vmatmul.f32.gmra.mxu0 %v1676
  %v2076 = vpop.f32.mrf.mxu0
  %v2077 = vadd.f32 0.0, %v2076
  %2078 = vmatmul.f32.gmra.mxu0 %v1679
  %v2079 = vpop.f32.mrf.mxu0
  %v2080 = vadd.f32 0.0, %v2079
  %2081 = vmatmul.f32.gmra.mxu0 %v1682
  %v2082 = vpop.f32.mrf.mxu0
  %v2083 = vadd.f32 0.0, %v2082
  %2084 = vmatmul.f32.gmra.mxu0 %v1685
  %v2085 = vpop.f32.mrf.mxu0
  %v2086 = vadd.f32 0.0, %v2085
  %2087 = vmatmul.f32.gmra.mxu0 %v1688
  %v2088 = vpop.f32.mrf.mxu0
  %v2089 = vadd.f32 0.0, %v2088
  %2090 = vmatmul.f32.gmra.mxu0 %v1691
  %v2091 = vpop.f32.mrf.mxu0
  %v2092 = vadd.f32 0.0, %v2091
  %2093 = vmatmul.f32.gmra.mxu0 %v1694
  %v2094 = vpop.f32.mrf.mxu0
  %v2095 = vadd.f32 0.0, %v2094
  %2096 = vmatmul.f32.gmra.mxu0 %v1697
  %v2097 = vpop.f32.mrf.mxu0
  %v2098 = vadd.f32 0.0, %v2097
  %2099 = vmatmul.f32.gmra.mxu0 %v1700
  %v2100 = vpop.f32.mrf.mxu0
  %v2101 = vadd.f32 0.0, %v2100
  %2102 = vmatmul.f32.gmra.mxu0 %v1703
  %v2103 = vpop.f32.mrf.mxu0
  %v2104 = vadd.f32 0.0, %v2103
  %2105 = vmatmul.f32.gmra.mxu0 %v1706
  %v2106 = vpop.f32.mrf.mxu0
  %v2107 = vadd.f32 0.0, %v2106
  %2108 = vmatmul.f32.gmra.mxu0 %v1709
  %v2109 = vpop.f32.mrf.mxu0
  %v2110 = vadd.f32 0.0, %v2109
  %2111 = vmatmul.f32.gmra.mxu0 %v1712
  %v2112 = vpop.f32.mrf.mxu0
  %v2113 = vadd.f32 0.0, %v2112
  %2114 = vmatmul.f32.gmra.mxu0 %v1715
  %v2115 = vpop.f32.mrf.mxu0
  %v2116 = vadd.f32 0.0, %v2115
  %2117 = vmatmul.f32.gmra.mxu0 %v1718
  %v2118 = vpop.f32.mrf.mxu0
  %v2119 = vadd.f32 0.0, %v2118
  %2120 = vmatmul.f32.gmra.mxu0 %v1721
  %v2121 = vpop.f32.mrf.mxu0
  %v2122 = vadd.f32 0.0, %v2121
  %2123 = vmatmul.f32.gmra.mxu0 %v1724
  %v2124 = vpop.f32.mrf.mxu0
  %v2125 = vadd.f32 0.0, %v2124
  %2126 = vmatmul.f32.gmra.mxu0 %v1727
  %v2127 = vpop.f32.mrf.mxu0
  %v2128 = vadd.f32 0.0, %v2127
  %2129 = vmatmul.f32.gmra.mxu0 %v1730
  %v2130 = vpop.f32.mrf.mxu0
  %v2131 = vadd.f32 0.0, %v2130
  %2132 = vmatmul.f32.gmra.mxu0 %v1733
  %v2133 = vpop.f32.mrf.mxu0
  %v2134 = vadd.f32 0.0, %v2133
  %2135 = vmatmul.f32.gmra.mxu0 %v1736
  %v2136 = vpop.f32.mrf.mxu0
  %v2137 = vadd.f32 0.0, %v2136
  %2138 = vmatmul.f32.gmra.mxu0 %v1739
  %v2139 = vpop.f32.mrf.mxu0
  %v2140 = vadd.f32 0.0, %v2139
  %2141 = vmatmul.f32.gmra.mxu0 %v1742
  %v2142 = vpop.f32.mrf.mxu0
  %v2143 = vadd.f32 0.0, %v2142
  %2144 = vmatmul.f32.gmra.mxu0 %v1745
  %v2145 = vpop.f32.mrf.mxu0
  %v2146 = vadd.f32 0.0, %v2145
  %2147 = vmatmul.f32.gmra.mxu0 %v1748
  %v2148 = vpop.f32.mrf.mxu0
  %v2149 = vadd.f32 0.0, %v2148
  %2150 = vmatmul.f32.gmra.mxu0 %v1751
  %v2151 = vpop.f32.mrf.mxu0
  %v2152 = vadd.f32 0.0, %v2151
  %2153 = vmatmul.f32.gmra.mxu0 %v1754
  %v2154 = vpop.f32.mrf.mxu0
  %v2155 = vadd.f32 0.0, %v2154
  %2156 = vmatmul.f32.gmra.mxu0 %v1757
  %v2157 = vpop.f32.mrf.mxu0
  %v2158 = vadd.f32 0.0, %v2157
  %2159 = vmatmul.f32.gmra.mxu0 %v1760
  %v2160 = vpop.f32.mrf.mxu0
  %v2161 = vadd.f32 0.0, %v2160
  %2162 = vdwg.mxu0
  %v2164 = vsel %vm1377, %v1004, 0
  %v2167 = vsel %vm1377, %v1005, 0
  %v2170 = vsel %vm1377, %v1006, 0
  %v2173 = vsel %vm1377, %v1007, 0
  %v2176 = vsel %vm1377, %v1008, 0
  %v2179 = vsel %vm1377, %v1009, 0
  %v2182 = vsel %vm1377, %v1010, 0
  %v2185 = vsel %vm1377, %v1011, 0
  %v2188 = vsel %vm1377, %v1012, 0
  %v2191 = vsel %vm1377, %v1013, 0
  %v2194 = vsel %vm1377, %v1014, 0
  %v2197 = vsel %vm1377, %v1015, 0
  %v2200 = vsel %vm1377, %v1016, 0
  %v2203 = vsel %vm1377, %v1017, 0
  %v2206 = vsel %vm1377, %v1018, 0
  %v2209 = vsel %vm1377, %v1019, 0
  %v2212 = vsel %vm1377, %v1020, 0
  %v2215 = vsel %vm1377, %v1021, 0
  %v2218 = vsel %vm1377, %v1022, 0
  %v2221 = vsel %vm1377, %v1023, 0
  %v2224 = vsel %vm1377, %v1024, 0
  %v2227 = vsel %vm1377, %v1025, 0
  %v2230 = vsel %vm1377, %v1026, 0
  %v2233 = vsel %vm1377, %v1027, 0
  %v2236 = vsel %vm1377, %v1028, 0
  %v2239 = vsel %vm1377, %v1029, 0
  %v2242 = vsel %vm1377, %v1030, 0
  %v2245 = vsel %vm1377, %v1031, 0
  %v2248 = vsel %vm1377, %v1032, 0
  %v2251 = vsel %vm1377, %v1033, 0
  %v2254 = vsel %vm1377, %v1034, 0
  %v2257 = vsel %vm1377, %v1035, 0
  %v2260 = vsel %vm1377, %v1036, 0
  %v2263 = vsel %vm1377, %v1037, 0
  %v2266 = vsel %vm1377, %v1038, 0
  %v2269 = vsel %vm1377, %v1039, 0
  %v2272 = vsel %vm1377, %v1040, 0
  %v2275 = vsel %vm1377, %v1041, 0
  %v2278 = vsel %vm1377, %v1042, 0
  %v2281 = vsel %vm1377, %v1043, 0
  %v2284 = vsel %vm1377, %v1044, 0
  %v2287 = vsel %vm1377, %v1045, 0
  %v2290 = vsel %vm1377, %v1046, 0
  %v2293 = vsel %vm1377, %v1047, 0
  %v2296 = vsel %vm1377, %v1048, 0
  %v2299 = vsel %vm1377, %v1049, 0
  %v2302 = vsel %vm1377, %v1050, 0
  %v2305 = vsel %vm1377, %v1051, 0
  %v2308 = vsel %vm1377, %v1052, 0
  %v2311 = vsel %vm1377, %v1053, 0
  %v2314 = vsel %vm1377, %v1054, 0
  %v2317 = vsel %vm1377, %v1055, 0
  %v2320 = vsel %vm1377, %v1056, 0
  %v2323 = vsel %vm1377, %v1057, 0
  %v2326 = vsel %vm1377, %v1058, 0
  %v2329 = vsel %vm1377, %v1059, 0
  %v2332 = vsel %vm1377, %v1060, 0
  %v2335 = vsel %vm1377, %v1061, 0
  %v2338 = vsel %vm1377, %v1062, 0
  %v2341 = vsel %vm1377, %v1063, 0
  %v2344 = vsel %vm1377, %v1064, 0
  %v2347 = vsel %vm1377, %v1065, 0
  %v2350 = vsel %vm1377, %v1066, 0
  %v2353 = vsel %vm1377, %v1067, 0
  %v2356 = vsel %vm1377, %v1068, 0
  %v2359 = vsel %vm1377, %v1069, 0
  %v2362 = vsel %vm1377, %v1070, 0
  %v2365 = vsel %vm1377, %v1071, 0
  %v2368 = vsel %vm1377, %v1072, 0
  %v2371 = vsel %vm1377, %v1073, 0
  %v2374 = vsel %vm1377, %v1074, 0
  %v2377 = vsel %vm1377, %v1075, 0
  %v2380 = vsel %vm1377, %v1076, 0
  %v2383 = vsel %vm1377, %v1077, 0
  %v2386 = vsel %vm1377, %v1078, 0
  %v2389 = vsel %vm1377, %v1079, 0
  %v2392 = vsel %vm1377, %v1080, 0
  %v2395 = vsel %vm1377, %v1081, 0
  %v2398 = vsel %vm1377, %v1082, 0
  %v2401 = vsel %vm1377, %v1083, 0
  %v2404 = vsel %vm1377, %v1084, 0
  %v2407 = vsel %vm1377, %v1085, 0
  %v2410 = vsel %vm1377, %v1086, 0
  %v2413 = vsel %vm1377, %v1087, 0
  %v2416 = vsel %vm1377, %v1088, 0
  %v2419 = vsel %vm1377, %v1089, 0
  %v2422 = vsel %vm1377, %v1090, 0
  %v2425 = vsel %vm1377, %v1091, 0
  %v2428 = vsel %vm1377, %v1092, 0
  %v2431 = vsel %vm1377, %v1093, 0
  %v2434 = vsel %vm1377, %v1094, 0
  %v2437 = vsel %vm1377, %v1095, 0
  %v2440 = vsel %vm1377, %v1096, 0
  %v2443 = vsel %vm1377, %v1097, 0
  %v2446 = vsel %vm1377, %v1098, 0
  %v2449 = vsel %vm1377, %v1099, 0
  %v2452 = vsel %vm1377, %v1100, 0
  %v2455 = vsel %vm1377, %v1101, 0
  %v2458 = vsel %vm1377, %v1102, 0
  %v2461 = vsel %vm1377, %v1103, 0
  %v2464 = vsel %vm1377, %v1104, 0
  %v2467 = vsel %vm1377, %v1105, 0
  %v2470 = vsel %vm1377, %v1106, 0
  %v2473 = vsel %vm1377, %v1107, 0
  %v2476 = vsel %vm1377, %v1108, 0
  %v2479 = vsel %vm1377, %v1109, 0
  %v2482 = vsel %vm1377, %v1110, 0
  %v2485 = vsel %vm1377, %v1111, 0
  %v2488 = vsel %vm1377, %v1112, 0
  %v2491 = vsel %vm1377, %v1113, 0
  %v2494 = vsel %vm1377, %v1114, 0
  %v2497 = vsel %vm1377, %v1115, 0
  %v2500 = vsel %vm1377, %v1116, 0
  %v2503 = vsel %vm1377, %v1117, 0
  %v2506 = vsel %vm1377, %v1118, 0
  %v2509 = vsel %vm1377, %v1119, 0
  %v2512 = vsel %vm1377, %v1120, 0
  %v2515 = vsel %vm1377, %v1121, 0
  %v2518 = vsel %vm1377, %v1122, 0
  %v2521 = vsel %vm1377, %v1123, 0
  %v2524 = vsel %vm1377, %v1124, 0
  %v2527 = vsel %vm1377, %v1125, 0
  %v2530 = vsel %vm1377, %v1126, 0
  %v2533 = vsel %vm1377, %v1127, 0
  %v2536 = vsel %vm1377, %v1128, 0
  %v2539 = vsel %vm1377, %v1129, 0
  %v2542 = vsel %vm1377, %v1130, 0
  %v2545 = vsel %vm1377, %v1131, 0
  %2547 = vmatpush.msra.mxu0 0.0
  %2548 = vmatpush.msra.mxu0 0.0
  %2549 = vmatpush.msra.mxu0 0.0
  %2550 = vmatpush.msra.mxu0 0.0
  %2551 = vmatpush.msra.mxu0 0.0
  %2552 = vmatpush.msra.mxu0 0.0
  %2553 = vmatpush.msra.mxu0 0.0
  %2554 = vmatpush.msra.mxu0 0.0
  %2555 = vmatpush.msra.mxu0 0.0
  %2556 = vmatpush.msra.mxu0 0.0
  %2557 = vmatpush.msra.mxu0 0.0
  %2558 = vmatpush.msra.mxu0 0.0
  %2559 = vmatpush.msra.mxu0 %v1002
  %2560 = vmatpush.msra.mxu0 %v999
  %2561 = vmatpush.msra.mxu0 %v996
  %2562 = vmatpush.msra.mxu0 %v993
  %2563 = vmatmul.f32.gmra.mxu0 %v2164
  %v2564 = vpop.f32.mrf.mxu0
  %v2565 = vadd.f32 %v1780, %v2564
  %2566 = vmatmul.f32.gmra.mxu0 %v2167
  %v2567 = vpop.f32.mrf.mxu0
  %v2568 = vadd.f32 %v1783, %v2567
  %2569 = vmatmul.f32.gmra.mxu0 %v2170
  %v2570 = vpop.f32.mrf.mxu0
  %v2571 = vadd.f32 %v1786, %v2570
  %2572 = vmatmul.f32.gmra.mxu0 %v2173
  %v2573 = vpop.f32.mrf.mxu0
  %v2574 = vadd.f32 %v1789, %v2573
  %2575 = vmatmul.f32.gmra.mxu0 %v2176
  %v2576 = vpop.f32.mrf.mxu0
  %v2577 = vadd.f32 %v1792, %v2576
  %2578 = vmatmul.f32.gmra.mxu0 %v2179
  %v2579 = vpop.f32.mrf.mxu0
  %v2580 = vadd.f32 %v1795, %v2579
  %2581 = vmatmul.f32.gmra.mxu0 %v2182
  %v2582 = vpop.f32.mrf.mxu0
  %v2583 = vadd.f32 %v1798, %v2582
  %2584 = vmatmul.f32.gmra.mxu0 %v2185
  %v2585 = vpop.f32.mrf.mxu0
  %v2586 = vadd.f32 %v1801, %v2585
  %2587 = vmatmul.f32.gmra.mxu0 %v2188
  %v2588 = vpop.f32.mrf.mxu0
  %v2589 = vadd.f32 %v1804, %v2588
  %2590 = vmatmul.f32.gmra.mxu0 %v2191
  %v2591 = vpop.f32.mrf.mxu0
  %v2592 = vadd.f32 %v1807, %v2591
  %2593 = vmatmul.f32.gmra.mxu0 %v2194
  %v2594 = vpop.f32.mrf.mxu0
  %v2595 = vadd.f32 %v1810, %v2594
  %2596 = vmatmul.f32.gmra.mxu0 %v2197
  %v2597 = vpop.f32.mrf.mxu0
  %v2598 = vadd.f32 %v1813, %v2597
  %2599 = vmatmul.f32.gmra.mxu0 %v2200
  %v2600 = vpop.f32.mrf.mxu0
  %v2601 = vadd.f32 %v1816, %v2600
  %2602 = vmatmul.f32.gmra.mxu0 %v2203
  %v2603 = vpop.f32.mrf.mxu0
  %v2604 = vadd.f32 %v1819, %v2603
  %2605 = vmatmul.f32.gmra.mxu0 %v2206
  %v2606 = vpop.f32.mrf.mxu0
  %v2607 = vadd.f32 %v1822, %v2606
  %2608 = vmatmul.f32.gmra.mxu0 %v2209
  %v2609 = vpop.f32.mrf.mxu0
  %v2610 = vadd.f32 %v1825, %v2609
  %2611 = vmatmul.f32.gmra.mxu0 %v2212
  %v2612 = vpop.f32.mrf.mxu0
  %v2613 = vadd.f32 %v1828, %v2612
  %2614 = vmatmul.f32.gmra.mxu0 %v2215
  %v2615 = vpop.f32.mrf.mxu0
  %v2616 = vadd.f32 %v1831, %v2615
  %2617 = vmatmul.f32.gmra.mxu0 %v2218
  %v2618 = vpop.f32.mrf.mxu0
  %v2619 = vadd.f32 %v1834, %v2618
  %2620 = vmatmul.f32.gmra.mxu0 %v2221
  %v2621 = vpop.f32.mrf.mxu0
  %v2622 = vadd.f32 %v1837, %v2621
  %2623 = vmatmul.f32.gmra.mxu0 %v2224
  %v2624 = vpop.f32.mrf.mxu0
  %v2625 = vadd.f32 %v1840, %v2624
  %2626 = vmatmul.f32.gmra.mxu0 %v2227
  %v2627 = vpop.f32.mrf.mxu0
  %v2628 = vadd.f32 %v1843, %v2627
  %2629 = vmatmul.f32.gmra.mxu0 %v2230
  %v2630 = vpop.f32.mrf.mxu0
  %v2631 = vadd.f32 %v1846, %v2630
  %2632 = vmatmul.f32.gmra.mxu0 %v2233
  %v2633 = vpop.f32.mrf.mxu0
  %v2634 = vadd.f32 %v1849, %v2633
  %2635 = vmatmul.f32.gmra.mxu0 %v2236
  %v2636 = vpop.f32.mrf.mxu0
  %v2637 = vadd.f32 %v1852, %v2636
  %2638 = vmatmul.f32.gmra.mxu0 %v2239
  %v2639 = vpop.f32.mrf.mxu0
  %v2640 = vadd.f32 %v1855, %v2639
  %2641 = vmatmul.f32.gmra.mxu0 %v2242
  %v2642 = vpop.f32.mrf.mxu0
  %v2643 = vadd.f32 %v1858, %v2642
  %2644 = vmatmul.f32.gmra.mxu0 %v2245
  %v2645 = vpop.f32.mrf.mxu0
  %v2646 = vadd.f32 %v1861, %v2645
  %2647 = vmatmul.f32.gmra.mxu0 %v2248
  %v2648 = vpop.f32.mrf.mxu0
  %v2649 = vadd.f32 %v1864, %v2648
  %2650 = vmatmul.f32.gmra.mxu0 %v2251
  %v2651 = vpop.f32.mrf.mxu0
  %v2652 = vadd.f32 %v1867, %v2651
  %2653 = vmatmul.f32.gmra.mxu0 %v2254
  %v2654 = vpop.f32.mrf.mxu0
  %v2655 = vadd.f32 %v1870, %v2654
  %2656 = vmatmul.f32.gmra.mxu0 %v2257
  %v2657 = vpop.f32.mrf.mxu0
  %v2658 = vadd.f32 %v1873, %v2657
  %2659 = vmatmul.f32.gmra.mxu0 %v2260
  %v2660 = vpop.f32.mrf.mxu0
  %v2661 = vadd.f32 %v1876, %v2660
  %2662 = vmatmul.f32.gmra.mxu0 %v2263
  %v2663 = vpop.f32.mrf.mxu0
  %v2664 = vadd.f32 %v1879, %v2663
  %2665 = vmatmul.f32.gmra.mxu0 %v2266
  %v2666 = vpop.f32.mrf.mxu0
  %v2667 = vadd.f32 %v1882, %v2666
  %2668 = vmatmul.f32.gmra.mxu0 %v2269
  %v2669 = vpop.f32.mrf.mxu0
  %v2670 = vadd.f32 %v1885, %v2669
  %2671 = vmatmul.f32.gmra.mxu0 %v2272
  %v2672 = vpop.f32.mrf.mxu0
  %v2673 = vadd.f32 %v1888, %v2672
  %2674 = vmatmul.f32.gmra.mxu0 %v2275
  %v2675 = vpop.f32.mrf.mxu0
  %v2676 = vadd.f32 %v1891, %v2675
  %2677 = vmatmul.f32.gmra.mxu0 %v2278
  %v2678 = vpop.f32.mrf.mxu0
  %v2679 = vadd.f32 %v1894, %v2678
  %2680 = vmatmul.f32.gmra.mxu0 %v2281
  %v2681 = vpop.f32.mrf.mxu0
  %v2682 = vadd.f32 %v1897, %v2681
  %2683 = vmatmul.f32.gmra.mxu0 %v2284
  %v2684 = vpop.f32.mrf.mxu0
  %v2685 = vadd.f32 %v1900, %v2684
  %2686 = vmatmul.f32.gmra.mxu0 %v2287
  %v2687 = vpop.f32.mrf.mxu0
  %v2688 = vadd.f32 %v1903, %v2687
  %2689 = vmatmul.f32.gmra.mxu0 %v2290
  %v2690 = vpop.f32.mrf.mxu0
  %v2691 = vadd.f32 %v1906, %v2690
  %2692 = vmatmul.f32.gmra.mxu0 %v2293
  %v2693 = vpop.f32.mrf.mxu0
  %v2694 = vadd.f32 %v1909, %v2693
  %2695 = vmatmul.f32.gmra.mxu0 %v2296
  %v2696 = vpop.f32.mrf.mxu0
  %v2697 = vadd.f32 %v1912, %v2696
  %2698 = vmatmul.f32.gmra.mxu0 %v2299
  %v2699 = vpop.f32.mrf.mxu0
  %v2700 = vadd.f32 %v1915, %v2699
  %2701 = vmatmul.f32.gmra.mxu0 %v2302
  %v2702 = vpop.f32.mrf.mxu0
  %v2703 = vadd.f32 %v1918, %v2702
  %2704 = vmatmul.f32.gmra.mxu0 %v2305
  %v2705 = vpop.f32.mrf.mxu0
  %v2706 = vadd.f32 %v1921, %v2705
  %2707 = vmatmul.f32.gmra.mxu0 %v2308
  %v2708 = vpop.f32.mrf.mxu0
  %v2709 = vadd.f32 %v1924, %v2708
  %2710 = vmatmul.f32.gmra.mxu0 %v2311
  %v2711 = vpop.f32.mrf.mxu0
  %v2712 = vadd.f32 %v1927, %v2711
  %2713 = vmatmul.f32.gmra.mxu0 %v2314
  %v2714 = vpop.f32.mrf.mxu0
  %v2715 = vadd.f32 %v1930, %v2714
  %2716 = vmatmul.f32.gmra.mxu0 %v2317
  %v2717 = vpop.f32.mrf.mxu0
  %v2718 = vadd.f32 %v1933, %v2717
  %2719 = vmatmul.f32.gmra.mxu0 %v2320
  %v2720 = vpop.f32.mrf.mxu0
  %v2721 = vadd.f32 %v1936, %v2720
  %2722 = vmatmul.f32.gmra.mxu0 %v2323
  %v2723 = vpop.f32.mrf.mxu0
  %v2724 = vadd.f32 %v1939, %v2723
  %2725 = vmatmul.f32.gmra.mxu0 %v2326
  %v2726 = vpop.f32.mrf.mxu0
  %v2727 = vadd.f32 %v1942, %v2726
  %2728 = vmatmul.f32.gmra.mxu0 %v2329
  %v2729 = vpop.f32.mrf.mxu0
  %v2730 = vadd.f32 %v1945, %v2729
  %2731 = vmatmul.f32.gmra.mxu0 %v2332
  %v2732 = vpop.f32.mrf.mxu0
  %v2733 = vadd.f32 %v1948, %v2732
  %2734 = vmatmul.f32.gmra.mxu0 %v2335
  %v2735 = vpop.f32.mrf.mxu0
  %v2736 = vadd.f32 %v1951, %v2735
  %2737 = vmatmul.f32.gmra.mxu0 %v2338
  %v2738 = vpop.f32.mrf.mxu0
  %v2739 = vadd.f32 %v1954, %v2738
  %2740 = vmatmul.f32.gmra.mxu0 %v2341
  %v2741 = vpop.f32.mrf.mxu0
  %v2742 = vadd.f32 %v1957, %v2741
  %2743 = vmatmul.f32.gmra.mxu0 %v2344
  %v2744 = vpop.f32.mrf.mxu0
  %v2745 = vadd.f32 %v1960, %v2744
  %2746 = vmatmul.f32.gmra.mxu0 %v2347
  %v2747 = vpop.f32.mrf.mxu0
  %v2748 = vadd.f32 %v1963, %v2747
  %2749 = vmatmul.f32.gmra.mxu0 %v2350
  %v2750 = vpop.f32.mrf.mxu0
  %v2751 = vadd.f32 %v1966, %v2750
  %2752 = vmatmul.f32.gmra.mxu0 %v2353
  %v2753 = vpop.f32.mrf.mxu0
  %v2754 = vadd.f32 %v1969, %v2753
  %2755 = vmatmul.f32.gmra.mxu0 %v2356
  %v2756 = vpop.f32.mrf.mxu0
  %v2757 = vadd.f32 %v1972, %v2756
  %2758 = vmatmul.f32.gmra.mxu0 %v2359
  %v2759 = vpop.f32.mrf.mxu0
  %v2760 = vadd.f32 %v1975, %v2759
  %2761 = vmatmul.f32.gmra.mxu0 %v2362
  %v2762 = vpop.f32.mrf.mxu0
  %v2763 = vadd.f32 %v1978, %v2762
  %2764 = vmatmul.f32.gmra.mxu0 %v2365
  %v2765 = vpop.f32.mrf.mxu0
  %v2766 = vadd.f32 %v1981, %v2765
  %2767 = vmatmul.f32.gmra.mxu0 %v2368
  %v2768 = vpop.f32.mrf.mxu0
  %v2769 = vadd.f32 %v1984, %v2768
  %2770 = vmatmul.f32.gmra.mxu0 %v2371
  %v2771 = vpop.f32.mrf.mxu0
  %v2772 = vadd.f32 %v1987, %v2771
  %2773 = vmatmul.f32.gmra.mxu0 %v2374
  %v2774 = vpop.f32.mrf.mxu0
  %v2775 = vadd.f32 %v1990, %v2774
  %2776 = vmatmul.f32.gmra.mxu0 %v2377
  %v2777 = vpop.f32.mrf.mxu0
  %v2778 = vadd.f32 %v1993, %v2777
  %2779 = vmatmul.f32.gmra.mxu0 %v2380
  %v2780 = vpop.f32.mrf.mxu0
  %v2781 = vadd.f32 %v1996, %v2780
  %2782 = vmatmul.f32.gmra.mxu0 %v2383
  %v2783 = vpop.f32.mrf.mxu0
  %v2784 = vadd.f32 %v1999, %v2783
  %2785 = vmatmul.f32.gmra.mxu0 %v2386
  %v2786 = vpop.f32.mrf.mxu0
  %v2787 = vadd.f32 %v2002, %v2786
  %2788 = vmatmul.f32.gmra.mxu0 %v2389
  %v2789 = vpop.f32.mrf.mxu0
  %v2790 = vadd.f32 %v2005, %v2789
  %2791 = vmatmul.f32.gmra.mxu0 %v2392
  %v2792 = vpop.f32.mrf.mxu0
  %v2793 = vadd.f32 %v2008, %v2792
  %2794 = vmatmul.f32.gmra.mxu0 %v2395
  %v2795 = vpop.f32.mrf.mxu0
  %v2796 = vadd.f32 %v2011, %v2795
  %2797 = vmatmul.f32.gmra.mxu0 %v2398
  %v2798 = vpop.f32.mrf.mxu0
  %v2799 = vadd.f32 %v2014, %v2798
  %2800 = vmatmul.f32.gmra.mxu0 %v2401
  %v2801 = vpop.f32.mrf.mxu0
  %v2802 = vadd.f32 %v2017, %v2801
  %2803 = vmatmul.f32.gmra.mxu0 %v2404
  %v2804 = vpop.f32.mrf.mxu0
  %v2805 = vadd.f32 %v2020, %v2804
  %2806 = vmatmul.f32.gmra.mxu0 %v2407
  %v2807 = vpop.f32.mrf.mxu0
  %v2808 = vadd.f32 %v2023, %v2807
  %2809 = vmatmul.f32.gmra.mxu0 %v2410
  %v2810 = vpop.f32.mrf.mxu0
  %v2811 = vadd.f32 %v2026, %v2810
  %2812 = vmatmul.f32.gmra.mxu0 %v2413
  %v2813 = vpop.f32.mrf.mxu0
  %v2814 = vadd.f32 %v2029, %v2813
  %2815 = vmatmul.f32.gmra.mxu0 %v2416
  %v2816 = vpop.f32.mrf.mxu0
  %v2817 = vadd.f32 %v2032, %v2816
  %2818 = vmatmul.f32.gmra.mxu0 %v2419
  %v2819 = vpop.f32.mrf.mxu0
  %v2820 = vadd.f32 %v2035, %v2819
  %2821 = vmatmul.f32.gmra.mxu0 %v2422
  %v2822 = vpop.f32.mrf.mxu0
  %v2823 = vadd.f32 %v2038, %v2822
  %2824 = vmatmul.f32.gmra.mxu0 %v2425
  %v2825 = vpop.f32.mrf.mxu0
  %v2826 = vadd.f32 %v2041, %v2825
  %2827 = vmatmul.f32.gmra.mxu0 %v2428
  %v2828 = vpop.f32.mrf.mxu0
  %v2829 = vadd.f32 %v2044, %v2828
  %2830 = vmatmul.f32.gmra.mxu0 %v2431
  %v2831 = vpop.f32.mrf.mxu0
  %v2832 = vadd.f32 %v2047, %v2831
  %2833 = vmatmul.f32.gmra.mxu0 %v2434
  %v2834 = vpop.f32.mrf.mxu0
  %v2835 = vadd.f32 %v2050, %v2834
  %2836 = vmatmul.f32.gmra.mxu0 %v2437
  %v2837 = vpop.f32.mrf.mxu0
  %v2838 = vadd.f32 %v2053, %v2837
  %2839 = vmatmul.f32.gmra.mxu0 %v2440
  %v2840 = vpop.f32.mrf.mxu0
  %v2841 = vadd.f32 %v2056, %v2840
  %2842 = vmatmul.f32.gmra.mxu0 %v2443
  %v2843 = vpop.f32.mrf.mxu0
  %v2844 = vadd.f32 %v2059, %v2843
  %2845 = vmatmul.f32.gmra.mxu0 %v2446
  %v2846 = vpop.f32.mrf.mxu0
  %v2847 = vadd.f32 %v2062, %v2846
  %2848 = vmatmul.f32.gmra.mxu0 %v2449
  %v2849 = vpop.f32.mrf.mxu0
  %v2850 = vadd.f32 %v2065, %v2849
  %2851 = vmatmul.f32.gmra.mxu0 %v2452
  %v2852 = vpop.f32.mrf.mxu0
  %v2853 = vadd.f32 %v2068, %v2852
  %2854 = vmatmul.f32.gmra.mxu0 %v2455
  %v2855 = vpop.f32.mrf.mxu0
  %v2856 = vadd.f32 %v2071, %v2855
  %2857 = vmatmul.f32.gmra.mxu0 %v2458
  %v2858 = vpop.f32.mrf.mxu0
  %v2859 = vadd.f32 %v2074, %v2858
  %2860 = vmatmul.f32.gmra.mxu0 %v2461
  %v2861 = vpop.f32.mrf.mxu0
  %v2862 = vadd.f32 %v2077, %v2861
  %2863 = vmatmul.f32.gmra.mxu0 %v2464
  %v2864 = vpop.f32.mrf.mxu0
  %v2865 = vadd.f32 %v2080, %v2864
  %2866 = vmatmul.f32.gmra.mxu0 %v2467
  %v2867 = vpop.f32.mrf.mxu0
  %v2868 = vadd.f32 %v2083, %v2867
  %2869 = vmatmul.f32.gmra.mxu0 %v2470
  %v2870 = vpop.f32.mrf.mxu0
  %v2871 = vadd.f32 %v2086, %v2870
  %2872 = vmatmul.f32.gmra.mxu0 %v2473
  %v2873 = vpop.f32.mrf.mxu0
  %v2874 = vadd.f32 %v2089, %v2873
  %2875 = vmatmul.f32.gmra.mxu0 %v2476
  %v2876 = vpop.f32.mrf.mxu0
  %v2877 = vadd.f32 %v2092, %v2876
  %2878 = vmatmul.f32.gmra.mxu0 %v2479
  %v2879 = vpop.f32.mrf.mxu0
  %v2880 = vadd.f32 %v2095, %v2879
  %2881 = vmatmul.f32.gmra.mxu0 %v2482
  %v2882 = vpop.f32.mrf.mxu0
  %v2883 = vadd.f32 %v2098, %v2882
  %2884 = vmatmul.f32.gmra.mxu0 %v2485
  %v2885 = vpop.f32.mrf.mxu0
  %v2886 = vadd.f32 %v2101, %v2885
  %2887 = vmatmul.f32.gmra.mxu0 %v2488
  %v2888 = vpop.f32.mrf.mxu0
  %v2889 = vadd.f32 %v2104, %v2888
  %2890 = vmatmul.f32.gmra.mxu0 %v2491
  %v2891 = vpop.f32.mrf.mxu0
  %v2892 = vadd.f32 %v2107, %v2891
  %2893 = vmatmul.f32.gmra.mxu0 %v2494
  %v2894 = vpop.f32.mrf.mxu0
  %v2895 = vadd.f32 %v2110, %v2894
  %2896 = vmatmul.f32.gmra.mxu0 %v2497
  %v2897 = vpop.f32.mrf.mxu0
  %v2898 = vadd.f32 %v2113, %v2897
  %2899 = vmatmul.f32.gmra.mxu0 %v2500
  %v2900 = vpop.f32.mrf.mxu0
  %v2901 = vadd.f32 %v2116, %v2900
  %2902 = vmatmul.f32.gmra.mxu0 %v2503
  %v2903 = vpop.f32.mrf.mxu0
  %v2904 = vadd.f32 %v2119, %v2903
  %2905 = vmatmul.f32.gmra.mxu0 %v2506
  %v2906 = vpop.f32.mrf.mxu0
  %v2907 = vadd.f32 %v2122, %v2906
  %2908 = vmatmul.f32.gmra.mxu0 %v2509
  %v2909 = vpop.f32.mrf.mxu0
  %v2910 = vadd.f32 %v2125, %v2909
  %2911 = vmatmul.f32.gmra.mxu0 %v2512
  %v2912 = vpop.f32.mrf.mxu0
  %v2913 = vadd.f32 %v2128, %v2912
  %2914 = vmatmul.f32.gmra.mxu0 %v2515
  %v2915 = vpop.f32.mrf.mxu0
  %v2916 = vadd.f32 %v2131, %v2915
  %2917 = vmatmul.f32.gmra.mxu0 %v2518
  %v2918 = vpop.f32.mrf.mxu0
  %v2919 = vadd.f32 %v2134, %v2918
  %2920 = vmatmul.f32.gmra.mxu0 %v2521
  %v2921 = vpop.f32.mrf.mxu0
  %v2922 = vadd.f32 %v2137, %v2921
  %2923 = vmatmul.f32.gmra.mxu0 %v2524
  %v2924 = vpop.f32.mrf.mxu0
  %v2925 = vadd.f32 %v2140, %v2924
  %2926 = vmatmul.f32.gmra.mxu0 %v2527
  %v2927 = vpop.f32.mrf.mxu0
  %v2928 = vadd.f32 %v2143, %v2927
  %2929 = vmatmul.f32.gmra.mxu0 %v2530
  %v2930 = vpop.f32.mrf.mxu0
  %v2931 = vadd.f32 %v2146, %v2930
  %2932 = vmatmul.f32.gmra.mxu0 %v2533
  %v2933 = vpop.f32.mrf.mxu0
  %v2934 = vadd.f32 %v2149, %v2933
  %2935 = vmatmul.f32.gmra.mxu0 %v2536
  %v2936 = vpop.f32.mrf.mxu0
  %v2937 = vadd.f32 %v2152, %v2936
  %2938 = vmatmul.f32.gmra.mxu0 %v2539
  %v2939 = vpop.f32.mrf.mxu0
  %v2940 = vadd.f32 %v2155, %v2939
  %2941 = vmatmul.f32.gmra.mxu0 %v2542
  %v2942 = vpop.f32.mrf.mxu0
  %v2943 = vadd.f32 %v2158, %v2942
  %2944 = vmatmul.f32.gmra.mxu0 %v2545
  %v2945 = vpop.f32.mrf.mxu0
  %v2946 = vadd.f32 %v2161, %v2945
  %2947 = vdwg.mxu0
  %2948 = vmatpush.msra.mxu0 %v839
  %2949 = vmatpush.msra.mxu0 %v838
  %2950 = vmatpush.msra.mxu0 %v837
  %2951 = vmatpush.msra.mxu0 %v836
  %2952 = vmatpush.msra.mxu0 %v835
  %2953 = vmatpush.msra.mxu0 %v834
  %2954 = vmatpush.msra.mxu0 %v833
  %2955 = vmatpush.msra.mxu0 %v832
  %2956 = vmatpush.msra.mxu0 %v831
  %2957 = vmatpush.msra.mxu0 %v830
  %2958 = vmatpush.msra.mxu0 %v829
  %2959 = vmatpush.msra.mxu0 %v828
  %2960 = vmatpush.msra.mxu0 %v827
  %2961 = vmatpush.msra.mxu0 %v826
  %2962 = vmatpush.msra.mxu0 %v825
  %2963 = vmatpush.msra.mxu0 %v824
  %2964 = vmatmul.f32.gmra.mxu0 %v752
  %v2965 = vpop.f32.mrf.mxu0
  %v2966 = vadd.f32 0.0, %v2965
  %2967 = vmatmul.f32.gmra.mxu0 %v772
  %v2968 = vpop.f32.mrf.mxu0
  %v2969 = vadd.f32 0.0, %v2968
  %2970 = vmatmul.f32.gmra.mxu0 %v792
  %v2971 = vpop.f32.mrf.mxu0
  %v2972 = vadd.f32 0.0, %v2971
  %2973 = vmatmul.f32.gmra.mxu0 %v812
  %v2974 = vpop.f32.mrf.mxu0
  %v2975 = vadd.f32 0.0, %v2974
  %2976 = vdwg.mxu0
  %2977 = vmatpush.msra.mxu0 %v855
  %2978 = vmatpush.msra.mxu0 %v854
  %2979 = vmatpush.msra.mxu0 %v853
  %2980 = vmatpush.msra.mxu0 %v852
  %2981 = vmatpush.msra.mxu0 %v851
  %2982 = vmatpush.msra.mxu0 %v850
  %2983 = vmatpush.msra.mxu0 %v849
  %2984 = vmatpush.msra.mxu0 %v848
  %2985 = vmatpush.msra.mxu0 %v847
  %2986 = vmatpush.msra.mxu0 %v846
  %2987 = vmatpush.msra.mxu0 %v845
  %2988 = vmatpush.msra.mxu0 %v844
  %2989 = vmatpush.msra.mxu0 %v843
  %2990 = vmatpush.msra.mxu0 %v842
  %2991 = vmatpush.msra.mxu0 %v841
  %2992 = vmatpush.msra.mxu0 %v840
  %2993 = vmatmul.f32.gmra.mxu0 %v753
  %v2994 = vpop.f32.mrf.mxu0
  %v2995 = vadd.f32 %v2966, %v2994
  %2996 = vmatmul.f32.gmra.mxu0 %v773
  %v2997 = vpop.f32.mrf.mxu0
  %v2998 = vadd.f32 %v2969, %v2997
  %2999 = vmatmul.f32.gmra.mxu0 %v793
  %v3000 = vpop.f32.mrf.mxu0
  %v3001 = vadd.f32 %v2972, %v3000
  %3002 = vmatmul.f32.gmra.mxu0 %v813
  %v3003 = vpop.f32.mrf.mxu0
  %v3004 = vadd.f32 %v2975, %v3003
  %3005 = vdwg.mxu0
  %3006 = vmatpush.msra.mxu0 %v871
  %3007 = vmatpush.msra.mxu0 %v870
  %3008 = vmatpush.msra.mxu0 %v869
  %3009 = vmatpush.msra.mxu0 %v868
  %3010 = vmatpush.msra.mxu0 %v867
  %3011 = vmatpush.msra.mxu0 %v866
  %3012 = vmatpush.msra.mxu0 %v865
  %3013 = vmatpush.msra.mxu0 %v864
  %3014 = vmatpush.msra.mxu0 %v863
  %3015 = vmatpush.msra.mxu0 %v862
  %3016 = vmatpush.msra.mxu0 %v861
  %3017 = vmatpush.msra.mxu0 %v860
  %3018 = vmatpush.msra.mxu0 %v859
  %3019 = vmatpush.msra.mxu0 %v858
  %3020 = vmatpush.msra.mxu0 %v857
  %3021 = vmatpush.msra.mxu0 %v856
  %3022 = vmatmul.f32.gmra.mxu0 %v754
  %v3023 = vpop.f32.mrf.mxu0
  %v3024 = vadd.f32 %v2995, %v3023
  %3025 = vmatmul.f32.gmra.mxu0 %v774
  %v3026 = vpop.f32.mrf.mxu0
  %v3027 = vadd.f32 %v2998, %v3026
  %3028 = vmatmul.f32.gmra.mxu0 %v794
  %v3029 = vpop.f32.mrf.mxu0
  %v3030 = vadd.f32 %v3001, %v3029
  %3031 = vmatmul.f32.gmra.mxu0 %v814
  %v3032 = vpop.f32.mrf.mxu0
  %v3033 = vadd.f32 %v3004, %v3032
  %3034 = vdwg.mxu0
  %3035 = vmatpush.msra.mxu0 %v887
  %3036 = vmatpush.msra.mxu0 %v886
  %3037 = vmatpush.msra.mxu0 %v885
  %3038 = vmatpush.msra.mxu0 %v884
  %3039 = vmatpush.msra.mxu0 %v883
  %3040 = vmatpush.msra.mxu0 %v882
  %3041 = vmatpush.msra.mxu0 %v881
  %3042 = vmatpush.msra.mxu0 %v880
  %3043 = vmatpush.msra.mxu0 %v879
  %3044 = vmatpush.msra.mxu0 %v878
  %3045 = vmatpush.msra.mxu0 %v877
  %3046 = vmatpush.msra.mxu0 %v876
  %3047 = vmatpush.msra.mxu0 %v875
  %3048 = vmatpush.msra.mxu0 %v874
  %3049 = vmatpush.msra.mxu0 %v873
  %3050 = vmatpush.msra.mxu0 %v872
  %3051 = vmatmul.f32.gmra.mxu0 %v755
  %v3052 = vpop.f32.mrf.mxu0
  %v3053 = vadd.f32 %v3024, %v3052
  %3054 = vmatmul.f32.gmra.mxu0 %v775
  %v3055 = vpop.f32.mrf.mxu0
  %v3056 = vadd.f32 %v3027, %v3055
  %3057 = vmatmul.f32.gmra.mxu0 %v795
  %v3058 = vpop.f32.mrf.mxu0
  %v3059 = vadd.f32 %v3030, %v3058
  %3060 = vmatmul.f32.gmra.mxu0 %v815
  %v3061 = vpop.f32.mrf.mxu0
  %v3062 = vadd.f32 %v3033, %v3061
  %3063 = vdwg.mxu0
  %s3064 = scalar_lea.vmem %s4, 2048
  %v3065 = vld [vmem:[%s3064] sm:$0xff]
  %v3066 = vld [vmem:[%s3064 + $0x8] sm:$0xff]
  %v3067 = vld [vmem:[%s3064 + $0x10] sm:$0xff]
  %v3068 = vld [vmem:[%s3064 + $0x18] sm:$0xff]
  %v3069 = vld [vmem:[%s3064 + $0x20] sm:$0xff]
  %v3070 = vld [vmem:[%s3064 + $0x28] sm:$0xff]
  %v3071 = vld [vmem:[%s3064 + $0x30] sm:$0xff]
  %v3072 = vld [vmem:[%s3064 + $0x38] sm:$0xff]
  %v3073 = vld [vmem:[%s3064 + $0x40] sm:$0xff]
  %v3074 = vld [vmem:[%s3064 + $0x48] sm:$0xff]
  %v3075 = vld [vmem:[%s3064 + $0x50] sm:$0xff]
  %v3076 = vld [vmem:[%s3064 + $0x58] sm:$0xff]
  %v3077 = vld [vmem:[%s3064 + $0x60] sm:$0xff]
  %v3078 = vld [vmem:[%s3064 + $0x68] sm:$0xff]
  %v3079 = vld [vmem:[%s3064 + $0x70] sm:$0xff]
  %v3080 = vld [vmem:[%s3064 + $0x78] sm:$0xff]
  %v3081 = vld [vmem:[%s3064 + $0x80] sm:$0xff]
  %v3082 = vld [vmem:[%s3064 + $0x88] sm:$0xff]
  %v3083 = vld [vmem:[%s3064 + $0x90] sm:$0xff]
  %v3084 = vld [vmem:[%s3064 + $0x98] sm:$0xff]
  %v3085 = vld [vmem:[%s3064 + $0xa0] sm:$0xff]
  %v3086 = vld [vmem:[%s3064 + $0xa8] sm:$0xff]
  %v3087 = vld [vmem:[%s3064 + $0xb0] sm:$0xff]
  %v3088 = vld [vmem:[%s3064 + $0xb8] sm:$0xff]
  %v3089 = vld [vmem:[%s3064 + $0xc0] sm:$0xff]
  %v3090 = vld [vmem:[%s3064 + $0xc8] sm:$0xff]
  %v3091 = vld [vmem:[%s3064 + $0xd0] sm:$0xff]
  %v3092 = vld [vmem:[%s3064 + $0xd8] sm:$0xff]
  %v3093 = vld [vmem:[%s3064 + $0xe0] sm:$0xff]
  %v3094 = vld [vmem:[%s3064 + $0xe8] sm:$0xff]
  %v3095 = vld [vmem:[%s3064 + $0xf0] sm:$0xff]
  %v3096 = vld [vmem:[%s3064 + $0xf8] sm:$0xff]
  %v3097 = vld [vmem:[%s3064 + $0x100] sm:$0xff]
  %v3098 = vld [vmem:[%s3064 + $0x108] sm:$0xff]
  %v3099 = vld [vmem:[%s3064 + $0x110] sm:$0xff]
  %v3100 = vld [vmem:[%s3064 + $0x118] sm:$0xff]
  %v3101 = vld [vmem:[%s3064 + $0x120] sm:$0xff]
  %v3102 = vld [vmem:[%s3064 + $0x128] sm:$0xff]
  %v3103 = vld [vmem:[%s3064 + $0x130] sm:$0xff]
  %v3104 = vld [vmem:[%s3064 + $0x138] sm:$0xff]
  %v3105 = vld [vmem:[%s3064 + $0x140] sm:$0xff]
  %v3106 = vld [vmem:[%s3064 + $0x148] sm:$0xff]
  %v3107 = vld [vmem:[%s3064 + $0x150] sm:$0xff]
  %v3108 = vld [vmem:[%s3064 + $0x158] sm:$0xff]
  %v3109 = vld [vmem:[%s3064 + $0x160] sm:$0xff]
  %v3110 = vld [vmem:[%s3064 + $0x168] sm:$0xff]
  %v3111 = vld [vmem:[%s3064 + $0x170] sm:$0xff]
  %v3112 = vld [vmem:[%s3064 + $0x178] sm:$0xff]
  %v3113 = vld [vmem:[%s3064 + $0x180] sm:$0xff]
  %v3114 = vld [vmem:[%s3064 + $0x188] sm:$0xff]
  %v3115 = vld [vmem:[%s3064 + $0x190] sm:$0xff]
  %v3116 = vld [vmem:[%s3064 + $0x198] sm:$0xff]
  %v3117 = vld [vmem:[%s3064 + $0x1a0] sm:$0xff]
  %v3118 = vld [vmem:[%s3064 + $0x1a8] sm:$0xff]
  %v3119 = vld [vmem:[%s3064 + $0x1b0] sm:$0xff]
  %v3120 = vld [vmem:[%s3064 + $0x1b8] sm:$0xff]
  %v3121 = vld [vmem:[%s3064 + $0x1c0] sm:$0xff]
  %v3122 = vld [vmem:[%s3064 + $0x1c8] sm:$0xff]
  %v3123 = vld [vmem:[%s3064 + $0x1d0] sm:$0xff]
  %v3124 = vld [vmem:[%s3064 + $0x1d8] sm:$0xff]
  %v3125 = vld [vmem:[%s3064 + $0x1e0] sm:$0xff]
  %v3126 = vld [vmem:[%s3064 + $0x1e8] sm:$0xff]
  %v3127 = vld [vmem:[%s3064 + $0x1f0] sm:$0xff]
  %v3128 = vld [vmem:[%s3064 + $0x1f8] sm:$0xff]
  %v3129 = vld [vmem:[%s3064 + $0x200] sm:$0xff]
  %v3130 = vld [vmem:[%s3064 + $0x208] sm:$0xff]
  %v3131 = vld [vmem:[%s3064 + $0x210] sm:$0xff]
  %v3132 = vld [vmem:[%s3064 + $0x218] sm:$0xff]
  %v3133 = vld [vmem:[%s3064 + $0x220] sm:$0xff]
  %v3134 = vld [vmem:[%s3064 + $0x228] sm:$0xff]
  %v3135 = vld [vmem:[%s3064 + $0x230] sm:$0xff]
  %v3136 = vld [vmem:[%s3064 + $0x238] sm:$0xff]
  %v3137 = vld [vmem:[%s3064 + $0x240] sm:$0xff]
  %v3138 = vld [vmem:[%s3064 + $0x248] sm:$0xff]
  %v3139 = vld [vmem:[%s3064 + $0x250] sm:$0xff]
  %v3140 = vld [vmem:[%s3064 + $0x258] sm:$0xff]
  %v3141 = vld [vmem:[%s3064 + $0x260] sm:$0xff]
  %v3142 = vld [vmem:[%s3064 + $0x268] sm:$0xff]
  %v3143 = vld [vmem:[%s3064 + $0x270] sm:$0xff]
  %v3144 = vld [vmem:[%s3064 + $0x278] sm:$0xff]
  %v3145 = vld [vmem:[%s3064 + $0x280] sm:$0xff]
  %v3146 = vld [vmem:[%s3064 + $0x288] sm:$0xff]
  %v3147 = vld [vmem:[%s3064 + $0x290] sm:$0xff]
  %v3148 = vld [vmem:[%s3064 + $0x298] sm:$0xff]
  %v3149 = vld [vmem:[%s3064 + $0x2a0] sm:$0xff]
  %v3150 = vld [vmem:[%s3064 + $0x2a8] sm:$0xff]
  %v3151 = vld [vmem:[%s3064 + $0x2b0] sm:$0xff]
  %v3152 = vld [vmem:[%s3064 + $0x2b8] sm:$0xff]
  %v3153 = vld [vmem:[%s3064 + $0x2c0] sm:$0xff]
  %v3154 = vld [vmem:[%s3064 + $0x2c8] sm:$0xff]
  %v3155 = vld [vmem:[%s3064 + $0x2d0] sm:$0xff]
  %v3156 = vld [vmem:[%s3064 + $0x2d8] sm:$0xff]
  %v3157 = vld [vmem:[%s3064 + $0x2e0] sm:$0xff]
  %v3158 = vld [vmem:[%s3064 + $0x2e8] sm:$0xff]
  %v3159 = vld [vmem:[%s3064 + $0x2f0] sm:$0xff]
  %v3160 = vld [vmem:[%s3064 + $0x2f8] sm:$0xff]
  %v3161 = vld [vmem:[%s3064 + $0x300] sm:$0xff]
  %v3162 = vld [vmem:[%s3064 + $0x308] sm:$0xff]
  %v3163 = vld [vmem:[%s3064 + $0x310] sm:$0xff]
  %v3164 = vld [vmem:[%s3064 + $0x318] sm:$0xff]
  %v3165 = vld [vmem:[%s3064 + $0x320] sm:$0xff]
  %v3166 = vld [vmem:[%s3064 + $0x328] sm:$0xff]
  %v3167 = vld [vmem:[%s3064 + $0x330] sm:$0xff]
  %v3168 = vld [vmem:[%s3064 + $0x338] sm:$0xff]
  %v3169 = vld [vmem:[%s3064 + $0x340] sm:$0xff]
  %v3170 = vld [vmem:[%s3064 + $0x348] sm:$0xff]
  %v3171 = vld [vmem:[%s3064 + $0x350] sm:$0xff]
  %v3172 = vld [vmem:[%s3064 + $0x358] sm:$0xff]
  %v3173 = vld [vmem:[%s3064 + $0x360] sm:$0xff]
  %v3174 = vld [vmem:[%s3064 + $0x368] sm:$0xff]
  %v3175 = vld [vmem:[%s3064 + $0x370] sm:$0xff]
  %v3176 = vld [vmem:[%s3064 + $0x378] sm:$0xff]
  %v3177 = vld [vmem:[%s3064 + $0x380] sm:$0xff]
  %v3178 = vld [vmem:[%s3064 + $0x388] sm:$0xff]
  %v3179 = vld [vmem:[%s3064 + $0x390] sm:$0xff]
  %v3180 = vld [vmem:[%s3064 + $0x398] sm:$0xff]
  %v3181 = vld [vmem:[%s3064 + $0x3a0] sm:$0xff]
  %v3182 = vld [vmem:[%s3064 + $0x3a8] sm:$0xff]
  %v3183 = vld [vmem:[%s3064 + $0x3b0] sm:$0xff]
  %v3184 = vld [vmem:[%s3064 + $0x3b8] sm:$0xff]
  %v3185 = vld [vmem:[%s3064 + $0x3c0] sm:$0xff]
  %v3186 = vld [vmem:[%s3064 + $0x3c8] sm:$0xff]
  %v3187 = vld [vmem:[%s3064 + $0x3d0] sm:$0xff]
  %v3188 = vld [vmem:[%s3064 + $0x3d8] sm:$0xff]
  %v3189 = vld [vmem:[%s3064 + $0x3e0] sm:$0xff]
  %v3190 = vld [vmem:[%s3064 + $0x3e8] sm:$0xff]
  %v3191 = vld [vmem:[%s3064 + $0x3f0] sm:$0xff]
  %v3192 = vld [vmem:[%s3064 + $0x3f8] sm:$0xff]
  %v3194 = vsel %vm1377, %v3065, 0
  %v3197 = vsel %vm1377, %v3066, 0
  %v3200 = vsel %vm1377, %v3067, 0
  %v3203 = vsel %vm1377, %v3068, 0
  %v3206 = vsel %vm1377, %v3069, 0
  %v3209 = vsel %vm1377, %v3070, 0
  %v3212 = vsel %vm1377, %v3071, 0
  %v3215 = vsel %vm1377, %v3072, 0
  %v3218 = vsel %vm1377, %v3073, 0
  %v3221 = vsel %vm1377, %v3074, 0
  %v3224 = vsel %vm1377, %v3075, 0
  %v3227 = vsel %vm1377, %v3076, 0
  %v3230 = vsel %vm1377, %v3077, 0
  %v3233 = vsel %vm1377, %v3078, 0
  %v3236 = vsel %vm1377, %v3079, 0
  %v3239 = vsel %vm1377, %v3080, 0
  %v3242 = vsel %vm1377, %v3081, 0
  %v3245 = vsel %vm1377, %v3082, 0
  %v3248 = vsel %vm1377, %v3083, 0
  %v3251 = vsel %vm1377, %v3084, 0
  %v3254 = vsel %vm1377, %v3085, 0
  %v3257 = vsel %vm1377, %v3086, 0
  %v3260 = vsel %vm1377, %v3087, 0
  %v3263 = vsel %vm1377, %v3088, 0
  %v3266 = vsel %vm1377, %v3089, 0
  %v3269 = vsel %vm1377, %v3090, 0
  %v3272 = vsel %vm1377, %v3091, 0
  %v3275 = vsel %vm1377, %v3092, 0
  %v3278 = vsel %vm1377, %v3093, 0
  %v3281 = vsel %vm1377, %v3094, 0
  %v3284 = vsel %vm1377, %v3095, 0
  %v3287 = vsel %vm1377, %v3096, 0
  %v3290 = vsel %vm1377, %v3097, 0
  %v3293 = vsel %vm1377, %v3098, 0
  %v3296 = vsel %vm1377, %v3099, 0
  %v3299 = vsel %vm1377, %v3100, 0
  %v3302 = vsel %vm1377, %v3101, 0
  %v3305 = vsel %vm1377, %v3102, 0
  %v3308 = vsel %vm1377, %v3103, 0
  %v3311 = vsel %vm1377, %v3104, 0
  %v3314 = vsel %vm1377, %v3105, 0
  %v3317 = vsel %vm1377, %v3106, 0
  %v3320 = vsel %vm1377, %v3107, 0
  %v3323 = vsel %vm1377, %v3108, 0
  %v3326 = vsel %vm1377, %v3109, 0
  %v3329 = vsel %vm1377, %v3110, 0
  %v3332 = vsel %vm1377, %v3111, 0
  %v3335 = vsel %vm1377, %v3112, 0
  %v3338 = vsel %vm1377, %v3113, 0
  %v3341 = vsel %vm1377, %v3114, 0
  %v3344 = vsel %vm1377, %v3115, 0
  %v3347 = vsel %vm1377, %v3116, 0
  %v3350 = vsel %vm1377, %v3117, 0
  %v3353 = vsel %vm1377, %v3118, 0
  %v3356 = vsel %vm1377, %v3119, 0
  %v3359 = vsel %vm1377, %v3120, 0
  %v3362 = vsel %vm1377, %v3121, 0
  %v3365 = vsel %vm1377, %v3122, 0
  %v3368 = vsel %vm1377, %v3123, 0
  %v3371 = vsel %vm1377, %v3124, 0
  %v3374 = vsel %vm1377, %v3125, 0
  %v3377 = vsel %vm1377, %v3126, 0
  %v3380 = vsel %vm1377, %v3127, 0
  %v3383 = vsel %vm1377, %v3128, 0
  %v3386 = vsel %vm1377, %v3129, 0
  %v3389 = vsel %vm1377, %v3130, 0
  %v3392 = vsel %vm1377, %v3131, 0
  %v3395 = vsel %vm1377, %v3132, 0
  %v3398 = vsel %vm1377, %v3133, 0
  %v3401 = vsel %vm1377, %v3134, 0
  %v3404 = vsel %vm1377, %v3135, 0
  %v3407 = vsel %vm1377, %v3136, 0
  %v3410 = vsel %vm1377, %v3137, 0
  %v3413 = vsel %vm1377, %v3138, 0
  %v3416 = vsel %vm1377, %v3139, 0
  %v3419 = vsel %vm1377, %v3140, 0
  %v3422 = vsel %vm1377, %v3141, 0
  %v3425 = vsel %vm1377, %v3142, 0
  %v3428 = vsel %vm1377, %v3143, 0
  %v3431 = vsel %vm1377, %v3144, 0
  %v3434 = vsel %vm1377, %v3145, 0
  %v3437 = vsel %vm1377, %v3146, 0
  %v3440 = vsel %vm1377, %v3147, 0
  %v3443 = vsel %vm1377, %v3148, 0
  %v3446 = vsel %vm1377, %v3149, 0
  %v3449 = vsel %vm1377, %v3150, 0
  %v3452 = vsel %vm1377, %v3151, 0
  %v3455 = vsel %vm1377, %v3152, 0
  %v3458 = vsel %vm1377, %v3153, 0
  %v3461 = vsel %vm1377, %v3154, 0
  %v3464 = vsel %vm1377, %v3155, 0
  %v3467 = vsel %vm1377, %v3156, 0
  %v3470 = vsel %vm1377, %v3157, 0
  %v3473 = vsel %vm1377, %v3158, 0
  %v3476 = vsel %vm1377, %v3159, 0
  %v3479 = vsel %vm1377, %v3160, 0
  %v3482 = vsel %vm1377, %v3161, 0
  %v3485 = vsel %vm1377, %v3162, 0
  %v3488 = vsel %vm1377, %v3163, 0
  %v3491 = vsel %vm1377, %v3164, 0
  %v3494 = vsel %vm1377, %v3165, 0
  %v3497 = vsel %vm1377, %v3166, 0
  %v3500 = vsel %vm1377, %v3167, 0
  %v3503 = vsel %vm1377, %v3168, 0
  %v3506 = vsel %vm1377, %v3169, 0
  %v3509 = vsel %vm1377, %v3170, 0
  %v3512 = vsel %vm1377, %v3171, 0
  %v3515 = vsel %vm1377, %v3172, 0
  %v3518 = vsel %vm1377, %v3173, 0
  %v3521 = vsel %vm1377, %v3174, 0
  %v3524 = vsel %vm1377, %v3175, 0
  %v3527 = vsel %vm1377, %v3176, 0
  %v3530 = vsel %vm1377, %v3177, 0
  %v3533 = vsel %vm1377, %v3178, 0
  %v3536 = vsel %vm1377, %v3179, 0
  %v3539 = vsel %vm1377, %v3180, 0
  %v3542 = vsel %vm1377, %v3181, 0
  %v3545 = vsel %vm1377, %v3182, 0
  %v3548 = vsel %vm1377, %v3183, 0
  %v3551 = vsel %vm1377, %v3184, 0
  %v3554 = vsel %vm1377, %v3185, 0
  %v3557 = vsel %vm1377, %v3186, 0
  %v3560 = vsel %vm1377, %v3187, 0
  %v3563 = vsel %vm1377, %v3188, 0
  %v3566 = vsel %vm1377, %v3189, 0
  %v3569 = vsel %vm1377, %v3190, 0
  %v3572 = vsel %vm1377, %v3191, 0
  %v3575 = vsel %vm1377, %v3192, 0
  %3577 = vmatpush.msra.mxu0 0.0
  %3578 = vmatpush.msra.mxu0 0.0
  %3579 = vmatpush.msra.mxu0 0.0
  %3580 = vmatpush.msra.mxu0 0.0
  %3581 = vmatpush.msra.mxu0 0.0
  %3582 = vmatpush.msra.mxu0 0.0
  %3583 = vmatpush.msra.mxu0 0.0
  %3584 = vmatpush.msra.mxu0 0.0
  %3585 = vmatpush.msra.mxu0 0.0
  %3586 = vmatpush.msra.mxu0 0.0
  %3587 = vmatpush.msra.mxu0 0.0
  %3588 = vmatpush.msra.mxu0 0.0
  %3589 = vmatpush.msra.mxu0 %v3062
  %3590 = vmatpush.msra.mxu0 %v3059
  %3591 = vmatpush.msra.mxu0 %v3056
  %3592 = vmatpush.msra.mxu0 %v3053
  %3593 = vmatmul.f32.gmra.mxu0 %v3194
  %v3594 = vpop.f32.mrf.mxu0
  %v3595 = vadd.f32 0.0, %v3594
  %3596 = vmatmul.f32.gmra.mxu0 %v3197
  %v3597 = vpop.f32.mrf.mxu0
  %v3598 = vadd.f32 0.0, %v3597
  %3599 = vmatmul.f32.gmra.mxu0 %v3200
  %v3600 = vpop.f32.mrf.mxu0
  %v3601 = vadd.f32 0.0, %v3600
  %3602 = vmatmul.f32.gmra.mxu0 %v3203
  %v3603 = vpop.f32.mrf.mxu0
  %v3604 = vadd.f32 0.0, %v3603
  %3605 = vmatmul.f32.gmra.mxu0 %v3206
  %v3606 = vpop.f32.mrf.mxu0
  %v3607 = vadd.f32 0.0, %v3606
  %3608 = vmatmul.f32.gmra.mxu0 %v3209
  %v3609 = vpop.f32.mrf.mxu0
  %v3610 = vadd.f32 0.0, %v3609
  %3611 = vmatmul.f32.gmra.mxu0 %v3212
  %v3612 = vpop.f32.mrf.mxu0
  %v3613 = vadd.f32 0.0, %v3612
  %3614 = vmatmul.f32.gmra.mxu0 %v3215
  %v3615 = vpop.f32.mrf.mxu0
  %v3616 = vadd.f32 0.0, %v3615
  %3617 = vmatmul.f32.gmra.mxu0 %v3218
  %v3618 = vpop.f32.mrf.mxu0
  %v3619 = vadd.f32 0.0, %v3618
  %3620 = vmatmul.f32.gmra.mxu0 %v3221
  %v3621 = vpop.f32.mrf.mxu0
  %v3622 = vadd.f32 0.0, %v3621
  %3623 = vmatmul.f32.gmra.mxu0 %v3224
  %v3624 = vpop.f32.mrf.mxu0
  %v3625 = vadd.f32 0.0, %v3624
  %3626 = vmatmul.f32.gmra.mxu0 %v3227
  %v3627 = vpop.f32.mrf.mxu0
  %v3628 = vadd.f32 0.0, %v3627
  %3629 = vmatmul.f32.gmra.mxu0 %v3230
  %v3630 = vpop.f32.mrf.mxu0
  %v3631 = vadd.f32 0.0, %v3630
  %3632 = vmatmul.f32.gmra.mxu0 %v3233
  %v3633 = vpop.f32.mrf.mxu0
  %v3634 = vadd.f32 0.0, %v3633
  %3635 = vmatmul.f32.gmra.mxu0 %v3236
  %v3636 = vpop.f32.mrf.mxu0
  %v3637 = vadd.f32 0.0, %v3636
  %3638 = vmatmul.f32.gmra.mxu0 %v3239
  %v3639 = vpop.f32.mrf.mxu0
  %v3640 = vadd.f32 0.0, %v3639
  %3641 = vmatmul.f32.gmra.mxu0 %v3242
  %v3642 = vpop.f32.mrf.mxu0
  %v3643 = vadd.f32 0.0, %v3642
  %3644 = vmatmul.f32.gmra.mxu0 %v3245
  %v3645 = vpop.f32.mrf.mxu0
  %v3646 = vadd.f32 0.0, %v3645
  %3647 = vmatmul.f32.gmra.mxu0 %v3248
  %v3648 = vpop.f32.mrf.mxu0
  %v3649 = vadd.f32 0.0, %v3648
  %3650 = vmatmul.f32.gmra.mxu0 %v3251
  %v3651 = vpop.f32.mrf.mxu0
  %v3652 = vadd.f32 0.0, %v3651
  %3653 = vmatmul.f32.gmra.mxu0 %v3254
  %v3654 = vpop.f32.mrf.mxu0
  %v3655 = vadd.f32 0.0, %v3654
  %3656 = vmatmul.f32.gmra.mxu0 %v3257
  %v3657 = vpop.f32.mrf.mxu0
  %v3658 = vadd.f32 0.0, %v3657
  %3659 = vmatmul.f32.gmra.mxu0 %v3260
  %v3660 = vpop.f32.mrf.mxu0
  %v3661 = vadd.f32 0.0, %v3660
  %3662 = vmatmul.f32.gmra.mxu0 %v3263
  %v3663 = vpop.f32.mrf.mxu0
  %v3664 = vadd.f32 0.0, %v3663
  %3665 = vmatmul.f32.gmra.mxu0 %v3266
  %v3666 = vpop.f32.mrf.mxu0
  %v3667 = vadd.f32 0.0, %v3666
  %3668 = vmatmul.f32.gmra.mxu0 %v3269
  %v3669 = vpop.f32.mrf.mxu0
  %v3670 = vadd.f32 0.0, %v3669
  %3671 = vmatmul.f32.gmra.mxu0 %v3272
  %v3672 = vpop.f32.mrf.mxu0
  %v3673 = vadd.f32 0.0, %v3672
  %3674 = vmatmul.f32.gmra.mxu0 %v3275
  %v3675 = vpop.f32.mrf.mxu0
  %v3676 = vadd.f32 0.0, %v3675
  %3677 = vmatmul.f32.gmra.mxu0 %v3278
  %v3678 = vpop.f32.mrf.mxu0
  %v3679 = vadd.f32 0.0, %v3678
  %3680 = vmatmul.f32.gmra.mxu0 %v3281
  %v3681 = vpop.f32.mrf.mxu0
  %v3682 = vadd.f32 0.0, %v3681
  %3683 = vmatmul.f32.gmra.mxu0 %v3284
  %v3684 = vpop.f32.mrf.mxu0
  %v3685 = vadd.f32 0.0, %v3684
  %3686 = vmatmul.f32.gmra.mxu0 %v3287
  %v3687 = vpop.f32.mrf.mxu0
  %v3688 = vadd.f32 0.0, %v3687
  %3689 = vmatmul.f32.gmra.mxu0 %v3290
  %v3690 = vpop.f32.mrf.mxu0
  %v3691 = vadd.f32 0.0, %v3690
  %3692 = vmatmul.f32.gmra.mxu0 %v3293
  %v3693 = vpop.f32.mrf.mxu0
  %v3694 = vadd.f32 0.0, %v3693
  %3695 = vmatmul.f32.gmra.mxu0 %v3296
  %v3696 = vpop.f32.mrf.mxu0
  %v3697 = vadd.f32 0.0, %v3696
  %3698 = vmatmul.f32.gmra.mxu0 %v3299
  %v3699 = vpop.f32.mrf.mxu0
  %v3700 = vadd.f32 0.0, %v3699
  %3701 = vmatmul.f32.gmra.mxu0 %v3302
  %v3702 = vpop.f32.mrf.mxu0
  %v3703 = vadd.f32 0.0, %v3702
  %3704 = vmatmul.f32.gmra.mxu0 %v3305
  %v3705 = vpop.f32.mrf.mxu0
  %v3706 = vadd.f32 0.0, %v3705
  %3707 = vmatmul.f32.gmra.mxu0 %v3308
  %v3708 = vpop.f32.mrf.mxu0
  %v3709 = vadd.f32 0.0, %v3708
  %3710 = vmatmul.f32.gmra.mxu0 %v3311
  %v3711 = vpop.f32.mrf.mxu0
  %v3712 = vadd.f32 0.0, %v3711
  %3713 = vmatmul.f32.gmra.mxu0 %v3314
  %v3714 = vpop.f32.mrf.mxu0
  %v3715 = vadd.f32 0.0, %v3714
  %3716 = vmatmul.f32.gmra.mxu0 %v3317
  %v3717 = vpop.f32.mrf.mxu0
  %v3718 = vadd.f32 0.0, %v3717
  %3719 = vmatmul.f32.gmra.mxu0 %v3320
  %v3720 = vpop.f32.mrf.mxu0
  %v3721 = vadd.f32 0.0, %v3720
  %3722 = vmatmul.f32.gmra.mxu0 %v3323
  %v3723 = vpop.f32.mrf.mxu0
  %v3724 = vadd.f32 0.0, %v3723
  %3725 = vmatmul.f32.gmra.mxu0 %v3326
  %v3726 = vpop.f32.mrf.mxu0
  %v3727 = vadd.f32 0.0, %v3726
  %3728 = vmatmul.f32.gmra.mxu0 %v3329
  %v3729 = vpop.f32.mrf.mxu0
  %v3730 = vadd.f32 0.0, %v3729
  %3731 = vmatmul.f32.gmra.mxu0 %v3332
  %v3732 = vpop.f32.mrf.mxu0
  %v3733 = vadd.f32 0.0, %v3732
  %3734 = vmatmul.f32.gmra.mxu0 %v3335
  %v3735 = vpop.f32.mrf.mxu0
  %v3736 = vadd.f32 0.0, %v3735
  %3737 = vmatmul.f32.gmra.mxu0 %v3338
  %v3738 = vpop.f32.mrf.mxu0
  %v3739 = vadd.f32 0.0, %v3738
  %3740 = vmatmul.f32.gmra.mxu0 %v3341
  %v3741 = vpop.f32.mrf.mxu0
  %v3742 = vadd.f32 0.0, %v3741
  %3743 = vmatmul.f32.gmra.mxu0 %v3344
  %v3744 = vpop.f32.mrf.mxu0
  %v3745 = vadd.f32 0.0, %v3744
  %3746 = vmatmul.f32.gmra.mxu0 %v3347
  %v3747 = vpop.f32.mrf.mxu0
  %v3748 = vadd.f32 0.0, %v3747
  %3749 = vmatmul.f32.gmra.mxu0 %v3350
  %v3750 = vpop.f32.mrf.mxu0
  %v3751 = vadd.f32 0.0, %v3750
  %3752 = vmatmul.f32.gmra.mxu0 %v3353
  %v3753 = vpop.f32.mrf.mxu0
  %v3754 = vadd.f32 0.0, %v3753
  %3755 = vmatmul.f32.gmra.mxu0 %v3356
  %v3756 = vpop.f32.mrf.mxu0
  %v3757 = vadd.f32 0.0, %v3756
  %3758 = vmatmul.f32.gmra.mxu0 %v3359
  %v3759 = vpop.f32.mrf.mxu0
  %v3760 = vadd.f32 0.0, %v3759
  %3761 = vmatmul.f32.gmra.mxu0 %v3362
  %v3762 = vpop.f32.mrf.mxu0
  %v3763 = vadd.f32 0.0, %v3762
  %3764 = vmatmul.f32.gmra.mxu0 %v3365
  %v3765 = vpop.f32.mrf.mxu0
  %v3766 = vadd.f32 0.0, %v3765
  %3767 = vmatmul.f32.gmra.mxu0 %v3368
  %v3768 = vpop.f32.mrf.mxu0
  %v3769 = vadd.f32 0.0, %v3768
  %3770 = vmatmul.f32.gmra.mxu0 %v3371
  %v3771 = vpop.f32.mrf.mxu0
  %v3772 = vadd.f32 0.0, %v3771
  %3773 = vmatmul.f32.gmra.mxu0 %v3374
  %v3774 = vpop.f32.mrf.mxu0
  %v3775 = vadd.f32 0.0, %v3774
  %3776 = vmatmul.f32.gmra.mxu0 %v3377
  %v3777 = vpop.f32.mrf.mxu0
  %v3778 = vadd.f32 0.0, %v3777
  %3779 = vmatmul.f32.gmra.mxu0 %v3380
  %v3780 = vpop.f32.mrf.mxu0
  %v3781 = vadd.f32 0.0, %v3780
  %3782 = vmatmul.f32.gmra.mxu0 %v3383
  %v3783 = vpop.f32.mrf.mxu0
  %v3784 = vadd.f32 0.0, %v3783
  %3785 = vmatmul.f32.gmra.mxu0 %v3386
  %v3786 = vpop.f32.mrf.mxu0
  %v3787 = vadd.f32 0.0, %v3786
  %3788 = vmatmul.f32.gmra.mxu0 %v3389
  %v3789 = vpop.f32.mrf.mxu0
  %v3790 = vadd.f32 0.0, %v3789
  %3791 = vmatmul.f32.gmra.mxu0 %v3392
  %v3792 = vpop.f32.mrf.mxu0
  %v3793 = vadd.f32 0.0, %v3792
  %3794 = vmatmul.f32.gmra.mxu0 %v3395
  %v3795 = vpop.f32.mrf.mxu0
  %v3796 = vadd.f32 0.0, %v3795
  %3797 = vmatmul.f32.gmra.mxu0 %v3398
  %v3798 = vpop.f32.mrf.mxu0
  %v3799 = vadd.f32 0.0, %v3798
  %3800 = vmatmul.f32.gmra.mxu0 %v3401
  %v3801 = vpop.f32.mrf.mxu0
  %v3802 = vadd.f32 0.0, %v3801
  %3803 = vmatmul.f32.gmra.mxu0 %v3404
  %v3804 = vpop.f32.mrf.mxu0
  %v3805 = vadd.f32 0.0, %v3804
  %3806 = vmatmul.f32.gmra.mxu0 %v3407
  %v3807 = vpop.f32.mrf.mxu0
  %v3808 = vadd.f32 0.0, %v3807
  %3809 = vmatmul.f32.gmra.mxu0 %v3410
  %v3810 = vpop.f32.mrf.mxu0
  %v3811 = vadd.f32 0.0, %v3810
  %3812 = vmatmul.f32.gmra.mxu0 %v3413
  %v3813 = vpop.f32.mrf.mxu0
  %v3814 = vadd.f32 0.0, %v3813
  %3815 = vmatmul.f32.gmra.mxu0 %v3416
  %v3816 = vpop.f32.mrf.mxu0
  %v3817 = vadd.f32 0.0, %v3816
  %3818 = vmatmul.f32.gmra.mxu0 %v3419
  %v3819 = vpop.f32.mrf.mxu0
  %v3820 = vadd.f32 0.0, %v3819
  %3821 = vmatmul.f32.gmra.mxu0 %v3422
  %v3822 = vpop.f32.mrf.mxu0
  %v3823 = vadd.f32 0.0, %v3822
  %3824 = vmatmul.f32.gmra.mxu0 %v3425
  %v3825 = vpop.f32.mrf.mxu0
  %v3826 = vadd.f32 0.0, %v3825
  %3827 = vmatmul.f32.gmra.mxu0 %v3428
  %v3828 = vpop.f32.mrf.mxu0
  %v3829 = vadd.f32 0.0, %v3828
  %3830 = vmatmul.f32.gmra.mxu0 %v3431
  %v3831 = vpop.f32.mrf.mxu0
  %v3832 = vadd.f32 0.0, %v3831
  %3833 = vmatmul.f32.gmra.mxu0 %v3434
  %v3834 = vpop.f32.mrf.mxu0
  %v3835 = vadd.f32 0.0, %v3834
  %3836 = vmatmul.f32.gmra.mxu0 %v3437
  %v3837 = vpop.f32.mrf.mxu0
  %v3838 = vadd.f32 0.0, %v3837
  %3839 = vmatmul.f32.gmra.mxu0 %v3440
  %v3840 = vpop.f32.mrf.mxu0
  %v3841 = vadd.f32 0.0, %v3840
  %3842 = vmatmul.f32.gmra.mxu0 %v3443
  %v3843 = vpop.f32.mrf.mxu0
  %v3844 = vadd.f32 0.0, %v3843
  %3845 = vmatmul.f32.gmra.mxu0 %v3446
  %v3846 = vpop.f32.mrf.mxu0
  %v3847 = vadd.f32 0.0, %v3846
  %3848 = vmatmul.f32.gmra.mxu0 %v3449
  %v3849 = vpop.f32.mrf.mxu0
  %v3850 = vadd.f32 0.0, %v3849
  %3851 = vmatmul.f32.gmra.mxu0 %v3452
  %v3852 = vpop.f32.mrf.mxu0
  %v3853 = vadd.f32 0.0, %v3852
  %3854 = vmatmul.f32.gmra.mxu0 %v3455
  %v3855 = vpop.f32.mrf.mxu0
  %v3856 = vadd.f32 0.0, %v3855
  %3857 = vmatmul.f32.gmra.mxu0 %v3458
  %v3858 = vpop.f32.mrf.mxu0
  %v3859 = vadd.f32 0.0, %v3858
  %3860 = vmatmul.f32.gmra.mxu0 %v3461
  %v3861 = vpop.f32.mrf.mxu0
  %v3862 = vadd.f32 0.0, %v3861
  %3863 = vmatmul.f32.gmra.mxu0 %v3464
  %v3864 = vpop.f32.mrf.mxu0
  %v3865 = vadd.f32 0.0, %v3864
  %3866 = vmatmul.f32.gmra.mxu0 %v3467
  %v3867 = vpop.f32.mrf.mxu0
  %v3868 = vadd.f32 0.0, %v3867
  %3869 = vmatmul.f32.gmra.mxu0 %v3470
  %v3870 = vpop.f32.mrf.mxu0
  %v3871 = vadd.f32 0.0, %v3870
  %3872 = vmatmul.f32.gmra.mxu0 %v3473
  %v3873 = vpop.f32.mrf.mxu0
  %v3874 = vadd.f32 0.0, %v3873
  %3875 = vmatmul.f32.gmra.mxu0 %v3476
  %v3876 = vpop.f32.mrf.mxu0
  %v3877 = vadd.f32 0.0, %v3876
  %3878 = vmatmul.f32.gmra.mxu0 %v3479
  %v3879 = vpop.f32.mrf.mxu0
  %v3880 = vadd.f32 0.0, %v3879
  %3881 = vmatmul.f32.gmra.mxu0 %v3482
  %v3882 = vpop.f32.mrf.mxu0
  %v3883 = vadd.f32 0.0, %v3882
  %3884 = vmatmul.f32.gmra.mxu0 %v3485
  %v3885 = vpop.f32.mrf.mxu0
  %v3886 = vadd.f32 0.0, %v3885
  %3887 = vmatmul.f32.gmra.mxu0 %v3488
  %v3888 = vpop.f32.mrf.mxu0
  %v3889 = vadd.f32 0.0, %v3888
  %3890 = vmatmul.f32.gmra.mxu0 %v3491
  %v3891 = vpop.f32.mrf.mxu0
  %v3892 = vadd.f32 0.0, %v3891
  %3893 = vmatmul.f32.gmra.mxu0 %v3494
  %v3894 = vpop.f32.mrf.mxu0
  %v3895 = vadd.f32 0.0, %v3894
  %3896 = vmatmul.f32.gmra.mxu0 %v3497
  %v3897 = vpop.f32.mrf.mxu0
  %v3898 = vadd.f32 0.0, %v3897
  %3899 = vmatmul.f32.gmra.mxu0 %v3500
  %v3900 = vpop.f32.mrf.mxu0
  %v3901 = vadd.f32 0.0, %v3900
  %3902 = vmatmul.f32.gmra.mxu0 %v3503
  %v3903 = vpop.f32.mrf.mxu0
  %v3904 = vadd.f32 0.0, %v3903
  %3905 = vmatmul.f32.gmra.mxu0 %v3506
  %v3906 = vpop.f32.mrf.mxu0
  %v3907 = vadd.f32 0.0, %v3906
  %3908 = vmatmul.f32.gmra.mxu0 %v3509
  %v3909 = vpop.f32.mrf.mxu0
  %v3910 = vadd.f32 0.0, %v3909
  %3911 = vmatmul.f32.gmra.mxu0 %v3512
  %v3912 = vpop.f32.mrf.mxu0
  %v3913 = vadd.f32 0.0, %v3912
  %3914 = vmatmul.f32.gmra.mxu0 %v3515
  %v3915 = vpop.f32.mrf.mxu0
  %v3916 = vadd.f32 0.0, %v3915
  %3917 = vmatmul.f32.gmra.mxu0 %v3518
  %v3918 = vpop.f32.mrf.mxu0
  %v3919 = vadd.f32 0.0, %v3918
  %3920 = vmatmul.f32.gmra.mxu0 %v3521
  %v3921 = vpop.f32.mrf.mxu0
  %v3922 = vadd.f32 0.0, %v3921
  %3923 = vmatmul.f32.gmra.mxu0 %v3524
  %v3924 = vpop.f32.mrf.mxu0
  %v3925 = vadd.f32 0.0, %v3924
  %3926 = vmatmul.f32.gmra.mxu0 %v3527
  %v3927 = vpop.f32.mrf.mxu0
  %v3928 = vadd.f32 0.0, %v3927
  %3929 = vmatmul.f32.gmra.mxu0 %v3530
  %v3930 = vpop.f32.mrf.mxu0
  %v3931 = vadd.f32 0.0, %v3930
  %3932 = vmatmul.f32.gmra.mxu0 %v3533
  %v3933 = vpop.f32.mrf.mxu0
  %v3934 = vadd.f32 0.0, %v3933
  %3935 = vmatmul.f32.gmra.mxu0 %v3536
  %v3936 = vpop.f32.mrf.mxu0
  %v3937 = vadd.f32 0.0, %v3936
  %3938 = vmatmul.f32.gmra.mxu0 %v3539
  %v3939 = vpop.f32.mrf.mxu0
  %v3940 = vadd.f32 0.0, %v3939
  %3941 = vmatmul.f32.gmra.mxu0 %v3542
  %v3942 = vpop.f32.mrf.mxu0
  %v3943 = vadd.f32 0.0, %v3942
  %3944 = vmatmul.f32.gmra.mxu0 %v3545
  %v3945 = vpop.f32.mrf.mxu0
  %v3946 = vadd.f32 0.0, %v3945
  %3947 = vmatmul.f32.gmra.mxu0 %v3548
  %v3948 = vpop.f32.mrf.mxu0
  %v3949 = vadd.f32 0.0, %v3948
  %3950 = vmatmul.f32.gmra.mxu0 %v3551
  %v3951 = vpop.f32.mrf.mxu0
  %v3952 = vadd.f32 0.0, %v3951
  %3953 = vmatmul.f32.gmra.mxu0 %v3554
  %v3954 = vpop.f32.mrf.mxu0
  %v3955 = vadd.f32 0.0, %v3954
  %3956 = vmatmul.f32.gmra.mxu0 %v3557
  %v3957 = vpop.f32.mrf.mxu0
  %v3958 = vadd.f32 0.0, %v3957
  %3959 = vmatmul.f32.gmra.mxu0 %v3560
  %v3960 = vpop.f32.mrf.mxu0
  %v3961 = vadd.f32 0.0, %v3960
  %3962 = vmatmul.f32.gmra.mxu0 %v3563
  %v3963 = vpop.f32.mrf.mxu0
  %v3964 = vadd.f32 0.0, %v3963
  %3965 = vmatmul.f32.gmra.mxu0 %v3566
  %v3966 = vpop.f32.mrf.mxu0
  %v3967 = vadd.f32 0.0, %v3966
  %3968 = vmatmul.f32.gmra.mxu0 %v3569
  %v3969 = vpop.f32.mrf.mxu0
  %v3970 = vadd.f32 0.0, %v3969
  %3971 = vmatmul.f32.gmra.mxu0 %v3572
  %v3972 = vpop.f32.mrf.mxu0
  %v3973 = vadd.f32 0.0, %v3972
  %3974 = vmatmul.f32.gmra.mxu0 %v3575
  %v3975 = vpop.f32.mrf.mxu0
  %v3976 = vadd.f32 0.0, %v3975
  %3977 = vdwg.mxu0
  %v3978 = vadd.f32 %v2565, %v3595
  %v3979 = vadd.f32 %v2568, %v3598
  %v3980 = vadd.f32 %v2571, %v3601
  %v3981 = vadd.f32 %v2574, %v3604
  %v3982 = vadd.f32 %v2577, %v3607
  %v3983 = vadd.f32 %v2580, %v3610
  %v3984 = vadd.f32 %v2583, %v3613
  %v3985 = vadd.f32 %v2586, %v3616
  %v3986 = vadd.f32 %v2589, %v3619
  %v3987 = vadd.f32 %v2592, %v3622
  %v3988 = vadd.f32 %v2595, %v3625
  %v3989 = vadd.f32 %v2598, %v3628
  %v3990 = vadd.f32 %v2601, %v3631
  %v3991 = vadd.f32 %v2604, %v3634
  %v3992 = vadd.f32 %v2607, %v3637
  %v3993 = vadd.f32 %v2610, %v3640
  %v3994 = vadd.f32 %v2613, %v3643
  %v3995 = vadd.f32 %v2616, %v3646
  %v3996 = vadd.f32 %v2619, %v3649
  %v3997 = vadd.f32 %v2622, %v3652
  %v3998 = vadd.f32 %v2625, %v3655
  %v3999 = vadd.f32 %v2628, %v3658
  %v4000 = vadd.f32 %v2631, %v3661
  %v4001 = vadd.f32 %v2634, %v3664
  %v4002 = vadd.f32 %v2637, %v3667
  %v4003 = vadd.f32 %v2640, %v3670
  %v4004 = vadd.f32 %v2643, %v3673
  %v4005 = vadd.f32 %v2646, %v3676
  %v4006 = vadd.f32 %v2649, %v3679
  %v4007 = vadd.f32 %v2652, %v3682
  %v4008 = vadd.f32 %v2655, %v3685
  %v4009 = vadd.f32 %v2658, %v3688
  %v4010 = vadd.f32 %v2661, %v3691
  %v4011 = vadd.f32 %v2664, %v3694
  %v4012 = vadd.f32 %v2667, %v3697
  %v4013 = vadd.f32 %v2670, %v3700
  %v4014 = vadd.f32 %v2673, %v3703
  %v4015 = vadd.f32 %v2676, %v3706
  %v4016 = vadd.f32 %v2679, %v3709
  %v4017 = vadd.f32 %v2682, %v3712
  %v4018 = vadd.f32 %v2685, %v3715
  %v4019 = vadd.f32 %v2688, %v3718
  %v4020 = vadd.f32 %v2691, %v3721
  %v4021 = vadd.f32 %v2694, %v3724
  %v4022 = vadd.f32 %v2697, %v3727
  %v4023 = vadd.f32 %v2700, %v3730
  %v4024 = vadd.f32 %v2703, %v3733
  %v4025 = vadd.f32 %v2706, %v3736
  %v4026 = vadd.f32 %v2709, %v3739
  %v4027 = vadd.f32 %v2712, %v3742
  %v4028 = vadd.f32 %v2715, %v3745
  %v4029 = vadd.f32 %v2718, %v3748
  %v4030 = vadd.f32 %v2721, %v3751
  %v4031 = vadd.f32 %v2724, %v3754
  %v4032 = vadd.f32 %v2727, %v3757
  %v4033 = vadd.f32 %v2730, %v3760
  %v4034 = vadd.f32 %v2733, %v3763
  %v4035 = vadd.f32 %v2736, %v3766
  %v4036 = vadd.f32 %v2739, %v3769
  %v4037 = vadd.f32 %v2742, %v3772
  %v4038 = vadd.f32 %v2745, %v3775
  %v4039 = vadd.f32 %v2748, %v3778
  %v4040 = vadd.f32 %v2751, %v3781
  %v4041 = vadd.f32 %v2754, %v3784
  %v4042 = vadd.f32 %v2757, %v3787
  %v4043 = vadd.f32 %v2760, %v3790
  %v4044 = vadd.f32 %v2763, %v3793
  %v4045 = vadd.f32 %v2766, %v3796
  %v4046 = vadd.f32 %v2769, %v3799
  %v4047 = vadd.f32 %v2772, %v3802
  %v4048 = vadd.f32 %v2775, %v3805
  %v4049 = vadd.f32 %v2778, %v3808
  %v4050 = vadd.f32 %v2781, %v3811
  %v4051 = vadd.f32 %v2784, %v3814
  %v4052 = vadd.f32 %v2787, %v3817
  %v4053 = vadd.f32 %v2790, %v3820
  %v4054 = vadd.f32 %v2793, %v3823
  %v4055 = vadd.f32 %v2796, %v3826
  %v4056 = vadd.f32 %v2799, %v3829
  %v4057 = vadd.f32 %v2802, %v3832
  %v4058 = vadd.f32 %v2805, %v3835
  %v4059 = vadd.f32 %v2808, %v3838
  %v4060 = vadd.f32 %v2811, %v3841
  %v4061 = vadd.f32 %v2814, %v3844
  %v4062 = vadd.f32 %v2817, %v3847
  %v4063 = vadd.f32 %v2820, %v3850
  %v4064 = vadd.f32 %v2823, %v3853
  %v4065 = vadd.f32 %v2826, %v3856
  %v4066 = vadd.f32 %v2829, %v3859
  %v4067 = vadd.f32 %v2832, %v3862
  %v4068 = vadd.f32 %v2835, %v3865
  %v4069 = vadd.f32 %v2838, %v3868
  %v4070 = vadd.f32 %v2841, %v3871
  %v4071 = vadd.f32 %v2844, %v3874
  %v4072 = vadd.f32 %v2847, %v3877
  %v4073 = vadd.f32 %v2850, %v3880
  %v4074 = vadd.f32 %v2853, %v3883
  %v4075 = vadd.f32 %v2856, %v3886
  %v4076 = vadd.f32 %v2859, %v3889
  %v4077 = vadd.f32 %v2862, %v3892
  %v4078 = vadd.f32 %v2865, %v3895
  %v4079 = vadd.f32 %v2868, %v3898
  %v4080 = vadd.f32 %v2871, %v3901
  %v4081 = vadd.f32 %v2874, %v3904
  %v4082 = vadd.f32 %v2877, %v3907
  %v4083 = vadd.f32 %v2880, %v3910
  %v4084 = vadd.f32 %v2883, %v3913
  %v4085 = vadd.f32 %v2886, %v3916
  %v4086 = vadd.f32 %v2889, %v3919
  %v4087 = vadd.f32 %v2892, %v3922
  %v4088 = vadd.f32 %v2895, %v3925
  %v4089 = vadd.f32 %v2898, %v3928
  %v4090 = vadd.f32 %v2901, %v3931
  %v4091 = vadd.f32 %v2904, %v3934
  %v4092 = vadd.f32 %v2907, %v3937
  %v4093 = vadd.f32 %v2910, %v3940
  %v4094 = vadd.f32 %v2913, %v3943
  %v4095 = vadd.f32 %v2916, %v3946
  %v4096 = vadd.f32 %v2919, %v3949
  %v4097 = vadd.f32 %v2922, %v3952
  %v4098 = vadd.f32 %v2925, %v3955
  %v4099 = vadd.f32 %v2928, %v3958
  %v4100 = vadd.f32 %v2931, %v3961
  %v4101 = vadd.f32 %v2934, %v3964
  %v4102 = vadd.f32 %v2937, %v3967
  %v4103 = vadd.f32 %v2940, %v3970
  %v4104 = vadd.f32 %v2943, %v3973
  %v4105 = vadd.f32 %v2946, %v3976
  %4106 = vmatpush.msra.mxu0 %v839
  %4107 = vmatpush.msra.mxu0 %v838
  %4108 = vmatpush.msra.mxu0 %v837
  %4109 = vmatpush.msra.mxu0 %v836
  %4110 = vmatpush.msra.mxu0 %v835
  %4111 = vmatpush.msra.mxu0 %v834
  %4112 = vmatpush.msra.mxu0 %v833
  %4113 = vmatpush.msra.mxu0 %v832
  %4114 = vmatpush.msra.mxu0 %v831
  %4115 = vmatpush.msra.mxu0 %v830
  %4116 = vmatpush.msra.mxu0 %v829
  %4117 = vmatpush.msra.mxu0 %v828
  %4118 = vmatpush.msra.mxu0 %v827
  %4119 = vmatpush.msra.mxu0 %v826
  %4120 = vmatpush.msra.mxu0 %v825
  %4121 = vmatpush.msra.mxu0 %v824
  %4122 = vmatmul.f32.gmra.mxu0 %v756
  %v4123 = vpop.f32.mrf.mxu0
  %v4124 = vadd.f32 0.0, %v4123
  %4125 = vmatmul.f32.gmra.mxu0 %v776
  %v4126 = vpop.f32.mrf.mxu0
  %v4127 = vadd.f32 0.0, %v4126
  %4128 = vmatmul.f32.gmra.mxu0 %v796
  %v4129 = vpop.f32.mrf.mxu0
  %v4130 = vadd.f32 0.0, %v4129
  %4131 = vmatmul.f32.gmra.mxu0 %v816
  %v4132 = vpop.f32.mrf.mxu0
  %v4133 = vadd.f32 0.0, %v4132
  %4134 = vdwg.mxu0
  %4135 = vmatpush.msra.mxu0 %v855
  %4136 = vmatpush.msra.mxu0 %v854
  %4137 = vmatpush.msra.mxu0 %v853
  %4138 = vmatpush.msra.mxu0 %v852
  %4139 = vmatpush.msra.mxu0 %v851
  %4140 = vmatpush.msra.mxu0 %v850
  %4141 = vmatpush.msra.mxu0 %v849
  %4142 = vmatpush.msra.mxu0 %v848
  %4143 = vmatpush.msra.mxu0 %v847
  %4144 = vmatpush.msra.mxu0 %v846
  %4145 = vmatpush.msra.mxu0 %v845
  %4146 = vmatpush.msra.mxu0 %v844
  %4147 = vmatpush.msra.mxu0 %v843
  %4148 = vmatpush.msra.mxu0 %v842
  %4149 = vmatpush.msra.mxu0 %v841
  %4150 = vmatpush.msra.mxu0 %v840
  %4151 = vmatmul.f32.gmra.mxu0 %v757
  %v4152 = vpop.f32.mrf.mxu0
  %v4153 = vadd.f32 %v4124, %v4152
  %4154 = vmatmul.f32.gmra.mxu0 %v777
  %v4155 = vpop.f32.mrf.mxu0
  %v4156 = vadd.f32 %v4127, %v4155
  %4157 = vmatmul.f32.gmra.mxu0 %v797
  %v4158 = vpop.f32.mrf.mxu0
  %v4159 = vadd.f32 %v4130, %v4158
  %4160 = vmatmul.f32.gmra.mxu0 %v817
  %v4161 = vpop.f32.mrf.mxu0
  %v4162 = vadd.f32 %v4133, %v4161
  %4163 = vdwg.mxu0
  %4164 = vmatpush.msra.mxu0 %v871
  %4165 = vmatpush.msra.mxu0 %v870
  %4166 = vmatpush.msra.mxu0 %v869
  %4167 = vmatpush.msra.mxu0 %v868
  %4168 = vmatpush.msra.mxu0 %v867
  %4169 = vmatpush.msra.mxu0 %v866
  %4170 = vmatpush.msra.mxu0 %v865
  %4171 = vmatpush.msra.mxu0 %v864
  %4172 = vmatpush.msra.mxu0 %v863
  %4173 = vmatpush.msra.mxu0 %v862
  %4174 = vmatpush.msra.mxu0 %v861
  %4175 = vmatpush.msra.mxu0 %v860
  %4176 = vmatpush.msra.mxu0 %v859
  %4177 = vmatpush.msra.mxu0 %v858
  %4178 = vmatpush.msra.mxu0 %v857
  %4179 = vmatpush.msra.mxu0 %v856
  %4180 = vmatmul.f32.gmra.mxu0 %v758
  %v4181 = vpop.f32.mrf.mxu0
  %v4182 = vadd.f32 %v4153, %v4181
  %4183 = vmatmul.f32.gmra.mxu0 %v778
  %v4184 = vpop.f32.mrf.mxu0
  %v4185 = vadd.f32 %v4156, %v4184
  %4186 = vmatmul.f32.gmra.mxu0 %v798
  %v4187 = vpop.f32.mrf.mxu0
  %v4188 = vadd.f32 %v4159, %v4187
  %4189 = vmatmul.f32.gmra.mxu0 %v818
  %v4190 = vpop.f32.mrf.mxu0
  %v4191 = vadd.f32 %v4162, %v4190
  %4192 = vdwg.mxu0
  %4193 = vmatpush.msra.mxu0 %v887
  %4194 = vmatpush.msra.mxu0 %v886
  %4195 = vmatpush.msra.mxu0 %v885
  %4196 = vmatpush.msra.mxu0 %v884
  %4197 = vmatpush.msra.mxu0 %v883
  %4198 = vmatpush.msra.mxu0 %v882
  %4199 = vmatpush.msra.mxu0 %v881
  %4200 = vmatpush.msra.mxu0 %v880
  %4201 = vmatpush.msra.mxu0 %v879
  %4202 = vmatpush.msra.mxu0 %v878
  %4203 = vmatpush.msra.mxu0 %v877
  %4204 = vmatpush.msra.mxu0 %v876
  %4205 = vmatpush.msra.mxu0 %v875
  %4206 = vmatpush.msra.mxu0 %v874
  %4207 = vmatpush.msra.mxu0 %v873
  %4208 = vmatpush.msra.mxu0 %v872
  %4209 = vmatmul.f32.gmra.mxu0 %v759
  %v4210 = vpop.f32.mrf.mxu0
  %v4211 = vadd.f32 %v4182, %v4210
  %4212 = vmatmul.f32.gmra.mxu0 %v779
  %v4213 = vpop.f32.mrf.mxu0
  %v4214 = vadd.f32 %v4185, %v4213
  %4215 = vmatmul.f32.gmra.mxu0 %v799
  %v4216 = vpop.f32.mrf.mxu0
  %v4217 = vadd.f32 %v4188, %v4216
  %4218 = vmatmul.f32.gmra.mxu0 %v819
  %v4219 = vpop.f32.mrf.mxu0
  %v4220 = vadd.f32 %v4191, %v4219
  %4221 = vdwg.mxu0
  %s4222 = scalar_lea.vmem %s4, 3072
  %v4223 = vld [vmem:[%s4222] sm:$0xff]
  %v4224 = vld [vmem:[%s4222 + $0x8] sm:$0xff]
  %v4225 = vld [vmem:[%s4222 + $0x10] sm:$0xff]
  %v4226 = vld [vmem:[%s4222 + $0x18] sm:$0xff]
  %v4227 = vld [vmem:[%s4222 + $0x20] sm:$0xff]
  %v4228 = vld [vmem:[%s4222 + $0x28] sm:$0xff]
  %v4229 = vld [vmem:[%s4222 + $0x30] sm:$0xff]
  %v4230 = vld [vmem:[%s4222 + $0x38] sm:$0xff]
  %v4231 = vld [vmem:[%s4222 + $0x40] sm:$0xff]
  %v4232 = vld [vmem:[%s4222 + $0x48] sm:$0xff]
  %v4233 = vld [vmem:[%s4222 + $0x50] sm:$0xff]
  %v4234 = vld [vmem:[%s4222 + $0x58] sm:$0xff]
  %v4235 = vld [vmem:[%s4222 + $0x60] sm:$0xff]
  %v4236 = vld [vmem:[%s4222 + $0x68] sm:$0xff]
  %v4237 = vld [vmem:[%s4222 + $0x70] sm:$0xff]
  %v4238 = vld [vmem:[%s4222 + $0x78] sm:$0xff]
  %v4239 = vld [vmem:[%s4222 + $0x80] sm:$0xff]
  %v4240 = vld [vmem:[%s4222 + $0x88] sm:$0xff]
  %v4241 = vld [vmem:[%s4222 + $0x90] sm:$0xff]
  %v4242 = vld [vmem:[%s4222 + $0x98] sm:$0xff]
  %v4243 = vld [vmem:[%s4222 + $0xa0] sm:$0xff]
  %v4244 = vld [vmem:[%s4222 + $0xa8] sm:$0xff]
  %v4245 = vld [vmem:[%s4222 + $0xb0] sm:$0xff]
  %v4246 = vld [vmem:[%s4222 + $0xb8] sm:$0xff]
  %v4247 = vld [vmem:[%s4222 + $0xc0] sm:$0xff]
  %v4248 = vld [vmem:[%s4222 + $0xc8] sm:$0xff]
  %v4249 = vld [vmem:[%s4222 + $0xd0] sm:$0xff]
  %v4250 = vld [vmem:[%s4222 + $0xd8] sm:$0xff]
  %v4251 = vld [vmem:[%s4222 + $0xe0] sm:$0xff]
  %v4252 = vld [vmem:[%s4222 + $0xe8] sm:$0xff]
  %v4253 = vld [vmem:[%s4222 + $0xf0] sm:$0xff]
  %v4254 = vld [vmem:[%s4222 + $0xf8] sm:$0xff]
  %v4255 = vld [vmem:[%s4222 + $0x100] sm:$0xff]
  %v4256 = vld [vmem:[%s4222 + $0x108] sm:$0xff]
  %v4257 = vld [vmem:[%s4222 + $0x110] sm:$0xff]
  %v4258 = vld [vmem:[%s4222 + $0x118] sm:$0xff]
  %v4259 = vld [vmem:[%s4222 + $0x120] sm:$0xff]
  %v4260 = vld [vmem:[%s4222 + $0x128] sm:$0xff]
  %v4261 = vld [vmem:[%s4222 + $0x130] sm:$0xff]
  %v4262 = vld [vmem:[%s4222 + $0x138] sm:$0xff]
  %v4263 = vld [vmem:[%s4222 + $0x140] sm:$0xff]
  %v4264 = vld [vmem:[%s4222 + $0x148] sm:$0xff]
  %v4265 = vld [vmem:[%s4222 + $0x150] sm:$0xff]
  %v4266 = vld [vmem:[%s4222 + $0x158] sm:$0xff]
  %v4267 = vld [vmem:[%s4222 + $0x160] sm:$0xff]
  %v4268 = vld [vmem:[%s4222 + $0x168] sm:$0xff]
  %v4269 = vld [vmem:[%s4222 + $0x170] sm:$0xff]
  %v4270 = vld [vmem:[%s4222 + $0x178] sm:$0xff]
  %v4271 = vld [vmem:[%s4222 + $0x180] sm:$0xff]
  %v4272 = vld [vmem:[%s4222 + $0x188] sm:$0xff]
  %v4273 = vld [vmem:[%s4222 + $0x190] sm:$0xff]
  %v4274 = vld [vmem:[%s4222 + $0x198] sm:$0xff]
  %v4275 = vld [vmem:[%s4222 + $0x1a0] sm:$0xff]
  %v4276 = vld [vmem:[%s4222 + $0x1a8] sm:$0xff]
  %v4277 = vld [vmem:[%s4222 + $0x1b0] sm:$0xff]
  %v4278 = vld [vmem:[%s4222 + $0x1b8] sm:$0xff]
  %v4279 = vld [vmem:[%s4222 + $0x1c0] sm:$0xff]
  %v4280 = vld [vmem:[%s4222 + $0x1c8] sm:$0xff]
  %v4281 = vld [vmem:[%s4222 + $0x1d0] sm:$0xff]
  %v4282 = vld [vmem:[%s4222 + $0x1d8] sm:$0xff]
  %v4283 = vld [vmem:[%s4222 + $0x1e0] sm:$0xff]
  %v4284 = vld [vmem:[%s4222 + $0x1e8] sm:$0xff]
  %v4285 = vld [vmem:[%s4222 + $0x1f0] sm:$0xff]
  %v4286 = vld [vmem:[%s4222 + $0x1f8] sm:$0xff]
  %v4287 = vld [vmem:[%s4222 + $0x200] sm:$0xff]
  %v4288 = vld [vmem:[%s4222 + $0x208] sm:$0xff]
  %v4289 = vld [vmem:[%s4222 + $0x210] sm:$0xff]
  %v4290 = vld [vmem:[%s4222 + $0x218] sm:$0xff]
  %v4291 = vld [vmem:[%s4222 + $0x220] sm:$0xff]
  %v4292 = vld [vmem:[%s4222 + $0x228] sm:$0xff]
  %v4293 = vld [vmem:[%s4222 + $0x230] sm:$0xff]
  %v4294 = vld [vmem:[%s4222 + $0x238] sm:$0xff]
  %v4295 = vld [vmem:[%s4222 + $0x240] sm:$0xff]
  %v4296 = vld [vmem:[%s4222 + $0x248] sm:$0xff]
  %v4297 = vld [vmem:[%s4222 + $0x250] sm:$0xff]
  %v4298 = vld [vmem:[%s4222 + $0x258] sm:$0xff]
  %v4299 = vld [vmem:[%s4222 + $0x260] sm:$0xff]
  %v4300 = vld [vmem:[%s4222 + $0x268] sm:$0xff]
  %v4301 = vld [vmem:[%s4222 + $0x270] sm:$0xff]
  %v4302 = vld [vmem:[%s4222 + $0x278] sm:$0xff]
  %v4303 = vld [vmem:[%s4222 + $0x280] sm:$0xff]
  %v4304 = vld [vmem:[%s4222 + $0x288] sm:$0xff]
  %v4305 = vld [vmem:[%s4222 + $0x290] sm:$0xff]
  %v4306 = vld [vmem:[%s4222 + $0x298] sm:$0xff]
  %v4307 = vld [vmem:[%s4222 + $0x2a0] sm:$0xff]
  %v4308 = vld [vmem:[%s4222 + $0x2a8] sm:$0xff]
  %v4309 = vld [vmem:[%s4222 + $0x2b0] sm:$0xff]
  %v4310 = vld [vmem:[%s4222 + $0x2b8] sm:$0xff]
  %v4311 = vld [vmem:[%s4222 + $0x2c0] sm:$0xff]
  %v4312 = vld [vmem:[%s4222 + $0x2c8] sm:$0xff]
  %v4313 = vld [vmem:[%s4222 + $0x2d0] sm:$0xff]
  %v4314 = vld [vmem:[%s4222 + $0x2d8] sm:$0xff]
  %v4315 = vld [vmem:[%s4222 + $0x2e0] sm:$0xff]
  %v4316 = vld [vmem:[%s4222 + $0x2e8] sm:$0xff]
  %v4317 = vld [vmem:[%s4222 + $0x2f0] sm:$0xff]
  %v4318 = vld [vmem:[%s4222 + $0x2f8] sm:$0xff]
  %v4319 = vld [vmem:[%s4222 + $0x300] sm:$0xff]
  %v4320 = vld [vmem:[%s4222 + $0x308] sm:$0xff]
  %v4321 = vld [vmem:[%s4222 + $0x310] sm:$0xff]
  %v4322 = vld [vmem:[%s4222 + $0x318] sm:$0xff]
  %v4323 = vld [vmem:[%s4222 + $0x320] sm:$0xff]
  %v4324 = vld [vmem:[%s4222 + $0x328] sm:$0xff]
  %v4325 = vld [vmem:[%s4222 + $0x330] sm:$0xff]
  %v4326 = vld [vmem:[%s4222 + $0x338] sm:$0xff]
  %v4327 = vld [vmem:[%s4222 + $0x340] sm:$0xff]
  %v4328 = vld [vmem:[%s4222 + $0x348] sm:$0xff]
  %v4329 = vld [vmem:[%s4222 + $0x350] sm:$0xff]
  %v4330 = vld [vmem:[%s4222 + $0x358] sm:$0xff]
  %v4331 = vld [vmem:[%s4222 + $0x360] sm:$0xff]
  %v4332 = vld [vmem:[%s4222 + $0x368] sm:$0xff]
  %v4333 = vld [vmem:[%s4222 + $0x370] sm:$0xff]
  %v4334 = vld [vmem:[%s4222 + $0x378] sm:$0xff]
  %v4335 = vld [vmem:[%s4222 + $0x380] sm:$0xff]
  %v4336 = vld [vmem:[%s4222 + $0x388] sm:$0xff]
  %v4337 = vld [vmem:[%s4222 + $0x390] sm:$0xff]
  %v4338 = vld [vmem:[%s4222 + $0x398] sm:$0xff]
  %v4339 = vld [vmem:[%s4222 + $0x3a0] sm:$0xff]
  %v4340 = vld [vmem:[%s4222 + $0x3a8] sm:$0xff]
  %v4341 = vld [vmem:[%s4222 + $0x3b0] sm:$0xff]
  %v4342 = vld [vmem:[%s4222 + $0x3b8] sm:$0xff]
  %v4343 = vld [vmem:[%s4222 + $0x3c0] sm:$0xff]
  %v4344 = vld [vmem:[%s4222 + $0x3c8] sm:$0xff]
  %v4345 = vld [vmem:[%s4222 + $0x3d0] sm:$0xff]
  %v4346 = vld [vmem:[%s4222 + $0x3d8] sm:$0xff]
  %v4347 = vld [vmem:[%s4222 + $0x3e0] sm:$0xff]
  %v4348 = vld [vmem:[%s4222 + $0x3e8] sm:$0xff]
  %v4349 = vld [vmem:[%s4222 + $0x3f0] sm:$0xff]
  %v4350 = vld [vmem:[%s4222 + $0x3f8] sm:$0xff]
  %v4352 = vsel %vm1377, %v4223, 0
  %v4355 = vsel %vm1377, %v4224, 0
  %v4358 = vsel %vm1377, %v4225, 0
  %v4361 = vsel %vm1377, %v4226, 0
  %v4364 = vsel %vm1377, %v4227, 0
  %v4367 = vsel %vm1377, %v4228, 0
  %v4370 = vsel %vm1377, %v4229, 0
  %v4373 = vsel %vm1377, %v4230, 0
  %v4376 = vsel %vm1377, %v4231, 0
  %v4379 = vsel %vm1377, %v4232, 0
  %v4382 = vsel %vm1377, %v4233, 0
  %v4385 = vsel %vm1377, %v4234, 0
  %v4388 = vsel %vm1377, %v4235, 0
  %v4391 = vsel %vm1377, %v4236, 0
  %v4394 = vsel %vm1377, %v4237, 0
  %v4397 = vsel %vm1377, %v4238, 0
  %v4400 = vsel %vm1377, %v4239, 0
  %v4403 = vsel %vm1377, %v4240, 0
  %v4406 = vsel %vm1377, %v4241, 0
  %v4409 = vsel %vm1377, %v4242, 0
  %v4412 = vsel %vm1377, %v4243, 0
  %v4415 = vsel %vm1377, %v4244, 0
  %v4418 = vsel %vm1377, %v4245, 0
  %v4421 = vsel %vm1377, %v4246, 0
  %v4424 = vsel %vm1377, %v4247, 0
  %v4427 = vsel %vm1377, %v4248, 0
  %v4430 = vsel %vm1377, %v4249, 0
  %v4433 = vsel %vm1377, %v4250, 0
  %v4436 = vsel %vm1377, %v4251, 0
  %v4439 = vsel %vm1377, %v4252, 0
  %v4442 = vsel %vm1377, %v4253, 0
  %v4445 = vsel %vm1377, %v4254, 0
  %v4448 = vsel %vm1377, %v4255, 0
  %v4451 = vsel %vm1377, %v4256, 0
  %v4454 = vsel %vm1377, %v4257, 0
  %v4457 = vsel %vm1377, %v4258, 0
  %v4460 = vsel %vm1377, %v4259, 0
  %v4463 = vsel %vm1377, %v4260, 0
  %v4466 = vsel %vm1377, %v4261, 0
  %v4469 = vsel %vm1377, %v4262, 0
  %v4472 = vsel %vm1377, %v4263, 0
  %v4475 = vsel %vm1377, %v4264, 0
  %v4478 = vsel %vm1377, %v4265, 0
  %v4481 = vsel %vm1377, %v4266, 0
  %v4484 = vsel %vm1377, %v4267, 0
  %v4487 = vsel %vm1377, %v4268, 0
  %v4490 = vsel %vm1377, %v4269, 0
  %v4493 = vsel %vm1377, %v4270, 0
  %v4496 = vsel %vm1377, %v4271, 0
  %v4499 = vsel %vm1377, %v4272, 0
  %v4502 = vsel %vm1377, %v4273, 0
  %v4505 = vsel %vm1377, %v4274, 0
  %v4508 = vsel %vm1377, %v4275, 0
  %v4511 = vsel %vm1377, %v4276, 0
  %v4514 = vsel %vm1377, %v4277, 0
  %v4517 = vsel %vm1377, %v4278, 0
  %v4520 = vsel %vm1377, %v4279, 0
  %v4523 = vsel %vm1377, %v4280, 0
  %v4526 = vsel %vm1377, %v4281, 0
  %v4529 = vsel %vm1377, %v4282, 0
  %v4532 = vsel %vm1377, %v4283, 0
  %v4535 = vsel %vm1377, %v4284, 0
  %v4538 = vsel %vm1377, %v4285, 0
  %v4541 = vsel %vm1377, %v4286, 0
  %v4544 = vsel %vm1377, %v4287, 0
  %v4547 = vsel %vm1377, %v4288, 0
  %v4550 = vsel %vm1377, %v4289, 0
  %v4553 = vsel %vm1377, %v4290, 0
  %v4556 = vsel %vm1377, %v4291, 0
  %v4559 = vsel %vm1377, %v4292, 0
  %v4562 = vsel %vm1377, %v4293, 0
  %v4565 = vsel %vm1377, %v4294, 0
  %v4568 = vsel %vm1377, %v4295, 0
  %v4571 = vsel %vm1377, %v4296, 0
  %v4574 = vsel %vm1377, %v4297, 0
  %v4577 = vsel %vm1377, %v4298, 0
  %v4580 = vsel %vm1377, %v4299, 0
  %v4583 = vsel %vm1377, %v4300, 0
  %v4586 = vsel %vm1377, %v4301, 0
  %v4589 = vsel %vm1377, %v4302, 0
  %v4592 = vsel %vm1377, %v4303, 0
  %v4595 = vsel %vm1377, %v4304, 0
  %v4598 = vsel %vm1377, %v4305, 0
  %v4601 = vsel %vm1377, %v4306, 0
  %v4604 = vsel %vm1377, %v4307, 0
  %v4607 = vsel %vm1377, %v4308, 0
  %v4610 = vsel %vm1377, %v4309, 0
  %v4613 = vsel %vm1377, %v4310, 0
  %v4616 = vsel %vm1377, %v4311, 0
  %v4619 = vsel %vm1377, %v4312, 0
  %v4622 = vsel %vm1377, %v4313, 0
  %v4625 = vsel %vm1377, %v4314, 0
  %v4628 = vsel %vm1377, %v4315, 0
  %v4631 = vsel %vm1377, %v4316, 0
  %v4634 = vsel %vm1377, %v4317, 0
  %v4637 = vsel %vm1377, %v4318, 0
  %v4640 = vsel %vm1377, %v4319, 0
  %v4643 = vsel %vm1377, %v4320, 0
  %v4646 = vsel %vm1377, %v4321, 0
  %v4649 = vsel %vm1377, %v4322, 0
  %v4652 = vsel %vm1377, %v4323, 0
  %v4655 = vsel %vm1377, %v4324, 0
  %v4658 = vsel %vm1377, %v4325, 0
  %v4661 = vsel %vm1377, %v4326, 0
  %v4664 = vsel %vm1377, %v4327, 0
  %v4667 = vsel %vm1377, %v4328, 0
  %v4670 = vsel %vm1377, %v4329, 0
  %v4673 = vsel %vm1377, %v4330, 0
  %v4676 = vsel %vm1377, %v4331, 0
  %v4679 = vsel %vm1377, %v4332, 0
  %v4682 = vsel %vm1377, %v4333, 0
  %v4685 = vsel %vm1377, %v4334, 0
  %v4688 = vsel %vm1377, %v4335, 0
  %v4691 = vsel %vm1377, %v4336, 0
  %v4694 = vsel %vm1377, %v4337, 0
  %v4697 = vsel %vm1377, %v4338, 0
  %v4700 = vsel %vm1377, %v4339, 0
  %v4703 = vsel %vm1377, %v4340, 0
  %v4706 = vsel %vm1377, %v4341, 0
  %v4709 = vsel %vm1377, %v4342, 0
  %v4712 = vsel %vm1377, %v4343, 0
  %v4715 = vsel %vm1377, %v4344, 0
  %v4718 = vsel %vm1377, %v4345, 0
  %v4721 = vsel %vm1377, %v4346, 0
  %v4724 = vsel %vm1377, %v4347, 0
  %v4727 = vsel %vm1377, %v4348, 0
  %v4730 = vsel %vm1377, %v4349, 0
  %v4733 = vsel %vm1377, %v4350, 0
  %4735 = vmatpush.msra.mxu0 0.0
  %4736 = vmatpush.msra.mxu0 0.0
  %4737 = vmatpush.msra.mxu0 0.0
  %4738 = vmatpush.msra.mxu0 0.0
  %4739 = vmatpush.msra.mxu0 0.0
  %4740 = vmatpush.msra.mxu0 0.0
  %4741 = vmatpush.msra.mxu0 0.0
  %4742 = vmatpush.msra.mxu0 0.0
  %4743 = vmatpush.msra.mxu0 0.0
  %4744 = vmatpush.msra.mxu0 0.0
  %4745 = vmatpush.msra.mxu0 0.0
  %4746 = vmatpush.msra.mxu0 0.0
  %4747 = vmatpush.msra.mxu0 %v4220
  %4748 = vmatpush.msra.mxu0 %v4217
  %4749 = vmatpush.msra.mxu0 %v4214
  %4750 = vmatpush.msra.mxu0 %v4211
  %4751 = vmatmul.f32.gmra.mxu0 %v4352
  %v4752 = vpop.f32.mrf.mxu0
  %v4753 = vadd.f32 0.0, %v4752
  %4754 = vmatmul.f32.gmra.mxu0 %v4355
  %v4755 = vpop.f32.mrf.mxu0
  %v4756 = vadd.f32 0.0, %v4755
  %4757 = vmatmul.f32.gmra.mxu0 %v4358
  %v4758 = vpop.f32.mrf.mxu0
  %v4759 = vadd.f32 0.0, %v4758
  %4760 = vmatmul.f32.gmra.mxu0 %v4361
  %v4761 = vpop.f32.mrf.mxu0
  %v4762 = vadd.f32 0.0, %v4761
  %4763 = vmatmul.f32.gmra.mxu0 %v4364
  %v4764 = vpop.f32.mrf.mxu0
  %v4765 = vadd.f32 0.0, %v4764
  %4766 = vmatmul.f32.gmra.mxu0 %v4367
  %v4767 = vpop.f32.mrf.mxu0
  %v4768 = vadd.f32 0.0, %v4767
  %4769 = vmatmul.f32.gmra.mxu0 %v4370
  %v4770 = vpop.f32.mrf.mxu0
  %v4771 = vadd.f32 0.0, %v4770
  %4772 = vmatmul.f32.gmra.mxu0 %v4373
  %v4773 = vpop.f32.mrf.mxu0
  %v4774 = vadd.f32 0.0, %v4773
  %4775 = vmatmul.f32.gmra.mxu0 %v4376
  %v4776 = vpop.f32.mrf.mxu0
  %v4777 = vadd.f32 0.0, %v4776
  %4778 = vmatmul.f32.gmra.mxu0 %v4379
  %v4779 = vpop.f32.mrf.mxu0
  %v4780 = vadd.f32 0.0, %v4779
  %4781 = vmatmul.f32.gmra.mxu0 %v4382
  %v4782 = vpop.f32.mrf.mxu0
  %v4783 = vadd.f32 0.0, %v4782
  %4784 = vmatmul.f32.gmra.mxu0 %v4385
  %v4785 = vpop.f32.mrf.mxu0
  %v4786 = vadd.f32 0.0, %v4785
  %4787 = vmatmul.f32.gmra.mxu0 %v4388
  %v4788 = vpop.f32.mrf.mxu0
  %v4789 = vadd.f32 0.0, %v4788
  %4790 = vmatmul.f32.gmra.mxu0 %v4391
  %v4791 = vpop.f32.mrf.mxu0
  %v4792 = vadd.f32 0.0, %v4791
  %4793 = vmatmul.f32.gmra.mxu0 %v4394
  %v4794 = vpop.f32.mrf.mxu0
  %v4795 = vadd.f32 0.0, %v4794
  %4796 = vmatmul.f32.gmra.mxu0 %v4397
  %v4797 = vpop.f32.mrf.mxu0
  %v4798 = vadd.f32 0.0, %v4797
  %4799 = vmatmul.f32.gmra.mxu0 %v4400
  %v4800 = vpop.f32.mrf.mxu0
  %v4801 = vadd.f32 0.0, %v4800
  %4802 = vmatmul.f32.gmra.mxu0 %v4403
  %v4803 = vpop.f32.mrf.mxu0
  %v4804 = vadd.f32 0.0, %v4803
  %4805 = vmatmul.f32.gmra.mxu0 %v4406
  %v4806 = vpop.f32.mrf.mxu0
  %v4807 = vadd.f32 0.0, %v4806
  %4808 = vmatmul.f32.gmra.mxu0 %v4409
  %v4809 = vpop.f32.mrf.mxu0
  %v4810 = vadd.f32 0.0, %v4809
  %4811 = vmatmul.f32.gmra.mxu0 %v4412
  %v4812 = vpop.f32.mrf.mxu0
  %v4813 = vadd.f32 0.0, %v4812
  %4814 = vmatmul.f32.gmra.mxu0 %v4415
  %v4815 = vpop.f32.mrf.mxu0
  %v4816 = vadd.f32 0.0, %v4815
  %4817 = vmatmul.f32.gmra.mxu0 %v4418
  %v4818 = vpop.f32.mrf.mxu0
  %v4819 = vadd.f32 0.0, %v4818
  %4820 = vmatmul.f32.gmra.mxu0 %v4421
  %v4821 = vpop.f32.mrf.mxu0
  %v4822 = vadd.f32 0.0, %v4821
  %4823 = vmatmul.f32.gmra.mxu0 %v4424
  %v4824 = vpop.f32.mrf.mxu0
  %v4825 = vadd.f32 0.0, %v4824
  %4826 = vmatmul.f32.gmra.mxu0 %v4427
  %v4827 = vpop.f32.mrf.mxu0
  %v4828 = vadd.f32 0.0, %v4827
  %4829 = vmatmul.f32.gmra.mxu0 %v4430
  %v4830 = vpop.f32.mrf.mxu0
  %v4831 = vadd.f32 0.0, %v4830
  %4832 = vmatmul.f32.gmra.mxu0 %v4433
  %v4833 = vpop.f32.mrf.mxu0
  %v4834 = vadd.f32 0.0, %v4833
  %4835 = vmatmul.f32.gmra.mxu0 %v4436
  %v4836 = vpop.f32.mrf.mxu0
  %v4837 = vadd.f32 0.0, %v4836
  %4838 = vmatmul.f32.gmra.mxu0 %v4439
  %v4839 = vpop.f32.mrf.mxu0
  %v4840 = vadd.f32 0.0, %v4839
  %4841 = vmatmul.f32.gmra.mxu0 %v4442
  %v4842 = vpop.f32.mrf.mxu0
  %v4843 = vadd.f32 0.0, %v4842
  %4844 = vmatmul.f32.gmra.mxu0 %v4445
  %v4845 = vpop.f32.mrf.mxu0
  %v4846 = vadd.f32 0.0, %v4845
  %4847 = vmatmul.f32.gmra.mxu0 %v4448
  %v4848 = vpop.f32.mrf.mxu0
  %v4849 = vadd.f32 0.0, %v4848
  %4850 = vmatmul.f32.gmra.mxu0 %v4451
  %v4851 = vpop.f32.mrf.mxu0
  %v4852 = vadd.f32 0.0, %v4851
  %4853 = vmatmul.f32.gmra.mxu0 %v4454
  %v4854 = vpop.f32.mrf.mxu0
  %v4855 = vadd.f32 0.0, %v4854
  %4856 = vmatmul.f32.gmra.mxu0 %v4457
  %v4857 = vpop.f32.mrf.mxu0
  %v4858 = vadd.f32 0.0, %v4857
  %4859 = vmatmul.f32.gmra.mxu0 %v4460
  %v4860 = vpop.f32.mrf.mxu0
  %v4861 = vadd.f32 0.0, %v4860
  %4862 = vmatmul.f32.gmra.mxu0 %v4463
  %v4863 = vpop.f32.mrf.mxu0
  %v4864 = vadd.f32 0.0, %v4863
  %4865 = vmatmul.f32.gmra.mxu0 %v4466
  %v4866 = vpop.f32.mrf.mxu0
  %v4867 = vadd.f32 0.0, %v4866
  %4868 = vmatmul.f32.gmra.mxu0 %v4469
  %v4869 = vpop.f32.mrf.mxu0
  %v4870 = vadd.f32 0.0, %v4869
  %4871 = vmatmul.f32.gmra.mxu0 %v4472
  %v4872 = vpop.f32.mrf.mxu0
  %v4873 = vadd.f32 0.0, %v4872
  %4874 = vmatmul.f32.gmra.mxu0 %v4475
  %v4875 = vpop.f32.mrf.mxu0
  %v4876 = vadd.f32 0.0, %v4875
  %4877 = vmatmul.f32.gmra.mxu0 %v4478
  %v4878 = vpop.f32.mrf.mxu0
  %v4879 = vadd.f32 0.0, %v4878
  %4880 = vmatmul.f32.gmra.mxu0 %v4481
  %v4881 = vpop.f32.mrf.mxu0
  %v4882 = vadd.f32 0.0, %v4881
  %4883 = vmatmul.f32.gmra.mxu0 %v4484
  %v4884 = vpop.f32.mrf.mxu0
  %v4885 = vadd.f32 0.0, %v4884
  %4886 = vmatmul.f32.gmra.mxu0 %v4487
  %v4887 = vpop.f32.mrf.mxu0
  %v4888 = vadd.f32 0.0, %v4887
  %4889 = vmatmul.f32.gmra.mxu0 %v4490
  %v4890 = vpop.f32.mrf.mxu0
  %v4891 = vadd.f32 0.0, %v4890
  %4892 = vmatmul.f32.gmra.mxu0 %v4493
  %v4893 = vpop.f32.mrf.mxu0
  %v4894 = vadd.f32 0.0, %v4893
  %4895 = vmatmul.f32.gmra.mxu0 %v4496
  %v4896 = vpop.f32.mrf.mxu0
  %v4897 = vadd.f32 0.0, %v4896
  %4898 = vmatmul.f32.gmra.mxu0 %v4499
  %v4899 = vpop.f32.mrf.mxu0
  %v4900 = vadd.f32 0.0, %v4899
  %4901 = vmatmul.f32.gmra.mxu0 %v4502
  %v4902 = vpop.f32.mrf.mxu0
  %v4903 = vadd.f32 0.0, %v4902
  %4904 = vmatmul.f32.gmra.mxu0 %v4505
  %v4905 = vpop.f32.mrf.mxu0
  %v4906 = vadd.f32 0.0, %v4905
  %4907 = vmatmul.f32.gmra.mxu0 %v4508
  %v4908 = vpop.f32.mrf.mxu0
  %v4909 = vadd.f32 0.0, %v4908
  %4910 = vmatmul.f32.gmra.mxu0 %v4511
  %v4911 = vpop.f32.mrf.mxu0
  %v4912 = vadd.f32 0.0, %v4911
  %4913 = vmatmul.f32.gmra.mxu0 %v4514
  %v4914 = vpop.f32.mrf.mxu0
  %v4915 = vadd.f32 0.0, %v4914
  %4916 = vmatmul.f32.gmra.mxu0 %v4517
  %v4917 = vpop.f32.mrf.mxu0
  %v4918 = vadd.f32 0.0, %v4917
  %4919 = vmatmul.f32.gmra.mxu0 %v4520
  %v4920 = vpop.f32.mrf.mxu0
  %v4921 = vadd.f32 0.0, %v4920
  %4922 = vmatmul.f32.gmra.mxu0 %v4523
  %v4923 = vpop.f32.mrf.mxu0
  %v4924 = vadd.f32 0.0, %v4923
  %4925 = vmatmul.f32.gmra.mxu0 %v4526
  %v4926 = vpop.f32.mrf.mxu0
  %v4927 = vadd.f32 0.0, %v4926
  %4928 = vmatmul.f32.gmra.mxu0 %v4529
  %v4929 = vpop.f32.mrf.mxu0
  %v4930 = vadd.f32 0.0, %v4929
  %4931 = vmatmul.f32.gmra.mxu0 %v4532
  %v4932 = vpop.f32.mrf.mxu0
  %v4933 = vadd.f32 0.0, %v4932
  %4934 = vmatmul.f32.gmra.mxu0 %v4535
  %v4935 = vpop.f32.mrf.mxu0
  %v4936 = vadd.f32 0.0, %v4935
  %4937 = vmatmul.f32.gmra.mxu0 %v4538
  %v4938 = vpop.f32.mrf.mxu0
  %v4939 = vadd.f32 0.0, %v4938
  %4940 = vmatmul.f32.gmra.mxu0 %v4541
  %v4941 = vpop.f32.mrf.mxu0
  %v4942 = vadd.f32 0.0, %v4941
  %4943 = vmatmul.f32.gmra.mxu0 %v4544
  %v4944 = vpop.f32.mrf.mxu0
  %v4945 = vadd.f32 0.0, %v4944
  %4946 = vmatmul.f32.gmra.mxu0 %v4547
  %v4947 = vpop.f32.mrf.mxu0
  %v4948 = vadd.f32 0.0, %v4947
  %4949 = vmatmul.f32.gmra.mxu0 %v4550
  %v4950 = vpop.f32.mrf.mxu0
  %v4951 = vadd.f32 0.0, %v4950
  %4952 = vmatmul.f32.gmra.mxu0 %v4553
  %v4953 = vpop.f32.mrf.mxu0
  %v4954 = vadd.f32 0.0, %v4953
  %4955 = vmatmul.f32.gmra.mxu0 %v4556
  %v4956 = vpop.f32.mrf.mxu0
  %v4957 = vadd.f32 0.0, %v4956
  %4958 = vmatmul.f32.gmra.mxu0 %v4559
  %v4959 = vpop.f32.mrf.mxu0
  %v4960 = vadd.f32 0.0, %v4959
  %4961 = vmatmul.f32.gmra.mxu0 %v4562
  %v4962 = vpop.f32.mrf.mxu0
  %v4963 = vadd.f32 0.0, %v4962
  %4964 = vmatmul.f32.gmra.mxu0 %v4565
  %v4965 = vpop.f32.mrf.mxu0
  %v4966 = vadd.f32 0.0, %v4965
  %4967 = vmatmul.f32.gmra.mxu0 %v4568
  %v4968 = vpop.f32.mrf.mxu0
  %v4969 = vadd.f32 0.0, %v4968
  %4970 = vmatmul.f32.gmra.mxu0 %v4571
  %v4971 = vpop.f32.mrf.mxu0
  %v4972 = vadd.f32 0.0, %v4971
  %4973 = vmatmul.f32.gmra.mxu0 %v4574
  %v4974 = vpop.f32.mrf.mxu0
  %v4975 = vadd.f32 0.0, %v4974
  %4976 = vmatmul.f32.gmra.mxu0 %v4577
  %v4977 = vpop.f32.mrf.mxu0
  %v4978 = vadd.f32 0.0, %v4977
  %4979 = vmatmul.f32.gmra.mxu0 %v4580
  %v4980 = vpop.f32.mrf.mxu0
  %v4981 = vadd.f32 0.0, %v4980
  %4982 = vmatmul.f32.gmra.mxu0 %v4583
  %v4983 = vpop.f32.mrf.mxu0
  %v4984 = vadd.f32 0.0, %v4983
  %4985 = vmatmul.f32.gmra.mxu0 %v4586
  %v4986 = vpop.f32.mrf.mxu0
  %v4987 = vadd.f32 0.0, %v4986
  %4988 = vmatmul.f32.gmra.mxu0 %v4589
  %v4989 = vpop.f32.mrf.mxu0
  %v4990 = vadd.f32 0.0, %v4989
  %4991 = vmatmul.f32.gmra.mxu0 %v4592
  %v4992 = vpop.f32.mrf.mxu0
  %v4993 = vadd.f32 0.0, %v4992
  %4994 = vmatmul.f32.gmra.mxu0 %v4595
  %v4995 = vpop.f32.mrf.mxu0
  %v4996 = vadd.f32 0.0, %v4995
  %4997 = vmatmul.f32.gmra.mxu0 %v4598
  %v4998 = vpop.f32.mrf.mxu0
  %v4999 = vadd.f32 0.0, %v4998
  %5000 = vmatmul.f32.gmra.mxu0 %v4601
  %v5001 = vpop.f32.mrf.mxu0
  %v5002 = vadd.f32 0.0, %v5001
  %5003 = vmatmul.f32.gmra.mxu0 %v4604
  %v5004 = vpop.f32.mrf.mxu0
  %v5005 = vadd.f32 0.0, %v5004
  %5006 = vmatmul.f32.gmra.mxu0 %v4607
  %v5007 = vpop.f32.mrf.mxu0
  %v5008 = vadd.f32 0.0, %v5007
  %5009 = vmatmul.f32.gmra.mxu0 %v4610
  %v5010 = vpop.f32.mrf.mxu0
  %v5011 = vadd.f32 0.0, %v5010
  %5012 = vmatmul.f32.gmra.mxu0 %v4613
  %v5013 = vpop.f32.mrf.mxu0
  %v5014 = vadd.f32 0.0, %v5013
  %5015 = vmatmul.f32.gmra.mxu0 %v4616
  %v5016 = vpop.f32.mrf.mxu0
  %v5017 = vadd.f32 0.0, %v5016
  %5018 = vmatmul.f32.gmra.mxu0 %v4619
  %v5019 = vpop.f32.mrf.mxu0
  %v5020 = vadd.f32 0.0, %v5019
  %5021 = vmatmul.f32.gmra.mxu0 %v4622
  %v5022 = vpop.f32.mrf.mxu0
  %v5023 = vadd.f32 0.0, %v5022
  %5024 = vmatmul.f32.gmra.mxu0 %v4625
  %v5025 = vpop.f32.mrf.mxu0
  %v5026 = vadd.f32 0.0, %v5025
  %5027 = vmatmul.f32.gmra.mxu0 %v4628
  %v5028 = vpop.f32.mrf.mxu0
  %v5029 = vadd.f32 0.0, %v5028
  %5030 = vmatmul.f32.gmra.mxu0 %v4631
  %v5031 = vpop.f32.mrf.mxu0
  %v5032 = vadd.f32 0.0, %v5031
  %5033 = vmatmul.f32.gmra.mxu0 %v4634
  %v5034 = vpop.f32.mrf.mxu0
  %v5035 = vadd.f32 0.0, %v5034
  %5036 = vmatmul.f32.gmra.mxu0 %v4637
  %v5037 = vpop.f32.mrf.mxu0
  %v5038 = vadd.f32 0.0, %v5037
  %5039 = vmatmul.f32.gmra.mxu0 %v4640
  %v5040 = vpop.f32.mrf.mxu0
  %v5041 = vadd.f32 0.0, %v5040
  %5042 = vmatmul.f32.gmra.mxu0 %v4643
  %v5043 = vpop.f32.mrf.mxu0
  %v5044 = vadd.f32 0.0, %v5043
  %5045 = vmatmul.f32.gmra.mxu0 %v4646
  %v5046 = vpop.f32.mrf.mxu0
  %v5047 = vadd.f32 0.0, %v5046
  %5048 = vmatmul.f32.gmra.mxu0 %v4649
  %v5049 = vpop.f32.mrf.mxu0
  %v5050 = vadd.f32 0.0, %v5049
  %5051 = vmatmul.f32.gmra.mxu0 %v4652
  %v5052 = vpop.f32.mrf.mxu0
  %v5053 = vadd.f32 0.0, %v5052
  %5054 = vmatmul.f32.gmra.mxu0 %v4655
  %v5055 = vpop.f32.mrf.mxu0
  %v5056 = vadd.f32 0.0, %v5055
  %5057 = vmatmul.f32.gmra.mxu0 %v4658
  %v5058 = vpop.f32.mrf.mxu0
  %v5059 = vadd.f32 0.0, %v5058
  %5060 = vmatmul.f32.gmra.mxu0 %v4661
  %v5061 = vpop.f32.mrf.mxu0
  %v5062 = vadd.f32 0.0, %v5061
  %5063 = vmatmul.f32.gmra.mxu0 %v4664
  %v5064 = vpop.f32.mrf.mxu0
  %v5065 = vadd.f32 0.0, %v5064
  %5066 = vmatmul.f32.gmra.mxu0 %v4667
  %v5067 = vpop.f32.mrf.mxu0
  %v5068 = vadd.f32 0.0, %v5067
  %5069 = vmatmul.f32.gmra.mxu0 %v4670
  %v5070 = vpop.f32.mrf.mxu0
  %v5071 = vadd.f32 0.0, %v5070
  %5072 = vmatmul.f32.gmra.mxu0 %v4673
  %v5073 = vpop.f32.mrf.mxu0
  %v5074 = vadd.f32 0.0, %v5073
  %5075 = vmatmul.f32.gmra.mxu0 %v4676
  %v5076 = vpop.f32.mrf.mxu0
  %v5077 = vadd.f32 0.0, %v5076
  %5078 = vmatmul.f32.gmra.mxu0 %v4679
  %v5079 = vpop.f32.mrf.mxu0
  %v5080 = vadd.f32 0.0, %v5079
  %5081 = vmatmul.f32.gmra.mxu0 %v4682
  %v5082 = vpop.f32.mrf.mxu0
  %v5083 = vadd.f32 0.0, %v5082
  %5084 = vmatmul.f32.gmra.mxu0 %v4685
  %v5085 = vpop.f32.mrf.mxu0
  %v5086 = vadd.f32 0.0, %v5085
  %5087 = vmatmul.f32.gmra.mxu0 %v4688
  %v5088 = vpop.f32.mrf.mxu0
  %v5089 = vadd.f32 0.0, %v5088
  %5090 = vmatmul.f32.gmra.mxu0 %v4691
  %v5091 = vpop.f32.mrf.mxu0
  %v5092 = vadd.f32 0.0, %v5091
  %5093 = vmatmul.f32.gmra.mxu0 %v4694
  %v5094 = vpop.f32.mrf.mxu0
  %v5095 = vadd.f32 0.0, %v5094
  %5096 = vmatmul.f32.gmra.mxu0 %v4697
  %v5097 = vpop.f32.mrf.mxu0
  %v5098 = vadd.f32 0.0, %v5097
  %5099 = vmatmul.f32.gmra.mxu0 %v4700
  %v5100 = vpop.f32.mrf.mxu0
  %v5101 = vadd.f32 0.0, %v5100
  %5102 = vmatmul.f32.gmra.mxu0 %v4703
  %v5103 = vpop.f32.mrf.mxu0
  %v5104 = vadd.f32 0.0, %v5103
  %5105 = vmatmul.f32.gmra.mxu0 %v4706
  %v5106 = vpop.f32.mrf.mxu0
  %v5107 = vadd.f32 0.0, %v5106
  %5108 = vmatmul.f32.gmra.mxu0 %v4709
  %v5109 = vpop.f32.mrf.mxu0
  %v5110 = vadd.f32 0.0, %v5109
  %5111 = vmatmul.f32.gmra.mxu0 %v4712
  %v5112 = vpop.f32.mrf.mxu0
  %v5113 = vadd.f32 0.0, %v5112
  %5114 = vmatmul.f32.gmra.mxu0 %v4715
  %v5115 = vpop.f32.mrf.mxu0
  %v5116 = vadd.f32 0.0, %v5115
  %5117 = vmatmul.f32.gmra.mxu0 %v4718
  %v5118 = vpop.f32.mrf.mxu0
  %v5119 = vadd.f32 0.0, %v5118
  %5120 = vmatmul.f32.gmra.mxu0 %v4721
  %v5121 = vpop.f32.mrf.mxu0
  %v5122 = vadd.f32 0.0, %v5121
  %5123 = vmatmul.f32.gmra.mxu0 %v4724
  %v5124 = vpop.f32.mrf.mxu0
  %v5125 = vadd.f32 0.0, %v5124
  %5126 = vmatmul.f32.gmra.mxu0 %v4727
  %v5127 = vpop.f32.mrf.mxu0
  %v5128 = vadd.f32 0.0, %v5127
  %5129 = vmatmul.f32.gmra.mxu0 %v4730
  %v5130 = vpop.f32.mrf.mxu0
  %v5131 = vadd.f32 0.0, %v5130
  %5132 = vmatmul.f32.gmra.mxu0 %v4733
  %v5133 = vpop.f32.mrf.mxu0
  %v5134 = vadd.f32 0.0, %v5133
  %5135 = vdwg.mxu0
  %v5136 = vadd.f32 %v3978, %v4753
  %v5137 = vadd.f32 %v3979, %v4756
  %v5138 = vadd.f32 %v3980, %v4759
  %v5139 = vadd.f32 %v3981, %v4762
  %v5140 = vadd.f32 %v3982, %v4765
  %v5141 = vadd.f32 %v3983, %v4768
  %v5142 = vadd.f32 %v3984, %v4771
  %v5143 = vadd.f32 %v3985, %v4774
  %v5144 = vadd.f32 %v3986, %v4777
  %v5145 = vadd.f32 %v3987, %v4780
  %v5146 = vadd.f32 %v3988, %v4783
  %v5147 = vadd.f32 %v3989, %v4786
  %v5148 = vadd.f32 %v3990, %v4789
  %v5149 = vadd.f32 %v3991, %v4792
  %v5150 = vadd.f32 %v3992, %v4795
  %v5151 = vadd.f32 %v3993, %v4798
  %v5152 = vadd.f32 %v3994, %v4801
  %v5153 = vadd.f32 %v3995, %v4804
  %v5154 = vadd.f32 %v3996, %v4807
  %v5155 = vadd.f32 %v3997, %v4810
  %v5156 = vadd.f32 %v3998, %v4813
  %v5157 = vadd.f32 %v3999, %v4816
  %v5158 = vadd.f32 %v4000, %v4819
  %v5159 = vadd.f32 %v4001, %v4822
  %v5160 = vadd.f32 %v4002, %v4825
  %v5161 = vadd.f32 %v4003, %v4828
  %v5162 = vadd.f32 %v4004, %v4831
  %v5163 = vadd.f32 %v4005, %v4834
  %v5164 = vadd.f32 %v4006, %v4837
  %v5165 = vadd.f32 %v4007, %v4840
  %v5166 = vadd.f32 %v4008, %v4843
  %v5167 = vadd.f32 %v4009, %v4846
  %v5168 = vadd.f32 %v4010, %v4849
  %v5169 = vadd.f32 %v4011, %v4852
  %v5170 = vadd.f32 %v4012, %v4855
  %v5171 = vadd.f32 %v4013, %v4858
  %v5172 = vadd.f32 %v4014, %v4861
  %v5173 = vadd.f32 %v4015, %v4864
  %v5174 = vadd.f32 %v4016, %v4867
  %v5175 = vadd.f32 %v4017, %v4870
  %v5176 = vadd.f32 %v4018, %v4873
  %v5177 = vadd.f32 %v4019, %v4876
  %v5178 = vadd.f32 %v4020, %v4879
  %v5179 = vadd.f32 %v4021, %v4882
  %v5180 = vadd.f32 %v4022, %v4885
  %v5181 = vadd.f32 %v4023, %v4888
  %v5182 = vadd.f32 %v4024, %v4891
  %v5183 = vadd.f32 %v4025, %v4894
  %v5184 = vadd.f32 %v4026, %v4897
  %v5185 = vadd.f32 %v4027, %v4900
  %v5186 = vadd.f32 %v4028, %v4903
  %v5187 = vadd.f32 %v4029, %v4906
  %v5188 = vadd.f32 %v4030, %v4909
  %v5189 = vadd.f32 %v4031, %v4912
  %v5190 = vadd.f32 %v4032, %v4915
  %v5191 = vadd.f32 %v4033, %v4918
  %v5192 = vadd.f32 %v4034, %v4921
  %v5193 = vadd.f32 %v4035, %v4924
  %v5194 = vadd.f32 %v4036, %v4927
  %v5195 = vadd.f32 %v4037, %v4930
  %v5196 = vadd.f32 %v4038, %v4933
  %v5197 = vadd.f32 %v4039, %v4936
  %v5198 = vadd.f32 %v4040, %v4939
  %v5199 = vadd.f32 %v4041, %v4942
  %v5200 = vadd.f32 %v4042, %v4945
  %v5201 = vadd.f32 %v4043, %v4948
  %v5202 = vadd.f32 %v4044, %v4951
  %v5203 = vadd.f32 %v4045, %v4954
  %v5204 = vadd.f32 %v4046, %v4957
  %v5205 = vadd.f32 %v4047, %v4960
  %v5206 = vadd.f32 %v4048, %v4963
  %v5207 = vadd.f32 %v4049, %v4966
  %v5208 = vadd.f32 %v4050, %v4969
  %v5209 = vadd.f32 %v4051, %v4972
  %v5210 = vadd.f32 %v4052, %v4975
  %v5211 = vadd.f32 %v4053, %v4978
  %v5212 = vadd.f32 %v4054, %v4981
  %v5213 = vadd.f32 %v4055, %v4984
  %v5214 = vadd.f32 %v4056, %v4987
  %v5215 = vadd.f32 %v4057, %v4990
  %v5216 = vadd.f32 %v4058, %v4993
  %v5217 = vadd.f32 %v4059, %v4996
  %v5218 = vadd.f32 %v4060, %v4999
  %v5219 = vadd.f32 %v4061, %v5002
  %v5220 = vadd.f32 %v4062, %v5005
  %v5221 = vadd.f32 %v4063, %v5008
  %v5222 = vadd.f32 %v4064, %v5011
  %v5223 = vadd.f32 %v4065, %v5014
  %v5224 = vadd.f32 %v4066, %v5017
  %v5225 = vadd.f32 %v4067, %v5020
  %v5226 = vadd.f32 %v4068, %v5023
  %v5227 = vadd.f32 %v4069, %v5026
  %v5228 = vadd.f32 %v4070, %v5029
  %v5229 = vadd.f32 %v4071, %v5032
  %v5230 = vadd.f32 %v4072, %v5035
  %v5231 = vadd.f32 %v4073, %v5038
  %v5232 = vadd.f32 %v4074, %v5041
  %v5233 = vadd.f32 %v4075, %v5044
  %v5234 = vadd.f32 %v4076, %v5047
  %v5235 = vadd.f32 %v4077, %v5050
  %v5236 = vadd.f32 %v4078, %v5053
  %v5237 = vadd.f32 %v4079, %v5056
  %v5238 = vadd.f32 %v4080, %v5059
  %v5239 = vadd.f32 %v4081, %v5062
  %v5240 = vadd.f32 %v4082, %v5065
  %v5241 = vadd.f32 %v4083, %v5068
  %v5242 = vadd.f32 %v4084, %v5071
  %v5243 = vadd.f32 %v4085, %v5074
  %v5244 = vadd.f32 %v4086, %v5077
  %v5245 = vadd.f32 %v4087, %v5080
  %v5246 = vadd.f32 %v4088, %v5083
  %v5247 = vadd.f32 %v4089, %v5086
  %v5248 = vadd.f32 %v4090, %v5089
  %v5249 = vadd.f32 %v4091, %v5092
  %v5250 = vadd.f32 %v4092, %v5095
  %v5251 = vadd.f32 %v4093, %v5098
  %v5252 = vadd.f32 %v4094, %v5101
  %v5253 = vadd.f32 %v4095, %v5104
  %v5254 = vadd.f32 %v4096, %v5107
  %v5255 = vadd.f32 %v4097, %v5110
  %v5256 = vadd.f32 %v4098, %v5113
  %v5257 = vadd.f32 %v4099, %v5116
  %v5258 = vadd.f32 %v4100, %v5119
  %v5259 = vadd.f32 %v4101, %v5122
  %v5260 = vadd.f32 %v4102, %v5125
  %v5261 = vadd.f32 %v4103, %v5128
  %v5262 = vadd.f32 %v4104, %v5131
  %v5263 = vadd.f32 %v4105, %v5134
  %5264 = vmatpush.msra.mxu0 %v839
  %5265 = vmatpush.msra.mxu0 %v838
  %5266 = vmatpush.msra.mxu0 %v837
  %5267 = vmatpush.msra.mxu0 %v836
  %5268 = vmatpush.msra.mxu0 %v835
  %5269 = vmatpush.msra.mxu0 %v834
  %5270 = vmatpush.msra.mxu0 %v833
  %5271 = vmatpush.msra.mxu0 %v832
  %5272 = vmatpush.msra.mxu0 %v831
  %5273 = vmatpush.msra.mxu0 %v830
  %5274 = vmatpush.msra.mxu0 %v829
  %5275 = vmatpush.msra.mxu0 %v828
  %5276 = vmatpush.msra.mxu0 %v827
  %5277 = vmatpush.msra.mxu0 %v826
  %5278 = vmatpush.msra.mxu0 %v825
  %5279 = vmatpush.msra.mxu0 %v824
  %5280 = vmatmul.f32.gmra.mxu0 %v760
  %v5281 = vpop.f32.mrf.mxu0
  %v5282 = vadd.f32 0.0, %v5281
  %5283 = vmatmul.f32.gmra.mxu0 %v780
  %v5284 = vpop.f32.mrf.mxu0
  %v5285 = vadd.f32 0.0, %v5284
  %5286 = vmatmul.f32.gmra.mxu0 %v800
  %v5287 = vpop.f32.mrf.mxu0
  %v5288 = vadd.f32 0.0, %v5287
  %5289 = vmatmul.f32.gmra.mxu0 %v820
  %v5290 = vpop.f32.mrf.mxu0
  %v5291 = vadd.f32 0.0, %v5290
  %5292 = vdwg.mxu0
  %5293 = vmatpush.msra.mxu0 %v855
  %5294 = vmatpush.msra.mxu0 %v854
  %5295 = vmatpush.msra.mxu0 %v853
  %5296 = vmatpush.msra.mxu0 %v852
  %5297 = vmatpush.msra.mxu0 %v851
  %5298 = vmatpush.msra.mxu0 %v850
  %5299 = vmatpush.msra.mxu0 %v849
  %5300 = vmatpush.msra.mxu0 %v848
  %5301 = vmatpush.msra.mxu0 %v847
  %5302 = vmatpush.msra.mxu0 %v846
  %5303 = vmatpush.msra.mxu0 %v845
  %5304 = vmatpush.msra.mxu0 %v844
  %5305 = vmatpush.msra.mxu0 %v843
  %5306 = vmatpush.msra.mxu0 %v842
  %5307 = vmatpush.msra.mxu0 %v841
  %5308 = vmatpush.msra.mxu0 %v840
  %5309 = vmatmul.f32.gmra.mxu0 %v761
  %v5310 = vpop.f32.mrf.mxu0
  %v5311 = vadd.f32 %v5282, %v5310
  %5312 = vmatmul.f32.gmra.mxu0 %v781
  %v5313 = vpop.f32.mrf.mxu0
  %v5314 = vadd.f32 %v5285, %v5313
  %5315 = vmatmul.f32.gmra.mxu0 %v801
  %v5316 = vpop.f32.mrf.mxu0
  %v5317 = vadd.f32 %v5288, %v5316
  %5318 = vmatmul.f32.gmra.mxu0 %v821
  %v5319 = vpop.f32.mrf.mxu0
  %v5320 = vadd.f32 %v5291, %v5319
  %5321 = vdwg.mxu0
  %5322 = vmatpush.msra.mxu0 %v871
  %5323 = vmatpush.msra.mxu0 %v870
  %5324 = vmatpush.msra.mxu0 %v869
  %5325 = vmatpush.msra.mxu0 %v868
  %5326 = vmatpush.msra.mxu0 %v867
  %5327 = vmatpush.msra.mxu0 %v866
  %5328 = vmatpush.msra.mxu0 %v865
  %5329 = vmatpush.msra.mxu0 %v864
  %5330 = vmatpush.msra.mxu0 %v863
  %5331 = vmatpush.msra.mxu0 %v862
  %5332 = vmatpush.msra.mxu0 %v861
  %5333 = vmatpush.msra.mxu0 %v860
  %5334 = vmatpush.msra.mxu0 %v859
  %5335 = vmatpush.msra.mxu0 %v858
  %5336 = vmatpush.msra.mxu0 %v857
  %5337 = vmatpush.msra.mxu0 %v856
  %5338 = vmatmul.f32.gmra.mxu0 %v762
  %v5339 = vpop.f32.mrf.mxu0
  %v5340 = vadd.f32 %v5311, %v5339
  %5341 = vmatmul.f32.gmra.mxu0 %v782
  %v5342 = vpop.f32.mrf.mxu0
  %v5343 = vadd.f32 %v5314, %v5342
  %5344 = vmatmul.f32.gmra.mxu0 %v802
  %v5345 = vpop.f32.mrf.mxu0
  %v5346 = vadd.f32 %v5317, %v5345
  %5347 = vmatmul.f32.gmra.mxu0 %v822
  %v5348 = vpop.f32.mrf.mxu0
  %v5349 = vadd.f32 %v5320, %v5348
  %5350 = vdwg.mxu0
  %5351 = vmatpush.msra.mxu0 %v887
  %5352 = vmatpush.msra.mxu0 %v886
  %5353 = vmatpush.msra.mxu0 %v885
  %5354 = vmatpush.msra.mxu0 %v884
  %5355 = vmatpush.msra.mxu0 %v883
  %5356 = vmatpush.msra.mxu0 %v882
  %5357 = vmatpush.msra.mxu0 %v881
  %5358 = vmatpush.msra.mxu0 %v880
  %5359 = vmatpush.msra.mxu0 %v879
  %5360 = vmatpush.msra.mxu0 %v878
  %5361 = vmatpush.msra.mxu0 %v877
  %5362 = vmatpush.msra.mxu0 %v876
  %5363 = vmatpush.msra.mxu0 %v875
  %5364 = vmatpush.msra.mxu0 %v874
  %5365 = vmatpush.msra.mxu0 %v873
  %5366 = vmatpush.msra.mxu0 %v872
  %5367 = vmatmul.f32.gmra.mxu0 %v763
  %v5368 = vpop.f32.mrf.mxu0
  %v5369 = vadd.f32 %v5340, %v5368
  %5370 = vmatmul.f32.gmra.mxu0 %v783
  %v5371 = vpop.f32.mrf.mxu0
  %v5372 = vadd.f32 %v5343, %v5371
  %5373 = vmatmul.f32.gmra.mxu0 %v803
  %v5374 = vpop.f32.mrf.mxu0
  %v5375 = vadd.f32 %v5346, %v5374
  %5376 = vmatmul.f32.gmra.mxu0 %v823
  %v5377 = vpop.f32.mrf.mxu0
  %v5378 = vadd.f32 %v5349, %v5377
  %5379 = vdwg.mxu0
  %s5380 = scalar_lea.vmem %s4, 4096
  %v5381 = vld [vmem:[%s5380] sm:$0xff]
  %v5382 = vld [vmem:[%s5380 + $0x8] sm:$0xff]
  %v5383 = vld [vmem:[%s5380 + $0x10] sm:$0xff]
  %v5384 = vld [vmem:[%s5380 + $0x18] sm:$0xff]
  %v5385 = vld [vmem:[%s5380 + $0x20] sm:$0xff]
  %v5386 = vld [vmem:[%s5380 + $0x28] sm:$0xff]
  %v5387 = vld [vmem:[%s5380 + $0x30] sm:$0xff]
  %v5388 = vld [vmem:[%s5380 + $0x38] sm:$0xff]
  %v5389 = vld [vmem:[%s5380 + $0x40] sm:$0xff]
  %v5390 = vld [vmem:[%s5380 + $0x48] sm:$0xff]
  %v5391 = vld [vmem:[%s5380 + $0x50] sm:$0xff]
  %v5392 = vld [vmem:[%s5380 + $0x58] sm:$0xff]
  %v5393 = vld [vmem:[%s5380 + $0x60] sm:$0xff]
  %v5394 = vld [vmem:[%s5380 + $0x68] sm:$0xff]
  %v5395 = vld [vmem:[%s5380 + $0x70] sm:$0xff]
  %v5396 = vld [vmem:[%s5380 + $0x78] sm:$0xff]
  %v5397 = vld [vmem:[%s5380 + $0x80] sm:$0xff]
  %v5398 = vld [vmem:[%s5380 + $0x88] sm:$0xff]
  %v5399 = vld [vmem:[%s5380 + $0x90] sm:$0xff]
  %v5400 = vld [vmem:[%s5380 + $0x98] sm:$0xff]
  %v5401 = vld [vmem:[%s5380 + $0xa0] sm:$0xff]
  %v5402 = vld [vmem:[%s5380 + $0xa8] sm:$0xff]
  %v5403 = vld [vmem:[%s5380 + $0xb0] sm:$0xff]
  %v5404 = vld [vmem:[%s5380 + $0xb8] sm:$0xff]
  %v5405 = vld [vmem:[%s5380 + $0xc0] sm:$0xff]
  %v5406 = vld [vmem:[%s5380 + $0xc8] sm:$0xff]
  %v5407 = vld [vmem:[%s5380 + $0xd0] sm:$0xff]
  %v5408 = vld [vmem:[%s5380 + $0xd8] sm:$0xff]
  %v5409 = vld [vmem:[%s5380 + $0xe0] sm:$0xff]
  %v5410 = vld [vmem:[%s5380 + $0xe8] sm:$0xff]
  %v5411 = vld [vmem:[%s5380 + $0xf0] sm:$0xff]
  %v5412 = vld [vmem:[%s5380 + $0xf8] sm:$0xff]
  %v5413 = vld [vmem:[%s5380 + $0x100] sm:$0xff]
  %v5414 = vld [vmem:[%s5380 + $0x108] sm:$0xff]
  %v5415 = vld [vmem:[%s5380 + $0x110] sm:$0xff]
  %v5416 = vld [vmem:[%s5380 + $0x118] sm:$0xff]
  %v5417 = vld [vmem:[%s5380 + $0x120] sm:$0xff]
  %v5418 = vld [vmem:[%s5380 + $0x128] sm:$0xff]
  %v5419 = vld [vmem:[%s5380 + $0x130] sm:$0xff]
  %v5420 = vld [vmem:[%s5380 + $0x138] sm:$0xff]
  %v5421 = vld [vmem:[%s5380 + $0x140] sm:$0xff]
  %v5422 = vld [vmem:[%s5380 + $0x148] sm:$0xff]
  %v5423 = vld [vmem:[%s5380 + $0x150] sm:$0xff]
  %v5424 = vld [vmem:[%s5380 + $0x158] sm:$0xff]
  %v5425 = vld [vmem:[%s5380 + $0x160] sm:$0xff]
  %v5426 = vld [vmem:[%s5380 + $0x168] sm:$0xff]
  %v5427 = vld [vmem:[%s5380 + $0x170] sm:$0xff]
  %v5428 = vld [vmem:[%s5380 + $0x178] sm:$0xff]
  %v5429 = vld [vmem:[%s5380 + $0x180] sm:$0xff]
  %v5430 = vld [vmem:[%s5380 + $0x188] sm:$0xff]
  %v5431 = vld [vmem:[%s5380 + $0x190] sm:$0xff]
  %v5432 = vld [vmem:[%s5380 + $0x198] sm:$0xff]
  %v5433 = vld [vmem:[%s5380 + $0x1a0] sm:$0xff]
  %v5434 = vld [vmem:[%s5380 + $0x1a8] sm:$0xff]
  %v5435 = vld [vmem:[%s5380 + $0x1b0] sm:$0xff]
  %v5436 = vld [vmem:[%s5380 + $0x1b8] sm:$0xff]
  %v5437 = vld [vmem:[%s5380 + $0x1c0] sm:$0xff]
  %v5438 = vld [vmem:[%s5380 + $0x1c8] sm:$0xff]
  %v5439 = vld [vmem:[%s5380 + $0x1d0] sm:$0xff]
  %v5440 = vld [vmem:[%s5380 + $0x1d8] sm:$0xff]
  %v5441 = vld [vmem:[%s5380 + $0x1e0] sm:$0xff]
  %v5442 = vld [vmem:[%s5380 + $0x1e8] sm:$0xff]
  %v5443 = vld [vmem:[%s5380 + $0x1f0] sm:$0xff]
  %v5444 = vld [vmem:[%s5380 + $0x1f8] sm:$0xff]
  %v5445 = vld [vmem:[%s5380 + $0x200] sm:$0xff]
  %v5446 = vld [vmem:[%s5380 + $0x208] sm:$0xff]
  %v5447 = vld [vmem:[%s5380 + $0x210] sm:$0xff]
  %v5448 = vld [vmem:[%s5380 + $0x218] sm:$0xff]
  %v5449 = vld [vmem:[%s5380 + $0x220] sm:$0xff]
  %v5450 = vld [vmem:[%s5380 + $0x228] sm:$0xff]
  %v5451 = vld [vmem:[%s5380 + $0x230] sm:$0xff]
  %v5452 = vld [vmem:[%s5380 + $0x238] sm:$0xff]
  %v5453 = vld [vmem:[%s5380 + $0x240] sm:$0xff]
  %v5454 = vld [vmem:[%s5380 + $0x248] sm:$0xff]
  %v5455 = vld [vmem:[%s5380 + $0x250] sm:$0xff]
  %v5456 = vld [vmem:[%s5380 + $0x258] sm:$0xff]
  %v5457 = vld [vmem:[%s5380 + $0x260] sm:$0xff]
  %v5458 = vld [vmem:[%s5380 + $0x268] sm:$0xff]
  %v5459 = vld [vmem:[%s5380 + $0x270] sm:$0xff]
  %v5460 = vld [vmem:[%s5380 + $0x278] sm:$0xff]
  %v5461 = vld [vmem:[%s5380 + $0x280] sm:$0xff]
  %v5462 = vld [vmem:[%s5380 + $0x288] sm:$0xff]
  %v5463 = vld [vmem:[%s5380 + $0x290] sm:$0xff]
  %v5464 = vld [vmem:[%s5380 + $0x298] sm:$0xff]
  %v5465 = vld [vmem:[%s5380 + $0x2a0] sm:$0xff]
  %v5466 = vld [vmem:[%s5380 + $0x2a8] sm:$0xff]
  %v5467 = vld [vmem:[%s5380 + $0x2b0] sm:$0xff]
  %v5468 = vld [vmem:[%s5380 + $0x2b8] sm:$0xff]
  %v5469 = vld [vmem:[%s5380 + $0x2c0] sm:$0xff]
  %v5470 = vld [vmem:[%s5380 + $0x2c8] sm:$0xff]
  %v5471 = vld [vmem:[%s5380 + $0x2d0] sm:$0xff]
  %v5472 = vld [vmem:[%s5380 + $0x2d8] sm:$0xff]
  %v5473 = vld [vmem:[%s5380 + $0x2e0] sm:$0xff]
  %v5474 = vld [vmem:[%s5380 + $0x2e8] sm:$0xff]
  %v5475 = vld [vmem:[%s5380 + $0x2f0] sm:$0xff]
  %v5476 = vld [vmem:[%s5380 + $0x2f8] sm:$0xff]
  %v5477 = vld [vmem:[%s5380 + $0x300] sm:$0xff]
  %v5478 = vld [vmem:[%s5380 + $0x308] sm:$0xff]
  %v5479 = vld [vmem:[%s5380 + $0x310] sm:$0xff]
  %v5480 = vld [vmem:[%s5380 + $0x318] sm:$0xff]
  %v5481 = vld [vmem:[%s5380 + $0x320] sm:$0xff]
  %v5482 = vld [vmem:[%s5380 + $0x328] sm:$0xff]
  %v5483 = vld [vmem:[%s5380 + $0x330] sm:$0xff]
  %v5484 = vld [vmem:[%s5380 + $0x338] sm:$0xff]
  %v5485 = vld [vmem:[%s5380 + $0x340] sm:$0xff]
  %v5486 = vld [vmem:[%s5380 + $0x348] sm:$0xff]
  %v5487 = vld [vmem:[%s5380 + $0x350] sm:$0xff]
  %v5488 = vld [vmem:[%s5380 + $0x358] sm:$0xff]
  %v5489 = vld [vmem:[%s5380 + $0x360] sm:$0xff]
  %v5490 = vld [vmem:[%s5380 + $0x368] sm:$0xff]
  %v5491 = vld [vmem:[%s5380 + $0x370] sm:$0xff]
  %v5492 = vld [vmem:[%s5380 + $0x378] sm:$0xff]
  %v5493 = vld [vmem:[%s5380 + $0x380] sm:$0xff]
  %v5494 = vld [vmem:[%s5380 + $0x388] sm:$0xff]
  %v5495 = vld [vmem:[%s5380 + $0x390] sm:$0xff]
  %v5496 = vld [vmem:[%s5380 + $0x398] sm:$0xff]
  %v5497 = vld [vmem:[%s5380 + $0x3a0] sm:$0xff]
  %v5498 = vld [vmem:[%s5380 + $0x3a8] sm:$0xff]
  %v5499 = vld [vmem:[%s5380 + $0x3b0] sm:$0xff]
  %v5500 = vld [vmem:[%s5380 + $0x3b8] sm:$0xff]
  %v5501 = vld [vmem:[%s5380 + $0x3c0] sm:$0xff]
  %v5502 = vld [vmem:[%s5380 + $0x3c8] sm:$0xff]
  %v5503 = vld [vmem:[%s5380 + $0x3d0] sm:$0xff]
  %v5504 = vld [vmem:[%s5380 + $0x3d8] sm:$0xff]
  %v5505 = vld [vmem:[%s5380 + $0x3e0] sm:$0xff]
  %v5506 = vld [vmem:[%s5380 + $0x3e8] sm:$0xff]
  %v5507 = vld [vmem:[%s5380 + $0x3f0] sm:$0xff]
  %v5508 = vld [vmem:[%s5380 + $0x3f8] sm:$0xff]
  %v5510 = vsel %vm1377, %v5381, 0
  %v5513 = vsel %vm1377, %v5382, 0
  %v5516 = vsel %vm1377, %v5383, 0
  %v5519 = vsel %vm1377, %v5384, 0
  %v5522 = vsel %vm1377, %v5385, 0
  %v5525 = vsel %vm1377, %v5386, 0
  %v5528 = vsel %vm1377, %v5387, 0
  %v5531 = vsel %vm1377, %v5388, 0
  %v5534 = vsel %vm1377, %v5389, 0
  %v5537 = vsel %vm1377, %v5390, 0
  %v5540 = vsel %vm1377, %v5391, 0
  %v5543 = vsel %vm1377, %v5392, 0
  %v5546 = vsel %vm1377, %v5393, 0
  %v5549 = vsel %vm1377, %v5394, 0
  %v5552 = vsel %vm1377, %v5395, 0
  %v5555 = vsel %vm1377, %v5396, 0
  %v5558 = vsel %vm1377, %v5397, 0
  %v5561 = vsel %vm1377, %v5398, 0
  %v5564 = vsel %vm1377, %v5399, 0
  %v5567 = vsel %vm1377, %v5400, 0
  %v5570 = vsel %vm1377, %v5401, 0
  %v5573 = vsel %vm1377, %v5402, 0
  %v5576 = vsel %vm1377, %v5403, 0
  %v5579 = vsel %vm1377, %v5404, 0
  %v5582 = vsel %vm1377, %v5405, 0
  %v5585 = vsel %vm1377, %v5406, 0
  %v5588 = vsel %vm1377, %v5407, 0
  %v5591 = vsel %vm1377, %v5408, 0
  %v5594 = vsel %vm1377, %v5409, 0
  %v5597 = vsel %vm1377, %v5410, 0
  %v5600 = vsel %vm1377, %v5411, 0
  %v5603 = vsel %vm1377, %v5412, 0
  %v5606 = vsel %vm1377, %v5413, 0
  %v5609 = vsel %vm1377, %v5414, 0
  %v5612 = vsel %vm1377, %v5415, 0
  %v5615 = vsel %vm1377, %v5416, 0
  %v5618 = vsel %vm1377, %v5417, 0
  %v5621 = vsel %vm1377, %v5418, 0
  %v5624 = vsel %vm1377, %v5419, 0
  %v5627 = vsel %vm1377, %v5420, 0
  %v5630 = vsel %vm1377, %v5421, 0
  %v5633 = vsel %vm1377, %v5422, 0
  %v5636 = vsel %vm1377, %v5423, 0
  %v5639 = vsel %vm1377, %v5424, 0
  %v5642 = vsel %vm1377, %v5425, 0
  %v5645 = vsel %vm1377, %v5426, 0
  %v5648 = vsel %vm1377, %v5427, 0
  %v5651 = vsel %vm1377, %v5428, 0
  %v5654 = vsel %vm1377, %v5429, 0
  %v5657 = vsel %vm1377, %v5430, 0
  %v5660 = vsel %vm1377, %v5431, 0
  %v5663 = vsel %vm1377, %v5432, 0
  %v5666 = vsel %vm1377, %v5433, 0
  %v5669 = vsel %vm1377, %v5434, 0
  %v5672 = vsel %vm1377, %v5435, 0
  %v5675 = vsel %vm1377, %v5436, 0
  %v5678 = vsel %vm1377, %v5437, 0
  %v5681 = vsel %vm1377, %v5438, 0
  %v5684 = vsel %vm1377, %v5439, 0
  %v5687 = vsel %vm1377, %v5440, 0
  %v5690 = vsel %vm1377, %v5441, 0
  %v5693 = vsel %vm1377, %v5442, 0
  %v5696 = vsel %vm1377, %v5443, 0
  %v5699 = vsel %vm1377, %v5444, 0
  %v5702 = vsel %vm1377, %v5445, 0
  %v5705 = vsel %vm1377, %v5446, 0
  %v5708 = vsel %vm1377, %v5447, 0
  %v5711 = vsel %vm1377, %v5448, 0
  %v5714 = vsel %vm1377, %v5449, 0
  %v5717 = vsel %vm1377, %v5450, 0
  %v5720 = vsel %vm1377, %v5451, 0
  %v5723 = vsel %vm1377, %v5452, 0
  %v5726 = vsel %vm1377, %v5453, 0
  %v5729 = vsel %vm1377, %v5454, 0
  %v5732 = vsel %vm1377, %v5455, 0
  %v5735 = vsel %vm1377, %v5456, 0
  %v5738 = vsel %vm1377, %v5457, 0
  %v5741 = vsel %vm1377, %v5458, 0
  %v5744 = vsel %vm1377, %v5459, 0
  %v5747 = vsel %vm1377, %v5460, 0
  %v5750 = vsel %vm1377, %v5461, 0
  %v5753 = vsel %vm1377, %v5462, 0
  %v5756 = vsel %vm1377, %v5463, 0
  %v5759 = vsel %vm1377, %v5464, 0
  %v5762 = vsel %vm1377, %v5465, 0
  %v5765 = vsel %vm1377, %v5466, 0
  %v5768 = vsel %vm1377, %v5467, 0
  %v5771 = vsel %vm1377, %v5468, 0
  %v5774 = vsel %vm1377, %v5469, 0
  %v5777 = vsel %vm1377, %v5470, 0
  %v5780 = vsel %vm1377, %v5471, 0
  %v5783 = vsel %vm1377, %v5472, 0
  %v5786 = vsel %vm1377, %v5473, 0
  %v5789 = vsel %vm1377, %v5474, 0
  %v5792 = vsel %vm1377, %v5475, 0
  %v5795 = vsel %vm1377, %v5476, 0
  %v5798 = vsel %vm1377, %v5477, 0
  %v5801 = vsel %vm1377, %v5478, 0
  %v5804 = vsel %vm1377, %v5479, 0
  %v5807 = vsel %vm1377, %v5480, 0
  %v5810 = vsel %vm1377, %v5481, 0
  %v5813 = vsel %vm1377, %v5482, 0
  %v5816 = vsel %vm1377, %v5483, 0
  %v5819 = vsel %vm1377, %v5484, 0
  %v5822 = vsel %vm1377, %v5485, 0
  %v5825 = vsel %vm1377, %v5486, 0
  %v5828 = vsel %vm1377, %v5487, 0
  %v5831 = vsel %vm1377, %v5488, 0
  %v5834 = vsel %vm1377, %v5489, 0
  %v5837 = vsel %vm1377, %v5490, 0
  %v5840 = vsel %vm1377, %v5491, 0
  %v5843 = vsel %vm1377, %v5492, 0
  %v5846 = vsel %vm1377, %v5493, 0
  %v5849 = vsel %vm1377, %v5494, 0
  %v5852 = vsel %vm1377, %v5495, 0
  %v5855 = vsel %vm1377, %v5496, 0
  %v5858 = vsel %vm1377, %v5497, 0
  %v5861 = vsel %vm1377, %v5498, 0
  %v5864 = vsel %vm1377, %v5499, 0
  %v5867 = vsel %vm1377, %v5500, 0
  %v5870 = vsel %vm1377, %v5501, 0
  %v5873 = vsel %vm1377, %v5502, 0
  %v5876 = vsel %vm1377, %v5503, 0
  %v5879 = vsel %vm1377, %v5504, 0
  %v5882 = vsel %vm1377, %v5505, 0
  %v5885 = vsel %vm1377, %v5506, 0
  %v5888 = vsel %vm1377, %v5507, 0
  %v5891 = vsel %vm1377, %v5508, 0
  %5893 = vmatpush.msra.mxu0 0.0
  %5894 = vmatpush.msra.mxu0 0.0
  %5895 = vmatpush.msra.mxu0 0.0
  %5896 = vmatpush.msra.mxu0 0.0
  %5897 = vmatpush.msra.mxu0 0.0
  %5898 = vmatpush.msra.mxu0 0.0
  %5899 = vmatpush.msra.mxu0 0.0
  %5900 = vmatpush.msra.mxu0 0.0
  %5901 = vmatpush.msra.mxu0 0.0
  %5902 = vmatpush.msra.mxu0 0.0
  %5903 = vmatpush.msra.mxu0 0.0
  %5904 = vmatpush.msra.mxu0 0.0
  %5905 = vmatpush.msra.mxu0 %v5378
  %5906 = vmatpush.msra.mxu0 %v5375
  %5907 = vmatpush.msra.mxu0 %v5372
  %5908 = vmatpush.msra.mxu0 %v5369
  %5909 = vmatmul.f32.gmra.mxu0 %v5510
  %v5910 = vpop.f32.mrf.mxu0
  %v5911 = vadd.f32 0.0, %v5910
  %5912 = vmatmul.f32.gmra.mxu0 %v5513
  %v5913 = vpop.f32.mrf.mxu0
  %v5914 = vadd.f32 0.0, %v5913
  %5915 = vmatmul.f32.gmra.mxu0 %v5516
  %v5916 = vpop.f32.mrf.mxu0
  %v5917 = vadd.f32 0.0, %v5916
  %5918 = vmatmul.f32.gmra.mxu0 %v5519
  %v5919 = vpop.f32.mrf.mxu0
  %v5920 = vadd.f32 0.0, %v5919
  %5921 = vmatmul.f32.gmra.mxu0 %v5522
  %v5922 = vpop.f32.mrf.mxu0
  %v5923 = vadd.f32 0.0, %v5922
  %5924 = vmatmul.f32.gmra.mxu0 %v5525
  %v5925 = vpop.f32.mrf.mxu0
  %v5926 = vadd.f32 0.0, %v5925
  %5927 = vmatmul.f32.gmra.mxu0 %v5528
  %v5928 = vpop.f32.mrf.mxu0
  %v5929 = vadd.f32 0.0, %v5928
  %5930 = vmatmul.f32.gmra.mxu0 %v5531
  %v5931 = vpop.f32.mrf.mxu0
  %v5932 = vadd.f32 0.0, %v5931
  %5933 = vmatmul.f32.gmra.mxu0 %v5534
  %v5934 = vpop.f32.mrf.mxu0
  %v5935 = vadd.f32 0.0, %v5934
  %5936 = vmatmul.f32.gmra.mxu0 %v5537
  %v5937 = vpop.f32.mrf.mxu0
  %v5938 = vadd.f32 0.0, %v5937
  %5939 = vmatmul.f32.gmra.mxu0 %v5540
  %v5940 = vpop.f32.mrf.mxu0
  %v5941 = vadd.f32 0.0, %v5940
  %5942 = vmatmul.f32.gmra.mxu0 %v5543
  %v5943 = vpop.f32.mrf.mxu0
  %v5944 = vadd.f32 0.0, %v5943
  %5945 = vmatmul.f32.gmra.mxu0 %v5546
  %v5946 = vpop.f32.mrf.mxu0
  %v5947 = vadd.f32 0.0, %v5946
  %5948 = vmatmul.f32.gmra.mxu0 %v5549
  %v5949 = vpop.f32.mrf.mxu0
  %v5950 = vadd.f32 0.0, %v5949
  %5951 = vmatmul.f32.gmra.mxu0 %v5552
  %v5952 = vpop.f32.mrf.mxu0
  %v5953 = vadd.f32 0.0, %v5952
  %5954 = vmatmul.f32.gmra.mxu0 %v5555
  %v5955 = vpop.f32.mrf.mxu0
  %v5956 = vadd.f32 0.0, %v5955
  %5957 = vmatmul.f32.gmra.mxu0 %v5558
  %v5958 = vpop.f32.mrf.mxu0
  %v5959 = vadd.f32 0.0, %v5958
  %5960 = vmatmul.f32.gmra.mxu0 %v5561
  %v5961 = vpop.f32.mrf.mxu0
  %v5962 = vadd.f32 0.0, %v5961
  %5963 = vmatmul.f32.gmra.mxu0 %v5564
  %v5964 = vpop.f32.mrf.mxu0
  %v5965 = vadd.f32 0.0, %v5964
  %5966 = vmatmul.f32.gmra.mxu0 %v5567
  %v5967 = vpop.f32.mrf.mxu0
  %v5968 = vadd.f32 0.0, %v5967
  %5969 = vmatmul.f32.gmra.mxu0 %v5570
  %v5970 = vpop.f32.mrf.mxu0
  %v5971 = vadd.f32 0.0, %v5970
  %5972 = vmatmul.f32.gmra.mxu0 %v5573
  %v5973 = vpop.f32.mrf.mxu0
  %v5974 = vadd.f32 0.0, %v5973
  %5975 = vmatmul.f32.gmra.mxu0 %v5576
  %v5976 = vpop.f32.mrf.mxu0
  %v5977 = vadd.f32 0.0, %v5976
  %5978 = vmatmul.f32.gmra.mxu0 %v5579
  %v5979 = vpop.f32.mrf.mxu0
  %v5980 = vadd.f32 0.0, %v5979
  %5981 = vmatmul.f32.gmra.mxu0 %v5582
  %v5982 = vpop.f32.mrf.mxu0
  %v5983 = vadd.f32 0.0, %v5982
  %5984 = vmatmul.f32.gmra.mxu0 %v5585
  %v5985 = vpop.f32.mrf.mxu0
  %v5986 = vadd.f32 0.0, %v5985
  %5987 = vmatmul.f32.gmra.mxu0 %v5588
  %v5988 = vpop.f32.mrf.mxu0
  %v5989 = vadd.f32 0.0, %v5988
  %5990 = vmatmul.f32.gmra.mxu0 %v5591
  %v5991 = vpop.f32.mrf.mxu0
  %v5992 = vadd.f32 0.0, %v5991
  %5993 = vmatmul.f32.gmra.mxu0 %v5594
  %v5994 = vpop.f32.mrf.mxu0
  %v5995 = vadd.f32 0.0, %v5994
  %5996 = vmatmul.f32.gmra.mxu0 %v5597
  %v5997 = vpop.f32.mrf.mxu0
  %v5998 = vadd.f32 0.0, %v5997
  %5999 = vmatmul.f32.gmra.mxu0 %v5600
  %v6000 = vpop.f32.mrf.mxu0
  %v6001 = vadd.f32 0.0, %v6000
  %6002 = vmatmul.f32.gmra.mxu0 %v5603
  %v6003 = vpop.f32.mrf.mxu0
  %v6004 = vadd.f32 0.0, %v6003
  %6005 = vmatmul.f32.gmra.mxu0 %v5606
  %v6006 = vpop.f32.mrf.mxu0
  %v6007 = vadd.f32 0.0, %v6006
  %6008 = vmatmul.f32.gmra.mxu0 %v5609
  %v6009 = vpop.f32.mrf.mxu0
  %v6010 = vadd.f32 0.0, %v6009
  %6011 = vmatmul.f32.gmra.mxu0 %v5612
  %v6012 = vpop.f32.mrf.mxu0
  %v6013 = vadd.f32 0.0, %v6012
  %6014 = vmatmul.f32.gmra.mxu0 %v5615
  %v6015 = vpop.f32.mrf.mxu0
  %v6016 = vadd.f32 0.0, %v6015
  %6017 = vmatmul.f32.gmra.mxu0 %v5618
  %v6018 = vpop.f32.mrf.mxu0
  %v6019 = vadd.f32 0.0, %v6018
  %6020 = vmatmul.f32.gmra.mxu0 %v5621
  %v6021 = vpop.f32.mrf.mxu0
  %v6022 = vadd.f32 0.0, %v6021
  %6023 = vmatmul.f32.gmra.mxu0 %v5624
  %v6024 = vpop.f32.mrf.mxu0
  %v6025 = vadd.f32 0.0, %v6024
  %6026 = vmatmul.f32.gmra.mxu0 %v5627
  %v6027 = vpop.f32.mrf.mxu0
  %v6028 = vadd.f32 0.0, %v6027
  %6029 = vmatmul.f32.gmra.mxu0 %v5630
  %v6030 = vpop.f32.mrf.mxu0
  %v6031 = vadd.f32 0.0, %v6030
  %6032 = vmatmul.f32.gmra.mxu0 %v5633
  %v6033 = vpop.f32.mrf.mxu0
  %v6034 = vadd.f32 0.0, %v6033
  %6035 = vmatmul.f32.gmra.mxu0 %v5636
  %v6036 = vpop.f32.mrf.mxu0
  %v6037 = vadd.f32 0.0, %v6036
  %6038 = vmatmul.f32.gmra.mxu0 %v5639
  %v6039 = vpop.f32.mrf.mxu0
  %v6040 = vadd.f32 0.0, %v6039
  %6041 = vmatmul.f32.gmra.mxu0 %v5642
  %v6042 = vpop.f32.mrf.mxu0
  %v6043 = vadd.f32 0.0, %v6042
  %6044 = vmatmul.f32.gmra.mxu0 %v5645
  %v6045 = vpop.f32.mrf.mxu0
  %v6046 = vadd.f32 0.0, %v6045
  %6047 = vmatmul.f32.gmra.mxu0 %v5648
  %v6048 = vpop.f32.mrf.mxu0
  %v6049 = vadd.f32 0.0, %v6048
  %6050 = vmatmul.f32.gmra.mxu0 %v5651
  %v6051 = vpop.f32.mrf.mxu0
  %v6052 = vadd.f32 0.0, %v6051
  %6053 = vmatmul.f32.gmra.mxu0 %v5654
  %v6054 = vpop.f32.mrf.mxu0
  %v6055 = vadd.f32 0.0, %v6054
  %6056 = vmatmul.f32.gmra.mxu0 %v5657
  %v6057 = vpop.f32.mrf.mxu0
  %v6058 = vadd.f32 0.0, %v6057
  %6059 = vmatmul.f32.gmra.mxu0 %v5660
  %v6060 = vpop.f32.mrf.mxu0
  %v6061 = vadd.f32 0.0, %v6060
  %6062 = vmatmul.f32.gmra.mxu0 %v5663
  %v6063 = vpop.f32.mrf.mxu0
  %v6064 = vadd.f32 0.0, %v6063
  %6065 = vmatmul.f32.gmra.mxu0 %v5666
  %v6066 = vpop.f32.mrf.mxu0
  %v6067 = vadd.f32 0.0, %v6066
  %6068 = vmatmul.f32.gmra.mxu0 %v5669
  %v6069 = vpop.f32.mrf.mxu0
  %v6070 = vadd.f32 0.0, %v6069
  %6071 = vmatmul.f32.gmra.mxu0 %v5672
  %v6072 = vpop.f32.mrf.mxu0
  %v6073 = vadd.f32 0.0, %v6072
  %6074 = vmatmul.f32.gmra.mxu0 %v5675
  %v6075 = vpop.f32.mrf.mxu0
  %v6076 = vadd.f32 0.0, %v6075
  %6077 = vmatmul.f32.gmra.mxu0 %v5678
  %v6078 = vpop.f32.mrf.mxu0
  %v6079 = vadd.f32 0.0, %v6078
  %6080 = vmatmul.f32.gmra.mxu0 %v5681
  %v6081 = vpop.f32.mrf.mxu0
  %v6082 = vadd.f32 0.0, %v6081
  %6083 = vmatmul.f32.gmra.mxu0 %v5684
  %v6084 = vpop.f32.mrf.mxu0
  %v6085 = vadd.f32 0.0, %v6084
  %6086 = vmatmul.f32.gmra.mxu0 %v5687
  %v6087 = vpop.f32.mrf.mxu0
  %v6088 = vadd.f32 0.0, %v6087
  %6089 = vmatmul.f32.gmra.mxu0 %v5690
  %v6090 = vpop.f32.mrf.mxu0
  %v6091 = vadd.f32 0.0, %v6090
  %6092 = vmatmul.f32.gmra.mxu0 %v5693
  %v6093 = vpop.f32.mrf.mxu0
  %v6094 = vadd.f32 0.0, %v6093
  %6095 = vmatmul.f32.gmra.mxu0 %v5696
  %v6096 = vpop.f32.mrf.mxu0
  %v6097 = vadd.f32 0.0, %v6096
  %6098 = vmatmul.f32.gmra.mxu0 %v5699
  %v6099 = vpop.f32.mrf.mxu0
  %v6100 = vadd.f32 0.0, %v6099
  %6101 = vmatmul.f32.gmra.mxu0 %v5702
  %v6102 = vpop.f32.mrf.mxu0
  %v6103 = vadd.f32 0.0, %v6102
  %6104 = vmatmul.f32.gmra.mxu0 %v5705
  %v6105 = vpop.f32.mrf.mxu0
  %v6106 = vadd.f32 0.0, %v6105
  %6107 = vmatmul.f32.gmra.mxu0 %v5708
  %v6108 = vpop.f32.mrf.mxu0
  %v6109 = vadd.f32 0.0, %v6108
  %6110 = vmatmul.f32.gmra.mxu0 %v5711
  %v6111 = vpop.f32.mrf.mxu0
  %v6112 = vadd.f32 0.0, %v6111
  %6113 = vmatmul.f32.gmra.mxu0 %v5714
  %v6114 = vpop.f32.mrf.mxu0
  %v6115 = vadd.f32 0.0, %v6114
  %6116 = vmatmul.f32.gmra.mxu0 %v5717
  %v6117 = vpop.f32.mrf.mxu0
  %v6118 = vadd.f32 0.0, %v6117
  %6119 = vmatmul.f32.gmra.mxu0 %v5720
  %v6120 = vpop.f32.mrf.mxu0
  %v6121 = vadd.f32 0.0, %v6120
  %6122 = vmatmul.f32.gmra.mxu0 %v5723
  %v6123 = vpop.f32.mrf.mxu0
  %v6124 = vadd.f32 0.0, %v6123
  %6125 = vmatmul.f32.gmra.mxu0 %v5726
  %v6126 = vpop.f32.mrf.mxu0
  %v6127 = vadd.f32 0.0, %v6126
  %6128 = vmatmul.f32.gmra.mxu0 %v5729
  %v6129 = vpop.f32.mrf.mxu0
  %v6130 = vadd.f32 0.0, %v6129
  %6131 = vmatmul.f32.gmra.mxu0 %v5732
  %v6132 = vpop.f32.mrf.mxu0
  %v6133 = vadd.f32 0.0, %v6132
  %6134 = vmatmul.f32.gmra.mxu0 %v5735
  %v6135 = vpop.f32.mrf.mxu0
  %v6136 = vadd.f32 0.0, %v6135
  %6137 = vmatmul.f32.gmra.mxu0 %v5738
  %v6138 = vpop.f32.mrf.mxu0
  %v6139 = vadd.f32 0.0, %v6138
  %6140 = vmatmul.f32.gmra.mxu0 %v5741
  %v6141 = vpop.f32.mrf.mxu0
  %v6142 = vadd.f32 0.0, %v6141
  %6143 = vmatmul.f32.gmra.mxu0 %v5744
  %v6144 = vpop.f32.mrf.mxu0
  %v6145 = vadd.f32 0.0, %v6144
  %6146 = vmatmul.f32.gmra.mxu0 %v5747
  %v6147 = vpop.f32.mrf.mxu0
  %v6148 = vadd.f32 0.0, %v6147
  %6149 = vmatmul.f32.gmra.mxu0 %v5750
  %v6150 = vpop.f32.mrf.mxu0
  %v6151 = vadd.f32 0.0, %v6150
  %6152 = vmatmul.f32.gmra.mxu0 %v5753
  %v6153 = vpop.f32.mrf.mxu0
  %v6154 = vadd.f32 0.0, %v6153
  %6155 = vmatmul.f32.gmra.mxu0 %v5756
  %v6156 = vpop.f32.mrf.mxu0
  %v6157 = vadd.f32 0.0, %v6156
  %6158 = vmatmul.f32.gmra.mxu0 %v5759
  %v6159 = vpop.f32.mrf.mxu0
  %v6160 = vadd.f32 0.0, %v6159
  %6161 = vmatmul.f32.gmra.mxu0 %v5762
  %v6162 = vpop.f32.mrf.mxu0
  %v6163 = vadd.f32 0.0, %v6162
  %6164 = vmatmul.f32.gmra.mxu0 %v5765
  %v6165 = vpop.f32.mrf.mxu0
  %v6166 = vadd.f32 0.0, %v6165
  %6167 = vmatmul.f32.gmra.mxu0 %v5768
  %v6168 = vpop.f32.mrf.mxu0
  %v6169 = vadd.f32 0.0, %v6168
  %6170 = vmatmul.f32.gmra.mxu0 %v5771
  %v6171 = vpop.f32.mrf.mxu0
  %v6172 = vadd.f32 0.0, %v6171
  %6173 = vmatmul.f32.gmra.mxu0 %v5774
  %v6174 = vpop.f32.mrf.mxu0
  %v6175 = vadd.f32 0.0, %v6174
  %6176 = vmatmul.f32.gmra.mxu0 %v5777
  %v6177 = vpop.f32.mrf.mxu0
  %v6178 = vadd.f32 0.0, %v6177
  %6179 = vmatmul.f32.gmra.mxu0 %v5780
  %v6180 = vpop.f32.mrf.mxu0
  %v6181 = vadd.f32 0.0, %v6180
  %6182 = vmatmul.f32.gmra.mxu0 %v5783
  %v6183 = vpop.f32.mrf.mxu0
  %v6184 = vadd.f32 0.0, %v6183
  %6185 = vmatmul.f32.gmra.mxu0 %v5786
  %v6186 = vpop.f32.mrf.mxu0
  %v6187 = vadd.f32 0.0, %v6186
  %6188 = vmatmul.f32.gmra.mxu0 %v5789
  %v6189 = vpop.f32.mrf.mxu0
  %v6190 = vadd.f32 0.0, %v6189
  %6191 = vmatmul.f32.gmra.mxu0 %v5792
  %v6192 = vpop.f32.mrf.mxu0
  %v6193 = vadd.f32 0.0, %v6192
  %6194 = vmatmul.f32.gmra.mxu0 %v5795
  %v6195 = vpop.f32.mrf.mxu0
  %v6196 = vadd.f32 0.0, %v6195
  %6197 = vmatmul.f32.gmra.mxu0 %v5798
  %v6198 = vpop.f32.mrf.mxu0
  %v6199 = vadd.f32 0.0, %v6198
  %6200 = vmatmul.f32.gmra.mxu0 %v5801
  %v6201 = vpop.f32.mrf.mxu0
  %v6202 = vadd.f32 0.0, %v6201
  %6203 = vmatmul.f32.gmra.mxu0 %v5804
  %v6204 = vpop.f32.mrf.mxu0
  %v6205 = vadd.f32 0.0, %v6204
  %6206 = vmatmul.f32.gmra.mxu0 %v5807
  %v6207 = vpop.f32.mrf.mxu0
  %v6208 = vadd.f32 0.0, %v6207
  %6209 = vmatmul.f32.gmra.mxu0 %v5810
  %v6210 = vpop.f32.mrf.mxu0
  %v6211 = vadd.f32 0.0, %v6210
  %6212 = vmatmul.f32.gmra.mxu0 %v5813
  %v6213 = vpop.f32.mrf.mxu0
  %v6214 = vadd.f32 0.0, %v6213
  %6215 = vmatmul.f32.gmra.mxu0 %v5816
  %v6216 = vpop.f32.mrf.mxu0
  %v6217 = vadd.f32 0.0, %v6216
  %6218 = vmatmul.f32.gmra.mxu0 %v5819
  %v6219 = vpop.f32.mrf.mxu0
  %v6220 = vadd.f32 0.0, %v6219
  %6221 = vmatmul.f32.gmra.mxu0 %v5822
  %v6222 = vpop.f32.mrf.mxu0
  %v6223 = vadd.f32 0.0, %v6222
  %6224 = vmatmul.f32.gmra.mxu0 %v5825
  %v6225 = vpop.f32.mrf.mxu0
  %v6226 = vadd.f32 0.0, %v6225
  %6227 = vmatmul.f32.gmra.mxu0 %v5828
  %v6228 = vpop.f32.mrf.mxu0
  %v6229 = vadd.f32 0.0, %v6228
  %6230 = vmatmul.f32.gmra.mxu0 %v5831
  %v6231 = vpop.f32.mrf.mxu0
  %v6232 = vadd.f32 0.0, %v6231
  %6233 = vmatmul.f32.gmra.mxu0 %v5834
  %v6234 = vpop.f32.mrf.mxu0
  %v6235 = vadd.f32 0.0, %v6234
  %6236 = vmatmul.f32.gmra.mxu0 %v5837
  %v6237 = vpop.f32.mrf.mxu0
  %v6238 = vadd.f32 0.0, %v6237
  %6239 = vmatmul.f32.gmra.mxu0 %v5840
  %v6240 = vpop.f32.mrf.mxu0
  %v6241 = vadd.f32 0.0, %v6240
  %6242 = vmatmul.f32.gmra.mxu0 %v5843
  %v6243 = vpop.f32.mrf.mxu0
  %v6244 = vadd.f32 0.0, %v6243
  %6245 = vmatmul.f32.gmra.mxu0 %v5846
  %v6246 = vpop.f32.mrf.mxu0
  %v6247 = vadd.f32 0.0, %v6246
  %6248 = vmatmul.f32.gmra.mxu0 %v5849
  %v6249 = vpop.f32.mrf.mxu0
  %v6250 = vadd.f32 0.0, %v6249
  %6251 = vmatmul.f32.gmra.mxu0 %v5852
  %v6252 = vpop.f32.mrf.mxu0
  %v6253 = vadd.f32 0.0, %v6252
  %6254 = vmatmul.f32.gmra.mxu0 %v5855
  %v6255 = vpop.f32.mrf.mxu0
  %v6256 = vadd.f32 0.0, %v6255
  %6257 = vmatmul.f32.gmra.mxu0 %v5858
  %v6258 = vpop.f32.mrf.mxu0
  %v6259 = vadd.f32 0.0, %v6258
  %6260 = vmatmul.f32.gmra.mxu0 %v5861
  %v6261 = vpop.f32.mrf.mxu0
  %v6262 = vadd.f32 0.0, %v6261
  %6263 = vmatmul.f32.gmra.mxu0 %v5864
  %v6264 = vpop.f32.mrf.mxu0
  %v6265 = vadd.f32 0.0, %v6264
  %6266 = vmatmul.f32.gmra.mxu0 %v5867
  %v6267 = vpop.f32.mrf.mxu0
  %v6268 = vadd.f32 0.0, %v6267
  %6269 = vmatmul.f32.gmra.mxu0 %v5870
  %v6270 = vpop.f32.mrf.mxu0
  %v6271 = vadd.f32 0.0, %v6270
  %6272 = vmatmul.f32.gmra.mxu0 %v5873
  %v6273 = vpop.f32.mrf.mxu0
  %v6274 = vadd.f32 0.0, %v6273
  %6275 = vmatmul.f32.gmra.mxu0 %v5876
  %v6276 = vpop.f32.mrf.mxu0
  %v6277 = vadd.f32 0.0, %v6276
  %6278 = vmatmul.f32.gmra.mxu0 %v5879
  %v6279 = vpop.f32.mrf.mxu0
  %v6280 = vadd.f32 0.0, %v6279
  %6281 = vmatmul.f32.gmra.mxu0 %v5882
  %v6282 = vpop.f32.mrf.mxu0
  %v6283 = vadd.f32 0.0, %v6282
  %6284 = vmatmul.f32.gmra.mxu0 %v5885
  %v6285 = vpop.f32.mrf.mxu0
  %v6286 = vadd.f32 0.0, %v6285
  %6287 = vmatmul.f32.gmra.mxu0 %v5888
  %v6288 = vpop.f32.mrf.mxu0
  %v6289 = vadd.f32 0.0, %v6288
  %6290 = vmatmul.f32.gmra.mxu0 %v5891
  %v6291 = vpop.f32.mrf.mxu0
  %v6292 = vadd.f32 0.0, %v6291
  %6293 = vdwg.mxu0
  %v6294 = vadd.f32 %v5136, %v5911
  %v6295 = vadd.f32 %v5137, %v5914
  %v6296 = vadd.f32 %v5138, %v5917
  %v6297 = vadd.f32 %v5139, %v5920
  %v6298 = vadd.f32 %v5140, %v5923
  %v6299 = vadd.f32 %v5141, %v5926
  %v6300 = vadd.f32 %v5142, %v5929
  %v6301 = vadd.f32 %v5143, %v5932
  %v6302 = vadd.f32 %v5144, %v5935
  %v6303 = vadd.f32 %v5145, %v5938
  %v6304 = vadd.f32 %v5146, %v5941
  %v6305 = vadd.f32 %v5147, %v5944
  %v6306 = vadd.f32 %v5148, %v5947
  %v6307 = vadd.f32 %v5149, %v5950
  %v6308 = vadd.f32 %v5150, %v5953
  %v6309 = vadd.f32 %v5151, %v5956
  %v6310 = vadd.f32 %v5152, %v5959
  %v6311 = vadd.f32 %v5153, %v5962
  %v6312 = vadd.f32 %v5154, %v5965
  %v6313 = vadd.f32 %v5155, %v5968
  %v6314 = vadd.f32 %v5156, %v5971
  %v6315 = vadd.f32 %v5157, %v5974
  %v6316 = vadd.f32 %v5158, %v5977
  %v6317 = vadd.f32 %v5159, %v5980
  %v6318 = vadd.f32 %v5160, %v5983
  %v6319 = vadd.f32 %v5161, %v5986
  %v6320 = vadd.f32 %v5162, %v5989
  %v6321 = vadd.f32 %v5163, %v5992
  %v6322 = vadd.f32 %v5164, %v5995
  %v6323 = vadd.f32 %v5165, %v5998
  %v6324 = vadd.f32 %v5166, %v6001
  %v6325 = vadd.f32 %v5167, %v6004
  %v6326 = vadd.f32 %v5168, %v6007
  %v6327 = vadd.f32 %v5169, %v6010
  %v6328 = vadd.f32 %v5170, %v6013
  %v6329 = vadd.f32 %v5171, %v6016
  %v6330 = vadd.f32 %v5172, %v6019
  %v6331 = vadd.f32 %v5173, %v6022
  %v6332 = vadd.f32 %v5174, %v6025
  %v6333 = vadd.f32 %v5175, %v6028
  %v6334 = vadd.f32 %v5176, %v6031
  %v6335 = vadd.f32 %v5177, %v6034
  %v6336 = vadd.f32 %v5178, %v6037
  %v6337 = vadd.f32 %v5179, %v6040
  %v6338 = vadd.f32 %v5180, %v6043
  %v6339 = vadd.f32 %v5181, %v6046
  %v6340 = vadd.f32 %v5182, %v6049
  %v6341 = vadd.f32 %v5183, %v6052
  %v6342 = vadd.f32 %v5184, %v6055
  %v6343 = vadd.f32 %v5185, %v6058
  %v6344 = vadd.f32 %v5186, %v6061
  %v6345 = vadd.f32 %v5187, %v6064
  %v6346 = vadd.f32 %v5188, %v6067
  %v6347 = vadd.f32 %v5189, %v6070
  %v6348 = vadd.f32 %v5190, %v6073
  %v6349 = vadd.f32 %v5191, %v6076
  %v6350 = vadd.f32 %v5192, %v6079
  %v6351 = vadd.f32 %v5193, %v6082
  %v6352 = vadd.f32 %v5194, %v6085
  %v6353 = vadd.f32 %v5195, %v6088
  %v6354 = vadd.f32 %v5196, %v6091
  %v6355 = vadd.f32 %v5197, %v6094
  %v6356 = vadd.f32 %v5198, %v6097
  %v6357 = vadd.f32 %v5199, %v6100
  %v6358 = vadd.f32 %v5200, %v6103
  %v6359 = vadd.f32 %v5201, %v6106
  %v6360 = vadd.f32 %v5202, %v6109
  %v6361 = vadd.f32 %v5203, %v6112
  %v6362 = vadd.f32 %v5204, %v6115
  %v6363 = vadd.f32 %v5205, %v6118
  %v6364 = vadd.f32 %v5206, %v6121
  %v6365 = vadd.f32 %v5207, %v6124
  %v6366 = vadd.f32 %v5208, %v6127
  %v6367 = vadd.f32 %v5209, %v6130
  %v6368 = vadd.f32 %v5210, %v6133
  %v6369 = vadd.f32 %v5211, %v6136
  %v6370 = vadd.f32 %v5212, %v6139
  %v6371 = vadd.f32 %v5213, %v6142
  %v6372 = vadd.f32 %v5214, %v6145
  %v6373 = vadd.f32 %v5215, %v6148
  %v6374 = vadd.f32 %v5216, %v6151
  %v6375 = vadd.f32 %v5217, %v6154
  %v6376 = vadd.f32 %v5218, %v6157
  %v6377 = vadd.f32 %v5219, %v6160
  %v6378 = vadd.f32 %v5220, %v6163
  %v6379 = vadd.f32 %v5221, %v6166
  %v6380 = vadd.f32 %v5222, %v6169
  %v6381 = vadd.f32 %v5223, %v6172
  %v6382 = vadd.f32 %v5224, %v6175
  %v6383 = vadd.f32 %v5225, %v6178
  %v6384 = vadd.f32 %v5226, %v6181
  %v6385 = vadd.f32 %v5227, %v6184
  %v6386 = vadd.f32 %v5228, %v6187
  %v6387 = vadd.f32 %v5229, %v6190
  %v6388 = vadd.f32 %v5230, %v6193
  %v6389 = vadd.f32 %v5231, %v6196
  %v6390 = vadd.f32 %v5232, %v6199
  %v6391 = vadd.f32 %v5233, %v6202
  %v6392 = vadd.f32 %v5234, %v6205
  %v6393 = vadd.f32 %v5235, %v6208
  %v6394 = vadd.f32 %v5236, %v6211
  %v6395 = vadd.f32 %v5237, %v6214
  %v6396 = vadd.f32 %v5238, %v6217
  %v6397 = vadd.f32 %v5239, %v6220
  %v6398 = vadd.f32 %v5240, %v6223
  %v6399 = vadd.f32 %v5241, %v6226
  %v6400 = vadd.f32 %v5242, %v6229
  %v6401 = vadd.f32 %v5243, %v6232
  %v6402 = vadd.f32 %v5244, %v6235
  %v6403 = vadd.f32 %v5245, %v6238
  %v6404 = vadd.f32 %v5246, %v6241
  %v6405 = vadd.f32 %v5247, %v6244
  %v6406 = vadd.f32 %v5248, %v6247
  %v6407 = vadd.f32 %v5249, %v6250
  %v6408 = vadd.f32 %v5250, %v6253
  %v6409 = vadd.f32 %v5251, %v6256
  %v6410 = vadd.f32 %v5252, %v6259
  %v6411 = vadd.f32 %v5253, %v6262
  %v6412 = vadd.f32 %v5254, %v6265
  %v6413 = vadd.f32 %v5255, %v6268
  %v6414 = vadd.f32 %v5256, %v6271
  %v6415 = vadd.f32 %v5257, %v6274
  %v6416 = vadd.f32 %v5258, %v6277
  %v6417 = vadd.f32 %v5259, %v6280
  %v6418 = vadd.f32 %v5260, %v6283
  %v6419 = vadd.f32 %v5261, %v6286
  %v6420 = vadd.f32 %v5262, %v6289
  %v6421 = vadd.f32 %v5263, %v6292
  %v6422 = vld [vmem:[%s5] sm:$0xff]
  %v6423 = vld [vmem:[%s5 + $0x8] sm:$0xff]
  %v6424 = vld [vmem:[%s5 + $0x10] sm:$0xff]
  %v6425 = vld [vmem:[%s5 + $0x18] sm:$0xff]
  %v6426 = vld [vmem:[%s5 + $0x20] sm:$0xff]
  %v6427 = vld [vmem:[%s5 + $0x28] sm:$0xff]
  %v6428 = vld [vmem:[%s5 + $0x30] sm:$0xff]
  %v6429 = vld [vmem:[%s5 + $0x38] sm:$0xff]
  %v6430 = vld [vmem:[%s5 + $0x40] sm:$0xff]
  %v6431 = vld [vmem:[%s5 + $0x48] sm:$0xff]
  %v6432 = vld [vmem:[%s5 + $0x50] sm:$0xff]
  %v6433 = vld [vmem:[%s5 + $0x58] sm:$0xff]
  %v6434 = vld [vmem:[%s5 + $0x60] sm:$0xff]
  %v6435 = vld [vmem:[%s5 + $0x68] sm:$0xff]
  %v6436 = vld [vmem:[%s5 + $0x70] sm:$0xff]
  %v6437 = vld [vmem:[%s5 + $0x78] sm:$0xff]
  %v6438 = vld [vmem:[%s5 + $0x80] sm:$0xff]
  %v6439 = vld [vmem:[%s5 + $0x88] sm:$0xff]
  %v6440 = vld [vmem:[%s5 + $0x90] sm:$0xff]
  %v6441 = vld [vmem:[%s5 + $0x98] sm:$0xff]
  %v6442 = vld [vmem:[%s5 + $0xa0] sm:$0xff]
  %v6443 = vld [vmem:[%s5 + $0xa8] sm:$0xff]
  %v6444 = vld [vmem:[%s5 + $0xb0] sm:$0xff]
  %v6445 = vld [vmem:[%s5 + $0xb8] sm:$0xff]
  %v6446 = vld [vmem:[%s5 + $0xc0] sm:$0xff]
  %v6447 = vld [vmem:[%s5 + $0xc8] sm:$0xff]
  %v6448 = vld [vmem:[%s5 + $0xd0] sm:$0xff]
  %v6449 = vld [vmem:[%s5 + $0xd8] sm:$0xff]
  %v6450 = vld [vmem:[%s5 + $0xe0] sm:$0xff]
  %v6451 = vld [vmem:[%s5 + $0xe8] sm:$0xff]
  %v6452 = vld [vmem:[%s5 + $0xf0] sm:$0xff]
  %v6453 = vld [vmem:[%s5 + $0xf8] sm:$0xff]
  %v6454 = vld [vmem:[%s5 + $0x100] sm:$0xff]
  %v6455 = vld [vmem:[%s5 + $0x108] sm:$0xff]
  %v6456 = vld [vmem:[%s5 + $0x110] sm:$0xff]
  %v6457 = vld [vmem:[%s5 + $0x118] sm:$0xff]
  %v6458 = vld [vmem:[%s5 + $0x120] sm:$0xff]
  %v6459 = vld [vmem:[%s5 + $0x128] sm:$0xff]
  %v6460 = vld [vmem:[%s5 + $0x130] sm:$0xff]
  %v6461 = vld [vmem:[%s5 + $0x138] sm:$0xff]
  %v6462 = vld [vmem:[%s5 + $0x140] sm:$0xff]
  %v6463 = vld [vmem:[%s5 + $0x148] sm:$0xff]
  %v6464 = vld [vmem:[%s5 + $0x150] sm:$0xff]
  %v6465 = vld [vmem:[%s5 + $0x158] sm:$0xff]
  %v6466 = vld [vmem:[%s5 + $0x160] sm:$0xff]
  %v6467 = vld [vmem:[%s5 + $0x168] sm:$0xff]
  %v6468 = vld [vmem:[%s5 + $0x170] sm:$0xff]
  %v6469 = vld [vmem:[%s5 + $0x178] sm:$0xff]
  %v6470 = vld [vmem:[%s5 + $0x180] sm:$0xff]
  %v6471 = vld [vmem:[%s5 + $0x188] sm:$0xff]
  %v6472 = vld [vmem:[%s5 + $0x190] sm:$0xff]
  %v6473 = vld [vmem:[%s5 + $0x198] sm:$0xff]
  %v6474 = vld [vmem:[%s5 + $0x1a0] sm:$0xff]
  %v6475 = vld [vmem:[%s5 + $0x1a8] sm:$0xff]
  %v6476 = vld [vmem:[%s5 + $0x1b0] sm:$0xff]
  %v6477 = vld [vmem:[%s5 + $0x1b8] sm:$0xff]
  %v6478 = vld [vmem:[%s5 + $0x1c0] sm:$0xff]
  %v6479 = vld [vmem:[%s5 + $0x1c8] sm:$0xff]
  %v6480 = vld [vmem:[%s5 + $0x1d0] sm:$0xff]
  %v6481 = vld [vmem:[%s5 + $0x1d8] sm:$0xff]
  %v6482 = vld [vmem:[%s5 + $0x1e0] sm:$0xff]
  %v6483 = vld [vmem:[%s5 + $0x1e8] sm:$0xff]
  %v6484 = vld [vmem:[%s5 + $0x1f0] sm:$0xff]
  %v6485 = vld [vmem:[%s5 + $0x1f8] sm:$0xff]
  %v6486 = vld [vmem:[%s5 + $0x200] sm:$0xff]
  %v6487 = vld [vmem:[%s5 + $0x208] sm:$0xff]
  %v6488 = vld [vmem:[%s5 + $0x210] sm:$0xff]
  %v6489 = vld [vmem:[%s5 + $0x218] sm:$0xff]
  %v6490 = vld [vmem:[%s5 + $0x220] sm:$0xff]
  %v6491 = vld [vmem:[%s5 + $0x228] sm:$0xff]
  %v6492 = vld [vmem:[%s5 + $0x230] sm:$0xff]
  %v6493 = vld [vmem:[%s5 + $0x238] sm:$0xff]
  %v6494 = vld [vmem:[%s5 + $0x240] sm:$0xff]
  %v6495 = vld [vmem:[%s5 + $0x248] sm:$0xff]
  %v6496 = vld [vmem:[%s5 + $0x250] sm:$0xff]
  %v6497 = vld [vmem:[%s5 + $0x258] sm:$0xff]
  %v6498 = vld [vmem:[%s5 + $0x260] sm:$0xff]
  %v6499 = vld [vmem:[%s5 + $0x268] sm:$0xff]
  %v6500 = vld [vmem:[%s5 + $0x270] sm:$0xff]
  %v6501 = vld [vmem:[%s5 + $0x278] sm:$0xff]
  %v6502 = vld [vmem:[%s5 + $0x280] sm:$0xff]
  %v6503 = vld [vmem:[%s5 + $0x288] sm:$0xff]
  %v6504 = vld [vmem:[%s5 + $0x290] sm:$0xff]
  %v6505 = vld [vmem:[%s5 + $0x298] sm:$0xff]
  %v6506 = vld [vmem:[%s5 + $0x2a0] sm:$0xff]
  %v6507 = vld [vmem:[%s5 + $0x2a8] sm:$0xff]
  %v6508 = vld [vmem:[%s5 + $0x2b0] sm:$0xff]
  %v6509 = vld [vmem:[%s5 + $0x2b8] sm:$0xff]
  %v6510 = vld [vmem:[%s5 + $0x2c0] sm:$0xff]
  %v6511 = vld [vmem:[%s5 + $0x2c8] sm:$0xff]
  %v6512 = vld [vmem:[%s5 + $0x2d0] sm:$0xff]
  %v6513 = vld [vmem:[%s5 + $0x2d8] sm:$0xff]
  %v6514 = vld [vmem:[%s5 + $0x2e0] sm:$0xff]
  %v6515 = vld [vmem:[%s5 + $0x2e8] sm:$0xff]
  %v6516 = vld [vmem:[%s5 + $0x2f0] sm:$0xff]
  %v6517 = vld [vmem:[%s5 + $0x2f8] sm:$0xff]
  %v6518 = vld [vmem:[%s5 + $0x300] sm:$0xff]
  %v6519 = vld [vmem:[%s5 + $0x308] sm:$0xff]
  %v6520 = vld [vmem:[%s5 + $0x310] sm:$0xff]
  %v6521 = vld [vmem:[%s5 + $0x318] sm:$0xff]
  %v6522 = vld [vmem:[%s5 + $0x320] sm:$0xff]
  %v6523 = vld [vmem:[%s5 + $0x328] sm:$0xff]
  %v6524 = vld [vmem:[%s5 + $0x330] sm:$0xff]
  %v6525 = vld [vmem:[%s5 + $0x338] sm:$0xff]
  %v6526 = vld [vmem:[%s5 + $0x340] sm:$0xff]
  %v6527 = vld [vmem:[%s5 + $0x348] sm:$0xff]
  %v6528 = vld [vmem:[%s5 + $0x350] sm:$0xff]
  %v6529 = vld [vmem:[%s5 + $0x358] sm:$0xff]
  %v6530 = vld [vmem:[%s5 + $0x360] sm:$0xff]
  %v6531 = vld [vmem:[%s5 + $0x368] sm:$0xff]
  %v6532 = vld [vmem:[%s5 + $0x370] sm:$0xff]
  %v6533 = vld [vmem:[%s5 + $0x378] sm:$0xff]
  %v6534 = vld [vmem:[%s5 + $0x380] sm:$0xff]
  %v6535 = vld [vmem:[%s5 + $0x388] sm:$0xff]
  %v6536 = vld [vmem:[%s5 + $0x390] sm:$0xff]
  %v6537 = vld [vmem:[%s5 + $0x398] sm:$0xff]
  %v6538 = vld [vmem:[%s5 + $0x3a0] sm:$0xff]
  %v6539 = vld [vmem:[%s5 + $0x3a8] sm:$0xff]
  %v6540 = vld [vmem:[%s5 + $0x3b0] sm:$0xff]
  %v6541 = vld [vmem:[%s5 + $0x3b8] sm:$0xff]
  %v6542 = vld [vmem:[%s5 + $0x3c0] sm:$0xff]
  %v6543 = vld [vmem:[%s5 + $0x3c8] sm:$0xff]
  %v6544 = vld [vmem:[%s5 + $0x3d0] sm:$0xff]
  %v6545 = vld [vmem:[%s5 + $0x3d8] sm:$0xff]
  %v6546 = vld [vmem:[%s5 + $0x3e0] sm:$0xff]
  %v6547 = vld [vmem:[%s5 + $0x3e8] sm:$0xff]
  %v6548 = vld [vmem:[%s5 + $0x3f0] sm:$0xff]
  %v6549 = vld [vmem:[%s5 + $0x3f8] sm:$0xff]
  %6551 = vset.pattern.permute.xlu0 0
  %6552 = vperm.xlu0 %6551, %v6422
  %v6553 = vpop.permute.xlu0 %6552
  %6556 = vset.pattern.permute.xlu0 0
  %6557 = vperm.xlu0 %6556, %v6423
  %v6558 = vpop.permute.xlu0 %6557
  %6561 = vset.pattern.permute.xlu0 0
  %6562 = vperm.xlu0 %6561, %v6424
  %v6563 = vpop.permute.xlu0 %6562
  %6566 = vset.pattern.permute.xlu0 0
  %6567 = vperm.xlu0 %6566, %v6425
  %v6568 = vpop.permute.xlu0 %6567
  %6571 = vset.pattern.permute.xlu0 0
  %6572 = vperm.xlu0 %6571, %v6426
  %v6573 = vpop.permute.xlu0 %6572
  %6576 = vset.pattern.permute.xlu0 0
  %6577 = vperm.xlu0 %6576, %v6427
  %v6578 = vpop.permute.xlu0 %6577
  %6581 = vset.pattern.permute.xlu0 0
  %6582 = vperm.xlu0 %6581, %v6428
  %v6583 = vpop.permute.xlu0 %6582
  %6586 = vset.pattern.permute.xlu0 0
  %6587 = vperm.xlu0 %6586, %v6429
  %v6588 = vpop.permute.xlu0 %6587
  %6591 = vset.pattern.permute.xlu0 0
  %6592 = vperm.xlu0 %6591, %v6430
  %v6593 = vpop.permute.xlu0 %6592
  %6596 = vset.pattern.permute.xlu0 0
  %6597 = vperm.xlu0 %6596, %v6431
  %v6598 = vpop.permute.xlu0 %6597
  %6601 = vset.pattern.permute.xlu0 0
  %6602 = vperm.xlu0 %6601, %v6432
  %v6603 = vpop.permute.xlu0 %6602
  %6606 = vset.pattern.permute.xlu0 0
  %6607 = vperm.xlu0 %6606, %v6433
  %v6608 = vpop.permute.xlu0 %6607
  %6611 = vset.pattern.permute.xlu0 0
  %6612 = vperm.xlu0 %6611, %v6434
  %v6613 = vpop.permute.xlu0 %6612
  %6616 = vset.pattern.permute.xlu0 0
  %6617 = vperm.xlu0 %6616, %v6435
  %v6618 = vpop.permute.xlu0 %6617
  %6621 = vset.pattern.permute.xlu0 0
  %6622 = vperm.xlu0 %6621, %v6436
  %v6623 = vpop.permute.xlu0 %6622
  %6626 = vset.pattern.permute.xlu0 0
  %6627 = vperm.xlu0 %6626, %v6437
  %v6628 = vpop.permute.xlu0 %6627
  %6631 = vset.pattern.permute.xlu0 0
  %6632 = vperm.xlu0 %6631, %v6438
  %v6633 = vpop.permute.xlu0 %6632
  %6636 = vset.pattern.permute.xlu0 0
  %6637 = vperm.xlu0 %6636, %v6439
  %v6638 = vpop.permute.xlu0 %6637
  %6641 = vset.pattern.permute.xlu0 0
  %6642 = vperm.xlu0 %6641, %v6440
  %v6643 = vpop.permute.xlu0 %6642
  %6646 = vset.pattern.permute.xlu0 0
  %6647 = vperm.xlu0 %6646, %v6441
  %v6648 = vpop.permute.xlu0 %6647
  %6651 = vset.pattern.permute.xlu0 0
  %6652 = vperm.xlu0 %6651, %v6442
  %v6653 = vpop.permute.xlu0 %6652
  %6656 = vset.pattern.permute.xlu0 0
  %6657 = vperm.xlu0 %6656, %v6443
  %v6658 = vpop.permute.xlu0 %6657
  %6661 = vset.pattern.permute.xlu0 0
  %6662 = vperm.xlu0 %6661, %v6444
  %v6663 = vpop.permute.xlu0 %6662
  %6666 = vset.pattern.permute.xlu0 0
  %6667 = vperm.xlu0 %6666, %v6445
  %v6668 = vpop.permute.xlu0 %6667
  %6671 = vset.pattern.permute.xlu0 0
  %6672 = vperm.xlu0 %6671, %v6446
  %v6673 = vpop.permute.xlu0 %6672
  %6676 = vset.pattern.permute.xlu0 0
  %6677 = vperm.xlu0 %6676, %v6447
  %v6678 = vpop.permute.xlu0 %6677
  %6681 = vset.pattern.permute.xlu0 0
  %6682 = vperm.xlu0 %6681, %v6448
  %v6683 = vpop.permute.xlu0 %6682
  %6686 = vset.pattern.permute.xlu0 0
  %6687 = vperm.xlu0 %6686, %v6449
  %v6688 = vpop.permute.xlu0 %6687
  %6691 = vset.pattern.permute.xlu0 0
  %6692 = vperm.xlu0 %6691, %v6450
  %v6693 = vpop.permute.xlu0 %6692
  %6696 = vset.pattern.permute.xlu0 0
  %6697 = vperm.xlu0 %6696, %v6451
  %v6698 = vpop.permute.xlu0 %6697
  %6701 = vset.pattern.permute.xlu0 0
  %6702 = vperm.xlu0 %6701, %v6452
  %v6703 = vpop.permute.xlu0 %6702
  %6706 = vset.pattern.permute.xlu0 0
  %6707 = vperm.xlu0 %6706, %v6453
  %v6708 = vpop.permute.xlu0 %6707
  %6711 = vset.pattern.permute.xlu0 0
  %6712 = vperm.xlu0 %6711, %v6454
  %v6713 = vpop.permute.xlu0 %6712
  %6716 = vset.pattern.permute.xlu0 0
  %6717 = vperm.xlu0 %6716, %v6455
  %v6718 = vpop.permute.xlu0 %6717
  %6721 = vset.pattern.permute.xlu0 0
  %6722 = vperm.xlu0 %6721, %v6456
  %v6723 = vpop.permute.xlu0 %6722
  %6726 = vset.pattern.permute.xlu0 0
  %6727 = vperm.xlu0 %6726, %v6457
  %v6728 = vpop.permute.xlu0 %6727
  %6731 = vset.pattern.permute.xlu0 0
  %6732 = vperm.xlu0 %6731, %v6458
  %v6733 = vpop.permute.xlu0 %6732
  %6736 = vset.pattern.permute.xlu0 0
  %6737 = vperm.xlu0 %6736, %v6459
  %v6738 = vpop.permute.xlu0 %6737
  %6741 = vset.pattern.permute.xlu0 0
  %6742 = vperm.xlu0 %6741, %v6460
  %v6743 = vpop.permute.xlu0 %6742
  %6746 = vset.pattern.permute.xlu0 0
  %6747 = vperm.xlu0 %6746, %v6461
  %v6748 = vpop.permute.xlu0 %6747
  %6751 = vset.pattern.permute.xlu0 0
  %6752 = vperm.xlu0 %6751, %v6462
  %v6753 = vpop.permute.xlu0 %6752
  %6756 = vset.pattern.permute.xlu0 0
  %6757 = vperm.xlu0 %6756, %v6463
  %v6758 = vpop.permute.xlu0 %6757
  %6761 = vset.pattern.permute.xlu0 0
  %6762 = vperm.xlu0 %6761, %v6464
  %v6763 = vpop.permute.xlu0 %6762
  %6766 = vset.pattern.permute.xlu0 0
  %6767 = vperm.xlu0 %6766, %v6465
  %v6768 = vpop.permute.xlu0 %6767
  %6771 = vset.pattern.permute.xlu0 0
  %6772 = vperm.xlu0 %6771, %v6466
  %v6773 = vpop.permute.xlu0 %6772
  %6776 = vset.pattern.permute.xlu0 0
  %6777 = vperm.xlu0 %6776, %v6467
  %v6778 = vpop.permute.xlu0 %6777
  %6781 = vset.pattern.permute.xlu0 0
  %6782 = vperm.xlu0 %6781, %v6468
  %v6783 = vpop.permute.xlu0 %6782
  %6786 = vset.pattern.permute.xlu0 0
  %6787 = vperm.xlu0 %6786, %v6469
  %v6788 = vpop.permute.xlu0 %6787
  %6791 = vset.pattern.permute.xlu0 0
  %6792 = vperm.xlu0 %6791, %v6470
  %v6793 = vpop.permute.xlu0 %6792
  %6796 = vset.pattern.permute.xlu0 0
  %6797 = vperm.xlu0 %6796, %v6471
  %v6798 = vpop.permute.xlu0 %6797
  %6801 = vset.pattern.permute.xlu0 0
  %6802 = vperm.xlu0 %6801, %v6472
  %v6803 = vpop.permute.xlu0 %6802
  %6806 = vset.pattern.permute.xlu0 0
  %6807 = vperm.xlu0 %6806, %v6473
  %v6808 = vpop.permute.xlu0 %6807
  %6811 = vset.pattern.permute.xlu0 0
  %6812 = vperm.xlu0 %6811, %v6474
  %v6813 = vpop.permute.xlu0 %6812
  %6816 = vset.pattern.permute.xlu0 0
  %6817 = vperm.xlu0 %6816, %v6475
  %v6818 = vpop.permute.xlu0 %6817
  %6821 = vset.pattern.permute.xlu0 0
  %6822 = vperm.xlu0 %6821, %v6476
  %v6823 = vpop.permute.xlu0 %6822
  %6826 = vset.pattern.permute.xlu0 0
  %6827 = vperm.xlu0 %6826, %v6477
  %v6828 = vpop.permute.xlu0 %6827
  %6831 = vset.pattern.permute.xlu0 0
  %6832 = vperm.xlu0 %6831, %v6478
  %v6833 = vpop.permute.xlu0 %6832
  %6836 = vset.pattern.permute.xlu0 0
  %6837 = vperm.xlu0 %6836, %v6479
  %v6838 = vpop.permute.xlu0 %6837
  %6841 = vset.pattern.permute.xlu0 0
  %6842 = vperm.xlu0 %6841, %v6480
  %v6843 = vpop.permute.xlu0 %6842
  %6846 = vset.pattern.permute.xlu0 0
  %6847 = vperm.xlu0 %6846, %v6481
  %v6848 = vpop.permute.xlu0 %6847
  %6851 = vset.pattern.permute.xlu0 0
  %6852 = vperm.xlu0 %6851, %v6482
  %v6853 = vpop.permute.xlu0 %6852
  %6856 = vset.pattern.permute.xlu0 0
  %6857 = vperm.xlu0 %6856, %v6483
  %v6858 = vpop.permute.xlu0 %6857
  %6861 = vset.pattern.permute.xlu0 0
  %6862 = vperm.xlu0 %6861, %v6484
  %v6863 = vpop.permute.xlu0 %6862
  %6866 = vset.pattern.permute.xlu0 0
  %6867 = vperm.xlu0 %6866, %v6485
  %v6868 = vpop.permute.xlu0 %6867
  %6871 = vset.pattern.permute.xlu0 0
  %6872 = vperm.xlu0 %6871, %v6486
  %v6873 = vpop.permute.xlu0 %6872
  %6876 = vset.pattern.permute.xlu0 0
  %6877 = vperm.xlu0 %6876, %v6487
  %v6878 = vpop.permute.xlu0 %6877
  %6881 = vset.pattern.permute.xlu0 0
  %6882 = vperm.xlu0 %6881, %v6488
  %v6883 = vpop.permute.xlu0 %6882
  %6886 = vset.pattern.permute.xlu0 0
  %6887 = vperm.xlu0 %6886, %v6489
  %v6888 = vpop.permute.xlu0 %6887
  %6891 = vset.pattern.permute.xlu0 0
  %6892 = vperm.xlu0 %6891, %v6490
  %v6893 = vpop.permute.xlu0 %6892
  %6896 = vset.pattern.permute.xlu0 0
  %6897 = vperm.xlu0 %6896, %v6491
  %v6898 = vpop.permute.xlu0 %6897
  %6901 = vset.pattern.permute.xlu0 0
  %6902 = vperm.xlu0 %6901, %v6492
  %v6903 = vpop.permute.xlu0 %6902
  %6906 = vset.pattern.permute.xlu0 0
  %6907 = vperm.xlu0 %6906, %v6493
  %v6908 = vpop.permute.xlu0 %6907
  %6911 = vset.pattern.permute.xlu0 0
  %6912 = vperm.xlu0 %6911, %v6494
  %v6913 = vpop.permute.xlu0 %6912
  %6916 = vset.pattern.permute.xlu0 0
  %6917 = vperm.xlu0 %6916, %v6495
  %v6918 = vpop.permute.xlu0 %6917
  %6921 = vset.pattern.permute.xlu0 0
  %6922 = vperm.xlu0 %6921, %v6496
  %v6923 = vpop.permute.xlu0 %6922
  %6926 = vset.pattern.permute.xlu0 0
  %6927 = vperm.xlu0 %6926, %v6497
  %v6928 = vpop.permute.xlu0 %6927
  %6931 = vset.pattern.permute.xlu0 0
  %6932 = vperm.xlu0 %6931, %v6498
  %v6933 = vpop.permute.xlu0 %6932
  %6936 = vset.pattern.permute.xlu0 0
  %6937 = vperm.xlu0 %6936, %v6499
  %v6938 = vpop.permute.xlu0 %6937
  %6941 = vset.pattern.permute.xlu0 0
  %6942 = vperm.xlu0 %6941, %v6500
  %v6943 = vpop.permute.xlu0 %6942
  %6946 = vset.pattern.permute.xlu0 0
  %6947 = vperm.xlu0 %6946, %v6501
  %v6948 = vpop.permute.xlu0 %6947
  %6951 = vset.pattern.permute.xlu0 0
  %6952 = vperm.xlu0 %6951, %v6502
  %v6953 = vpop.permute.xlu0 %6952
  %6956 = vset.pattern.permute.xlu0 0
  %6957 = vperm.xlu0 %6956, %v6503
  %v6958 = vpop.permute.xlu0 %6957
  %6961 = vset.pattern.permute.xlu0 0
  %6962 = vperm.xlu0 %6961, %v6504
  %v6963 = vpop.permute.xlu0 %6962
  %6966 = vset.pattern.permute.xlu0 0
  %6967 = vperm.xlu0 %6966, %v6505
  %v6968 = vpop.permute.xlu0 %6967
  %6971 = vset.pattern.permute.xlu0 0
  %6972 = vperm.xlu0 %6971, %v6506
  %v6973 = vpop.permute.xlu0 %6972
  %6976 = vset.pattern.permute.xlu0 0
  %6977 = vperm.xlu0 %6976, %v6507
  %v6978 = vpop.permute.xlu0 %6977
  %6981 = vset.pattern.permute.xlu0 0
  %6982 = vperm.xlu0 %6981, %v6508
  %v6983 = vpop.permute.xlu0 %6982
  %6986 = vset.pattern.permute.xlu0 0
  %6987 = vperm.xlu0 %6986, %v6509
  %v6988 = vpop.permute.xlu0 %6987
  %6991 = vset.pattern.permute.xlu0 0
  %6992 = vperm.xlu0 %6991, %v6510
  %v6993 = vpop.permute.xlu0 %6992
  %6996 = vset.pattern.permute.xlu0 0
  %6997 = vperm.xlu0 %6996, %v6511
  %v6998 = vpop.permute.xlu0 %6997
  %7001 = vset.pattern.permute.xlu0 0
  %7002 = vperm.xlu0 %7001, %v6512
  %v7003 = vpop.permute.xlu0 %7002
  %7006 = vset.pattern.permute.xlu0 0
  %7007 = vperm.xlu0 %7006, %v6513
  %v7008 = vpop.permute.xlu0 %7007
  %7011 = vset.pattern.permute.xlu0 0
  %7012 = vperm.xlu0 %7011, %v6514
  %v7013 = vpop.permute.xlu0 %7012
  %7016 = vset.pattern.permute.xlu0 0
  %7017 = vperm.xlu0 %7016, %v6515
  %v7018 = vpop.permute.xlu0 %7017
  %7021 = vset.pattern.permute.xlu0 0
  %7022 = vperm.xlu0 %7021, %v6516
  %v7023 = vpop.permute.xlu0 %7022
  %7026 = vset.pattern.permute.xlu0 0
  %7027 = vperm.xlu0 %7026, %v6517
  %v7028 = vpop.permute.xlu0 %7027
  %7031 = vset.pattern.permute.xlu0 0
  %7032 = vperm.xlu0 %7031, %v6518
  %v7033 = vpop.permute.xlu0 %7032
  %7036 = vset.pattern.permute.xlu0 0
  %7037 = vperm.xlu0 %7036, %v6519
  %v7038 = vpop.permute.xlu0 %7037
  %7041 = vset.pattern.permute.xlu0 0
  %7042 = vperm.xlu0 %7041, %v6520
  %v7043 = vpop.permute.xlu0 %7042
  %7046 = vset.pattern.permute.xlu0 0
  %7047 = vperm.xlu0 %7046, %v6521
  %v7048 = vpop.permute.xlu0 %7047
  %7051 = vset.pattern.permute.xlu0 0
  %7052 = vperm.xlu0 %7051, %v6522
  %v7053 = vpop.permute.xlu0 %7052
  %7056 = vset.pattern.permute.xlu0 0
  %7057 = vperm.xlu0 %7056, %v6523
  %v7058 = vpop.permute.xlu0 %7057
  %7061 = vset.pattern.permute.xlu0 0
  %7062 = vperm.xlu0 %7061, %v6524
  %v7063 = vpop.permute.xlu0 %7062
  %7066 = vset.pattern.permute.xlu0 0
  %7067 = vperm.xlu0 %7066, %v6525
  %v7068 = vpop.permute.xlu0 %7067
  %7071 = vset.pattern.permute.xlu0 0
  %7072 = vperm.xlu0 %7071, %v6526
  %v7073 = vpop.permute.xlu0 %7072
  %7076 = vset.pattern.permute.xlu0 0
  %7077 = vperm.xlu0 %7076, %v6527
  %v7078 = vpop.permute.xlu0 %7077
  %7081 = vset.pattern.permute.xlu0 0
  %7082 = vperm.xlu0 %7081, %v6528
  %v7083 = vpop.permute.xlu0 %7082
  %7086 = vset.pattern.permute.xlu0 0
  %7087 = vperm.xlu0 %7086, %v6529
  %v7088 = vpop.permute.xlu0 %7087
  %7091 = vset.pattern.permute.xlu0 0
  %7092 = vperm.xlu0 %7091, %v6530
  %v7093 = vpop.permute.xlu0 %7092
  %7096 = vset.pattern.permute.xlu0 0
  %7097 = vperm.xlu0 %7096, %v6531
  %v7098 = vpop.permute.xlu0 %7097
  %7101 = vset.pattern.permute.xlu0 0
  %7102 = vperm.xlu0 %7101, %v6532
  %v7103 = vpop.permute.xlu0 %7102
  %7106 = vset.pattern.permute.xlu0 0
  %7107 = vperm.xlu0 %7106, %v6533
  %v7108 = vpop.permute.xlu0 %7107
  %7111 = vset.pattern.permute.xlu0 0
  %7112 = vperm.xlu0 %7111, %v6534
  %v7113 = vpop.permute.xlu0 %7112
  %7116 = vset.pattern.permute.xlu0 0
  %7117 = vperm.xlu0 %7116, %v6535
  %v7118 = vpop.permute.xlu0 %7117
  %7121 = vset.pattern.permute.xlu0 0
  %7122 = vperm.xlu0 %7121, %v6536
  %v7123 = vpop.permute.xlu0 %7122
  %7126 = vset.pattern.permute.xlu0 0
  %7127 = vperm.xlu0 %7126, %v6537
  %v7128 = vpop.permute.xlu0 %7127
  %7131 = vset.pattern.permute.xlu0 0
  %7132 = vperm.xlu0 %7131, %v6538
  %v7133 = vpop.permute.xlu0 %7132
  %7136 = vset.pattern.permute.xlu0 0
  %7137 = vperm.xlu0 %7136, %v6539
  %v7138 = vpop.permute.xlu0 %7137
  %7141 = vset.pattern.permute.xlu0 0
  %7142 = vperm.xlu0 %7141, %v6540
  %v7143 = vpop.permute.xlu0 %7142
  %7146 = vset.pattern.permute.xlu0 0
  %7147 = vperm.xlu0 %7146, %v6541
  %v7148 = vpop.permute.xlu0 %7147
  %7151 = vset.pattern.permute.xlu0 0
  %7152 = vperm.xlu0 %7151, %v6542
  %v7153 = vpop.permute.xlu0 %7152
  %7156 = vset.pattern.permute.xlu0 0
  %7157 = vperm.xlu0 %7156, %v6543
  %v7158 = vpop.permute.xlu0 %7157
  %7161 = vset.pattern.permute.xlu0 0
  %7162 = vperm.xlu0 %7161, %v6544
  %v7163 = vpop.permute.xlu0 %7162
  %7166 = vset.pattern.permute.xlu0 0
  %7167 = vperm.xlu0 %7166, %v6545
  %v7168 = vpop.permute.xlu0 %7167
  %7171 = vset.pattern.permute.xlu0 0
  %7172 = vperm.xlu0 %7171, %v6546
  %v7173 = vpop.permute.xlu0 %7172
  %7176 = vset.pattern.permute.xlu0 0
  %7177 = vperm.xlu0 %7176, %v6547
  %v7178 = vpop.permute.xlu0 %7177
  %7181 = vset.pattern.permute.xlu0 0
  %7182 = vperm.xlu0 %7181, %v6548
  %v7183 = vpop.permute.xlu0 %7182
  %7186 = vset.pattern.permute.xlu0 0
  %7187 = vperm.xlu0 %7186, %v6549
  %v7188 = vpop.permute.xlu0 %7187
  %v7190 = vadd.f32 %v6294, %v6553
  %v7191 = vadd.f32 %v6295, %v6558
  %v7192 = vadd.f32 %v6296, %v6563
  %v7193 = vadd.f32 %v6297, %v6568
  %v7194 = vadd.f32 %v6298, %v6573
  %v7195 = vadd.f32 %v6299, %v6578
  %v7196 = vadd.f32 %v6300, %v6583
  %v7197 = vadd.f32 %v6301, %v6588
  %v7198 = vadd.f32 %v6302, %v6593
  %v7199 = vadd.f32 %v6303, %v6598
  %v7200 = vadd.f32 %v6304, %v6603
  %v7201 = vadd.f32 %v6305, %v6608
  %v7202 = vadd.f32 %v6306, %v6613
  %v7203 = vadd.f32 %v6307, %v6618
  %v7204 = vadd.f32 %v6308, %v6623
  %v7205 = vadd.f32 %v6309, %v6628
  %v7206 = vadd.f32 %v6310, %v6633
  %v7207 = vadd.f32 %v6311, %v6638
  %v7208 = vadd.f32 %v6312, %v6643
  %v7209 = vadd.f32 %v6313, %v6648
  %v7210 = vadd.f32 %v6314, %v6653
  %v7211 = vadd.f32 %v6315, %v6658
  %v7212 = vadd.f32 %v6316, %v6663
  %v7213 = vadd.f32 %v6317, %v6668
  %v7214 = vadd.f32 %v6318, %v6673
  %v7215 = vadd.f32 %v6319, %v6678
  %v7216 = vadd.f32 %v6320, %v6683
  %v7217 = vadd.f32 %v6321, %v6688
  %v7218 = vadd.f32 %v6322, %v6693
  %v7219 = vadd.f32 %v6323, %v6698
  %v7220 = vadd.f32 %v6324, %v6703
  %v7221 = vadd.f32 %v6325, %v6708
  %v7222 = vadd.f32 %v6326, %v6713
  %v7223 = vadd.f32 %v6327, %v6718
  %v7224 = vadd.f32 %v6328, %v6723
  %v7225 = vadd.f32 %v6329, %v6728
  %v7226 = vadd.f32 %v6330, %v6733
  %v7227 = vadd.f32 %v6331, %v6738
  %v7228 = vadd.f32 %v6332, %v6743
  %v7229 = vadd.f32 %v6333, %v6748
  %v7230 = vadd.f32 %v6334, %v6753
  %v7231 = vadd.f32 %v6335, %v6758
  %v7232 = vadd.f32 %v6336, %v6763
  %v7233 = vadd.f32 %v6337, %v6768
  %v7234 = vadd.f32 %v6338, %v6773
  %v7235 = vadd.f32 %v6339, %v6778
  %v7236 = vadd.f32 %v6340, %v6783
  %v7237 = vadd.f32 %v6341, %v6788
  %v7238 = vadd.f32 %v6342, %v6793
  %v7239 = vadd.f32 %v6343, %v6798
  %v7240 = vadd.f32 %v6344, %v6803
  %v7241 = vadd.f32 %v6345, %v6808
  %v7242 = vadd.f32 %v6346, %v6813
  %v7243 = vadd.f32 %v6347, %v6818
  %v7244 = vadd.f32 %v6348, %v6823
  %v7245 = vadd.f32 %v6349, %v6828
  %v7246 = vadd.f32 %v6350, %v6833
  %v7247 = vadd.f32 %v6351, %v6838
  %v7248 = vadd.f32 %v6352, %v6843
  %v7249 = vadd.f32 %v6353, %v6848
  %v7250 = vadd.f32 %v6354, %v6853
  %v7251 = vadd.f32 %v6355, %v6858
  %v7252 = vadd.f32 %v6356, %v6863
  %v7253 = vadd.f32 %v6357, %v6868
  %v7254 = vadd.f32 %v6358, %v6873
  %v7255 = vadd.f32 %v6359, %v6878
  %v7256 = vadd.f32 %v6360, %v6883
  %v7257 = vadd.f32 %v6361, %v6888
  %v7258 = vadd.f32 %v6362, %v6893
  %v7259 = vadd.f32 %v6363, %v6898
  %v7260 = vadd.f32 %v6364, %v6903
  %v7261 = vadd.f32 %v6365, %v6908
  %v7262 = vadd.f32 %v6366, %v6913
  %v7263 = vadd.f32 %v6367, %v6918
  %v7264 = vadd.f32 %v6368, %v6923
  %v7265 = vadd.f32 %v6369, %v6928
  %v7266 = vadd.f32 %v6370, %v6933
  %v7267 = vadd.f32 %v6371, %v6938
  %v7268 = vadd.f32 %v6372, %v6943
  %v7269 = vadd.f32 %v6373, %v6948
  %v7270 = vadd.f32 %v6374, %v6953
  %v7271 = vadd.f32 %v6375, %v6958
  %v7272 = vadd.f32 %v6376, %v6963
  %v7273 = vadd.f32 %v6377, %v6968
  %v7274 = vadd.f32 %v6378, %v6973
  %v7275 = vadd.f32 %v6379, %v6978
  %v7276 = vadd.f32 %v6380, %v6983
  %v7277 = vadd.f32 %v6381, %v6988
  %v7278 = vadd.f32 %v6382, %v6993
  %v7279 = vadd.f32 %v6383, %v6998
  %v7280 = vadd.f32 %v6384, %v7003
  %v7281 = vadd.f32 %v6385, %v7008
  %v7282 = vadd.f32 %v6386, %v7013
  %v7283 = vadd.f32 %v6387, %v7018
  %v7284 = vadd.f32 %v6388, %v7023
  %v7285 = vadd.f32 %v6389, %v7028
  %v7286 = vadd.f32 %v6390, %v7033
  %v7287 = vadd.f32 %v6391, %v7038
  %v7288 = vadd.f32 %v6392, %v7043
  %v7289 = vadd.f32 %v6393, %v7048
  %v7290 = vadd.f32 %v6394, %v7053
  %v7291 = vadd.f32 %v6395, %v7058
  %v7292 = vadd.f32 %v6396, %v7063
  %v7293 = vadd.f32 %v6397, %v7068
  %v7294 = vadd.f32 %v6398, %v7073
  %v7295 = vadd.f32 %v6399, %v7078
  %v7296 = vadd.f32 %v6400, %v7083
  %v7297 = vadd.f32 %v6401, %v7088
  %v7298 = vadd.f32 %v6402, %v7093
  %v7299 = vadd.f32 %v6403, %v7098
  %v7300 = vadd.f32 %v6404, %v7103
  %v7301 = vadd.f32 %v6405, %v7108
  %v7302 = vadd.f32 %v6406, %v7113
  %v7303 = vadd.f32 %v6407, %v7118
  %v7304 = vadd.f32 %v6408, %v7123
  %v7305 = vadd.f32 %v6409, %v7128
  %v7306 = vadd.f32 %v6410, %v7133
  %v7307 = vadd.f32 %v6411, %v7138
  %v7308 = vadd.f32 %v6412, %v7143
  %v7309 = vadd.f32 %v6413, %v7148
  %v7310 = vadd.f32 %v6414, %v7153
  %v7311 = vadd.f32 %v6415, %v7158
  %v7312 = vadd.f32 %v6416, %v7163
  %v7313 = vadd.f32 %v6417, %v7168
  %v7314 = vadd.f32 %v6418, %v7173
  %v7315 = vadd.f32 %v6419, %v7178
  %v7316 = vadd.f32 %v6420, %v7183
  %v7317 = vadd.f32 %v6421, %v7188
  %v7318 = vmax.f32 %v7190, 0.0
  %v7319 = vmax.f32 %v7191, 0.0
  %v7320 = vmax.f32 %v7192, 0.0
  %v7321 = vmax.f32 %v7193, 0.0
  %v7322 = vmax.f32 %v7194, 0.0
  %v7323 = vmax.f32 %v7195, 0.0
  %v7324 = vmax.f32 %v7196, 0.0
  %v7325 = vmax.f32 %v7197, 0.0
  %v7326 = vmax.f32 %v7198, 0.0
  %v7327 = vmax.f32 %v7199, 0.0
  %v7328 = vmax.f32 %v7200, 0.0
  %v7329 = vmax.f32 %v7201, 0.0
  %v7330 = vmax.f32 %v7202, 0.0
  %v7331 = vmax.f32 %v7203, 0.0
  %v7332 = vmax.f32 %v7204, 0.0
  %v7333 = vmax.f32 %v7205, 0.0
  %v7334 = vmax.f32 %v7206, 0.0
  %v7335 = vmax.f32 %v7207, 0.0
  %v7336 = vmax.f32 %v7208, 0.0
  %v7337 = vmax.f32 %v7209, 0.0
  %v7338 = vmax.f32 %v7210, 0.0
  %v7339 = vmax.f32 %v7211, 0.0
  %v7340 = vmax.f32 %v7212, 0.0
  %v7341 = vmax.f32 %v7213, 0.0
  %v7342 = vmax.f32 %v7214, 0.0
  %v7343 = vmax.f32 %v7215, 0.0
  %v7344 = vmax.f32 %v7216, 0.0
  %v7345 = vmax.f32 %v7217, 0.0
  %v7346 = vmax.f32 %v7218, 0.0
  %v7347 = vmax.f32 %v7219, 0.0
  %v7348 = vmax.f32 %v7220, 0.0
  %v7349 = vmax.f32 %v7221, 0.0
  %v7350 = vmax.f32 %v7222, 0.0
  %v7351 = vmax.f32 %v7223, 0.0
  %v7352 = vmax.f32 %v7224, 0.0
  %v7353 = vmax.f32 %v7225, 0.0
  %v7354 = vmax.f32 %v7226, 0.0
  %v7355 = vmax.f32 %v7227, 0.0
  %v7356 = vmax.f32 %v7228, 0.0
  %v7357 = vmax.f32 %v7229, 0.0
  %v7358 = vmax.f32 %v7230, 0.0
  %v7359 = vmax.f32 %v7231, 0.0
  %v7360 = vmax.f32 %v7232, 0.0
  %v7361 = vmax.f32 %v7233, 0.0
  %v7362 = vmax.f32 %v7234, 0.0
  %v7363 = vmax.f32 %v7235, 0.0
  %v7364 = vmax.f32 %v7236, 0.0
  %v7365 = vmax.f32 %v7237, 0.0
  %v7366 = vmax.f32 %v7238, 0.0
  %v7367 = vmax.f32 %v7239, 0.0
  %v7368 = vmax.f32 %v7240, 0.0
  %v7369 = vmax.f32 %v7241, 0.0
  %v7370 = vmax.f32 %v7242, 0.0
  %v7371 = vmax.f32 %v7243, 0.0
  %v7372 = vmax.f32 %v7244, 0.0
  %v7373 = vmax.f32 %v7245, 0.0
  %v7374 = vmax.f32 %v7246, 0.0
  %v7375 = vmax.f32 %v7247, 0.0
  %v7376 = vmax.f32 %v7248, 0.0
  %v7377 = vmax.f32 %v7249, 0.0
  %v7378 = vmax.f32 %v7250, 0.0
  %v7379 = vmax.f32 %v7251, 0.0
  %v7380 = vmax.f32 %v7252, 0.0
  %v7381 = vmax.f32 %v7253, 0.0
  %v7382 = vmax.f32 %v7254, 0.0
  %v7383 = vmax.f32 %v7255, 0.0
  %v7384 = vmax.f32 %v7256, 0.0
  %v7385 = vmax.f32 %v7257, 0.0
  %v7386 = vmax.f32 %v7258, 0.0
  %v7387 = vmax.f32 %v7259, 0.0
  %v7388 = vmax.f32 %v7260, 0.0
  %v7389 = vmax.f32 %v7261, 0.0
  %v7390 = vmax.f32 %v7262, 0.0
  %v7391 = vmax.f32 %v7263, 0.0
  %v7392 = vmax.f32 %v7264, 0.0
  %v7393 = vmax.f32 %v7265, 0.0
  %v7394 = vmax.f32 %v7266, 0.0
  %v7395 = vmax.f32 %v7267, 0.0
  %v7396 = vmax.f32 %v7268, 0.0
  %v7397 = vmax.f32 %v7269, 0.0
  %v7398 = vmax.f32 %v7270, 0.0
  %v7399 = vmax.f32 %v7271, 0.0
  %v7400 = vmax.f32 %v7272, 0.0
  %v7401 = vmax.f32 %v7273, 0.0
  %v7402 = vmax.f32 %v7274, 0.0
  %v7403 = vmax.f32 %v7275, 0.0
  %v7404 = vmax.f32 %v7276, 0.0
  %v7405 = vmax.f32 %v7277, 0.0
  %v7406 = vmax.f32 %v7278, 0.0
  %v7407 = vmax.f32 %v7279, 0.0
  %v7408 = vmax.f32 %v7280, 0.0
  %v7409 = vmax.f32 %v7281, 0.0
  %v7410 = vmax.f32 %v7282, 0.0
  %v7411 = vmax.f32 %v7283, 0.0
  %v7412 = vmax.f32 %v7284, 0.0
  %v7413 = vmax.f32 %v7285, 0.0
  %v7414 = vmax.f32 %v7286, 0.0
  %v7415 = vmax.f32 %v7287, 0.0
  %v7416 = vmax.f32 %v7288, 0.0
  %v7417 = vmax.f32 %v7289, 0.0
  %v7418 = vmax.f32 %v7290, 0.0
  %v7419 = vmax.f32 %v7291, 0.0
  %v7420 = vmax.f32 %v7292, 0.0
  %v7421 = vmax.f32 %v7293, 0.0
  %v7422 = vmax.f32 %v7294, 0.0
  %v7423 = vmax.f32 %v7295, 0.0
  %v7424 = vmax.f32 %v7296, 0.0
  %v7425 = vmax.f32 %v7297, 0.0
  %v7426 = vmax.f32 %v7298, 0.0
  %v7427 = vmax.f32 %v7299, 0.0
  %v7428 = vmax.f32 %v7300, 0.0
  %v7429 = vmax.f32 %v7301, 0.0
  %v7430 = vmax.f32 %v7302, 0.0
  %v7431 = vmax.f32 %v7303, 0.0
  %v7432 = vmax.f32 %v7304, 0.0
  %v7433 = vmax.f32 %v7305, 0.0
  %v7434 = vmax.f32 %v7306, 0.0
  %v7435 = vmax.f32 %v7307, 0.0
  %v7436 = vmax.f32 %v7308, 0.0
  %v7437 = vmax.f32 %v7309, 0.0
  %v7438 = vmax.f32 %v7310, 0.0
  %v7439 = vmax.f32 %v7311, 0.0
  %v7440 = vmax.f32 %v7312, 0.0
  %v7441 = vmax.f32 %v7313, 0.0
  %v7442 = vmax.f32 %v7314, 0.0
  %v7443 = vmax.f32 %v7315, 0.0
  %v7444 = vmax.f32 %v7316, 0.0
  %v7445 = vmax.f32 %v7317, 0.0
  %v7446 = vld [vmem:[%s6] sm:$0xff]
  %v7447 = vld [vmem:[%s6 + $0x8] sm:$0xff]
  %v7448 = vld [vmem:[%s6 + $0x10] sm:$0xff]
  %v7449 = vld [vmem:[%s6 + $0x18] sm:$0xff]
  %v7450 = vld [vmem:[%s6 + $0x20] sm:$0xff]
  %v7451 = vld [vmem:[%s6 + $0x28] sm:$0xff]
  %v7452 = vld [vmem:[%s6 + $0x30] sm:$0xff]
  %v7453 = vld [vmem:[%s6 + $0x38] sm:$0xff]
  %v7454 = vld [vmem:[%s6 + $0x40] sm:$0xff]
  %v7455 = vld [vmem:[%s6 + $0x48] sm:$0xff]
  %v7456 = vld [vmem:[%s6 + $0x50] sm:$0xff]
  %v7457 = vld [vmem:[%s6 + $0x58] sm:$0xff]
  %v7458 = vld [vmem:[%s6 + $0x60] sm:$0xff]
  %v7459 = vld [vmem:[%s6 + $0x68] sm:$0xff]
  %v7460 = vld [vmem:[%s6 + $0x70] sm:$0xff]
  %v7461 = vld [vmem:[%s6 + $0x78] sm:$0xff]
  %v7462 = vld [vmem:[%s6 + $0x80] sm:$0xff]
  %v7463 = vld [vmem:[%s6 + $0x88] sm:$0xff]
  %v7464 = vld [vmem:[%s6 + $0x90] sm:$0xff]
  %v7465 = vld [vmem:[%s6 + $0x98] sm:$0xff]
  %v7466 = vld [vmem:[%s6 + $0xa0] sm:$0xff]
  %v7467 = vld [vmem:[%s6 + $0xa8] sm:$0xff]
  %v7468 = vld [vmem:[%s6 + $0xb0] sm:$0xff]
  %v7469 = vld [vmem:[%s6 + $0xb8] sm:$0xff]
  %v7470 = vld [vmem:[%s6 + $0xc0] sm:$0xff]
  %v7471 = vld [vmem:[%s6 + $0xc8] sm:$0xff]
  %v7472 = vld [vmem:[%s6 + $0xd0] sm:$0xff]
  %v7473 = vld [vmem:[%s6 + $0xd8] sm:$0xff]
  %v7474 = vld [vmem:[%s6 + $0xe0] sm:$0xff]
  %v7475 = vld [vmem:[%s6 + $0xe8] sm:$0xff]
  %v7476 = vld [vmem:[%s6 + $0xf0] sm:$0xff]
  %v7477 = vld [vmem:[%s6 + $0xf8] sm:$0xff]
  %v7478 = vld [vmem:[%s6 + $0x100] sm:$0xff]
  %v7479 = vld [vmem:[%s6 + $0x108] sm:$0xff]
  %v7480 = vld [vmem:[%s6 + $0x110] sm:$0xff]
  %v7481 = vld [vmem:[%s6 + $0x118] sm:$0xff]
  %v7482 = vld [vmem:[%s6 + $0x120] sm:$0xff]
  %v7483 = vld [vmem:[%s6 + $0x128] sm:$0xff]
  %v7484 = vld [vmem:[%s6 + $0x130] sm:$0xff]
  %v7485 = vld [vmem:[%s6 + $0x138] sm:$0xff]
  %v7486 = vld [vmem:[%s6 + $0x140] sm:$0xff]
  %v7487 = vld [vmem:[%s6 + $0x148] sm:$0xff]
  %v7488 = vld [vmem:[%s6 + $0x150] sm:$0xff]
  %v7489 = vld [vmem:[%s6 + $0x158] sm:$0xff]
  %v7490 = vld [vmem:[%s6 + $0x160] sm:$0xff]
  %v7491 = vld [vmem:[%s6 + $0x168] sm:$0xff]
  %v7492 = vld [vmem:[%s6 + $0x170] sm:$0xff]
  %v7493 = vld [vmem:[%s6 + $0x178] sm:$0xff]
  %v7494 = vld [vmem:[%s6 + $0x180] sm:$0xff]
  %v7495 = vld [vmem:[%s6 + $0x188] sm:$0xff]
  %v7496 = vld [vmem:[%s6 + $0x190] sm:$0xff]
  %v7497 = vld [vmem:[%s6 + $0x198] sm:$0xff]
  %v7498 = vld [vmem:[%s6 + $0x1a0] sm:$0xff]
  %v7499 = vld [vmem:[%s6 + $0x1a8] sm:$0xff]
  %v7500 = vld [vmem:[%s6 + $0x1b0] sm:$0xff]
  %v7501 = vld [vmem:[%s6 + $0x1b8] sm:$0xff]
  %v7502 = vld [vmem:[%s6 + $0x1c0] sm:$0xff]
  %v7503 = vld [vmem:[%s6 + $0x1c8] sm:$0xff]
  %v7504 = vld [vmem:[%s6 + $0x1d0] sm:$0xff]
  %v7505 = vld [vmem:[%s6 + $0x1d8] sm:$0xff]
  %v7506 = vld [vmem:[%s6 + $0x1e0] sm:$0xff]
  %v7507 = vld [vmem:[%s6 + $0x1e8] sm:$0xff]
  %v7508 = vld [vmem:[%s6 + $0x1f0] sm:$0xff]
  %v7509 = vld [vmem:[%s6 + $0x1f8] sm:$0xff]
  %v7510 = vld [vmem:[%s6 + $0x200] sm:$0xff]
  %v7511 = vld [vmem:[%s6 + $0x208] sm:$0xff]
  %v7512 = vld [vmem:[%s6 + $0x210] sm:$0xff]
  %v7513 = vld [vmem:[%s6 + $0x218] sm:$0xff]
  %v7514 = vld [vmem:[%s6 + $0x220] sm:$0xff]
  %v7515 = vld [vmem:[%s6 + $0x228] sm:$0xff]
  %v7516 = vld [vmem:[%s6 + $0x230] sm:$0xff]
  %v7517 = vld [vmem:[%s6 + $0x238] sm:$0xff]
  %v7518 = vld [vmem:[%s6 + $0x240] sm:$0xff]
  %v7519 = vld [vmem:[%s6 + $0x248] sm:$0xff]
  %v7520 = vld [vmem:[%s6 + $0x250] sm:$0xff]
  %v7521 = vld [vmem:[%s6 + $0x258] sm:$0xff]
  %v7522 = vld [vmem:[%s6 + $0x260] sm:$0xff]
  %v7523 = vld [vmem:[%s6 + $0x268] sm:$0xff]
  %v7524 = vld [vmem:[%s6 + $0x270] sm:$0xff]
  %v7525 = vld [vmem:[%s6 + $0x278] sm:$0xff]
  %v7526 = vld [vmem:[%s6 + $0x280] sm:$0xff]
  %v7527 = vld [vmem:[%s6 + $0x288] sm:$0xff]
  %v7528 = vld [vmem:[%s6 + $0x290] sm:$0xff]
  %v7529 = vld [vmem:[%s6 + $0x298] sm:$0xff]
  %v7530 = vld [vmem:[%s6 + $0x2a0] sm:$0xff]
  %v7531 = vld [vmem:[%s6 + $0x2a8] sm:$0xff]
  %v7532 = vld [vmem:[%s6 + $0x2b0] sm:$0xff]
  %v7533 = vld [vmem:[%s6 + $0x2b8] sm:$0xff]
  %v7534 = vld [vmem:[%s6 + $0x2c0] sm:$0xff]
  %v7535 = vld [vmem:[%s6 + $0x2c8] sm:$0xff]
  %v7536 = vld [vmem:[%s6 + $0x2d0] sm:$0xff]
  %v7537 = vld [vmem:[%s6 + $0x2d8] sm:$0xff]
  %v7538 = vld [vmem:[%s6 + $0x2e0] sm:$0xff]
  %v7539 = vld [vmem:[%s6 + $0x2e8] sm:$0xff]
  %v7540 = vld [vmem:[%s6 + $0x2f0] sm:$0xff]
  %v7541 = vld [vmem:[%s6 + $0x2f8] sm:$0xff]
  %v7542 = vld [vmem:[%s6 + $0x300] sm:$0xff]
  %v7543 = vld [vmem:[%s6 + $0x308] sm:$0xff]
  %v7544 = vld [vmem:[%s6 + $0x310] sm:$0xff]
  %v7545 = vld [vmem:[%s6 + $0x318] sm:$0xff]
  %v7546 = vld [vmem:[%s6 + $0x320] sm:$0xff]
  %v7547 = vld [vmem:[%s6 + $0x328] sm:$0xff]
  %v7548 = vld [vmem:[%s6 + $0x330] sm:$0xff]
  %v7549 = vld [vmem:[%s6 + $0x338] sm:$0xff]
  %v7550 = vld [vmem:[%s6 + $0x340] sm:$0xff]
  %v7551 = vld [vmem:[%s6 + $0x348] sm:$0xff]
  %v7552 = vld [vmem:[%s6 + $0x350] sm:$0xff]
  %v7553 = vld [vmem:[%s6 + $0x358] sm:$0xff]
  %v7554 = vld [vmem:[%s6 + $0x360] sm:$0xff]
  %v7555 = vld [vmem:[%s6 + $0x368] sm:$0xff]
  %v7556 = vld [vmem:[%s6 + $0x370] sm:$0xff]
  %v7557 = vld [vmem:[%s6 + $0x378] sm:$0xff]
  %v7558 = vld [vmem:[%s6 + $0x380] sm:$0xff]
  %v7559 = vld [vmem:[%s6 + $0x388] sm:$0xff]
  %v7560 = vld [vmem:[%s6 + $0x390] sm:$0xff]
  %v7561 = vld [vmem:[%s6 + $0x398] sm:$0xff]
  %v7562 = vld [vmem:[%s6 + $0x3a0] sm:$0xff]
  %v7563 = vld [vmem:[%s6 + $0x3a8] sm:$0xff]
  %v7564 = vld [vmem:[%s6 + $0x3b0] sm:$0xff]
  %v7565 = vld [vmem:[%s6 + $0x3b8] sm:$0xff]
  %v7566 = vld [vmem:[%s6 + $0x3c0] sm:$0xff]
  %v7567 = vld [vmem:[%s6 + $0x3c8] sm:$0xff]
  %v7568 = vld [vmem:[%s6 + $0x3d0] sm:$0xff]
  %v7569 = vld [vmem:[%s6 + $0x3d8] sm:$0xff]
  %v7570 = vld [vmem:[%s6 + $0x3e0] sm:$0xff]
  %v7571 = vld [vmem:[%s6 + $0x3e8] sm:$0xff]
  %v7572 = vld [vmem:[%s6 + $0x3f0] sm:$0xff]
  %v7573 = vld [vmem:[%s6 + $0x3f8] sm:$0xff]
  %v7574 = vld [vmem:[%s7] sm:$0xff]
  %v7575 = vld [vmem:[%s7 + $0x8] sm:$0xff]
  %v7576 = vld [vmem:[%s7 + $0x10] sm:$0xff]
  %v7577 = vld [vmem:[%s7 + $0x18] sm:$0xff]
  %v7578 = vld [vmem:[%s7 + $0x20] sm:$0xff]
  %v7579 = vld [vmem:[%s7 + $0x28] sm:$0xff]
  %v7580 = vld [vmem:[%s7 + $0x30] sm:$0xff]
  %v7581 = vld [vmem:[%s7 + $0x38] sm:$0xff]
  %v7582 = vld [vmem:[%s7 + $0x40] sm:$0xff]
  %v7583 = vld [vmem:[%s7 + $0x48] sm:$0xff]
  %v7584 = vld [vmem:[%s7 + $0x50] sm:$0xff]
  %v7585 = vld [vmem:[%s7 + $0x58] sm:$0xff]
  %v7586 = vld [vmem:[%s7 + $0x60] sm:$0xff]
  %v7587 = vld [vmem:[%s7 + $0x68] sm:$0xff]
  %v7588 = vld [vmem:[%s7 + $0x70] sm:$0xff]
  %v7589 = vld [vmem:[%s7 + $0x78] sm:$0xff]
  %7591 = vset.pattern.permute.xlu0 0
  %7592 = vperm.xlu0 %7591, %v7574
  %v7593 = vpop.permute.xlu0 %7592
  %7596 = vset.pattern.permute.xlu0 0
  %7597 = vperm.xlu0 %7596, %v7575
  %v7598 = vpop.permute.xlu0 %7597
  %7601 = vset.pattern.permute.xlu0 0
  %7602 = vperm.xlu0 %7601, %v7576
  %v7603 = vpop.permute.xlu0 %7602
  %7606 = vset.pattern.permute.xlu0 0
  %7607 = vperm.xlu0 %7606, %v7577
  %v7608 = vpop.permute.xlu0 %7607
  %7611 = vset.pattern.permute.xlu0 0
  %7612 = vperm.xlu0 %7611, %v7578
  %v7613 = vpop.permute.xlu0 %7612
  %7616 = vset.pattern.permute.xlu0 0
  %7617 = vperm.xlu0 %7616, %v7579
  %v7618 = vpop.permute.xlu0 %7617
  %7621 = vset.pattern.permute.xlu0 0
  %7622 = vperm.xlu0 %7621, %v7580
  %v7623 = vpop.permute.xlu0 %7622
  %7626 = vset.pattern.permute.xlu0 0
  %7627 = vperm.xlu0 %7626, %v7581
  %v7628 = vpop.permute.xlu0 %7627
  %7631 = vset.pattern.permute.xlu0 0
  %7632 = vperm.xlu0 %7631, %v7582
  %v7633 = vpop.permute.xlu0 %7632
  %7636 = vset.pattern.permute.xlu0 0
  %7637 = vperm.xlu0 %7636, %v7583
  %v7638 = vpop.permute.xlu0 %7637
  %7641 = vset.pattern.permute.xlu0 0
  %7642 = vperm.xlu0 %7641, %v7584
  %v7643 = vpop.permute.xlu0 %7642
  %7646 = vset.pattern.permute.xlu0 0
  %7647 = vperm.xlu0 %7646, %v7585
  %v7648 = vpop.permute.xlu0 %7647
  %7651 = vset.pattern.permute.xlu0 0
  %7652 = vperm.xlu0 %7651, %v7586
  %v7653 = vpop.permute.xlu0 %7652
  %7656 = vset.pattern.permute.xlu0 0
  %7657 = vperm.xlu0 %7656, %v7587
  %v7658 = vpop.permute.xlu0 %7657
  %7661 = vset.pattern.permute.xlu0 0
  %7662 = vperm.xlu0 %7661, %v7588
  %v7663 = vpop.permute.xlu0 %7662
  %7666 = vset.pattern.permute.xlu0 0
  %7667 = vperm.xlu0 %7666, %v7589
  %v7668 = vpop.permute.xlu0 %7667
  %7670 = vmatpush.msra.mxu0 %v7333
  %7671 = vmatpush.msra.mxu0 %v7332
  %7672 = vmatpush.msra.mxu0 %v7331
  %7673 = vmatpush.msra.mxu0 %v7330
  %7674 = vmatpush.msra.mxu0 %v7329
  %7675 = vmatpush.msra.mxu0 %v7328
  %7676 = vmatpush.msra.mxu0 %v7327
  %7677 = vmatpush.msra.mxu0 %v7326
  %7678 = vmatpush.msra.mxu0 %v7325
  %7679 = vmatpush.msra.mxu0 %v7324
  %7680 = vmatpush.msra.mxu0 %v7323
  %7681 = vmatpush.msra.mxu0 %v7322
  %7682 = vmatpush.msra.mxu0 %v7321
  %7683 = vmatpush.msra.mxu0 %v7320
  %7684 = vmatpush.msra.mxu0 %v7319
  %7685 = vmatpush.msra.mxu0 %v7318
  %7686 = vmatmul.f32.gmra.mxu0 %v7446
  %v7687 = vpop.f32.mrf.mxu0
  %v7688 = vadd.f32 %v7593, %v7687
  %7689 = vmatmul.f32.gmra.mxu0 %v7454
  %v7690 = vpop.f32.mrf.mxu0
  %v7691 = vadd.f32 %v7598, %v7690
  %7692 = vmatmul.f32.gmra.mxu0 %v7462
  %v7693 = vpop.f32.mrf.mxu0
  %v7694 = vadd.f32 %v7603, %v7693
  %7695 = vmatmul.f32.gmra.mxu0 %v7470
  %v7696 = vpop.f32.mrf.mxu0
  %v7697 = vadd.f32 %v7608, %v7696
  %7698 = vmatmul.f32.gmra.mxu0 %v7478
  %v7699 = vpop.f32.mrf.mxu0
  %v7700 = vadd.f32 %v7613, %v7699
  %7701 = vmatmul.f32.gmra.mxu0 %v7486
  %v7702 = vpop.f32.mrf.mxu0
  %v7703 = vadd.f32 %v7618, %v7702
  %7704 = vmatmul.f32.gmra.mxu0 %v7494
  %v7705 = vpop.f32.mrf.mxu0
  %v7706 = vadd.f32 %v7623, %v7705
  %7707 = vmatmul.f32.gmra.mxu0 %v7502
  %v7708 = vpop.f32.mrf.mxu0
  %v7709 = vadd.f32 %v7628, %v7708
  %7710 = vmatmul.f32.gmra.mxu0 %v7510
  %v7711 = vpop.f32.mrf.mxu0
  %v7712 = vadd.f32 %v7633, %v7711
  %7713 = vmatmul.f32.gmra.mxu0 %v7518
  %v7714 = vpop.f32.mrf.mxu0
  %v7715 = vadd.f32 %v7638, %v7714
  %7716 = vmatmul.f32.gmra.mxu0 %v7526
  %v7717 = vpop.f32.mrf.mxu0
  %v7718 = vadd.f32 %v7643, %v7717
  %7719 = vmatmul.f32.gmra.mxu0 %v7534
  %v7720 = vpop.f32.mrf.mxu0
  %v7721 = vadd.f32 %v7648, %v7720
  %7722 = vmatmul.f32.gmra.mxu0 %v7542
  %v7723 = vpop.f32.mrf.mxu0
  %v7724 = vadd.f32 %v7653, %v7723
  %7725 = vmatmul.f32.gmra.mxu0 %v7550
  %v7726 = vpop.f32.mrf.mxu0
  %v7727 = vadd.f32 %v7658, %v7726
  %7728 = vmatmul.f32.gmra.mxu0 %v7558
  %v7729 = vpop.f32.mrf.mxu0
  %v7730 = vadd.f32 %v7663, %v7729
  %7731 = vmatmul.f32.gmra.mxu0 %v7566
  %v7732 = vpop.f32.mrf.mxu0
  %v7733 = vadd.f32 %v7668, %v7732
  %7734 = vdwg.mxu0
  %7735 = vmatpush.msra.mxu0 %v7349
  %7736 = vmatpush.msra.mxu0 %v7348
  %7737 = vmatpush.msra.mxu0 %v7347
  %7738 = vmatpush.msra.mxu0 %v7346
  %7739 = vmatpush.msra.mxu0 %v7345
  %7740 = vmatpush.msra.mxu0 %v7344
  %7741 = vmatpush.msra.mxu0 %v7343
  %7742 = vmatpush.msra.mxu0 %v7342
  %7743 = vmatpush.msra.mxu0 %v7341
  %7744 = vmatpush.msra.mxu0 %v7340
  %7745 = vmatpush.msra.mxu0 %v7339
  %7746 = vmatpush.msra.mxu0 %v7338
  %7747 = vmatpush.msra.mxu0 %v7337
  %7748 = vmatpush.msra.mxu0 %v7336
  %7749 = vmatpush.msra.mxu0 %v7335
  %7750 = vmatpush.msra.mxu0 %v7334
  %7751 = vmatmul.f32.gmra.mxu0 %v7447
  %v7752 = vpop.f32.mrf.mxu0
  %v7753 = vadd.f32 %v7688, %v7752
  %7754 = vmatmul.f32.gmra.mxu0 %v7455
  %v7755 = vpop.f32.mrf.mxu0
  %v7756 = vadd.f32 %v7691, %v7755
  %7757 = vmatmul.f32.gmra.mxu0 %v7463
  %v7758 = vpop.f32.mrf.mxu0
  %v7759 = vadd.f32 %v7694, %v7758
  %7760 = vmatmul.f32.gmra.mxu0 %v7471
  %v7761 = vpop.f32.mrf.mxu0
  %v7762 = vadd.f32 %v7697, %v7761
  %7763 = vmatmul.f32.gmra.mxu0 %v7479
  %v7764 = vpop.f32.mrf.mxu0
  %v7765 = vadd.f32 %v7700, %v7764
  %7766 = vmatmul.f32.gmra.mxu0 %v7487
  %v7767 = vpop.f32.mrf.mxu0
  %v7768 = vadd.f32 %v7703, %v7767
  %7769 = vmatmul.f32.gmra.mxu0 %v7495
  %v7770 = vpop.f32.mrf.mxu0
  %v7771 = vadd.f32 %v7706, %v7770
  %7772 = vmatmul.f32.gmra.mxu0 %v7503
  %v7773 = vpop.f32.mrf.mxu0
  %v7774 = vadd.f32 %v7709, %v7773
  %7775 = vmatmul.f32.gmra.mxu0 %v7511
  %v7776 = vpop.f32.mrf.mxu0
  %v7777 = vadd.f32 %v7712, %v7776
  %7778 = vmatmul.f32.gmra.mxu0 %v7519
  %v7779 = vpop.f32.mrf.mxu0
  %v7780 = vadd.f32 %v7715, %v7779
  %7781 = vmatmul.f32.gmra.mxu0 %v7527
  %v7782 = vpop.f32.mrf.mxu0
  %v7783 = vadd.f32 %v7718, %v7782
  %7784 = vmatmul.f32.gmra.mxu0 %v7535
  %v7785 = vpop.f32.mrf.mxu0
  %v7786 = vadd.f32 %v7721, %v7785
  %7787 = vmatmul.f32.gmra.mxu0 %v7543
  %v7788 = vpop.f32.mrf.mxu0
  %v7789 = vadd.f32 %v7724, %v7788
  %7790 = vmatmul.f32.gmra.mxu0 %v7551
  %v7791 = vpop.f32.mrf.mxu0
  %v7792 = vadd.f32 %v7727, %v7791
  %7793 = vmatmul.f32.gmra.mxu0 %v7559
  %v7794 = vpop.f32.mrf.mxu0
  %v7795 = vadd.f32 %v7730, %v7794
  %7796 = vmatmul.f32.gmra.mxu0 %v7567
  %v7797 = vpop.f32.mrf.mxu0
  %v7798 = vadd.f32 %v7733, %v7797
  %7799 = vdwg.mxu0
  %7800 = vmatpush.msra.mxu0 %v7365
  %7801 = vmatpush.msra.mxu0 %v7364
  %7802 = vmatpush.msra.mxu0 %v7363
  %7803 = vmatpush.msra.mxu0 %v7362
  %7804 = vmatpush.msra.mxu0 %v7361
  %7805 = vmatpush.msra.mxu0 %v7360
  %7806 = vmatpush.msra.mxu0 %v7359
  %7807 = vmatpush.msra.mxu0 %v7358
  %7808 = vmatpush.msra.mxu0 %v7357
  %7809 = vmatpush.msra.mxu0 %v7356
  %7810 = vmatpush.msra.mxu0 %v7355
  %7811 = vmatpush.msra.mxu0 %v7354
  %7812 = vmatpush.msra.mxu0 %v7353
  %7813 = vmatpush.msra.mxu0 %v7352
  %7814 = vmatpush.msra.mxu0 %v7351
  %7815 = vmatpush.msra.mxu0 %v7350
  %7816 = vmatmul.f32.gmra.mxu0 %v7448
  %v7817 = vpop.f32.mrf.mxu0
  %v7818 = vadd.f32 %v7753, %v7817
  %7819 = vmatmul.f32.gmra.mxu0 %v7456
  %v7820 = vpop.f32.mrf.mxu0
  %v7821 = vadd.f32 %v7756, %v7820
  %7822 = vmatmul.f32.gmra.mxu0 %v7464
  %v7823 = vpop.f32.mrf.mxu0
  %v7824 = vadd.f32 %v7759, %v7823
  %7825 = vmatmul.f32.gmra.mxu0 %v7472
  %v7826 = vpop.f32.mrf.mxu0
  %v7827 = vadd.f32 %v7762, %v7826
  %7828 = vmatmul.f32.gmra.mxu0 %v7480
  %v7829 = vpop.f32.mrf.mxu0
  %v7830 = vadd.f32 %v7765, %v7829
  %7831 = vmatmul.f32.gmra.mxu0 %v7488
  %v7832 = vpop.f32.mrf.mxu0
  %v7833 = vadd.f32 %v7768, %v7832
  %7834 = vmatmul.f32.gmra.mxu0 %v7496
  %v7835 = vpop.f32.mrf.mxu0
  %v7836 = vadd.f32 %v7771, %v7835
  %7837 = vmatmul.f32.gmra.mxu0 %v7504
  %v7838 = vpop.f32.mrf.mxu0
  %v7839 = vadd.f32 %v7774, %v7838
  %7840 = vmatmul.f32.gmra.mxu0 %v7512
  %v7841 = vpop.f32.mrf.mxu0
  %v7842 = vadd.f32 %v7777, %v7841
  %7843 = vmatmul.f32.gmra.mxu0 %v7520
  %v7844 = vpop.f32.mrf.mxu0
  %v7845 = vadd.f32 %v7780, %v7844
  %7846 = vmatmul.f32.gmra.mxu0 %v7528
  %v7847 = vpop.f32.mrf.mxu0
  %v7848 = vadd.f32 %v7783, %v7847
  %7849 = vmatmul.f32.gmra.mxu0 %v7536
  %v7850 = vpop.f32.mrf.mxu0
  %v7851 = vadd.f32 %v7786, %v7850
  %7852 = vmatmul.f32.gmra.mxu0 %v7544
  %v7853 = vpop.f32.mrf.mxu0
  %v7854 = vadd.f32 %v7789, %v7853
  %7855 = vmatmul.f32.gmra.mxu0 %v7552
  %v7856 = vpop.f32.mrf.mxu0
  %v7857 = vadd.f32 %v7792, %v7856
  %7858 = vmatmul.f32.gmra.mxu0 %v7560
  %v7859 = vpop.f32.mrf.mxu0
  %v7860 = vadd.f32 %v7795, %v7859
  %7861 = vmatmul.f32.gmra.mxu0 %v7568
  %v7862 = vpop.f32.mrf.mxu0
  %v7863 = vadd.f32 %v7798, %v7862
  %7864 = vdwg.mxu0
  %7865 = vmatpush.msra.mxu0 %v7381
  %7866 = vmatpush.msra.mxu0 %v7380
  %7867 = vmatpush.msra.mxu0 %v7379
  %7868 = vmatpush.msra.mxu0 %v7378
  %7869 = vmatpush.msra.mxu0 %v7377
  %7870 = vmatpush.msra.mxu0 %v7376
  %7871 = vmatpush.msra.mxu0 %v7375
  %7872 = vmatpush.msra.mxu0 %v7374
  %7873 = vmatpush.msra.mxu0 %v7373
  %7874 = vmatpush.msra.mxu0 %v7372
  %7875 = vmatpush.msra.mxu0 %v7371
  %7876 = vmatpush.msra.mxu0 %v7370
  %7877 = vmatpush.msra.mxu0 %v7369
  %7878 = vmatpush.msra.mxu0 %v7368
  %7879 = vmatpush.msra.mxu0 %v7367
  %7880 = vmatpush.msra.mxu0 %v7366
  %7881 = vmatmul.f32.gmra.mxu0 %v7449
  %v7882 = vpop.f32.mrf.mxu0
  %v7883 = vadd.f32 %v7818, %v7882
  %7884 = vmatmul.f32.gmra.mxu0 %v7457
  %v7885 = vpop.f32.mrf.mxu0
  %v7886 = vadd.f32 %v7821, %v7885
  %7887 = vmatmul.f32.gmra.mxu0 %v7465
  %v7888 = vpop.f32.mrf.mxu0
  %v7889 = vadd.f32 %v7824, %v7888
  %7890 = vmatmul.f32.gmra.mxu0 %v7473
  %v7891 = vpop.f32.mrf.mxu0
  %v7892 = vadd.f32 %v7827, %v7891
  %7893 = vmatmul.f32.gmra.mxu0 %v7481
  %v7894 = vpop.f32.mrf.mxu0
  %v7895 = vadd.f32 %v7830, %v7894
  %7896 = vmatmul.f32.gmra.mxu0 %v7489
  %v7897 = vpop.f32.mrf.mxu0
  %v7898 = vadd.f32 %v7833, %v7897
  %7899 = vmatmul.f32.gmra.mxu0 %v7497
  %v7900 = vpop.f32.mrf.mxu0
  %v7901 = vadd.f32 %v7836, %v7900
  %7902 = vmatmul.f32.gmra.mxu0 %v7505
  %v7903 = vpop.f32.mrf.mxu0
  %v7904 = vadd.f32 %v7839, %v7903
  %7905 = vmatmul.f32.gmra.mxu0 %v7513
  %v7906 = vpop.f32.mrf.mxu0
  %v7907 = vadd.f32 %v7842, %v7906
  %7908 = vmatmul.f32.gmra.mxu0 %v7521
  %v7909 = vpop.f32.mrf.mxu0
  %v7910 = vadd.f32 %v7845, %v7909
  %7911 = vmatmul.f32.gmra.mxu0 %v7529
  %v7912 = vpop.f32.mrf.mxu0
  %v7913 = vadd.f32 %v7848, %v7912
  %7914 = vmatmul.f32.gmra.mxu0 %v7537
  %v7915 = vpop.f32.mrf.mxu0
  %v7916 = vadd.f32 %v7851, %v7915
  %7917 = vmatmul.f32.gmra.mxu0 %v7545
  %v7918 = vpop.f32.mrf.mxu0
  %v7919 = vadd.f32 %v7854, %v7918
  %7920 = vmatmul.f32.gmra.mxu0 %v7553
  %v7921 = vpop.f32.mrf.mxu0
  %v7922 = vadd.f32 %v7857, %v7921
  %7923 = vmatmul.f32.gmra.mxu0 %v7561
  %v7924 = vpop.f32.mrf.mxu0
  %v7925 = vadd.f32 %v7860, %v7924
  %7926 = vmatmul.f32.gmra.mxu0 %v7569
  %v7927 = vpop.f32.mrf.mxu0
  %v7928 = vadd.f32 %v7863, %v7927
  %7929 = vdwg.mxu0
  %7930 = vmatpush.msra.mxu0 %v7397
  %7931 = vmatpush.msra.mxu0 %v7396
  %7932 = vmatpush.msra.mxu0 %v7395
  %7933 = vmatpush.msra.mxu0 %v7394
  %7934 = vmatpush.msra.mxu0 %v7393
  %7935 = vmatpush.msra.mxu0 %v7392
  %7936 = vmatpush.msra.mxu0 %v7391
  %7937 = vmatpush.msra.mxu0 %v7390
  %7938 = vmatpush.msra.mxu0 %v7389
  %7939 = vmatpush.msra.mxu0 %v7388
  %7940 = vmatpush.msra.mxu0 %v7387
  %7941 = vmatpush.msra.mxu0 %v7386
  %7942 = vmatpush.msra.mxu0 %v7385
  %7943 = vmatpush.msra.mxu0 %v7384
  %7944 = vmatpush.msra.mxu0 %v7383
  %7945 = vmatpush.msra.mxu0 %v7382
  %7946 = vmatmul.f32.gmra.mxu0 %v7450
  %v7947 = vpop.f32.mrf.mxu0
  %v7948 = vadd.f32 %v7883, %v7947
  %7949 = vmatmul.f32.gmra.mxu0 %v7458
  %v7950 = vpop.f32.mrf.mxu0
  %v7951 = vadd.f32 %v7886, %v7950
  %7952 = vmatmul.f32.gmra.mxu0 %v7466
  %v7953 = vpop.f32.mrf.mxu0
  %v7954 = vadd.f32 %v7889, %v7953
  %7955 = vmatmul.f32.gmra.mxu0 %v7474
  %v7956 = vpop.f32.mrf.mxu0
  %v7957 = vadd.f32 %v7892, %v7956
  %7958 = vmatmul.f32.gmra.mxu0 %v7482
  %v7959 = vpop.f32.mrf.mxu0
  %v7960 = vadd.f32 %v7895, %v7959
  %7961 = vmatmul.f32.gmra.mxu0 %v7490
  %v7962 = vpop.f32.mrf.mxu0
  %v7963 = vadd.f32 %v7898, %v7962
  %7964 = vmatmul.f32.gmra.mxu0 %v7498
  %v7965 = vpop.f32.mrf.mxu0
  %v7966 = vadd.f32 %v7901, %v7965
  %7967 = vmatmul.f32.gmra.mxu0 %v7506
  %v7968 = vpop.f32.mrf.mxu0
  %v7969 = vadd.f32 %v7904, %v7968
  %7970 = vmatmul.f32.gmra.mxu0 %v7514
  %v7971 = vpop.f32.mrf.mxu0
  %v7972 = vadd.f32 %v7907, %v7971
  %7973 = vmatmul.f32.gmra.mxu0 %v7522
  %v7974 = vpop.f32.mrf.mxu0
  %v7975 = vadd.f32 %v7910, %v7974
  %7976 = vmatmul.f32.gmra.mxu0 %v7530
  %v7977 = vpop.f32.mrf.mxu0
  %v7978 = vadd.f32 %v7913, %v7977
  %7979 = vmatmul.f32.gmra.mxu0 %v7538
  %v7980 = vpop.f32.mrf.mxu0
  %v7981 = vadd.f32 %v7916, %v7980
  %7982 = vmatmul.f32.gmra.mxu0 %v7546
  %v7983 = vpop.f32.mrf.mxu0
  %v7984 = vadd.f32 %v7919, %v7983
  %7985 = vmatmul.f32.gmra.mxu0 %v7554
  %v7986 = vpop.f32.mrf.mxu0
  %v7987 = vadd.f32 %v7922, %v7986
  %7988 = vmatmul.f32.gmra.mxu0 %v7562
  %v7989 = vpop.f32.mrf.mxu0
  %v7990 = vadd.f32 %v7925, %v7989
  %7991 = vmatmul.f32.gmra.mxu0 %v7570
  %v7992 = vpop.f32.mrf.mxu0
  %v7993 = vadd.f32 %v7928, %v7992
  %7994 = vdwg.mxu0
  %7995 = vmatpush.msra.mxu0 %v7413
  %7996 = vmatpush.msra.mxu0 %v7412
  %7997 = vmatpush.msra.mxu0 %v7411
  %7998 = vmatpush.msra.mxu0 %v7410
  %7999 = vmatpush.msra.mxu0 %v7409
  %8000 = vmatpush.msra.mxu0 %v7408
  %8001 = vmatpush.msra.mxu0 %v7407
  %8002 = vmatpush.msra.mxu0 %v7406
  %8003 = vmatpush.msra.mxu0 %v7405
  %8004 = vmatpush.msra.mxu0 %v7404
  %8005 = vmatpush.msra.mxu0 %v7403
  %8006 = vmatpush.msra.mxu0 %v7402
  %8007 = vmatpush.msra.mxu0 %v7401
  %8008 = vmatpush.msra.mxu0 %v7400
  %8009 = vmatpush.msra.mxu0 %v7399
  %8010 = vmatpush.msra.mxu0 %v7398
  %8011 = vmatmul.f32.gmra.mxu0 %v7451
  %v8012 = vpop.f32.mrf.mxu0
  %v8013 = vadd.f32 %v7948, %v8012
  %8014 = vmatmul.f32.gmra.mxu0 %v7459
  %v8015 = vpop.f32.mrf.mxu0
  %v8016 = vadd.f32 %v7951, %v8015
  %8017 = vmatmul.f32.gmra.mxu0 %v7467
  %v8018 = vpop.f32.mrf.mxu0
  %v8019 = vadd.f32 %v7954, %v8018
  %8020 = vmatmul.f32.gmra.mxu0 %v7475
  %v8021 = vpop.f32.mrf.mxu0
  %v8022 = vadd.f32 %v7957, %v8021
  %8023 = vmatmul.f32.gmra.mxu0 %v7483
  %v8024 = vpop.f32.mrf.mxu0
  %v8025 = vadd.f32 %v7960, %v8024
  %8026 = vmatmul.f32.gmra.mxu0 %v7491
  %v8027 = vpop.f32.mrf.mxu0
  %v8028 = vadd.f32 %v7963, %v8027
  %8029 = vmatmul.f32.gmra.mxu0 %v7499
  %v8030 = vpop.f32.mrf.mxu0
  %v8031 = vadd.f32 %v7966, %v8030
  %8032 = vmatmul.f32.gmra.mxu0 %v7507
  %v8033 = vpop.f32.mrf.mxu0
  %v8034 = vadd.f32 %v7969, %v8033
  %8035 = vmatmul.f32.gmra.mxu0 %v7515
  %v8036 = vpop.f32.mrf.mxu0
  %v8037 = vadd.f32 %v7972, %v8036
  %8038 = vmatmul.f32.gmra.mxu0 %v7523
  %v8039 = vpop.f32.mrf.mxu0
  %v8040 = vadd.f32 %v7975, %v8039
  %8041 = vmatmul.f32.gmra.mxu0 %v7531
  %v8042 = vpop.f32.mrf.mxu0
  %v8043 = vadd.f32 %v7978, %v8042
  %8044 = vmatmul.f32.gmra.mxu0 %v7539
  %v8045 = vpop.f32.mrf.mxu0
  %v8046 = vadd.f32 %v7981, %v8045
  %8047 = vmatmul.f32.gmra.mxu0 %v7547
  %v8048 = vpop.f32.mrf.mxu0
  %v8049 = vadd.f32 %v7984, %v8048
  %8050 = vmatmul.f32.gmra.mxu0 %v7555
  %v8051 = vpop.f32.mrf.mxu0
  %v8052 = vadd.f32 %v7987, %v8051
  %8053 = vmatmul.f32.gmra.mxu0 %v7563
  %v8054 = vpop.f32.mrf.mxu0
  %v8055 = vadd.f32 %v7990, %v8054
  %8056 = vmatmul.f32.gmra.mxu0 %v7571
  %v8057 = vpop.f32.mrf.mxu0
  %v8058 = vadd.f32 %v7993, %v8057
  %8059 = vdwg.mxu0
  %8060 = vmatpush.msra.mxu0 %v7429
  %8061 = vmatpush.msra.mxu0 %v7428
  %8062 = vmatpush.msra.mxu0 %v7427
  %8063 = vmatpush.msra.mxu0 %v7426
  %8064 = vmatpush.msra.mxu0 %v7425
  %8065 = vmatpush.msra.mxu0 %v7424
  %8066 = vmatpush.msra.mxu0 %v7423
  %8067 = vmatpush.msra.mxu0 %v7422
  %8068 = vmatpush.msra.mxu0 %v7421
  %8069 = vmatpush.msra.mxu0 %v7420
  %8070 = vmatpush.msra.mxu0 %v7419
  %8071 = vmatpush.msra.mxu0 %v7418
  %8072 = vmatpush.msra.mxu0 %v7417
  %8073 = vmatpush.msra.mxu0 %v7416
  %8074 = vmatpush.msra.mxu0 %v7415
  %8075 = vmatpush.msra.mxu0 %v7414
  %8076 = vmatmul.f32.gmra.mxu0 %v7452
  %v8077 = vpop.f32.mrf.mxu0
  %v8078 = vadd.f32 %v8013, %v8077
  %8079 = vmatmul.f32.gmra.mxu0 %v7460
  %v8080 = vpop.f32.mrf.mxu0
  %v8081 = vadd.f32 %v8016, %v8080
  %8082 = vmatmul.f32.gmra.mxu0 %v7468
  %v8083 = vpop.f32.mrf.mxu0
  %v8084 = vadd.f32 %v8019, %v8083
  %8085 = vmatmul.f32.gmra.mxu0 %v7476
  %v8086 = vpop.f32.mrf.mxu0
  %v8087 = vadd.f32 %v8022, %v8086
  %8088 = vmatmul.f32.gmra.mxu0 %v7484
  %v8089 = vpop.f32.mrf.mxu0
  %v8090 = vadd.f32 %v8025, %v8089
  %8091 = vmatmul.f32.gmra.mxu0 %v7492
  %v8092 = vpop.f32.mrf.mxu0
  %v8093 = vadd.f32 %v8028, %v8092
  %8094 = vmatmul.f32.gmra.mxu0 %v7500
  %v8095 = vpop.f32.mrf.mxu0
  %v8096 = vadd.f32 %v8031, %v8095
  %8097 = vmatmul.f32.gmra.mxu0 %v7508
  %v8098 = vpop.f32.mrf.mxu0
  %v8099 = vadd.f32 %v8034, %v8098
  %8100 = vmatmul.f32.gmra.mxu0 %v7516
  %v8101 = vpop.f32.mrf.mxu0
  %v8102 = vadd.f32 %v8037, %v8101
  %8103 = vmatmul.f32.gmra.mxu0 %v7524
  %v8104 = vpop.f32.mrf.mxu0
  %v8105 = vadd.f32 %v8040, %v8104
  %8106 = vmatmul.f32.gmra.mxu0 %v7532
  %v8107 = vpop.f32.mrf.mxu0
  %v8108 = vadd.f32 %v8043, %v8107
  %8109 = vmatmul.f32.gmra.mxu0 %v7540
  %v8110 = vpop.f32.mrf.mxu0
  %v8111 = vadd.f32 %v8046, %v8110
  %8112 = vmatmul.f32.gmra.mxu0 %v7548
  %v8113 = vpop.f32.mrf.mxu0
  %v8114 = vadd.f32 %v8049, %v8113
  %8115 = vmatmul.f32.gmra.mxu0 %v7556
  %v8116 = vpop.f32.mrf.mxu0
  %v8117 = vadd.f32 %v8052, %v8116
  %8118 = vmatmul.f32.gmra.mxu0 %v7564
  %v8119 = vpop.f32.mrf.mxu0
  %v8120 = vadd.f32 %v8055, %v8119
  %8121 = vmatmul.f32.gmra.mxu0 %v7572
  %v8122 = vpop.f32.mrf.mxu0
  %v8123 = vadd.f32 %v8058, %v8122
  %8124 = vdwg.mxu0
  %8125 = vmatpush.msra.mxu0 %v7445
  %8126 = vmatpush.msra.mxu0 %v7444
  %8127 = vmatpush.msra.mxu0 %v7443
  %8128 = vmatpush.msra.mxu0 %v7442
  %8129 = vmatpush.msra.mxu0 %v7441
  %8130 = vmatpush.msra.mxu0 %v7440
  %8131 = vmatpush.msra.mxu0 %v7439
  %8132 = vmatpush.msra.mxu0 %v7438
  %8133 = vmatpush.msra.mxu0 %v7437
  %8134 = vmatpush.msra.mxu0 %v7436
  %8135 = vmatpush.msra.mxu0 %v7435
  %8136 = vmatpush.msra.mxu0 %v7434
  %8137 = vmatpush.msra.mxu0 %v7433
  %8138 = vmatpush.msra.mxu0 %v7432
  %8139 = vmatpush.msra.mxu0 %v7431
  %8140 = vmatpush.msra.mxu0 %v7430
  %8141 = vmatmul.f32.gmra.mxu0 %v7453
  %v8142 = vpop.f32.mrf.mxu0
  %v8143 = vadd.f32 %v8078, %v8142
  %8144 = vmatmul.f32.gmra.mxu0 %v7461
  %v8145 = vpop.f32.mrf.mxu0
  %v8146 = vadd.f32 %v8081, %v8145
  %8147 = vmatmul.f32.gmra.mxu0 %v7469
  %v8148 = vpop.f32.mrf.mxu0
  %v8149 = vadd.f32 %v8084, %v8148
  %8150 = vmatmul.f32.gmra.mxu0 %v7477
  %v8151 = vpop.f32.mrf.mxu0
  %v8152 = vadd.f32 %v8087, %v8151
  %8153 = vmatmul.f32.gmra.mxu0 %v7485
  %v8154 = vpop.f32.mrf.mxu0
  %v8155 = vadd.f32 %v8090, %v8154
  %8156 = vmatmul.f32.gmra.mxu0 %v7493
  %v8157 = vpop.f32.mrf.mxu0
  %v8158 = vadd.f32 %v8093, %v8157
  %8159 = vmatmul.f32.gmra.mxu0 %v7501
  %v8160 = vpop.f32.mrf.mxu0
  %v8161 = vadd.f32 %v8096, %v8160
  %8162 = vmatmul.f32.gmra.mxu0 %v7509
  %v8163 = vpop.f32.mrf.mxu0
  %v8164 = vadd.f32 %v8099, %v8163
  %8165 = vmatmul.f32.gmra.mxu0 %v7517
  %v8166 = vpop.f32.mrf.mxu0
  %v8167 = vadd.f32 %v8102, %v8166
  %8168 = vmatmul.f32.gmra.mxu0 %v7525
  %v8169 = vpop.f32.mrf.mxu0
  %v8170 = vadd.f32 %v8105, %v8169
  %8171 = vmatmul.f32.gmra.mxu0 %v7533
  %v8172 = vpop.f32.mrf.mxu0
  %v8173 = vadd.f32 %v8108, %v8172
  %8174 = vmatmul.f32.gmra.mxu0 %v7541
  %v8175 = vpop.f32.mrf.mxu0
  %v8176 = vadd.f32 %v8111, %v8175
  %8177 = vmatmul.f32.gmra.mxu0 %v7549
  %v8178 = vpop.f32.mrf.mxu0
  %v8179 = vadd.f32 %v8114, %v8178
  %8180 = vmatmul.f32.gmra.mxu0 %v7557
  %v8181 = vpop.f32.mrf.mxu0
  %v8182 = vadd.f32 %v8117, %v8181
  %8183 = vmatmul.f32.gmra.mxu0 %v7565
  %v8184 = vpop.f32.mrf.mxu0
  %v8185 = vadd.f32 %v8120, %v8184
  %8186 = vmatmul.f32.gmra.mxu0 %v7573
  %v8187 = vpop.f32.mrf.mxu0
  %v8188 = vadd.f32 %v8123, %v8187
  %8189 = vdwg.mxu0
  %vm8190 = vcmask 15360
  %8191 = vst.msk [vmem:[%s8] sm:$0xff] %vm8190, %v8143
  %8192 = vst.msk [vmem:[%s8 + $0x8] sm:$0xff] %vm8190, %v8146
  %8193 = vst.msk [vmem:[%s8 + $0x10] sm:$0xff] %vm8190, %v8149
  %8194 = vst.msk [vmem:[%s8 + $0x18] sm:$0xff] %vm8190, %v8152
  %8195 = vst.msk [vmem:[%s8 + $0x20] sm:$0xff] %vm8190, %v8155
  %8196 = vst.msk [vmem:[%s8 + $0x28] sm:$0xff] %vm8190, %v8158
  %8197 = vst.msk [vmem:[%s8 + $0x30] sm:$0xff] %vm8190, %v8161
  %8198 = vst.msk [vmem:[%s8 + $0x38] sm:$0xff] %vm8190, %v8164
  %8199 = vst.msk [vmem:[%s8 + $0x40] sm:$0xff] %vm8190, %v8167
  %8200 = vst.msk [vmem:[%s8 + $0x48] sm:$0xff] %vm8190, %v8170
  %8201 = vst.msk [vmem:[%s8 + $0x50] sm:$0xff] %vm8190, %v8173
  %8202 = vst.msk [vmem:[%s8 + $0x58] sm:$0xff] %vm8190, %v8176
  %8203 = vst.msk [vmem:[%s8 + $0x60] sm:$0xff] %vm8190, %v8179
  %8204 = vst.msk [vmem:[%s8 + $0x68] sm:$0xff] %vm8190, %v8182
  %8205 = vst.msk [vmem:[%s8 + $0x70] sm:$0xff] %vm8190, %v8185
  %8206 = vst.msk [vmem:[%s8 + $0x78] sm:$0xff] %vm8190, %v8188
  // Predicated region
  $region34: #{mvcnn_forward.1} parent=0 // pred_check
    _
  $region35: #{mvcnn_forward.1} parent=0 // pred_check_branch
    %8208 = sbr.rel (0) target = $region37
  $region36: #{mvcnn_forward.1} parent=0 // pred_region
    _
  $region37: #{mvcnn_forward.1} parent=0 // pred_fallthru
    _
  // Predicated region
  $region38: #{mvcnn_forward.1} parent=0 // pred_check
    _
  $region39: #{mvcnn_forward.1} parent=0 // pred_check_branch
    %8210 = sbr.rel (0) target = $region41
  $region40: #{mvcnn_forward.1} parent=0 // pred_region
    _
  $region41: #{mvcnn_forward.1} parent=0 // pred_fallthru
    _

</llo_original>
